<compile_context>
chip_gen: v5e
topology: v5e:2x2
jax: 0.10.0
libtpu: 0.0.40
codegen_flags: <defaults>
</compile_context>

<pallas_src>
import functools

import jax
import jax.numpy as jnp
from jax.experimental import pallas as pl
from jax.experimental.pallas import tpu as pltpu


def multivae_kernel(*refs, apply_dropout, latent_dim):
    if apply_dropout:
        (x_ref, eps_ref, mask_ref,
         w1_ref, b1_ref, w2_ref, b2_ref, w3_ref, b3_ref, w4_ref, b4_ref,
         recon_ref, mean_ref, logvar_ref) = refs
    else:
        (x_ref, eps_ref,
         w1_ref, b1_ref, w2_ref, b2_ref, w3_ref, b3_ref, w4_ref, b4_ref,
         recon_ref, mean_ref, logvar_ref) = refs
        mask_ref = None

    x = x_ref[...].astype(jnp.float32)                      # (TB, D), bf16 stream

    # F.normalize(x): L2 normalize along last dim (eps = 1e-12).
    # rsqrt(max(sumsq, eps^2)) == 1 / max(||x||, eps); rsqrt rides the EUP slot.
    sumsq = jnp.sum(x * x, axis=-1, keepdims=True)
    h = x * jax.lax.rsqrt(jnp.maximum(sumsq, 1e-24))

    if apply_dropout:
        # Mask is pre-scaled to {0, 1/keep_prob} in the wrapper -> one multiply.
        h = h * mask_ref[...].astype(jnp.float32)

    # Encoder: Linear -> Tanh -> Linear.  bf16 MXU inputs, f32 accumulation.
    hb = h.astype(jnp.bfloat16)
    h1 = jnp.tanh(
        jnp.dot(hb, w1_ref[...], preferred_element_type=jnp.float32) + b1_ref[...]
    )
    h1b = h1.astype(jnp.bfloat16)
    # Fused (H0, 2L) head: single full-width MXU push; lane-aligned slice at L.
    enc = jnp.dot(h1b, w2_ref[...], preferred_element_type=jnp.float32) + b2_ref[...]
    mean = enc[:, :latent_dim]
    logvar = enc[:, latent_dim:]

    # Reparameterization (the reference module applies it unconditionally):
    # z = eps * exp(0.5 * logvar) + mean
    z = eps_ref[...] * jnp.exp(0.5 * logvar) + mean

    # Decoder: Linear -> Tanh -> Linear
    zb = z.astype(jnp.bfloat16)
    d = jnp.tanh(
        jnp.dot(zb, w3_ref[...], preferred_element_type=jnp.float32) + b3_ref[...]
    )
    db = d.astype(jnp.bfloat16)
    recon = jnp.dot(db, w4_ref[...], preferred_element_type=jnp.float32) + b4_ref[...]

    recon_ref[...] = recon.astype(recon_ref.dtype)
    mean_ref[...] = mean
    logvar_ref[...] = logvar


def _resident_spec(shape, single_buffer):
    """Constant-index BlockSpec for weights that stay VMEM-resident."""
    if single_buffer:
        try:
            # Weights never change across the batch grid -> single buffer
            # (halves weight VMEM vs. the default double-buffering).
            return pl.BlockSpec(shape, lambda i: (0, 0),
                                pipeline_mode=pl.Buffered(1))
        except Exception:  # older jax: no pipeline_mode / pl.Buffered
            pass
    return pl.BlockSpec(shape, lambda i: (0, 0))


def multivae_forward(x, eps, params, *, dropout_mask=None, tile_b=256,
                     recon_dtype=jnp.float32, vmem_limit_bytes=None,
                     single_buffer_weights=True):
    """MultiVAE forward.

    params = (w1, b1, w2, b2, w3, b3, w4, b4); weights stored (in, out) and
    cast to bf16, biases f32; w2/b2 are the fused [mean | logvar] head of
    width 2 * latent_dim.
    dropout_mask: optional (B, D) mask pre-scaled to {0, 1/keep_prob};
    None disables dropout (eval mode).
    """
    B, D = x.shape
    L = eps.shape[-1]
    w1, b1, w2, b2, w3, b3, w4, b4 = params
    H0 = w1.shape[1]
    assert w2.shape == (H0, 2 * L), "w2 must be the fused (H0, 2*latent) head"

    apply_dropout = dropout_mask is not None

    # Batch tiling: multiple of 8 sublanes (ideally 128/256); pad batch.
    tb = max(8, min(int(tile_b), ((B + 7) // 8) * 8))
    tb = ((tb + 7) // 8) * 8
    nb = (B + tb - 1) // tb
    b_pad = nb * tb

    xb = x.astype(jnp.bfloat16)                 # halve the dominant HBM read
    mask = dropout_mask
    if b_pad != B:
        pad = ((0, b_pad - B), (0, 0))
        xb = jnp.pad(xb, pad)
        eps = jnp.pad(eps, pad)
        if apply_dropout:
            mask = jnp.pad(mask, pad)
    if apply_dropout:
        mask = mask.astype(jnp.bfloat16)

    weights = [w1, b1, w2, b2, w3, b3, w4, b4]

    # Auto VMEM limit: resident weights (x2 worst case) + double-buffered
    # streamed tiles + headroom, capped at 56 MiB (safe on v7x's 64 MiB).
    if vmem_limit_bytes is None:
        wbytes = sum(int(w.size) * w.dtype.itemsize for w in weights)
        recon_isz = jnp.dtype(recon_dtype).itemsize
        tile_bytes = (tb * D * 2 + tb * L * 4 + (tb * D * 2 if apply_dropout else 0)
                      + tb * D * recon_isz + 2 * tb * L * 4)
        vmem_limit_bytes = int(min(max(2 * wbytes + 2 * tile_bytes + (8 << 20),
                                       32 << 20), 56 << 20))

    kernel = functools.partial(multivae_kernel,
                               apply_dropout=apply_dropout, latent_dim=L)

    stream = lambda cols: pl.BlockSpec((tb, cols), lambda i: (i, 0))

    out_shapes = (
        jax.ShapeDtypeStruct((b_pad, D), recon_dtype),
        jax.ShapeDtypeStruct((b_pad, L), jnp.float32),
        jax.ShapeDtypeStruct((b_pad, L), jnp.float32),
    )
    out_specs = (stream(D), stream(L), stream(L))

    def run(single_buffer):
        in_specs = [stream(D), stream(L)]
        inputs = [xb, eps]
        if apply_dropout:
            in_specs.append(stream(D))
            inputs.append(mask)
        in_specs += [_resident_spec(w.shape, single_buffer) for w in weights]
        inputs += weights
        return pl.pallas_call(
            kernel,
            out_shape=out_shapes,
            grid=(nb,),
            in_specs=in_specs,
            out_specs=out_specs,
            compiler_params=pltpu.CompilerParams(
                dimension_semantics=("parallel",),
                vmem_limit_bytes=vmem_limit_bytes,
            ),
        )(*inputs)

    if single_buffer_weights:
        try:
            recon, mean, logvar = run(True)
        except Exception:
            # Fallback: default double-buffered weights (older jax / lowering).
            recon, mean, logvar = run(False)
    else:
        recon, mean, logvar = run(False)

    if b_pad != B:
        recon, mean, logvar = recon[:B], mean[:B], logvar[:B]
    return recon, mean, logvar


# ----------------------------- parameters ----------------------------------


def xavier_normal(key, fan_in, fan_out):
    std = (2.0 / (fan_in + fan_out)) ** 0.5
    # stored as (in, out) so the kernel computes x @ W (== x @ W_pt.T)
    return std * jax.random.normal(key, (fan_in, fan_out), dtype=jnp.float32)


def make_params(key, input_dim, hidden_dims):
    h0, h1 = hidden_dims
    keys = jax.random.split(key, 8)
    w1 = xavier_normal(keys[0], input_dim, h0)
    b1 = 0.001 * jax.random.normal(keys[1], (1, h0), dtype=jnp.float32)
    w2 = xavier_normal(keys[2], h0, 2 * h1)            # fused [mean | logvar]
    b2 = 0.001 * jax.random.normal(keys[3], (1, 2 * h1), dtype=jnp.float32)
    w3 = xavier_normal(keys[4], h1, h0)
    b3 = 0.001 * jax.random.normal(keys[5], (1, h0), dtype=jnp.float32)
    w4 = xavier_normal(keys[6], h0, input_dim)
    b4 = 0.001 * jax.random.normal(keys[7], (1, input_dim), dtype=jnp.float32)
    return (w1, b1, w2, b2, w3, b3, w4, b4)


def prepare_params(params):
    """Cast weights to bf16 (biases stay f32)."""
    w1, b1, w2, b2, w3, b3, w4, b4 = params
    bf = lambda w: w.astype(jnp.bfloat16)
    return (bf(w1), b1, bf(w2), b2, bf(w3), b3, bf(w4), b4)


# ----------------------------- reference ------------------------------------


def reference_forward(x, eps, params, dropout_mask=None):
    """Pure-JAX reference mirroring the kernel's bf16 streaming/matmuls."""
    w1, b1, w2, b2, w3, b3, w4, b4 = params
    x = x.astype(jnp.bfloat16).astype(jnp.float32)      # mirror bf16 x stream
    sumsq = jnp.sum(x * x, axis=-1, keepdims=True)
    h = x * jax.lax.rsqrt(jnp.maximum(sumsq, 1e-24))
    if dropout_mask is not None:
        h = h * dropout_mask.astype(jnp.float32)
    hb = h.astype(jnp.bfloat16)
    h1 = jnp.tanh(jnp.dot(hb, w1, preferred_element_type=jnp.float32) + b1)
    enc = jnp.dot(h1.astype(jnp.bfloat16), w2,
                  preferred_element_type=jnp.float32) + b2
    L = eps.shape[-1]
    mean, logvar = enc[:, :L], enc[:, L:]
    z = eps * jnp.exp(0.5 * logvar) + mean
    d = jnp.tanh(jnp.dot(z.astype(jnp.bfloat16), w3,
                         preferred_element_type=jnp.float32) + b3)
    recon = jnp.dot(d.astype(jnp.bfloat16), w4,
                    preferred_element_type=jnp.float32) + b4
    return recon, mean, logvar


if __name__ == "__main__":
    # Small, lane-aligned shapes consistent with the module
    # (user-item matrix [B, input_dim], hidden_dims -> latent).
    B = 512
    input_dim = 512
    hidden_dims = (256, 128)
    dropout_p = 0.5

    key = jax.random.PRNGKey(0)
    k_x, k_params, k_eps, k_mask = jax.random.split(key, 4)

    # Non-negative "interaction counts"
    x = jax.random.uniform(k_x, (B, input_dim), dtype=jnp.float32)
    params = prepare_params(make_params(k_params, input_dim, hidden_dims))
    # Reparameterization noise (randn_like(std))
    eps = jax.random.normal(k_eps, (B, hidden_dims[1]), dtype=jnp.float32)

    # 1) Eval mode (dropout off): deterministic, check against pure-JAX ref.
    recon_x, mean, logvar = multivae_forward(x, eps, params, tile_b=256)
    jax.block_until_ready((recon_x, mean, logvar))
    r_ref, m_ref, lv_ref = reference_forward(x, eps, params)
    assert jnp.allclose(recon_x, r_ref, atol=1e-2, rtol=1e-2)
    assert jnp.allclose(mean, m_ref, atol=1e-2, rtol=1e-2)
    assert jnp.allclose(logvar, lv_ref, atol=1e-2, rtol=1e-2)

    # 2) Training mode: host-generated, pre-scaled bf16 dropout mask streamed
    #    per tile (TPU-PRNG-free -> portable), compared against the same mask.
    keep_prob = 1.0 - dropout_p
    keep = jax.random.bernoulli(k_mask, keep_prob, (B, input_dim))
    mask = jnp.where(keep, 1.0 / keep_prob, 0.0).astype(jnp.bfloat16)
    recon_t, mean_t, logvar_t = multivae_forward(
        x, eps, params, dropout_mask=mask, tile_b=256)
    jax.block_until_ready((recon_t, mean_t, logvar_t))
    r_t, m_t, lv_t = reference_forward(x, eps, params, dropout_mask=mask)
    assert jnp.allclose(recon_t, r_t, atol=1e-2, rtol=1e-2)
    assert jnp.allclose(mean_t, m_t, atol=1e-2, rtol=1e-2)
    assert jnp.allclose(logvar_t, lv_t, atol=1e-2, rtol=1e-2)
    assert bool(jnp.all(jnp.isfinite(recon_t)))

    print("KERNEL_OK")
</pallas_src>

<mosaic_0001>
module attributes {stable_mosaic.version = 11 : i64} {
  func.func @multivae_kernel(%arg0: i32, %arg1: memref<256x512xbf16, #tpu.memory_space<vmem>>, %arg2: memref<256x128xf32, #tpu.memory_space<vmem>>, %arg3: memref<512x256xbf16, #tpu.memory_space<vmem>>, %arg4: memref<1x256xf32, #tpu.memory_space<vmem>>, %arg5: memref<256x256xbf16, #tpu.memory_space<vmem>>, %arg6: memref<1x256xf32, #tpu.memory_space<vmem>>, %arg7: memref<128x256xbf16, #tpu.memory_space<vmem>>, %arg8: memref<1x256xf32, #tpu.memory_space<vmem>>, %arg9: memref<256x512xbf16, #tpu.memory_space<vmem>>, %arg10: memref<1x512xf32, #tpu.memory_space<vmem>>, %arg11: memref<256x512xf32, #tpu.memory_space<vmem>>, %arg12: memref<256x128xf32, #tpu.memory_space<vmem>>, %arg13: memref<256x128xf32, #tpu.memory_space<vmem>>) attributes {dimension_semantics = [#tpu.dimension_semantics<parallel>], iteration_bounds = array<i64: 2>, scalar_prefetch = 0 : i64, scratch_operands = 0 : i64, tpu.core_type = #tpu.core_type<tc>, window_params = [{transform_indices = @transform_0, window_bounds = array<i64: 256, 512>}, {transform_indices = @transform_1, window_bounds = array<i64: 256, 128>}, {pipeline_mode = #tpu.pipeline_mode<synchronous>, transform_indices = @transform_2, window_bounds = array<i64: 512, 256>}, {pipeline_mode = #tpu.pipeline_mode<synchronous>, transform_indices = @transform_3, window_bounds = array<i64: 1, 256>}, {pipeline_mode = #tpu.pipeline_mode<synchronous>, transform_indices = @transform_4, window_bounds = array<i64: 256, 256>}, {pipeline_mode = #tpu.pipeline_mode<synchronous>, transform_indices = @transform_5, window_bounds = array<i64: 1, 256>}, {pipeline_mode = #tpu.pipeline_mode<synchronous>, transform_indices = @transform_6, window_bounds = array<i64: 128, 256>}, {pipeline_mode = #tpu.pipeline_mode<synchronous>, transform_indices = @transform_7, window_bounds = array<i64: 1, 256>}, {pipeline_mode = #tpu.pipeline_mode<synchronous>, transform_indices = @transform_8, window_bounds = array<i64: 256, 512>}, {pipeline_mode = #tpu.pipeline_mode<synchronous>, transform_indices = @transform_9, window_bounds = array<i64: 1, 512>}, {transform_indices = @transform_10, window_bounds = array<i64: 256, 512>}, {transform_indices = @transform_11, window_bounds = array<i64: 256, 128>}, {transform_indices = @transform_12, window_bounds = array<i64: 256, 128>}]} {
    %c0 = arith.constant 0 : index
    %c0_0 = arith.constant 0 : index
    %0 = vector.load %arg1[%c0, %c0_0] : memref<256x512xbf16, #tpu.memory_space<vmem>>, vector<256x512xbf16>
    %1 = arith.extf %0 : vector<256x512xbf16> to vector<256x512xf32>
    %2 = arith.mulf %1, %1 : vector<256x512xf32>
    %cst = arith.constant dense<0.000000e+00> : vector<256xf32>
    %3 = vector.multi_reduction <add>, %2, %cst [1] : vector<256x512xf32> to vector<256xf32>
    %4 = vector.shape_cast %3 : vector<256xf32> to vector<256x1xf32>
    %cst_1 = arith.constant 1.000000e-24 : f32
    %5 = vector.broadcast %cst_1 : f32 to vector<256x1xf32>
    %6 = arith.maximumf %4, %5 : vector<256x1xf32>
    %7 = math.rsqrt %6 : vector<256x1xf32>
    %8 = vector.broadcast %7 : vector<256x1xf32> to vector<256x512xf32>
    %9 = arith.mulf %1, %8 : vector<256x512xf32>
    %10 = arith.truncf %9 : vector<256x512xf32> to vector<256x512xbf16>
    %c0_2 = arith.constant 0 : index
    %c0_3 = arith.constant 0 : index
    %11 = vector.load %arg3[%c0_2, %c0_3] : memref<512x256xbf16, #tpu.memory_space<vmem>>, vector<512x256xbf16>
    %cst_4 = arith.constant dense<0.000000e+00> : vector<256x256xf32>
    %12 = tpu.matmul %10, %11, %cst_4 {dimension_numbers = #tpu.dot_dimension_numbers<[1], [0], [0], [1], [0, 0, 1, 1], [], []>} : vector<256x512xbf16>, vector<512x256xbf16>, vector<256x256xf32> -> vector<256x256xf32>
    %c0_5 = arith.constant 0 : index
    %c0_6 = arith.constant 0 : index
    %13 = vector.load %arg4[%c0_5, %c0_6] : memref<1x256xf32, #tpu.memory_space<vmem>>, vector<1x256xf32>
    %14 = vector.broadcast %13 : vector<1x256xf32> to vector<256x256xf32>
    %15 = arith.addf %12, %14 : vector<256x256xf32>
    %16 = math.tanh %15 : vector<256x256xf32>
    %17 = arith.truncf %16 : vector<256x256xf32> to vector<256x256xbf16>
    %c0_7 = arith.constant 0 : index
    %c0_8 = arith.constant 0 : index
    %18 = vector.load %arg5[%c0_7, %c0_8] : memref<256x256xbf16, #tpu.memory_space<vmem>>, vector<256x256xbf16>
    %cst_9 = arith.constant dense<0.000000e+00> : vector<256x256xf32>
    %19 = tpu.matmul %17, %18, %cst_9 {dimension_numbers = #tpu.dot_dimension_numbers<[1], [0], [0], [1], [0, 0, 1, 1], [], []>} : vector<256x256xbf16>, vector<256x256xbf16>, vector<256x256xf32> -> vector<256x256xf32>
    %c0_10 = arith.constant 0 : index
    %c0_11 = arith.constant 0 : index
    %20 = vector.load %arg6[%c0_10, %c0_11] : memref<1x256xf32, #tpu.memory_space<vmem>>, vector<1x256xf32>
    %21 = vector.broadcast %20 : vector<1x256xf32> to vector<256x256xf32>
    %22 = arith.addf %19, %21 : vector<256x256xf32>
    %23 = vector.extract_strided_slice %22 {offsets = [0, 0], sizes = [256, 128], strides = [1, 1]} : vector<256x256xf32> to vector<256x128xf32>
    %24 = vector.extract_strided_slice %22 {offsets = [0, 128], sizes = [256, 128], strides = [1, 1]} : vector<256x256xf32> to vector<256x128xf32>
    %c0_12 = arith.constant 0 : index
    %c0_13 = arith.constant 0 : index
    %25 = vector.load %arg2[%c0_12, %c0_13] : memref<256x128xf32, #tpu.memory_space<vmem>>, vector<256x128xf32>
    %cst_14 = arith.constant 5.000000e-01 : f32
    %26 = vector.broadcast %cst_14 : f32 to vector<256x128xf32>
    %27 = arith.mulf %26, %24 : vector<256x128xf32>
    %28 = math.exp %27 : vector<256x128xf32>
    %29 = arith.mulf %25, %28 : vector<256x128xf32>
    %30 = arith.addf %29, %23 : vector<256x128xf32>
    %31 = arith.truncf %30 : vector<256x128xf32> to vector<256x128xbf16>
    %c0_15 = arith.constant 0 : index
    %c0_16 = arith.constant 0 : index
    %32 = vector.load %arg7[%c0_15, %c0_16] : memref<128x256xbf16, #tpu.memory_space<vmem>>, vector<128x256xbf16>
    %cst_17 = arith.constant dense<0.000000e+00> : vector<256x256xf32>
    %33 = tpu.matmul %31, %32, %cst_17 {dimension_numbers = #tpu.dot_dimension_numbers<[1], [0], [0], [1], [0, 0, 1, 1], [], []>} : vector<256x128xbf16>, vector<128x256xbf16>, vector<256x256xf32> -> vector<256x256xf32>
    %c0_18 = arith.constant 0 : index
    %c0_19 = arith.constant 0 : index
    %34 = vector.load %arg8[%c0_18, %c0_19] : memref<1x256xf32, #tpu.memory_space<vmem>>, vector<1x256xf32>
    %35 = vector.broadcast %34 : vector<1x256xf32> to vector<256x256xf32>
    %36 = arith.addf %33, %35 : vector<256x256xf32>
    %37 = math.tanh %36 : vector<256x256xf32>
    %38 = arith.truncf %37 : vector<256x256xf32> to vector<256x256xbf16>
    %c0_20 = arith.constant 0 : index
    %c0_21 = arith.constant 0 : index
    %39 = vector.load %arg9[%c0_20, %c0_21] : memref<256x512xbf16, #tpu.memory_space<vmem>>, vector<256x512xbf16>
    %cst_22 = arith.constant dense<0.000000e+00> : vector<256x512xf32>
    %40 = tpu.matmul %38, %39, %cst_22 {dimension_numbers = #tpu.dot_dimension_numbers<[1], [0], [0], [1], [0, 0, 1, 1], [], []>} : vector<256x256xbf16>, vector<256x512xbf16>, vector<256x512xf32> -> vector<256x512xf32>
    %c0_23 = arith.constant 0 : index
    %c0_24 = arith.constant 0 : index
    %41 = vector.load %arg10[%c0_23, %c0_24] : memref<1x512xf32, #tpu.memory_space<vmem>>, vector<1x512xf32>
    %42 = vector.broadcast %41 : vector<1x512xf32> to vector<256x512xf32>
    %43 = arith.addf %40, %42 : vector<256x512xf32>
    %c0_25 = arith.constant 0 : index
    %c0_26 = arith.constant 0 : index
    %44 = vector.load %arg11[%c0_25, %c0_26] : memref<256x512xf32, #tpu.memory_space<vmem>>, vector<256x512xf32>
    tpu.vector_store %arg11[%c0_25, %c0_26], %43 {strides = array<i32>} : memref<256x512xf32, #tpu.memory_space<vmem>>, vector<256x512xf32>,
    %c0_27 = arith.constant 0 : index
    %c0_28 = arith.constant 0 : index
    %45 = vector.load %arg12[%c0_27, %c0_28] : memref<256x128xf32, #tpu.memory_space<vmem>>, vector<256x128xf32>
    tpu.vector_store %arg12[%c0_27, %c0_28], %23 {strides = array<i32>} : memref<256x128xf32, #tpu.memory_space<vmem>>, vector<256x128xf32>,
    %c0_29 = arith.constant 0 : index
    %c0_30 = arith.constant 0 : index
    %46 = vector.load %arg13[%c0_29, %c0_30] : memref<256x128xf32, #tpu.memory_space<vmem>>, vector<256x128xf32>
    tpu.vector_store %arg13[%c0_29, %c0_30], %24 {strides = array<i32>} : memref<256x128xf32, #tpu.memory_space<vmem>>, vector<256x128xf32>,
    return
  }
  func.func @transform_0(%arg0: i32) -> (i32, i32) {
    %c0_i32 = arith.constant 0 : i32
    %c0_i32_0 = arith.constant 0 : i32
    return %arg0, %c0_i32 : i32, i32
  }
  func.func @transform_1(%arg0: i32) -> (i32, i32) {
    %c0_i32 = arith.constant 0 : i32
    %c0_i32_0 = arith.constant 0 : i32
    return %arg0, %c0_i32 : i32, i32
  }
  func.func @transform_2(%arg0: i32) -> (i32, i32) {
    %c0_i32 = arith.constant 0 : i32
    %c0_i32_0 = arith.constant 0 : i32
    %c0_i32_1 = arith.constant 0 : i32
    return %c0_i32, %c0_i32_0 : i32, i32
  }
  func.func @transform_3(%arg0: i32) -> (i32, i32) {
    %c0_i32 = arith.constant 0 : i32
    %c0_i32_0 = arith.constant 0 : i32
    %c0_i32_1 = arith.constant 0 : i32
    return %c0_i32, %c0_i32_0 : i32, i32
  }
  func.func @transform_4(%arg0: i32) -> (i32, i32) {
    %c0_i32 = arith.constant 0 : i32
    %c0_i32_0 = arith.constant 0 : i32
    %c0_i32_1 = arith.constant 0 : i32
    return %c0_i32, %c0_i32_0 : i32, i32
  }
  func.func @transform_5(%arg0: i32) -> (i32, i32) {
    %c0_i32 = arith.constant 0 : i32
    %c0_i32_0 = arith.constant 0 : i32
    %c0_i32_1 = arith.constant 0 : i32
    return %c0_i32, %c0_i32_0 : i32, i32
  }
  func.func @transform_6(%arg0: i32) -> (i32, i32) {
    %c0_i32 = arith.constant 0 : i32
    %c0_i32_0 = arith.constant 0 : i32
    %c0_i32_1 = arith.constant 0 : i32
    return %c0_i32, %c0_i32_0 : i32, i32
  }
  func.func @transform_7(%arg0: i32) -> (i32, i32) {
    %c0_i32 = arith.constant 0 : i32
    %c0_i32_0 = arith.constant 0 : i32
    %c0_i32_1 = arith.constant 0 : i32
    return %c0_i32, %c0_i32_0 : i32, i32
  }
  func.func @transform_8(%arg0: i32) -> (i32, i32) {
    %c0_i32 = arith.constant 0 : i32
    %c0_i32_0 = arith.constant 0 : i32
    %c0_i32_1 = arith.constant 0 : i32
    return %c0_i32, %c0_i32_0 : i32, i32
  }
  func.func @transform_9(%arg0: i32) -> (i32, i32) {
    %c0_i32 = arith.constant 0 : i32
    %c0_i32_0 = arith.constant 0 : i32
    %c0_i32_1 = arith.constant 0 : i32
    return %c0_i32, %c0_i32_0 : i32, i32
  }
  func.func @transform_10(%arg0: i32) -> (i32, i32) {
    %c0_i32 = arith.constant 0 : i32
    %c0_i32_0 = arith.constant 0 : i32
    return %arg0, %c0_i32 : i32, i32
  }
  func.func @transform_11(%arg0: i32) -> (i32, i32) {
    %c0_i32 = arith.constant 0 : i32
    %c0_i32_0 = arith.constant 0 : i32
    return %arg0, %c0_i32 : i32, i32
  }
  func.func @transform_12(%arg0: i32) -> (i32, i32) {
    %c0_i32 = arith.constant 0 : i32
    %c0_i32_0 = arith.constant 0 : i32
    return %arg0, %c0_i32 : i32, i32
  }
}

module attributes {stable_mosaic.version = 11 : i64} {
  func.func @multivae_kernel(%arg0: i32, %arg1: memref<256x512xbf16, #tpu.memory_space<vmem>>, %arg2: memref<256x128xf32, #tpu.memory_space<vmem>>, %arg3: memref<512x256xbf16, #tpu.memory_space<vmem>>, %arg4: memref<1x256xf32, #tpu.memory_space<vmem>>, %arg5: memref<256x256xbf16, #tpu.memory_space<vmem>>, %arg6: memref<1x256xf32, #tpu.memory_space<vmem>>, %arg7: memref<128x256xbf16, #tpu.memory_space<vmem>>, %arg8: memref<1x256xf32, #tpu.memory_space<vmem>>, %arg9: memref<256x512xbf16, #tpu.memory_space<vmem>>, %arg10: memref<1x512xf32, #tpu.memory_space<vmem>>, %arg11: memref<256x512xf32, #tpu.memory_space<vmem>>, %arg12: memref<256x128xf32, #tpu.memory_space<vmem>>, %arg13: memref<256x128xf32, #tpu.memory_space<vmem>>) attributes {dimension_semantics = [#tpu.dimension_semantics<parallel>], iteration_bounds = array<i64: 2>, scalar_prefetch = 0 : i64, scratch_operands = 0 : i64, tpu.core_type = #tpu.core_type<tc>, window_params = [{transform_indices = @transform_0, window_bounds = array<i64: 256, 512>}, {transform_indices = @transform_1, window_bounds = array<i64: 256, 128>}, {pipeline_mode = #tpu.pipeline_mode<synchronous>, transform_indices = @transform_2, window_bounds = array<i64: 512, 256>}, {pipeline_mode = #tpu.pipeline_mode<synchronous>, transform_indices = @transform_3, window_bounds = array<i64: 1, 256>}, {pipeline_mode = #tpu.pipeline_mode<synchronous>, transform_indices = @transform_4, window_bounds = array<i64: 256, 256>}, {pipeline_mode = #tpu.pipeline_mode<synchronous>, transform_indices = @transform_5, window_bounds = array<i64: 1, 256>}, {pipeline_mode = #tpu.pipeline_mode<synchronous>, transform_indices = @transform_6, window_bounds = array<i64: 128, 256>}, {pipeline_mode = #tpu.pipeline_mode<synchronous>, transform_indices = @transform_7, window_bounds = array<i64: 1, 256>}, {pipeline_mode = #tpu.pipeline_mode<synchronous>, transform_indices = @transform_8, window_bounds = array<i64: 256, 512>}, {pipeline_mode = #tpu.pipeline_mode<synchronous>, transform_indices = @transform_9, window_bounds = array<i64: 1, 512>}, {transform_indices = @transform_10, window_bounds = array<i64: 256, 512>}, {transform_indices = @transform_11, window_bounds = array<i64: 256, 128>}, {transform_indices = @transform_12, window_bounds = array<i64: 256, 128>}]} {
    %c0 = arith.constant 0 : index
    %c0_0 = arith.constant 0 : index
    %0 = vector.load %arg1[%c0, %c0_0] : memref<256x512xbf16, #tpu.memory_space<vmem>>, vector<256x512xbf16>
    %1 = arith.extf %0 : vector<256x512xbf16> to vector<256x512xf32>
    %2 = arith.mulf %1, %1 : vector<256x512xf32>
    %cst = arith.constant dense<0.000000e+00> : vector<256xf32>
    %3 = vector.multi_reduction <add>, %2, %cst [1] : vector<256x512xf32> to vector<256xf32>
    %4 = vector.shape_cast %3 : vector<256xf32> to vector<256x1xf32>
    %cst_1 = arith.constant 1.000000e-24 : f32
    %5 = vector.broadcast %cst_1 : f32 to vector<256x1xf32>
    %6 = arith.maximumf %4, %5 : vector<256x1xf32>
    %7 = math.rsqrt %6 : vector<256x1xf32>
    %8 = vector.broadcast %7 : vector<256x1xf32> to vector<256x512xf32>
    %9 = arith.mulf %1, %8 : vector<256x512xf32>
    %10 = arith.truncf %9 : vector<256x512xf32> to vector<256x512xbf16>
    %c0_2 = arith.constant 0 : index
    %c0_3 = arith.constant 0 : index
    %11 = vector.load %arg3[%c0_2, %c0_3] : memref<512x256xbf16, #tpu.memory_space<vmem>>, vector<512x256xbf16>
    %cst_4 = arith.constant dense<0.000000e+00> : vector<256x256xf32>
    %12 = tpu.matmul %10, %11, %cst_4 {dimension_numbers = #tpu.dot_dimension_numbers<[1], [0], [0], [1], [0, 0, 1, 1], [], []>} : vector<256x512xbf16>, vector<512x256xbf16>, vector<256x256xf32> -> vector<256x256xf32>
    %c0_5 = arith.constant 0 : index
    %c0_6 = arith.constant 0 : index
    %13 = vector.load %arg4[%c0_5, %c0_6] : memref<1x256xf32, #tpu.memory_space<vmem>>, vector<1x256xf32>
    %14 = vector.broadcast %13 : vector<1x256xf32> to vector<256x256xf32>
    %15 = arith.addf %12, %14 : vector<256x256xf32>
    %16 = math.tanh %15 : vector<256x256xf32>
    %17 = arith.truncf %16 : vector<256x256xf32> to vector<256x256xbf16>
    %c0_7 = arith.constant 0 : index
    %c0_8 = arith.constant 0 : index
    %18 = vector.load %arg5[%c0_7, %c0_8] : memref<256x256xbf16, #tpu.memory_space<vmem>>, vector<256x256xbf16>
    %cst_9 = arith.constant dense<0.000000e+00> : vector<256x256xf32>
    %19 = tpu.matmul %17, %18, %cst_9 {dimension_numbers = #tpu.dot_dimension_numbers<[1], [0], [0], [1], [0, 0, 1, 1], [], []>} : vector<256x256xbf16>, vector<256x256xbf16>, vector<256x256xf32> -> vector<256x256xf32>
    %c0_10 = arith.constant 0 : index
    %c0_11 = arith.constant 0 : index
    %20 = vector.load %arg6[%c0_10, %c0_11] : memref<1x256xf32, #tpu.memory_space<vmem>>, vector<1x256xf32>
    %21 = vector.broadcast %20 : vector<1x256xf32> to vector<256x256xf32>
    %22 = arith.addf %19, %21 : vector<256x256xf32>
    %23 = vector.extract_strided_slice %22 {offsets = [0, 0], sizes = [256, 128], strides = [1, 1]} : vector<256x256xf32> to vector<256x128xf32>
    %24 = vector.extract_strided_slice %22 {offsets = [0, 128], sizes = [256, 128], strides = [1, 1]} : vector<256x256xf32> to vector<256x128xf32>
    %c0_12 = arith.constant 0 : index
    %c0_13 = arith.constant 0 : index
    %25 = vector.load %arg2[%c0_12, %c0_13] : memref<256x128xf32, #tpu.memory_space<vmem>>, vector<256x128xf32>
    %cst_14 = arith.constant 5.000000e-01 : f32
    %26 = vector.broadcast %cst_14 : f32 to vector<256x128xf32>
    %27 = arith.mulf %26, %24 : vector<256x128xf32>
    %28 = math.exp %27 : vector<256x128xf32>
    %29 = arith.mulf %25, %28 : vector<256x128xf32>
    %30 = arith.addf %29, %23 : vector<256x128xf32>
    %31 = arith.truncf %30 : vector<256x128xf32> to vector<256x128xbf16>
    %c0_15 = arith.constant 0 : index
    %c0_16 = arith.constant 0 : index
    %32 = vector.load %arg7[%c0_15, %c0_16] : memref<128x256xbf16, #tpu.memory_space<vmem>>, vector<128x256xbf16>
    %cst_17 = arith.constant dense<0.000000e+00> : vector<256x256xf32>
    %33 = tpu.matmul %31, %32, %cst_17 {dimension_numbers = #tpu.dot_dimension_numbers<[1], [0], [0], [1], [0, 0, 1, 1], [], []>} : vector<256x128xbf16>, vector<128x256xbf16>, vector<256x256xf32> -> vector<256x256xf32>
    %c0_18 = arith.constant 0 : index
    %c0_19 = arith.constant 0 : index
    %34 = vector.load %arg8[%c0_18, %c0_19] : memref<1x256xf32, #tpu.memory_space<vmem>>, vector<1x256xf32>
    %35 = vector.broadcast %34 : vector<1x256xf32> to vector<256x256xf32>
    %36 = arith.addf %33, %35 : vector<256x256xf32>
    %37 = math.tanh %36 : vector<256x256xf32>
    %38 = arith.truncf %37 : vector<256x256xf32> to vector<256x256xbf16>
    %c0_20 = arith.constant 0 : index
    %c0_21 = arith.constant 0 : index
    %39 = vector.load %arg9[%c0_20, %c0_21] : memref<256x512xbf16, #tpu.memory_space<vmem>>, vector<256x512xbf16>
    %cst_22 = arith.constant dense<0.000000e+00> : vector<256x512xf32>
    %40 = tpu.matmul %38, %39, %cst_22 {dimension_numbers = #tpu.dot_dimension_numbers<[1], [0], [0], [1], [0, 0, 1, 1], [], []>} : vector<256x256xbf16>, vector<256x512xbf16>, vector<256x512xf32> -> vector<256x512xf32>
    %c0_23 = arith.constant 0 : index
    %c0_24 = arith.constant 0 : index
    %41 = vector.load %arg10[%c0_23, %c0_24] : memref<1x512xf32, #tpu.memory_space<vmem>>, vector<1x512xf32>
    %42 = vector.broadcast %41 : vector<1x512xf32> to vector<256x512xf32>
    %43 = arith.addf %40, %42 : vector<256x512xf32>
    %c0_25 = arith.constant 0 : index
    %c0_26 = arith.constant 0 : index
    %44 = vector.load %arg11[%c0_25, %c0_26] : memref<256x512xf32, #tpu.memory_space<vmem>>, vector<256x512xf32>
    tpu.vector_store %arg11[%c0_25, %c0_26], %43 {strides = array<i32>} : memref<256x512xf32, #tpu.memory_space<vmem>>, vector<256x512xf32>,
    %c0_27 = arith.constant 0 : index
    %c0_28 = arith.constant 0 : index
    %45 = vector.load %arg12[%c0_27, %c0_28] : memref<256x128xf32, #tpu.memory_space<vmem>>, vector<256x128xf32>
    tpu.vector_store %arg12[%c0_27, %c0_28], %23 {strides = array<i32>} : memref<256x128xf32, #tpu.memory_space<vmem>>, vector<256x128xf32>,
    %c0_29 = arith.constant 0 : index
    %c0_30 = arith.constant 0 : index
    %46 = vector.load %arg13[%c0_29, %c0_30] : memref<256x128xf32, #tpu.memory_space<vmem>>, vector<256x128xf32>
    tpu.vector_store %arg13[%c0_29, %c0_30], %24 {strides = array<i32>} : memref<256x128xf32, #tpu.memory_space<vmem>>, vector<256x128xf32>,
    return
  }
  func.func @transform_0(%arg0: i32) -> (i32, i32) {
    %c0_i32 = arith.constant 0 : i32
    %c0_i32_0 = arith.constant 0 : i32
    return %arg0, %c0_i32 : i32, i32
  }
  func.func @transform_1(%arg0: i32) -> (i32, i32) {
    %c0_i32 = arith.constant 0 : i32
    %c0_i32_0 = arith.constant 0 : i32
    return %arg0, %c0_i32 : i32, i32
  }
  func.func @transform_2(%arg0: i32) -> (i32, i32) {
    %c0_i32 = arith.constant 0 : i32
    %c0_i32_0 = arith.constant 0 : i32
    %c0_i32_1 = arith.constant 0 : i32
    return %c0_i32, %c0_i32_0 : i32, i32
  }
  func.func @transform_3(%arg0: i32) -> (i32, i32) {
    %c0_i32 = arith.constant 0 : i32
    %c0_i32_0 = arith.constant 0 : i32
    %c0_i32_1 = arith.constant 0 : i32
    return %c0_i32, %c0_i32_0 : i32, i32
  }
  func.func @transform_4(%arg0: i32) -> (i32, i32) {
    %c0_i32 = arith.constant 0 : i32
    %c0_i32_0 = arith.constant 0 : i32
    %c0_i32_1 = arith.constant 0 : i32
    return %c0_i32, %c0_i32_0 : i32, i32
  }
  func.func @transform_5(%arg0: i32) -> (i32, i32) {
    %c0_i32 = arith.constant 0 : i32
    %c0_i32_0 = arith.constant 0 : i32
    %c0_i32_1 = arith.constant 0 : i32
    return %c0_i32, %c0_i32_0 : i32, i32
  }
  func.func @transform_6(%arg0: i32) -> (i32, i32) {
    %c0_i32 = arith.constant 0 : i32
    %c0_i32_0 = arith.constant 0 : i32
    %c0_i32_1 = arith.constant 0 : i32
    return %c0_i32, %c0_i32_0 : i32, i32
  }
  func.func @transform_7(%arg0: i32) -> (i32, i32) {
    %c0_i32 = arith.constant 0 : i32
    %c0_i32_0 = arith.constant 0 : i32
    %c0_i32_1 = arith.constant 0 : i32
    return %c0_i32, %c0_i32_0 : i32, i32
  }
  func.func @transform_8(%arg0: i32) -> (i32, i32) {
    %c0_i32 = arith.constant 0 : i32
    %c0_i32_0 = arith.constant 0 : i32
    %c0_i32_1 = arith.constant 0 : i32
    return %c0_i32, %c0_i32_0 : i32, i32
  }
  func.func @transform_9(%arg0: i32) -> (i32, i32) {
    %c0_i32 = arith.constant 0 : i32
    %c0_i32_0 = arith.constant 0 : i32
    %c0_i32_1 = arith.constant 0 : i32
    return %c0_i32, %c0_i32_0 : i32, i32
  }
  func.func @transform_10(%arg0: i32) -> (i32, i32) {
    %c0_i32 = arith.constant 0 : i32
    %c0_i32_0 = arith.constant 0 : i32
    return %arg0, %c0_i32 : i32, i32
  }
  func.func @transform_11(%arg0: i32) -> (i32, i32) {
    %c0_i32 = arith.constant 0 : i32
    %c0_i32_0 = arith.constant 0 : i32
    return %arg0, %c0_i32 : i32, i32
  }
  func.func @transform_12(%arg0: i32) -> (i32, i32) {
    %c0_i32 = arith.constant 0 : i32
    %c0_i32_0 = arith.constant 0 : i32
    return %arg0, %c0_i32 : i32, i32
  }
}

</mosaic_0001>

<llo_original>
// kernel: tpu_custom_call.1
$region0: #{tpu_custom_call.1}
  #allocation0 [shape = 'u32[]', space=smem, size = 0x4, offset = 0x4, fixed_abs, tag = 'smem constant byte address 0x4 - core index']
  #allocation1 [shape = 'u32[72,128]{1,0:T(1,128)}', space=vmem, size = 0x9000, scoped, tag = 'internal scratch']
  %s0 = inlined_call_operand.hbm [shape: bf16[512,512], index: 0, kind: input, shape index: {}]
  %s1 = inlined_call_operand.hbm [shape: f32[512,128], index: 1, kind: input, shape index: {}]
  %s2 = inlined_call_operand.hbm [shape: bf16[512,256], index: 2, kind: input, shape index: {}]
  %s3 = inlined_call_operand.vmem [shape: f32[1,256], index: 3, kind: input, shape index: {}]
  %s4 = inlined_call_operand.hbm [shape: bf16[256,256], index: 4, kind: input, shape index: {}]
  %s5 = inlined_call_operand.hbm [shape: f32[1,256], index: 5, kind: input, shape index: {}]
  %s6 = inlined_call_operand.hbm [shape: bf16[128,256], index: 6, kind: input, shape index: {}]
  %s7 = inlined_call_operand.hbm [shape: f32[1,256], index: 7, kind: input, shape index: {}]
  %s8 = inlined_call_operand.hbm [shape: bf16[256,512], index: 8, kind: input, shape index: {}]
  %s9 = inlined_call_operand.vmem [shape: f32[1,512], index: 9, kind: input, shape index: {}]
  %s10 = inlined_call_operand.hbm [shape: f32[512,512], index: 10, kind: output, shape index: {0}]
  %s11 = inlined_call_operand.hbm [shape: f32[512,128], index: 11, kind: output, shape index: {1}]
  %s12 = inlined_call_operand.hbm [shape: f32[512,128], index: 12, kind: output, shape index: {2}]
  %13 = xla_tuple %s10, %s11, %s12
  %s14 = sld [smem:[#allocation0]]
  $region121: #{tpu_custom_call.1} parent=0
    _
  %s16 = ssub.s32 1, %s14
  %s17 = scalar_select 0, %s16, %s14
  $region1: #{tpu_custom_call.1} parent=0
    #allocation2 [shape = 'u8[524288]{0}', space=vmem, size = 0x80000, scoped, tag = 'input window, operand 0']
    #allocation3 [shape = 's32[2]{0}', space=sflag, size = 0x8, scoped, tag = 'scoped memory for tpu_custom_call.1']
    #allocation4 [shape = 's32[2]{0}', space=sflag, size = 0x8, scoped, tag = 'scoped memory for tpu_custom_call.1']
    #allocation5 [shape = 'u8[262144]{0}', space=vmem, size = 0x40000, scoped, tag = 'input window, operand 1']
    #allocation6 [shape = 's32[2]{0}', space=sflag, size = 0x8, scoped, tag = 'scoped memory for tpu_custom_call.1']
    #allocation7 [shape = 'u8[262144]{0}', space=vmem, size = 0x40000, scoped, tag = 'input window, operand 2, single buffered']
    #allocation8 [shape = 'u8[131072]{0}', space=vmem, size = 0x20000, scoped, tag = 'input window, operand 4, single buffered']
    #allocation9 [shape = 's32[1]{0}', space=sflag, size = 0x4, scoped, tag = 'scoped memory for tpu_custom_call.1']
    #allocation10 [shape = 'u8[1024]{0}', space=vmem, size = 0x400, scoped, tag = 'input window, operand 5, single buffered']
    #allocation11 [shape = 'u8[65536]{0}', space=vmem, size = 0x10000, scoped, tag = 'input window, operand 6, single buffered']
    #allocation12 [shape = 's32[1]{0}', space=sflag, size = 0x4, scoped, tag = 'scoped memory for tpu_custom_call.1']
    #allocation13 [shape = 'u8[1024]{0}', space=vmem, size = 0x400, scoped, tag = 'input window, operand 7, single buffered']
    #allocation14 [shape = 'u8[262144]{0}', space=vmem, size = 0x40000, scoped, tag = 'input window, operand 8, single buffered']
    #allocation15 [shape = 's32[1]{0}', space=sflag, size = 0x4, scoped, tag = 'scoped memory for tpu_custom_call.1']
    #allocation16 [shape = 'u8[1048576]{0}', space=vmem, size = 0x100000, scoped, tag = 'output window, operand 0']
    #allocation17 [shape = 'u8[262144]{0}', space=vmem, size = 0x40000, scoped, tag = 'output window, operand 1']
    #allocation18 [shape = 's32[2]{0}', space=sflag, size = 0x8, scoped, tag = 'scoped memory for tpu_custom_call.1']
    #allocation19 [shape = 'u8[262144]{0}', space=vmem, size = 0x40000, scoped, tag = 'output window, operand 2']
    %18 = vsyncpa [#allocation3], 0
    %s19 = scalar_lea.sflag [#allocation3], 1
    %20 = vsyncpa %s19, 0
    %21 = vsyncpa [#allocation6], 0
    %s22 = scalar_lea.sflag [#allocation6], 1
    %23 = vsyncpa %s22, 0
    %24 = vsyncpa [#allocation9], 0
    %25 = vsyncpa [#allocation12], 0
    %26 = vsyncpa [#allocation15], 0
    %27 = vsyncpa [#allocation4], 0
    %s28 = scalar_lea.sflag [#allocation4], 1
    %29 = vsyncpa %s28, 0
    %30 = vsyncpa [#allocation18], 0
    %s31 = scalar_lea.sflag [#allocation18], 1
    %32 = vsyncpa %s31, 0
    loop: start=0, step=1, limit=4
    $region2: #{tpu_custom_call.1} parent=1 // loop_pre_header
      _
    $region3: #{tpu_custom_call.1} parent=1 // loop_header
      %s34 = sphi 0, %s38
      %p35 = scmp.ge.s32.totalorder %s34, 4
      %s44 = sphi 0, %s46
      %s47 = sphi 0, %s44
      %s48 = sphi 0, %s47
      %s64 = sphi 0, %s48
      %s70 = sphi 0, %s72
      %s73 = sphi 0, %s70
      %s74 = sphi 0, %s73
      %s90 = sphi 0, %s74
      %s94 = sphi 0, %s94
      %s96 = sphi 0, %s94
      %s97 = sphi 0, %s96
      %s111 = sphi 0, %s97
      %s115 = sphi 0, %s115
      %s117 = sphi 0, %s115
      %s118 = sphi 0, %s117
      %s132 = sphi 0, %s118
      %s136 = sphi 0, %s136
      %s138 = sphi 0, %s136
      %s139 = sphi 0, %s138
      %s153 = sphi 0, %s139
      %s157 = sphi 0, %s157
      %s159 = sphi 0, %s157
      %s160 = sphi 0, %s159
      %s174 = sphi 0, %s160
      %s178 = sphi 0, %s178
      %s180 = sphi 0, %s178
      %s181 = sphi 0, %s180
      %s195 = sphi 0, %s181
      %s199 = sphi 0, %s199
      %s201 = sphi 0, %s199
      %s202 = sphi 0, %s201
      %s216 = sphi 0, %s202
      %s220 = sphi 0, %s220
      %s222 = sphi 0, %s220
      %s223 = sphi 0, %s222
      %s237 = sphi 0, %s223
      %s241 = sphi 0, %s241
      %s243 = sphi 0, %s241
      %s244 = sphi 0, %s243
      %s258 = sphi 0, %s244
      %s264 = sphi 0, %s266
      %s267 = sphi 0, %s264
      %s268 = sphi 0, %s267
      %s284 = sphi 0, %s268
      %s290 = sphi 0, %s292
      %s293 = sphi 0, %s290
      %s294 = sphi 0, %s293
      %s310 = sphi 0, %s294
      %s316 = sphi 0, %s318
      %s319 = sphi 0, %s316
      %s320 = sphi 0, %s319
      %s336 = sphi 0, %s320
    $region4: #{tpu_custom_call.1} parent=1 // loop_header_branch
      %37 = sbr.rel (%p35) target = $region8
    $region5: #{tpu_custom_call.1} parent=1 // loop_body
      %s39 = ssub.s32 %s34, 1
      %s40 = ssub.s32 %s34, 2
      %s41 = sadd.s32 %s34, 1
      %s42 = ssub.s32 %s34, %s41
      %p43 = scmp.eq.s32.totalorder %s42, 0
      %s45 = sadd.s32 %s44, 1
      %s46 = scalar_select %p43, %s44, %s45
      %p49 = pneg %p43
      %p50 = scmp.eq.s32.totalorder %s34, 1
      %p51 = por %p49, %p50
      %p52 = scmp.ne.s32.totalorder %s44, %s47
      %p53 = scmp.eq.s32.totalorder %s34, 0
      %p54 = por %p52, %p53
      %p55 = scmp.ne.s32.totalorder %s44, %s47
      %p56 = scmp.eq.s32.totalorder %s39, 1
      %p57 = por %p55, %p56
      %p58 = scmp.ne.s32.totalorder %s47, %s48
      %p59 = scmp.eq.s32.totalorder %s39, 0
      %p60 = por %p58, %p59
      %p61 = scmp.ne.s32.totalorder %s47, %s48
      %p62 = scmp.eq.s32.totalorder %s40, 1
      %p63 = por %p61, %p62
      %p65 = scmp.ne.s32.totalorder %s48, %s64
      %p66 = scmp.eq.s32.totalorder %s40, 0
      %p67 = por %p65, %p66
      %s68 = ssub.s32 %s34, %s41
      %p69 = scmp.eq.s32.totalorder %s68, 0
      %s71 = sadd.s32 %s70, 1
      %s72 = scalar_select %p69, %s70, %s71
      %p75 = pneg %p69
      %p76 = scmp.eq.s32.totalorder %s34, 1
      %p77 = por %p75, %p76
      %p78 = scmp.ne.s32.totalorder %s70, %s73
      %p79 = scmp.eq.s32.totalorder %s34, 0
      %p80 = por %p78, %p79
      %p81 = scmp.ne.s32.totalorder %s70, %s73
      %p82 = scmp.eq.s32.totalorder %s39, 1
      %p83 = por %p81, %p82
      %p84 = scmp.ne.s32.totalorder %s73, %s74
      %p85 = scmp.eq.s32.totalorder %s39, 0
      %p86 = por %p84, %p85
      %p87 = scmp.ne.s32.totalorder %s73, %s74
      %p88 = scmp.eq.s32.totalorder %s40, 1
      %p89 = por %p87, %p88
      %p91 = scmp.ne.s32.totalorder %s74, %s90
      %p92 = scmp.eq.s32.totalorder %s40, 0
      %p93 = por %p91, %p92
      %s95 = sadd.s32 %s94, 1
      %p98 = scmp.eq.s32.totalorder %s34, 1
      %p99 = scmp.ne.s32.totalorder %s94, %s96
      %p100 = scmp.eq.s32.totalorder %s34, 0
      %p101 = por %p99, %p100
      %p102 = scmp.ne.s32.totalorder %s94, %s96
      %p103 = scmp.eq.s32.totalorder %s39, 1
      %p104 = por %p102, %p103
      %p105 = scmp.ne.s32.totalorder %s96, %s97
      %p106 = scmp.eq.s32.totalorder %s39, 0
      %p107 = por %p105, %p106
      %p108 = scmp.ne.s32.totalorder %s96, %s97
      %p109 = scmp.eq.s32.totalorder %s40, 1
      %p110 = por %p108, %p109
      %p112 = scmp.ne.s32.totalorder %s97, %s111
      %p113 = scmp.eq.s32.totalorder %s40, 0
      %p114 = por %p112, %p113
      %s116 = sadd.s32 %s115, 1
      %p119 = scmp.eq.s32.totalorder %s34, 1
      %p120 = scmp.ne.s32.totalorder %s115, %s117
      %p121 = scmp.eq.s32.totalorder %s34, 0
      %p122 = por %p120, %p121
      %p123 = scmp.ne.s32.totalorder %s115, %s117
      %p124 = scmp.eq.s32.totalorder %s39, 1
      %p125 = por %p123, %p124
      %p126 = scmp.ne.s32.totalorder %s117, %s118
      %p127 = scmp.eq.s32.totalorder %s39, 0
      %p128 = por %p126, %p127
      %p129 = scmp.ne.s32.totalorder %s117, %s118
      %p130 = scmp.eq.s32.totalorder %s40, 1
      %p131 = por %p129, %p130
      %p133 = scmp.ne.s32.totalorder %s118, %s132
      %p134 = scmp.eq.s32.totalorder %s40, 0
      %p135 = por %p133, %p134
      %s137 = sadd.s32 %s136, 1
      %p140 = scmp.eq.s32.totalorder %s34, 1
      %p141 = scmp.ne.s32.totalorder %s136, %s138
      %p142 = scmp.eq.s32.totalorder %s34, 0
      %p143 = por %p141, %p142
      %p144 = scmp.ne.s32.totalorder %s136, %s138
      %p145 = scmp.eq.s32.totalorder %s39, 1
      %p146 = por %p144, %p145
      %p147 = scmp.ne.s32.totalorder %s138, %s139
      %p148 = scmp.eq.s32.totalorder %s39, 0
      %p149 = por %p147, %p148
      %p150 = scmp.ne.s32.totalorder %s138, %s139
      %p151 = scmp.eq.s32.totalorder %s40, 1
      %p152 = por %p150, %p151
      %p154 = scmp.ne.s32.totalorder %s139, %s153
      %p155 = scmp.eq.s32.totalorder %s40, 0
      %p156 = por %p154, %p155
      %s158 = sadd.s32 %s157, 1
      %p161 = scmp.eq.s32.totalorder %s34, 1
      %p162 = scmp.ne.s32.totalorder %s157, %s159
      %p163 = scmp.eq.s32.totalorder %s34, 0
      %p164 = por %p162, %p163
      %p165 = scmp.ne.s32.totalorder %s157, %s159
      %p166 = scmp.eq.s32.totalorder %s39, 1
      %p167 = por %p165, %p166
      %p168 = scmp.ne.s32.totalorder %s159, %s160
      %p169 = scmp.eq.s32.totalorder %s39, 0
      %p170 = por %p168, %p169
      %p171 = scmp.ne.s32.totalorder %s159, %s160
      %p172 = scmp.eq.s32.totalorder %s40, 1
      %p173 = por %p171, %p172
      %p175 = scmp.ne.s32.totalorder %s160, %s174
      %p176 = scmp.eq.s32.totalorder %s40, 0
      %p177 = por %p175, %p176
      %s179 = sadd.s32 %s178, 1
      %p182 = scmp.eq.s32.totalorder %s34, 1
      %p183 = scmp.ne.s32.totalorder %s178, %s180
      %p184 = scmp.eq.s32.totalorder %s34, 0
      %p185 = por %p183, %p184
      %p186 = scmp.ne.s32.totalorder %s178, %s180
      %p187 = scmp.eq.s32.totalorder %s39, 1
      %p188 = por %p186, %p187
      %p189 = scmp.ne.s32.totalorder %s180, %s181
      %p190 = scmp.eq.s32.totalorder %s39, 0
      %p191 = por %p189, %p190
      %p192 = scmp.ne.s32.totalorder %s180, %s181
      %p193 = scmp.eq.s32.totalorder %s40, 1
      %p194 = por %p192, %p193
      %p196 = scmp.ne.s32.totalorder %s181, %s195
      %p197 = scmp.eq.s32.totalorder %s40, 0
      %p198 = por %p196, %p197
      %s200 = sadd.s32 %s199, 1
      %p203 = scmp.eq.s32.totalorder %s34, 1
      %p204 = scmp.ne.s32.totalorder %s199, %s201
      %p205 = scmp.eq.s32.totalorder %s34, 0
      %p206 = por %p204, %p205
      %p207 = scmp.ne.s32.totalorder %s199, %s201
      %p208 = scmp.eq.s32.totalorder %s39, 1
      %p209 = por %p207, %p208
      %p210 = scmp.ne.s32.totalorder %s201, %s202
      %p211 = scmp.eq.s32.totalorder %s39, 0
      %p212 = por %p210, %p211
      %p213 = scmp.ne.s32.totalorder %s201, %s202
      %p214 = scmp.eq.s32.totalorder %s40, 1
      %p215 = por %p213, %p214
      %p217 = scmp.ne.s32.totalorder %s202, %s216
      %p218 = scmp.eq.s32.totalorder %s40, 0
      %p219 = por %p217, %p218
      %s221 = sadd.s32 %s220, 1
      %p224 = scmp.eq.s32.totalorder %s34, 1
      %p225 = scmp.ne.s32.totalorder %s220, %s222
      %p226 = scmp.eq.s32.totalorder %s34, 0
      %p227 = por %p225, %p226
      %p228 = scmp.ne.s32.totalorder %s220, %s222
      %p229 = scmp.eq.s32.totalorder %s39, 1
      %p230 = por %p228, %p229
      %p231 = scmp.ne.s32.totalorder %s222, %s223
      %p232 = scmp.eq.s32.totalorder %s39, 0
      %p233 = por %p231, %p232
      %p234 = scmp.ne.s32.totalorder %s222, %s223
      %p235 = scmp.eq.s32.totalorder %s40, 1
      %p236 = por %p234, %p235
      %p238 = scmp.ne.s32.totalorder %s223, %s237
      %p239 = scmp.eq.s32.totalorder %s40, 0
      %p240 = por %p238, %p239
      %s242 = sadd.s32 %s241, 1
      %p245 = scmp.eq.s32.totalorder %s34, 1
      %p246 = scmp.ne.s32.totalorder %s241, %s243
      %p247 = scmp.eq.s32.totalorder %s34, 0
      %p248 = por %p246, %p247
      %p249 = scmp.ne.s32.totalorder %s241, %s243
      %p250 = scmp.eq.s32.totalorder %s39, 1
      %p251 = por %p249, %p250
      %p252 = scmp.ne.s32.totalorder %s243, %s244
      %p253 = scmp.eq.s32.totalorder %s39, 0
      %p254 = por %p252, %p253
      %p255 = scmp.ne.s32.totalorder %s243, %s244
      %p256 = scmp.eq.s32.totalorder %s40, 1
      %p257 = por %p255, %p256
      %p259 = scmp.ne.s32.totalorder %s244, %s258
      %p260 = scmp.eq.s32.totalorder %s40, 0
      %p261 = por %p259, %p260
      %s262 = ssub.s32 %s34, %s41
      %p263 = scmp.eq.s32.totalorder %s262, 0
      %s265 = sadd.s32 %s264, 1
      %s266 = scalar_select %p263, %s264, %s265
      %p269 = pneg %p263
      %p270 = scmp.eq.s32.totalorder %s34, 1
      %p271 = por %p269, %p270
      %p272 = scmp.ne.s32.totalorder %s264, %s267
      %p273 = scmp.eq.s32.totalorder %s34, 0
      %p274 = por %p272, %p273
      %p275 = scmp.ne.s32.totalorder %s264, %s267
      %p276 = scmp.eq.s32.totalorder %s39, 1
      %p277 = por %p275, %p276
      %p278 = scmp.ne.s32.totalorder %s267, %s268
      %p279 = scmp.eq.s32.totalorder %s39, 0
      %p280 = por %p278, %p279
      %p281 = scmp.ne.s32.totalorder %s267, %s268
      %p282 = scmp.eq.s32.totalorder %s40, 1
      %p283 = por %p281, %p282
      %p285 = scmp.ne.s32.totalorder %s268, %s284
      %p286 = scmp.eq.s32.totalorder %s40, 0
      %p287 = por %p285, %p286
      %s288 = ssub.s32 %s34, %s41
      %p289 = scmp.eq.s32.totalorder %s288, 0
      %s291 = sadd.s32 %s290, 1
      %s292 = scalar_select %p289, %s290, %s291
      %p295 = pneg %p289
      %p296 = scmp.eq.s32.totalorder %s34, 1
      %p297 = por %p295, %p296
      %p298 = scmp.ne.s32.totalorder %s290, %s293
      %p299 = scmp.eq.s32.totalorder %s34, 0
      %p300 = por %p298, %p299
      %p301 = scmp.ne.s32.totalorder %s290, %s293
      %p302 = scmp.eq.s32.totalorder %s39, 1
      %p303 = por %p301, %p302
      %p304 = scmp.ne.s32.totalorder %s293, %s294
      %p305 = scmp.eq.s32.totalorder %s39, 0
      %p306 = por %p304, %p305
      %p307 = scmp.ne.s32.totalorder %s293, %s294
      %p308 = scmp.eq.s32.totalorder %s40, 1
      %p309 = por %p307, %p308
      %p311 = scmp.ne.s32.totalorder %s294, %s310
      %p312 = scmp.eq.s32.totalorder %s40, 0
      %p313 = por %p311, %p312
      %s314 = ssub.s32 %s34, %s41
      %p315 = scmp.eq.s32.totalorder %s314, 0
      %s317 = sadd.s32 %s316, 1
      %s318 = scalar_select %p315, %s316, %s317
      %p321 = pneg %p315
      %p322 = scmp.eq.s32.totalorder %s34, 1
      %p323 = por %p321, %p322
      %p324 = scmp.ne.s32.totalorder %s316, %s319
      %p325 = scmp.eq.s32.totalorder %s34, 0
      %p326 = por %p324, %p325
      %p327 = scmp.ne.s32.totalorder %s316, %s319
      %p328 = scmp.eq.s32.totalorder %s39, 1
      %p329 = por %p327, %p328
      %p330 = scmp.ne.s32.totalorder %s319, %s320
      %p331 = scmp.eq.s32.totalorder %s39, 0
      %p332 = por %p330, %p331
      %p333 = scmp.ne.s32.totalorder %s319, %s320
      %p334 = scmp.eq.s32.totalorder %s40, 1
      %p335 = por %p333, %p334
      %p337 = scmp.ne.s32.totalorder %s320, %s336
      %p338 = scmp.eq.s32.totalorder %s40, 0
      %p339 = por %p337, %p338
      %p340 = scmp.le.s32.totalorder 1, %s34
      %p341 = scmp.lt.s32.totalorder %s34, 3
      %p342 = pnand %p340, %p341
      %p343 = pneg %p342
      // Predicated region
      $region9: #{tpu_custom_call.1} parent=5 // pred_check
        _
      $region10: #{tpu_custom_call.1} parent=5 // pred_check_branch
        %345 = sbr.rel (%p342) target = $region12
      $region11: #{tpu_custom_call.1} parent=5 // pred_region
        %s346 = ssub.s32 %s34, 1
        // Predicated region
        $region13: #{tpu_custom_call.1} parent=11 // pred_check
          %p347 = pneg %p107
        $region14: #{tpu_custom_call.1} parent=11 // pred_check_branch
          %349 = sbr.rel (%p347) target = $region16
        $region15: #{tpu_custom_call.1} parent=11 // pred_region
          %351 = vsyncadd [#allocation6], 0
          %s352 = sshll.u32 %s2, 4
          %s353 = int_to_ptr.hbm [resolvable:$true] %s352
          %s354 = sshll.u32 [#allocation7], 4
          %s355 = int_to_ptr.vmem [resolvable:$true] %s354
          %360 = dma.hbm_to_vmem [thread:$0]  %s353, 8192, %s355, [#allocation6], 128, 128, 8
        $region16: #{tpu_custom_call.1} parent=11 // pred_fallthru
          _
        // Predicated region
        $region17: #{tpu_custom_call.1} parent=11 // pred_check
          %p361 = pneg %p128
        $region18: #{tpu_custom_call.1} parent=11 // pred_check_branch
          %363 = sbr.rel (%p361) target = $region20
        $region19: #{tpu_custom_call.1} parent=11 // pred_region
          _
        $region20: #{tpu_custom_call.1} parent=11 // pred_fallthru
          _
        // Predicated region
        $region21: #{tpu_custom_call.1} parent=11 // pred_check
          %p364 = pneg %p149
        $region22: #{tpu_custom_call.1} parent=11 // pred_check_branch
          %366 = sbr.rel (%p364) target = $region24
        $region23: #{tpu_custom_call.1} parent=11 // pred_region
          %368 = vsyncadd [#allocation9], 0
          %s369 = sshll.u32 %s4, 4
          %s370 = int_to_ptr.hbm [resolvable:$true] %s369
          %s371 = sshll.u32 [#allocation8], 4
          %s372 = int_to_ptr.vmem [resolvable:$true] %s371
          %377 = dma.hbm_to_vmem [thread:$0]  %s370, 4096, %s372, [#allocation9], 128, 128, 8
        $region24: #{tpu_custom_call.1} parent=11 // pred_fallthru
          _
        // Predicated region
        $region25: #{tpu_custom_call.1} parent=11 // pred_check
          %p378 = pneg %p170
        $region26: #{tpu_custom_call.1} parent=11 // pred_check_branch
          %380 = sbr.rel (%p378) target = $region28
        $region27: #{tpu_custom_call.1} parent=11 // pred_region
          %382 = vsyncadd [#allocation9], 0
          %s384 = sshll.u32 %s5, 4
          %s385 = int_to_ptr.hbm [resolvable:$true] %s384
          %s386 = sshll.u32 [#allocation10], 4
          %s387 = int_to_ptr.vmem [resolvable:$true] %s386
          %389 = dma.hbm_to_vmem [thread:$0]  %s385, 32, %s387, [#allocation9]
        $region28: #{tpu_custom_call.1} parent=11 // pred_fallthru
          _
        // Predicated region
        $region29: #{tpu_custom_call.1} parent=11 // pred_check
          %p390 = pneg %p191
        $region30: #{tpu_custom_call.1} parent=11 // pred_check_branch
          %392 = sbr.rel (%p390) target = $region32
        $region31: #{tpu_custom_call.1} parent=11 // pred_region
          %394 = vsyncadd [#allocation12], 0
          %s395 = sshll.u32 %s6, 4
          %s396 = int_to_ptr.hbm [resolvable:$true] %s395
          %s397 = sshll.u32 [#allocation11], 4
          %s398 = int_to_ptr.vmem [resolvable:$true] %s397
          %403 = dma.hbm_to_vmem [thread:$0]  %s396, 2048, %s398, [#allocation12], 128, 128, 8
        $region32: #{tpu_custom_call.1} parent=11 // pred_fallthru
          _
        // Predicated region
        $region33: #{tpu_custom_call.1} parent=11 // pred_check
          %p404 = pneg %p212
        $region34: #{tpu_custom_call.1} parent=11 // pred_check_branch
          %406 = sbr.rel (%p404) target = $region36
        $region35: #{tpu_custom_call.1} parent=11 // pred_region
          %408 = vsyncadd [#allocation12], 0
          %s410 = sshll.u32 %s7, 4
          %s411 = int_to_ptr.hbm [resolvable:$true] %s410
          %s412 = sshll.u32 [#allocation13], 4
          %s413 = int_to_ptr.vmem [resolvable:$true] %s412
          %415 = dma.hbm_to_vmem [thread:$0]  %s411, 32, %s413, [#allocation12]
        $region36: #{tpu_custom_call.1} parent=11 // pred_fallthru
          _
        // Predicated region
        $region37: #{tpu_custom_call.1} parent=11 // pred_check
          %p416 = pneg %p233
        $region38: #{tpu_custom_call.1} parent=11 // pred_check_branch
          %418 = sbr.rel (%p416) target = $region40
        $region39: #{tpu_custom_call.1} parent=11 // pred_region
          %420 = vsyncadd [#allocation15], 0
          %s421 = sshll.u32 %s8, 4
          %s422 = int_to_ptr.hbm [resolvable:$true] %s421
          %s423 = sshll.u32 [#allocation14], 4
          %s424 = int_to_ptr.vmem [resolvable:$true] %s423
          %429 = dma.hbm_to_vmem [thread:$0]  %s422, 8192, %s424, [#allocation15], 256, 256, 16
        $region40: #{tpu_custom_call.1} parent=11 // pred_fallthru
          _
        // Predicated region
        $region41: #{tpu_custom_call.1} parent=11 // pred_check
          %p430 = pneg %p254
        $region42: #{tpu_custom_call.1} parent=11 // pred_check_branch
          %432 = sbr.rel (%p430) target = $region44
        $region43: #{tpu_custom_call.1} parent=11 // pred_region
          _
        $region44: #{tpu_custom_call.1} parent=11 // pred_fallthru
          _
      $region12: #{tpu_custom_call.1} parent=5 // pred_fallthru
        _
      %p433 = scmp.lt.s32.totalorder %s34, 2
      // Predicated region
      $region45: #{tpu_custom_call.1} parent=5 // pred_check
        %p434 = pneg %p433
      $region46: #{tpu_custom_call.1} parent=5 // pred_check_branch
        %436 = sbr.rel (%p434) target = $region48
      $region47: #{tpu_custom_call.1} parent=5 // pred_region
        // Predicated region
        $region49: #{tpu_custom_call.1} parent=47 // pred_check
          %p437 = pneg %p54
        $region50: #{tpu_custom_call.1} parent=47 // pred_check_branch
          %439 = sbr.rel (%p437) target = $region52
        $region51: #{tpu_custom_call.1} parent=47 // pred_region
          %s440 = sand.u32 %s44, 1
          %s441 = scalar_lea.sflag [#allocation3], %s440
          %s442 = sand.u32 %s44, 1
          %s443 = smul.addr %s442, 512
          %s444 = scalar_lea.vmem [#allocation2], %s443
          %s445 = smul.u32 32, %s34
          %447 = vsyncadd %s441, 0
          %s448 = smul.addr %s445, 4
          %s449 = smul.addr %s448, 4
          %s450 = scalar_lea.hbm %s0, %s449
          %s451 = sshll.u32 %s450, 4
          %s452 = int_to_ptr.hbm [resolvable:$true] %s451
          %s453 = sshll.u32 %s444, 4
          %s454 = int_to_ptr.vmem [resolvable:$true] %s453
          %459 = dma.hbm_to_vmem [thread:$0]  %s452, 8192, %s454, %s441, 256, 256, 16
        $region52: #{tpu_custom_call.1} parent=47 // pred_fallthru
          _
        // Predicated region
        $region53: #{tpu_custom_call.1} parent=47 // pred_check
          %p460 = pneg %p80
        $region54: #{tpu_custom_call.1} parent=47 // pred_check_branch
          %462 = sbr.rel (%p460) target = $region56
        $region55: #{tpu_custom_call.1} parent=47 // pred_region
          %s463 = sand.u32 %s34, 1
          %s464 = scalar_lea.sflag [#allocation6], %s463
          %s465 = sand.u32 %s70, 1
          %s466 = smul.addr %s465, 256
          %s467 = scalar_lea.vmem [#allocation5], %s466
          %s468 = smul.u32 32, %s34
          %470 = vsyncadd %s464, 0
          %s471 = smul.addr %s468, 8
          %s472 = scalar_lea.hbm %s1, %s471
          %s473 = sshll.u32 %s472, 4
          %s474 = int_to_ptr.hbm [resolvable:$true] %s473
          %s475 = sshll.u32 %s467, 4
          %s476 = int_to_ptr.vmem [resolvable:$true] %s475
          %481 = dma.hbm_to_vmem [thread:$0]  %s474, 4096, %s476, %s464, 128, 128, 8
        $region56: #{tpu_custom_call.1} parent=47 // pred_fallthru
          _
      $region48: #{tpu_custom_call.1} parent=5 // pred_fallthru
        _
      %p482 = scmp.le.s32.totalorder 1, %s34
      %p483 = scmp.lt.s32.totalorder %s34, 3
      %p484 = pnand %p482, %p483
      %p485 = pneg %p484
      // Predicated region
      $region57: #{tpu_custom_call.1} parent=5 // pred_check
        _
      $region58: #{tpu_custom_call.1} parent=5 // pred_check_branch
        %487 = sbr.rel (%p484) target = $region60
      $region59: #{tpu_custom_call.1} parent=5 // pred_region
        %s488 = ssub.s32 %s34, 1
        %s489 = sand.u32 %s47, 1
        %s490 = scalar_lea.sflag [#allocation3], %s489
        %s491 = sand.u32 %s47, 1
        %s492 = smul.addr %s491, 512
        %s493 = scalar_lea.vmem [#allocation2], %s492
        // Predicated region
        $region61: #{tpu_custom_call.1} parent=59 // pred_check
          %p494 = pneg %p60
        $region62: #{tpu_custom_call.1} parent=59 // pred_check_branch
          %496 = sbr.rel (%p494) target = $region64
        $region63: #{tpu_custom_call.1} parent=59 // pred_region
          %498 = dma.done %s490, 8192
        $region64: #{tpu_custom_call.1} parent=59 // pred_fallthru
          _
        %s499 = sand.u32 %s39, 1
        %s500 = scalar_lea.sflag [#allocation6], %s499
        %s501 = sand.u32 %s73, 1
        %s502 = smul.addr %s501, 256
        %s503 = scalar_lea.vmem [#allocation5], %s502
        // Predicated region
        $region65: #{tpu_custom_call.1} parent=59 // pred_check
          %p504 = pneg %p86
        $region66: #{tpu_custom_call.1} parent=59 // pred_check_branch
          %506 = sbr.rel (%p504) target = $region68
        $region67: #{tpu_custom_call.1} parent=59 // pred_region
          %508 = dma.done %s500, 4096
        $region68: #{tpu_custom_call.1} parent=59 // pred_fallthru
          _
        // Predicated region
        $region69: #{tpu_custom_call.1} parent=59 // pred_check
          %p509 = pneg %p107
        $region70: #{tpu_custom_call.1} parent=59 // pred_check_branch
          %511 = sbr.rel (%p509) target = $region72
        $region71: #{tpu_custom_call.1} parent=59 // pred_region
          %513 = dma.done [#allocation6], 8192
        $region72: #{tpu_custom_call.1} parent=59 // pred_fallthru
          _
        // Predicated region
        $region73: #{tpu_custom_call.1} parent=59 // pred_check
          %p514 = pneg %p149
        $region74: #{tpu_custom_call.1} parent=59 // pred_check_branch
          %516 = sbr.rel (%p514) target = $region76
        $region75: #{tpu_custom_call.1} parent=59 // pred_region
          %518 = dma.done [#allocation9], 4096
        $region76: #{tpu_custom_call.1} parent=59 // pred_fallthru
          _
        // Predicated region
        $region77: #{tpu_custom_call.1} parent=59 // pred_check
          %p519 = pneg %p170
        $region78: #{tpu_custom_call.1} parent=59 // pred_check_branch
          %521 = sbr.rel (%p519) target = $region80
        $region79: #{tpu_custom_call.1} parent=59 // pred_region
          %523 = dma.done [#allocation9], 32
        $region80: #{tpu_custom_call.1} parent=59 // pred_fallthru
          _
        // Predicated region
        $region81: #{tpu_custom_call.1} parent=59 // pred_check
          %p524 = pneg %p191
        $region82: #{tpu_custom_call.1} parent=59 // pred_check_branch
          %526 = sbr.rel (%p524) target = $region84
        $region83: #{tpu_custom_call.1} parent=59 // pred_region
          %528 = dma.done [#allocation12], 2048
        $region84: #{tpu_custom_call.1} parent=59 // pred_fallthru
          _
        // Predicated region
        $region85: #{tpu_custom_call.1} parent=59 // pred_check
          %p529 = pneg %p212
        $region86: #{tpu_custom_call.1} parent=59 // pred_check_branch
          %531 = sbr.rel (%p529) target = $region88
        $region87: #{tpu_custom_call.1} parent=59 // pred_region
          %533 = dma.done [#allocation12], 32
        $region88: #{tpu_custom_call.1} parent=59 // pred_fallthru
          _
        // Predicated region
        $region89: #{tpu_custom_call.1} parent=59 // pred_check
          %p534 = pneg %p233
        $region90: #{tpu_custom_call.1} parent=59 // pred_check_branch
          %536 = sbr.rel (%p534) target = $region92
        $region91: #{tpu_custom_call.1} parent=59 // pred_region
          %538 = dma.done [#allocation15], 8192
        $region92: #{tpu_custom_call.1} parent=59 // pred_fallthru
          _
        %s539 = sand.u32 %s47, 1
        %s540 = scalar_lea.sflag [#allocation3], %s539
        %s541 = sand.u32 %s47, 1
        %s542 = smul.addr %s541, 512
        %s543 = scalar_lea.vmem [#allocation2], %s542
        %p544 = pneg %p60
        %p545 = pneg %p57
        %s546 = sand.u32 %s39, 1
        %s547 = scalar_lea.sflag [#allocation6], %s546
        %s548 = sand.u32 %s73, 1
        %s549 = smul.addr %s548, 256
        %s550 = scalar_lea.vmem [#allocation5], %s549
        %p551 = pneg %p86
        %p552 = pneg %p83
        %p553 = pneg %p107
        %p554 = pneg %p104
        %p555 = pneg %p128
        %p556 = pneg %p125
        %p557 = pneg %p149
        %p558 = pneg %p146
        %p559 = pneg %p170
        %p560 = pneg %p167
        %p561 = pneg %p191
        %p562 = pneg %p188
        %p563 = pneg %p212
        %p564 = pneg %p209
        %p565 = pneg %p233
        %p566 = pneg %p230
        %p567 = pneg %p254
        %p568 = pneg %p251
        %p569 = pneg %p280
        %p570 = pneg %p277
        %s571 = sand.u32 %s267, 1
        %s572 = scalar_lea.sflag [#allocation4], %s571
        %s573 = sand.u32 %s267, 1
        %s574 = smul.addr %s573, 1024
        %s575 = scalar_lea.vmem [#allocation16], %s574
        %p576 = pneg %p306
        %p577 = pneg %p303
        %s578 = sand.u32 %s39, 1
        %s579 = scalar_lea.sflag [#allocation18], %s578
        %s580 = sand.u32 %s293, 1
        %s581 = smul.addr %s580, 256
        %s582 = scalar_lea.vmem [#allocation17], %s581
        %p583 = pneg %p332
        %p584 = pneg %p329
        %s585 = sand.u32 %s39, 1
        %s586 = scalar_lea.sflag [#allocation18], %s585
        %s587 = sand.u32 %s319, 1
        %s588 = smul.addr %s587, 256
        %s589 = scalar_lea.vmem [#allocation19], %s588
        %s590 = smul.u32 32, %s39
        %s591 = smul.u32 32, %s39
        %s592 = smul.u32 32, %s39
        %s593 = smul.u32 32, %s39
        %s594 = smul.u32 32, %s39
        %v595 = vld [vmem:[%s493] sm:$0xff]
        %v596 = vld [vmem:[%s493 + $0x8] sm:$0xff]
        %v597 = vld [vmem:[%s493 + $0x10] sm:$0xff]
        %v598 = vld [vmem:[%s493 + $0x18] sm:$0xff]
        %v599 = vld [vmem:[%s493 + $0x20] sm:$0xff]
        %v600 = vld [vmem:[%s493 + $0x28] sm:$0xff]
        %v601 = vld [vmem:[%s493 + $0x30] sm:$0xff]
        %v602 = vld [vmem:[%s493 + $0x38] sm:$0xff]
        %v603 = vld [vmem:[%s493 + $0x40] sm:$0xff]
        %v604 = vld [vmem:[%s493 + $0x48] sm:$0xff]
        %v605 = vld [vmem:[%s493 + $0x50] sm:$0xff]
        %v606 = vld [vmem:[%s493 + $0x58] sm:$0xff]
        %v607 = vld [vmem:[%s493 + $0x60] sm:$0xff]
        %v608 = vld [vmem:[%s493 + $0x68] sm:$0xff]
        %v609 = vld [vmem:[%s493 + $0x70] sm:$0xff]
        %v610 = vld [vmem:[%s493 + $0x78] sm:$0xff]
        %v611 = vld [vmem:[%s493 + $0x80] sm:$0xff]
        %v612 = vld [vmem:[%s493 + $0x88] sm:$0xff]
        %v613 = vld [vmem:[%s493 + $0x90] sm:$0xff]
        %v614 = vld [vmem:[%s493 + $0x98] sm:$0xff]
        %v615 = vld [vmem:[%s493 + $0xa0] sm:$0xff]
        %v616 = vld [vmem:[%s493 + $0xa8] sm:$0xff]
        %v617 = vld [vmem:[%s493 + $0xb0] sm:$0xff]
        %v618 = vld [vmem:[%s493 + $0xb8] sm:$0xff]
        %v619 = vld [vmem:[%s493 + $0xc0] sm:$0xff]
        %v620 = vld [vmem:[%s493 + $0xc8] sm:$0xff]
        %v621 = vld [vmem:[%s493 + $0xd0] sm:$0xff]
        %v622 = vld [vmem:[%s493 + $0xd8] sm:$0xff]
        %v623 = vld [vmem:[%s493 + $0xe0] sm:$0xff]
        %v624 = vld [vmem:[%s493 + $0xe8] sm:$0xff]
        %v625 = vld [vmem:[%s493 + $0xf0] sm:$0xff]
        %v626 = vld [vmem:[%s493 + $0xf8] sm:$0xff]
        %v627 = vld [vmem:[%s493 + $0x100] sm:$0xff]
        %v628 = vld [vmem:[%s493 + $0x108] sm:$0xff]
        %v629 = vld [vmem:[%s493 + $0x110] sm:$0xff]
        %v630 = vld [vmem:[%s493 + $0x118] sm:$0xff]
        %v631 = vld [vmem:[%s493 + $0x120] sm:$0xff]
        %v632 = vld [vmem:[%s493 + $0x128] sm:$0xff]
        %v633 = vld [vmem:[%s493 + $0x130] sm:$0xff]
        %v634 = vld [vmem:[%s493 + $0x138] sm:$0xff]
        %v635 = vld [vmem:[%s493 + $0x140] sm:$0xff]
        %v636 = vld [vmem:[%s493 + $0x148] sm:$0xff]
        %v637 = vld [vmem:[%s493 + $0x150] sm:$0xff]
        %v638 = vld [vmem:[%s493 + $0x158] sm:$0xff]
        %v639 = vld [vmem:[%s493 + $0x160] sm:$0xff]
        %v640 = vld [vmem:[%s493 + $0x168] sm:$0xff]
        %v641 = vld [vmem:[%s493 + $0x170] sm:$0xff]
        %v642 = vld [vmem:[%s493 + $0x178] sm:$0xff]
        %v643 = vld [vmem:[%s493 + $0x180] sm:$0xff]
        %v644 = vld [vmem:[%s493 + $0x188] sm:$0xff]
        %v645 = vld [vmem:[%s493 + $0x190] sm:$0xff]
        %v646 = vld [vmem:[%s493 + $0x198] sm:$0xff]
        %v647 = vld [vmem:[%s493 + $0x1a0] sm:$0xff]
        %v648 = vld [vmem:[%s493 + $0x1a8] sm:$0xff]
        %v649 = vld [vmem:[%s493 + $0x1b0] sm:$0xff]
        %v650 = vld [vmem:[%s493 + $0x1b8] sm:$0xff]
        %v651 = vld [vmem:[%s493 + $0x1c0] sm:$0xff]
        %v652 = vld [vmem:[%s493 + $0x1c8] sm:$0xff]
        %v653 = vld [vmem:[%s493 + $0x1d0] sm:$0xff]
        %v654 = vld [vmem:[%s493 + $0x1d8] sm:$0xff]
        %v655 = vld [vmem:[%s493 + $0x1e0] sm:$0xff]
        %v656 = vld [vmem:[%s493 + $0x1e8] sm:$0xff]
        %v657 = vld [vmem:[%s493 + $0x1f0] sm:$0xff]
        %v658 = vld [vmem:[%s493 + $0x1f8] sm:$0xff]
        %v659 = vunpack.c.l.bf16 %v595
        %v660 = vunpack.c.h.bf16 %v595
        %v661 = vunpack.c.l.bf16 %v596
        %v662 = vunpack.c.h.bf16 %v596
        %v663 = vunpack.c.l.bf16 %v597
        %v664 = vunpack.c.h.bf16 %v597
        %v665 = vunpack.c.l.bf16 %v598
        %v666 = vunpack.c.h.bf16 %v598
        %v667 = vunpack.c.l.bf16 %v599
        %v668 = vunpack.c.h.bf16 %v599
        %v669 = vunpack.c.l.bf16 %v600
        %v670 = vunpack.c.h.bf16 %v600
        %v671 = vunpack.c.l.bf16 %v601
        %v672 = vunpack.c.h.bf16 %v601
        %v673 = vunpack.c.l.bf16 %v602
        %v674 = vunpack.c.h.bf16 %v602
        %v675 = vunpack.c.l.bf16 %v603
        %v676 = vunpack.c.h.bf16 %v603
        %v677 = vunpack.c.l.bf16 %v604
        %v678 = vunpack.c.h.bf16 %v604
        %v679 = vunpack.c.l.bf16 %v605
        %v680 = vunpack.c.h.bf16 %v605
        %v681 = vunpack.c.l.bf16 %v606
        %v682 = vunpack.c.h.bf16 %v606
        %v683 = vunpack.c.l.bf16 %v607
        %v684 = vunpack.c.h.bf16 %v607
        %v685 = vunpack.c.l.bf16 %v608
        %v686 = vunpack.c.h.bf16 %v608
        %v687 = vunpack.c.l.bf16 %v609
        %v688 = vunpack.c.h.bf16 %v609
        %v689 = vunpack.c.l.bf16 %v610
        %v690 = vunpack.c.h.bf16 %v610
        %v691 = vunpack.c.l.bf16 %v611
        %v692 = vunpack.c.h.bf16 %v611
        %v693 = vunpack.c.l.bf16 %v612
        %v694 = vunpack.c.h.bf16 %v612
        %v695 = vunpack.c.l.bf16 %v613
        %v696 = vunpack.c.h.bf16 %v613
        %v697 = vunpack.c.l.bf16 %v614
        %v698 = vunpack.c.h.bf16 %v614
        %v699 = vunpack.c.l.bf16 %v615
        %v700 = vunpack.c.h.bf16 %v615
        %v701 = vunpack.c.l.bf16 %v616
        %v702 = vunpack.c.h.bf16 %v616
        %v703 = vunpack.c.l.bf16 %v617
        %v704 = vunpack.c.h.bf16 %v617
        %v705 = vunpack.c.l.bf16 %v618
        %v706 = vunpack.c.h.bf16 %v618
        %v707 = vunpack.c.l.bf16 %v619
        %v708 = vunpack.c.h.bf16 %v619
        %v709 = vunpack.c.l.bf16 %v620
        %v710 = vunpack.c.h.bf16 %v620
        %v711 = vunpack.c.l.bf16 %v621
        %v712 = vunpack.c.h.bf16 %v621
        %v713 = vunpack.c.l.bf16 %v622
        %v714 = vunpack.c.h.bf16 %v622
        %v715 = vunpack.c.l.bf16 %v623
        %v716 = vunpack.c.h.bf16 %v623
        %v717 = vunpack.c.l.bf16 %v624
        %v718 = vunpack.c.h.bf16 %v624
        %v719 = vunpack.c.l.bf16 %v625
        %v720 = vunpack.c.h.bf16 %v625
        %v721 = vunpack.c.l.bf16 %v626
        %v722 = vunpack.c.h.bf16 %v626
        %v723 = vunpack.c.l.bf16 %v627
        %v724 = vunpack.c.h.bf16 %v627
        %v725 = vunpack.c.l.bf16 %v628
        %v726 = vunpack.c.h.bf16 %v628
        %v727 = vunpack.c.l.bf16 %v629
        %v728 = vunpack.c.h.bf16 %v629
        %v729 = vunpack.c.l.bf16 %v630
        %v730 = vunpack.c.h.bf16 %v630
        %v731 = vunpack.c.l.bf16 %v631
        %v732 = vunpack.c.h.bf16 %v631
        %v733 = vunpack.c.l.bf16 %v632
        %v734 = vunpack.c.h.bf16 %v632
        %v735 = vunpack.c.l.bf16 %v633
        %v736 = vunpack.c.h.bf16 %v633
        %v737 = vunpack.c.l.bf16 %v634
        %v738 = vunpack.c.h.bf16 %v634
        %v739 = vunpack.c.l.bf16 %v635
        %v740 = vunpack.c.h.bf16 %v635
        %v741 = vunpack.c.l.bf16 %v636
        %v742 = vunpack.c.h.bf16 %v636
        %v743 = vunpack.c.l.bf16 %v637
        %v744 = vunpack.c.h.bf16 %v637
        %v745 = vunpack.c.l.bf16 %v638
        %v746 = vunpack.c.h.bf16 %v638
        %v747 = vunpack.c.l.bf16 %v639
        %v748 = vunpack.c.h.bf16 %v639
        %v749 = vunpack.c.l.bf16 %v640
        %v750 = vunpack.c.h.bf16 %v640
        %v751 = vunpack.c.l.bf16 %v641
        %v752 = vunpack.c.h.bf16 %v641
        %v753 = vunpack.c.l.bf16 %v642
        %v754 = vunpack.c.h.bf16 %v642
        %v755 = vunpack.c.l.bf16 %v643
        %v756 = vunpack.c.h.bf16 %v643
        %v757 = vunpack.c.l.bf16 %v644
        %v758 = vunpack.c.h.bf16 %v644
        %v759 = vunpack.c.l.bf16 %v645
        %v760 = vunpack.c.h.bf16 %v645
        %v761 = vunpack.c.l.bf16 %v646
        %v762 = vunpack.c.h.bf16 %v646
        %v763 = vunpack.c.l.bf16 %v647
        %v764 = vunpack.c.h.bf16 %v647
        %v765 = vunpack.c.l.bf16 %v648
        %v766 = vunpack.c.h.bf16 %v648
        %v767 = vunpack.c.l.bf16 %v649
        %v768 = vunpack.c.h.bf16 %v649
        %v769 = vunpack.c.l.bf16 %v650
        %v770 = vunpack.c.h.bf16 %v650
        %v771 = vunpack.c.l.bf16 %v651
        %v772 = vunpack.c.h.bf16 %v651
        %v773 = vunpack.c.l.bf16 %v652
        %v774 = vunpack.c.h.bf16 %v652
        %v775 = vunpack.c.l.bf16 %v653
        %v776 = vunpack.c.h.bf16 %v653
        %v777 = vunpack.c.l.bf16 %v654
        %v778 = vunpack.c.h.bf16 %v654
        %v779 = vunpack.c.l.bf16 %v655
        %v780 = vunpack.c.h.bf16 %v655
        %v781 = vunpack.c.l.bf16 %v656
        %v782 = vunpack.c.h.bf16 %v656
        %v783 = vunpack.c.l.bf16 %v657
        %v784 = vunpack.c.h.bf16 %v657
        %v785 = vunpack.c.l.bf16 %v658
        %v786 = vunpack.c.h.bf16 %v658
        %v787 = vmul.f32 %v659, %v659
        %v788 = vmul.f32 %v660, %v660
        %v789 = vmul.f32 %v661, %v661
        %v790 = vmul.f32 %v662, %v662
        %v791 = vmul.f32 %v663, %v663
        %v792 = vmul.f32 %v664, %v664
        %v793 = vmul.f32 %v665, %v665
        %v794 = vmul.f32 %v666, %v666
        %v795 = vmul.f32 %v667, %v667
        %v796 = vmul.f32 %v668, %v668
        %v797 = vmul.f32 %v669, %v669
        %v798 = vmul.f32 %v670, %v670
        %v799 = vmul.f32 %v671, %v671
        %v800 = vmul.f32 %v672, %v672
        %v801 = vmul.f32 %v673, %v673
        %v802 = vmul.f32 %v674, %v674
        %v803 = vmul.f32 %v675, %v675
        %v804 = vmul.f32 %v676, %v676
        %v805 = vmul.f32 %v677, %v677
        %v806 = vmul.f32 %v678, %v678
        %v807 = vmul.f32 %v679, %v679
        %v808 = vmul.f32 %v680, %v680
        %v809 = vmul.f32 %v681, %v681
        %v810 = vmul.f32 %v682, %v682
        %v811 = vmul.f32 %v683, %v683
        %v812 = vmul.f32 %v684, %v684
        %v813 = vmul.f32 %v685, %v685
        %v814 = vmul.f32 %v686, %v686
        %v815 = vmul.f32 %v687, %v687
        %v816 = vmul.f32 %v688, %v688
        %v817 = vmul.f32 %v689, %v689
        %v818 = vmul.f32 %v690, %v690
        %v819 = vmul.f32 %v691, %v691
        %v820 = vmul.f32 %v692, %v692
        %v821 = vmul.f32 %v693, %v693
        %v822 = vmul.f32 %v694, %v694
        %v823 = vmul.f32 %v695, %v695
        %v824 = vmul.f32 %v696, %v696
        %v825 = vmul.f32 %v697, %v697
        %v826 = vmul.f32 %v698, %v698
        %v827 = vmul.f32 %v699, %v699
        %v828 = vmul.f32 %v700, %v700
        %v829 = vmul.f32 %v701, %v701
        %v830 = vmul.f32 %v702, %v702
        %v831 = vmul.f32 %v703, %v703
        %v832 = vmul.f32 %v704, %v704
        %v833 = vmul.f32 %v705, %v705
        %v834 = vmul.f32 %v706, %v706
        %v835 = vmul.f32 %v707, %v707
        %v836 = vmul.f32 %v708, %v708
        %v837 = vmul.f32 %v709, %v709
        %v838 = vmul.f32 %v710, %v710
        %v839 = vmul.f32 %v711, %v711
        %v840 = vmul.f32 %v712, %v712
        %v841 = vmul.f32 %v713, %v713
        %v842 = vmul.f32 %v714, %v714
        %v843 = vmul.f32 %v715, %v715
        %v844 = vmul.f32 %v716, %v716
        %v845 = vmul.f32 %v717, %v717
        %v846 = vmul.f32 %v718, %v718
        %v847 = vmul.f32 %v719, %v719
        %v848 = vmul.f32 %v720, %v720
        %v849 = vmul.f32 %v721, %v721
        %v850 = vmul.f32 %v722, %v722
        %v851 = vmul.f32 %v723, %v723
        %v852 = vmul.f32 %v724, %v724
        %v853 = vmul.f32 %v725, %v725
        %v854 = vmul.f32 %v726, %v726
        %v855 = vmul.f32 %v727, %v727
        %v856 = vmul.f32 %v728, %v728
        %v857 = vmul.f32 %v729, %v729
        %v858 = vmul.f32 %v730, %v730
        %v859 = vmul.f32 %v731, %v731
        %v860 = vmul.f32 %v732, %v732
        %v861 = vmul.f32 %v733, %v733
        %v862 = vmul.f32 %v734, %v734
        %v863 = vmul.f32 %v735, %v735
        %v864 = vmul.f32 %v736, %v736
        %v865 = vmul.f32 %v737, %v737
        %v866 = vmul.f32 %v738, %v738
        %v867 = vmul.f32 %v739, %v739
        %v868 = vmul.f32 %v740, %v740
        %v869 = vmul.f32 %v741, %v741
        %v870 = vmul.f32 %v742, %v742
        %v871 = vmul.f32 %v743, %v743
        %v872 = vmul.f32 %v744, %v744
        %v873 = vmul.f32 %v745, %v745
        %v874 = vmul.f32 %v746, %v746
        %v875 = vmul.f32 %v747, %v747
        %v876 = vmul.f32 %v748, %v748
        %v877 = vmul.f32 %v749, %v749
        %v878 = vmul.f32 %v750, %v750
        %v879 = vmul.f32 %v751, %v751
        %v880 = vmul.f32 %v752, %v752
        %v881 = vmul.f32 %v753, %v753
        %v882 = vmul.f32 %v754, %v754
        %v883 = vmul.f32 %v755, %v755
        %v884 = vmul.f32 %v756, %v756
        %v885 = vmul.f32 %v757, %v757
        %v886 = vmul.f32 %v758, %v758
        %v887 = vmul.f32 %v759, %v759
        %v888 = vmul.f32 %v760, %v760
        %v889 = vmul.f32 %v761, %v761
        %v890 = vmul.f32 %v762, %v762
        %v891 = vmul.f32 %v763, %v763
        %v892 = vmul.f32 %v764, %v764
        %v893 = vmul.f32 %v765, %v765
        %v894 = vmul.f32 %v766, %v766
        %v895 = vmul.f32 %v767, %v767
        %v896 = vmul.f32 %v768, %v768
        %v897 = vmul.f32 %v769, %v769
        %v898 = vmul.f32 %v770, %v770
        %v899 = vmul.f32 %v771, %v771
        %v900 = vmul.f32 %v772, %v772
        %v901 = vmul.f32 %v773, %v773
        %v902 = vmul.f32 %v774, %v774
        %v903 = vmul.f32 %v775, %v775
        %v904 = vmul.f32 %v776, %v776
        %v905 = vmul.f32 %v777, %v777
        %v906 = vmul.f32 %v778, %v778
        %v907 = vmul.f32 %v779, %v779
        %v908 = vmul.f32 %v780, %v780
        %v909 = vmul.f32 %v781, %v781
        %v910 = vmul.f32 %v782, %v782
        %v911 = vmul.f32 %v783, %v783
        %v912 = vmul.f32 %v784, %v784
        %v913 = vmul.f32 %v785, %v785
        %v914 = vmul.f32 %v786, %v786
        %v915 = vadd.f32 %v787, %v788
        %v916 = vadd.f32 %v915, %v789
        %v917 = vadd.f32 %v916, %v790
        %918 = vadd.xlane.f32.xlu0 %v917
        %v919 = vpop.xlane.xlu0 %918
        %v920 = vadd.f32 %v791, %v792
        %v921 = vadd.f32 %v920, %v793
        %v922 = vadd.f32 %v921, %v794
        %923 = vadd.xlane.f32.xlu0 %v922
        %v924 = vpop.xlane.xlu0 %923
        %v925 = vadd.f32 %v795, %v796
        %v926 = vadd.f32 %v925, %v797
        %v927 = vadd.f32 %v926, %v798
        %928 = vadd.xlane.f32.xlu0 %v927
        %v929 = vpop.xlane.xlu0 %928
        %v930 = vadd.f32 %v799, %v800
        %v931 = vadd.f32 %v930, %v801
        %v932 = vadd.f32 %v931, %v802
        %933 = vadd.xlane.f32.xlu0 %v932
        %v934 = vpop.xlane.xlu0 %933
        %v935 = vadd.f32 %v803, %v804
        %v936 = vadd.f32 %v935, %v805
        %v937 = vadd.f32 %v936, %v806
        %938 = vadd.xlane.f32.xlu0 %v937
        %v939 = vpop.xlane.xlu0 %938
        %v940 = vadd.f32 %v807, %v808
        %v941 = vadd.f32 %v940, %v809
        %v942 = vadd.f32 %v941, %v810
        %943 = vadd.xlane.f32.xlu0 %v942
        %v944 = vpop.xlane.xlu0 %943
        %v945 = vadd.f32 %v811, %v812
        %v946 = vadd.f32 %v945, %v813
        %v947 = vadd.f32 %v946, %v814
        %948 = vadd.xlane.f32.xlu0 %v947
        %v949 = vpop.xlane.xlu0 %948
        %v950 = vadd.f32 %v815, %v816
        %v951 = vadd.f32 %v950, %v817
        %v952 = vadd.f32 %v951, %v818
        %953 = vadd.xlane.f32.xlu0 %v952
        %v954 = vpop.xlane.xlu0 %953
        %v955 = vadd.f32 %v819, %v820
        %v956 = vadd.f32 %v955, %v821
        %v957 = vadd.f32 %v956, %v822
        %958 = vadd.xlane.f32.xlu0 %v957
        %v959 = vpop.xlane.xlu0 %958
        %v960 = vadd.f32 %v823, %v824
        %v961 = vadd.f32 %v960, %v825
        %v962 = vadd.f32 %v961, %v826
        %963 = vadd.xlane.f32.xlu0 %v962
        %v964 = vpop.xlane.xlu0 %963
        %v965 = vadd.f32 %v827, %v828
        %v966 = vadd.f32 %v965, %v829
        %v967 = vadd.f32 %v966, %v830
        %968 = vadd.xlane.f32.xlu0 %v967
        %v969 = vpop.xlane.xlu0 %968
        %v970 = vadd.f32 %v831, %v832
        %v971 = vadd.f32 %v970, %v833
        %v972 = vadd.f32 %v971, %v834
        %973 = vadd.xlane.f32.xlu0 %v972
        %v974 = vpop.xlane.xlu0 %973
        %v975 = vadd.f32 %v835, %v836
        %v976 = vadd.f32 %v975, %v837
        %v977 = vadd.f32 %v976, %v838
        %978 = vadd.xlane.f32.xlu0 %v977
        %v979 = vpop.xlane.xlu0 %978
        %v980 = vadd.f32 %v839, %v840
        %v981 = vadd.f32 %v980, %v841
        %v982 = vadd.f32 %v981, %v842
        %983 = vadd.xlane.f32.xlu0 %v982
        %v984 = vpop.xlane.xlu0 %983
        %v985 = vadd.f32 %v843, %v844
        %v986 = vadd.f32 %v985, %v845
        %v987 = vadd.f32 %v986, %v846
        %988 = vadd.xlane.f32.xlu0 %v987
        %v989 = vpop.xlane.xlu0 %988
        %v990 = vadd.f32 %v847, %v848
        %v991 = vadd.f32 %v990, %v849
        %v992 = vadd.f32 %v991, %v850
        %993 = vadd.xlane.f32.xlu0 %v992
        %v994 = vpop.xlane.xlu0 %993
        %v995 = vadd.f32 %v851, %v852
        %v996 = vadd.f32 %v995, %v853
        %v997 = vadd.f32 %v996, %v854
        %998 = vadd.xlane.f32.xlu0 %v997
        %v999 = vpop.xlane.xlu0 %998
        %v1000 = vadd.f32 %v855, %v856
        %v1001 = vadd.f32 %v1000, %v857
        %v1002 = vadd.f32 %v1001, %v858
        %1003 = vadd.xlane.f32.xlu0 %v1002
        %v1004 = vpop.xlane.xlu0 %1003
        %v1005 = vadd.f32 %v859, %v860
        %v1006 = vadd.f32 %v1005, %v861
        %v1007 = vadd.f32 %v1006, %v862
        %1008 = vadd.xlane.f32.xlu0 %v1007
        %v1009 = vpop.xlane.xlu0 %1008
        %v1010 = vadd.f32 %v863, %v864
        %v1011 = vadd.f32 %v1010, %v865
        %v1012 = vadd.f32 %v1011, %v866
        %1013 = vadd.xlane.f32.xlu0 %v1012
        %v1014 = vpop.xlane.xlu0 %1013
        %v1015 = vadd.f32 %v867, %v868
        %v1016 = vadd.f32 %v1015, %v869
        %v1017 = vadd.f32 %v1016, %v870
        %1018 = vadd.xlane.f32.xlu0 %v1017
        %v1019 = vpop.xlane.xlu0 %1018
        %v1020 = vadd.f32 %v871, %v872
        %v1021 = vadd.f32 %v1020, %v873
        %v1022 = vadd.f32 %v1021, %v874
        %1023 = vadd.xlane.f32.xlu0 %v1022
        %v1024 = vpop.xlane.xlu0 %1023
        %v1025 = vadd.f32 %v875, %v876
        %v1026 = vadd.f32 %v1025, %v877
        %v1027 = vadd.f32 %v1026, %v878
        %1028 = vadd.xlane.f32.xlu0 %v1027
        %v1029 = vpop.xlane.xlu0 %1028
        %v1030 = vadd.f32 %v879, %v880
        %v1031 = vadd.f32 %v1030, %v881
        %v1032 = vadd.f32 %v1031, %v882
        %1033 = vadd.xlane.f32.xlu0 %v1032
        %v1034 = vpop.xlane.xlu0 %1033
        %v1035 = vadd.f32 %v883, %v884
        %v1036 = vadd.f32 %v1035, %v885
        %v1037 = vadd.f32 %v1036, %v886
        %1038 = vadd.xlane.f32.xlu0 %v1037
        %v1039 = vpop.xlane.xlu0 %1038
        %v1040 = vadd.f32 %v887, %v888
        %v1041 = vadd.f32 %v1040, %v889
        %v1042 = vadd.f32 %v1041, %v890
        %1043 = vadd.xlane.f32.xlu0 %v1042
        %v1044 = vpop.xlane.xlu0 %1043
        %v1045 = vadd.f32 %v891, %v892
        %v1046 = vadd.f32 %v1045, %v893
        %v1047 = vadd.f32 %v1046, %v894
        %1048 = vadd.xlane.f32.xlu0 %v1047
        %v1049 = vpop.xlane.xlu0 %1048
        %v1050 = vadd.f32 %v895, %v896
        %v1051 = vadd.f32 %v1050, %v897
        %v1052 = vadd.f32 %v1051, %v898
        %1053 = vadd.xlane.f32.xlu0 %v1052
        %v1054 = vpop.xlane.xlu0 %1053
        %v1055 = vadd.f32 %v899, %v900
        %v1056 = vadd.f32 %v1055, %v901
        %v1057 = vadd.f32 %v1056, %v902
        %1058 = vadd.xlane.f32.xlu0 %v1057
        %v1059 = vpop.xlane.xlu0 %1058
        %v1060 = vadd.f32 %v903, %v904
        %v1061 = vadd.f32 %v1060, %v905
        %v1062 = vadd.f32 %v1061, %v906
        %1063 = vadd.xlane.f32.xlu0 %v1062
        %v1064 = vpop.xlane.xlu0 %1063
        %v1065 = vadd.f32 %v907, %v908
        %v1066 = vadd.f32 %v1065, %v909
        %v1067 = vadd.f32 %v1066, %v910
        %1068 = vadd.xlane.f32.xlu0 %v1067
        %v1069 = vpop.xlane.xlu0 %1068
        %v1070 = vadd.f32 %v911, %v912
        %v1071 = vadd.f32 %v1070, %v913
        %v1072 = vadd.f32 %v1071, %v914
        %1073 = vadd.xlane.f32.xlu0 %v1072
        %v1074 = vpop.xlane.xlu0 %1073
        %v1075 = vmax.f32 %v919, 1e-24
        %v1076 = vmax.f32 %v924, 1e-24
        %v1077 = vmax.f32 %v929, 1e-24
        %v1078 = vmax.f32 %v934, 1e-24
        %v1079 = vmax.f32 %v939, 1e-24
        %v1080 = vmax.f32 %v944, 1e-24
        %v1081 = vmax.f32 %v949, 1e-24
        %v1082 = vmax.f32 %v954, 1e-24
        %v1083 = vmax.f32 %v959, 1e-24
        %v1084 = vmax.f32 %v964, 1e-24
        %v1085 = vmax.f32 %v969, 1e-24
        %v1086 = vmax.f32 %v974, 1e-24
        %v1087 = vmax.f32 %v979, 1e-24
        %v1088 = vmax.f32 %v984, 1e-24
        %v1089 = vmax.f32 %v989, 1e-24
        %v1090 = vmax.f32 %v994, 1e-24
        %v1091 = vmax.f32 %v999, 1e-24
        %v1092 = vmax.f32 %v1004, 1e-24
        %v1093 = vmax.f32 %v1009, 1e-24
        %v1094 = vmax.f32 %v1014, 1e-24
        %v1095 = vmax.f32 %v1019, 1e-24
        %v1096 = vmax.f32 %v1024, 1e-24
        %v1097 = vmax.f32 %v1029, 1e-24
        %v1098 = vmax.f32 %v1034, 1e-24
        %v1099 = vmax.f32 %v1039, 1e-24
        %v1100 = vmax.f32 %v1044, 1e-24
        %v1101 = vmax.f32 %v1049, 1e-24
        %v1102 = vmax.f32 %v1054, 1e-24
        %v1103 = vmax.f32 %v1059, 1e-24
        %v1104 = vmax.f32 %v1064, 1e-24
        %v1105 = vmax.f32 %v1069, 1e-24
        %v1106 = vmax.f32 %v1074, 1e-24
        %v1107 = vrsqrt.pop %v1075
        %v1108 = vmul.f32 %v1107, %v1075
        %v1109 = vmul.f32 %v1108, %v1107
        %v1110 = vmul.f32 0.5, %v1109
        %v1111 = vsub.f32 1.5, %v1110
        %v1112 = vmul.f32 %v1107, %v1111
        %vm1113 = vweird.f32 %v1075
        %vm1114 = vweird.f32 %v1107
        %vm1115 = vmor %vm1113, %vm1114
        %v1116 = vsel %vm1115, %v1107, %v1112
        %v1117 = vrsqrt.pop %v1076
        %v1118 = vmul.f32 %v1117, %v1076
        %v1119 = vmul.f32 %v1118, %v1117
        %v1120 = vmul.f32 0.5, %v1119
        %v1121 = vsub.f32 1.5, %v1120
        %v1122 = vmul.f32 %v1117, %v1121
        %vm1123 = vweird.f32 %v1076
        %vm1124 = vweird.f32 %v1117
        %vm1125 = vmor %vm1123, %vm1124
        %v1126 = vsel %vm1125, %v1117, %v1122
        %v1127 = vrsqrt.pop %v1077
        %v1128 = vmul.f32 %v1127, %v1077
        %v1129 = vmul.f32 %v1128, %v1127
        %v1130 = vmul.f32 0.5, %v1129
        %v1131 = vsub.f32 1.5, %v1130
        %v1132 = vmul.f32 %v1127, %v1131
        %vm1133 = vweird.f32 %v1077
        %vm1134 = vweird.f32 %v1127
        %vm1135 = vmor %vm1133, %vm1134
        %v1136 = vsel %vm1135, %v1127, %v1132
        %v1137 = vrsqrt.pop %v1078
        %v1138 = vmul.f32 %v1137, %v1078
        %v1139 = vmul.f32 %v1138, %v1137
        %v1140 = vmul.f32 0.5, %v1139
        %v1141 = vsub.f32 1.5, %v1140
        %v1142 = vmul.f32 %v1137, %v1141
        %vm1143 = vweird.f32 %v1078
        %vm1144 = vweird.f32 %v1137
        %vm1145 = vmor %vm1143, %vm1144
        %v1146 = vsel %vm1145, %v1137, %v1142
        %v1147 = vrsqrt.pop %v1079
        %v1148 = vmul.f32 %v1147, %v1079
        %v1149 = vmul.f32 %v1148, %v1147
        %v1150 = vmul.f32 0.5, %v1149
        %v1151 = vsub.f32 1.5, %v1150
        %v1152 = vmul.f32 %v1147, %v1151
        %vm1153 = vweird.f32 %v1079
        %vm1154 = vweird.f32 %v1147
        %vm1155 = vmor %vm1153, %vm1154
        %v1156 = vsel %vm1155, %v1147, %v1152
        %v1157 = vrsqrt.pop %v1080
        %v1158 = vmul.f32 %v1157, %v1080
        %v1159 = vmul.f32 %v1158, %v1157
        %v1160 = vmul.f32 0.5, %v1159
        %v1161 = vsub.f32 1.5, %v1160
        %v1162 = vmul.f32 %v1157, %v1161
        %vm1163 = vweird.f32 %v1080
        %vm1164 = vweird.f32 %v1157
        %vm1165 = vmor %vm1163, %vm1164
        %v1166 = vsel %vm1165, %v1157, %v1162
        %v1167 = vrsqrt.pop %v1081
        %v1168 = vmul.f32 %v1167, %v1081
        %v1169 = vmul.f32 %v1168, %v1167
        %v1170 = vmul.f32 0.5, %v1169
        %v1171 = vsub.f32 1.5, %v1170
        %v1172 = vmul.f32 %v1167, %v1171
        %vm1173 = vweird.f32 %v1081
        %vm1174 = vweird.f32 %v1167
        %vm1175 = vmor %vm1173, %vm1174
        %v1176 = vsel %vm1175, %v1167, %v1172
        %v1177 = vrsqrt.pop %v1082
        %v1178 = vmul.f32 %v1177, %v1082
        %v1179 = vmul.f32 %v1178, %v1177
        %v1180 = vmul.f32 0.5, %v1179
        %v1181 = vsub.f32 1.5, %v1180
        %v1182 = vmul.f32 %v1177, %v1181
        %vm1183 = vweird.f32 %v1082
        %vm1184 = vweird.f32 %v1177
        %vm1185 = vmor %vm1183, %vm1184
        %v1186 = vsel %vm1185, %v1177, %v1182
        %v1187 = vrsqrt.pop %v1083
        %v1188 = vmul.f32 %v1187, %v1083
        %v1189 = vmul.f32 %v1188, %v1187
        %v1190 = vmul.f32 0.5, %v1189
        %v1191 = vsub.f32 1.5, %v1190
        %v1192 = vmul.f32 %v1187, %v1191
        %vm1193 = vweird.f32 %v1083
        %vm1194 = vweird.f32 %v1187
        %vm1195 = vmor %vm1193, %vm1194
        %v1196 = vsel %vm1195, %v1187, %v1192
        %v1197 = vrsqrt.pop %v1084
        %v1198 = vmul.f32 %v1197, %v1084
        %v1199 = vmul.f32 %v1198, %v1197
        %v1200 = vmul.f32 0.5, %v1199
        %v1201 = vsub.f32 1.5, %v1200
        %v1202 = vmul.f32 %v1197, %v1201
        %vm1203 = vweird.f32 %v1084
        %vm1204 = vweird.f32 %v1197
        %vm1205 = vmor %vm1203, %vm1204
        %v1206 = vsel %vm1205, %v1197, %v1202
        %v1207 = vrsqrt.pop %v1085
        %v1208 = vmul.f32 %v1207, %v1085
        %v1209 = vmul.f32 %v1208, %v1207
        %v1210 = vmul.f32 0.5, %v1209
        %v1211 = vsub.f32 1.5, %v1210
        %v1212 = vmul.f32 %v1207, %v1211
        %vm1213 = vweird.f32 %v1085
        %vm1214 = vweird.f32 %v1207
        %vm1215 = vmor %vm1213, %vm1214
        %v1216 = vsel %vm1215, %v1207, %v1212
        %v1217 = vrsqrt.pop %v1086
        %v1218 = vmul.f32 %v1217, %v1086
        %v1219 = vmul.f32 %v1218, %v1217
        %v1220 = vmul.f32 0.5, %v1219
        %v1221 = vsub.f32 1.5, %v1220
        %v1222 = vmul.f32 %v1217, %v1221
        %vm1223 = vweird.f32 %v1086
        %vm1224 = vweird.f32 %v1217
        %vm1225 = vmor %vm1223, %vm1224
        %v1226 = vsel %vm1225, %v1217, %v1222
        %v1227 = vrsqrt.pop %v1087
        %v1228 = vmul.f32 %v1227, %v1087
        %v1229 = vmul.f32 %v1228, %v1227
        %v1230 = vmul.f32 0.5, %v1229
        %v1231 = vsub.f32 1.5, %v1230
        %v1232 = vmul.f32 %v1227, %v1231
        %vm1233 = vweird.f32 %v1087
        %vm1234 = vweird.f32 %v1227
        %vm1235 = vmor %vm1233, %vm1234
        %v1236 = vsel %vm1235, %v1227, %v1232
        %v1237 = vrsqrt.pop %v1088
        %v1238 = vmul.f32 %v1237, %v1088
        %v1239 = vmul.f32 %v1238, %v1237
        %v1240 = vmul.f32 0.5, %v1239
        %v1241 = vsub.f32 1.5, %v1240
        %v1242 = vmul.f32 %v1237, %v1241
        %vm1243 = vweird.f32 %v1088
        %vm1244 = vweird.f32 %v1237
        %vm1245 = vmor %vm1243, %vm1244
        %v1246 = vsel %vm1245, %v1237, %v1242
        %v1247 = vrsqrt.pop %v1089
        %v1248 = vmul.f32 %v1247, %v1089
        %v1249 = vmul.f32 %v1248, %v1247
        %v1250 = vmul.f32 0.5, %v1249
        %v1251 = vsub.f32 1.5, %v1250
        %v1252 = vmul.f32 %v1247, %v1251
        %vm1253 = vweird.f32 %v1089
        %vm1254 = vweird.f32 %v1247
        %vm1255 = vmor %vm1253, %vm1254
        %v1256 = vsel %vm1255, %v1247, %v1252
        %v1257 = vrsqrt.pop %v1090
        %v1258 = vmul.f32 %v1257, %v1090
        %v1259 = vmul.f32 %v1258, %v1257
        %v1260 = vmul.f32 0.5, %v1259
        %v1261 = vsub.f32 1.5, %v1260
        %v1262 = vmul.f32 %v1257, %v1261
        %vm1263 = vweird.f32 %v1090
        %vm1264 = vweird.f32 %v1257
        %vm1265 = vmor %vm1263, %vm1264
        %v1266 = vsel %vm1265, %v1257, %v1262
        %v1267 = vrsqrt.pop %v1091
        %v1268 = vmul.f32 %v1267, %v1091
        %v1269 = vmul.f32 %v1268, %v1267
        %v1270 = vmul.f32 0.5, %v1269
        %v1271 = vsub.f32 1.5, %v1270
        %v1272 = vmul.f32 %v1267, %v1271
        %vm1273 = vweird.f32 %v1091
        %vm1274 = vweird.f32 %v1267
        %vm1275 = vmor %vm1273, %vm1274
        %v1276 = vsel %vm1275, %v1267, %v1272
        %v1277 = vrsqrt.pop %v1092
        %v1278 = vmul.f32 %v1277, %v1092
        %v1279 = vmul.f32 %v1278, %v1277
        %v1280 = vmul.f32 0.5, %v1279
        %v1281 = vsub.f32 1.5, %v1280
        %v1282 = vmul.f32 %v1277, %v1281
        %vm1283 = vweird.f32 %v1092
        %vm1284 = vweird.f32 %v1277
        %vm1285 = vmor %vm1283, %vm1284
        %v1286 = vsel %vm1285, %v1277, %v1282
        %v1287 = vrsqrt.pop %v1093
        %v1288 = vmul.f32 %v1287, %v1093
        %v1289 = vmul.f32 %v1288, %v1287
        %v1290 = vmul.f32 0.5, %v1289
        %v1291 = vsub.f32 1.5, %v1290
        %v1292 = vmul.f32 %v1287, %v1291
        %vm1293 = vweird.f32 %v1093
        %vm1294 = vweird.f32 %v1287
        %vm1295 = vmor %vm1293, %vm1294
        %v1296 = vsel %vm1295, %v1287, %v1292
        %v1297 = vrsqrt.pop %v1094
        %v1298 = vmul.f32 %v1297, %v1094
        %v1299 = vmul.f32 %v1298, %v1297
        %v1300 = vmul.f32 0.5, %v1299
        %v1301 = vsub.f32 1.5, %v1300
        %v1302 = vmul.f32 %v1297, %v1301
        %vm1303 = vweird.f32 %v1094
        %vm1304 = vweird.f32 %v1297
        %vm1305 = vmor %vm1303, %vm1304
        %v1306 = vsel %vm1305, %v1297, %v1302
        %v1307 = vrsqrt.pop %v1095
        %v1308 = vmul.f32 %v1307, %v1095
        %v1309 = vmul.f32 %v1308, %v1307
        %v1310 = vmul.f32 0.5, %v1309
        %v1311 = vsub.f32 1.5, %v1310
        %v1312 = vmul.f32 %v1307, %v1311
        %vm1313 = vweird.f32 %v1095
        %vm1314 = vweird.f32 %v1307
        %vm1315 = vmor %vm1313, %vm1314
        %v1316 = vsel %vm1315, %v1307, %v1312
        %v1317 = vrsqrt.pop %v1096
        %v1318 = vmul.f32 %v1317, %v1096
        %v1319 = vmul.f32 %v1318, %v1317
        %v1320 = vmul.f32 0.5, %v1319
        %v1321 = vsub.f32 1.5, %v1320
        %v1322 = vmul.f32 %v1317, %v1321
        %vm1323 = vweird.f32 %v1096
        %vm1324 = vweird.f32 %v1317
        %vm1325 = vmor %vm1323, %vm1324
        %v1326 = vsel %vm1325, %v1317, %v1322
        %v1327 = vrsqrt.pop %v1097
        %v1328 = vmul.f32 %v1327, %v1097
        %v1329 = vmul.f32 %v1328, %v1327
        %v1330 = vmul.f32 0.5, %v1329
        %v1331 = vsub.f32 1.5, %v1330
        %v1332 = vmul.f32 %v1327, %v1331
        %vm1333 = vweird.f32 %v1097
        %vm1334 = vweird.f32 %v1327
        %vm1335 = vmor %vm1333, %vm1334
        %v1336 = vsel %vm1335, %v1327, %v1332
        %v1337 = vrsqrt.pop %v1098
        %v1338 = vmul.f32 %v1337, %v1098
        %v1339 = vmul.f32 %v1338, %v1337
        %v1340 = vmul.f32 0.5, %v1339
        %v1341 = vsub.f32 1.5, %v1340
        %v1342 = vmul.f32 %v1337, %v1341
        %vm1343 = vweird.f32 %v1098
        %vm1344 = vweird.f32 %v1337
        %vm1345 = vmor %vm1343, %vm1344
        %v1346 = vsel %vm1345, %v1337, %v1342
        %v1347 = vrsqrt.pop %v1099
        %v1348 = vmul.f32 %v1347, %v1099
        %v1349 = vmul.f32 %v1348, %v1347
        %v1350 = vmul.f32 0.5, %v1349
        %v1351 = vsub.f32 1.5, %v1350
        %v1352 = vmul.f32 %v1347, %v1351
        %vm1353 = vweird.f32 %v1099
        %vm1354 = vweird.f32 %v1347
        %vm1355 = vmor %vm1353, %vm1354
        %v1356 = vsel %vm1355, %v1347, %v1352
        %v1357 = vrsqrt.pop %v1100
        %v1358 = vmul.f32 %v1357, %v1100
        %v1359 = vmul.f32 %v1358, %v1357
        %v1360 = vmul.f32 0.5, %v1359
        %v1361 = vsub.f32 1.5, %v1360
        %v1362 = vmul.f32 %v1357, %v1361
        %vm1363 = vweird.f32 %v1100
        %vm1364 = vweird.f32 %v1357
        %vm1365 = vmor %vm1363, %vm1364
        %v1366 = vsel %vm1365, %v1357, %v1362
        %v1367 = vrsqrt.pop %v1101
        %v1368 = vmul.f32 %v1367, %v1101
        %v1369 = vmul.f32 %v1368, %v1367
        %v1370 = vmul.f32 0.5, %v1369
        %v1371 = vsub.f32 1.5, %v1370
        %v1372 = vmul.f32 %v1367, %v1371
        %vm1373 = vweird.f32 %v1101
        %vm1374 = vweird.f32 %v1367
        %vm1375 = vmor %vm1373, %vm1374
        %v1376 = vsel %vm1375, %v1367, %v1372
        %v1377 = vrsqrt.pop %v1102
        %v1378 = vmul.f32 %v1377, %v1102
        %v1379 = vmul.f32 %v1378, %v1377
        %v1380 = vmul.f32 0.5, %v1379
        %v1381 = vsub.f32 1.5, %v1380
        %v1382 = vmul.f32 %v1377, %v1381
        %vm1383 = vweird.f32 %v1102
        %vm1384 = vweird.f32 %v1377
        %vm1385 = vmor %vm1383, %vm1384
        %v1386 = vsel %vm1385, %v1377, %v1382
        %v1387 = vrsqrt.pop %v1103
        %v1388 = vmul.f32 %v1387, %v1103
        %v1389 = vmul.f32 %v1388, %v1387
        %v1390 = vmul.f32 0.5, %v1389
        %v1391 = vsub.f32 1.5, %v1390
        %v1392 = vmul.f32 %v1387, %v1391
        %vm1393 = vweird.f32 %v1103
        %vm1394 = vweird.f32 %v1387
        %vm1395 = vmor %vm1393, %vm1394
        %v1396 = vsel %vm1395, %v1387, %v1392
        %v1397 = vrsqrt.pop %v1104
        %v1398 = vmul.f32 %v1397, %v1104
        %v1399 = vmul.f32 %v1398, %v1397
        %v1400 = vmul.f32 0.5, %v1399
        %v1401 = vsub.f32 1.5, %v1400
        %v1402 = vmul.f32 %v1397, %v1401
        %vm1403 = vweird.f32 %v1104
        %vm1404 = vweird.f32 %v1397
        %vm1405 = vmor %vm1403, %vm1404
        %v1406 = vsel %vm1405, %v1397, %v1402
        %v1407 = vrsqrt.pop %v1105
        %v1408 = vmul.f32 %v1407, %v1105
        %v1409 = vmul.f32 %v1408, %v1407
        %v1410 = vmul.f32 0.5, %v1409
        %v1411 = vsub.f32 1.5, %v1410
        %v1412 = vmul.f32 %v1407, %v1411
        %vm1413 = vweird.f32 %v1105
        %vm1414 = vweird.f32 %v1407
        %vm1415 = vmor %vm1413, %vm1414
        %v1416 = vsel %vm1415, %v1407, %v1412
        %v1417 = vrsqrt.pop %v1106
        %v1418 = vmul.f32 %v1417, %v1106
        %v1419 = vmul.f32 %v1418, %v1417
        %v1420 = vmul.f32 0.5, %v1419
        %v1421 = vsub.f32 1.5, %v1420
        %v1422 = vmul.f32 %v1417, %v1421
        %vm1423 = vweird.f32 %v1106
        %vm1424 = vweird.f32 %v1417
        %vm1425 = vmor %vm1423, %vm1424
        %v1426 = vsel %vm1425, %v1417, %v1422
        %v1427 = vmul.f32 %v659, %v1116
        %v1428 = vmul.f32 %v660, %v1116
        %v1429 = vmul.f32 %v661, %v1116
        %v1430 = vmul.f32 %v662, %v1116
        %v1431 = vmul.f32 %v663, %v1126
        %v1432 = vmul.f32 %v664, %v1126
        %v1433 = vmul.f32 %v665, %v1126
        %v1434 = vmul.f32 %v666, %v1126
        %v1435 = vmul.f32 %v667, %v1136
        %v1436 = vmul.f32 %v668, %v1136
        %v1437 = vmul.f32 %v669, %v1136
        %v1438 = vmul.f32 %v670, %v1136
        %v1439 = vmul.f32 %v671, %v1146
        %v1440 = vmul.f32 %v672, %v1146
        %v1441 = vmul.f32 %v673, %v1146
        %v1442 = vmul.f32 %v674, %v1146
        %v1443 = vmul.f32 %v675, %v1156
        %v1444 = vmul.f32 %v676, %v1156
        %v1445 = vmul.f32 %v677, %v1156
        %v1446 = vmul.f32 %v678, %v1156
        %v1447 = vmul.f32 %v679, %v1166
        %v1448 = vmul.f32 %v680, %v1166
        %v1449 = vmul.f32 %v681, %v1166
        %v1450 = vmul.f32 %v682, %v1166
        %v1451 = vmul.f32 %v683, %v1176
        %v1452 = vmul.f32 %v684, %v1176
        %v1453 = vmul.f32 %v685, %v1176
        %v1454 = vmul.f32 %v686, %v1176
        %v1455 = vmul.f32 %v687, %v1186
        %v1456 = vmul.f32 %v688, %v1186
        %v1457 = vmul.f32 %v689, %v1186
        %v1458 = vmul.f32 %v690, %v1186
        %v1459 = vmul.f32 %v691, %v1196
        %v1460 = vmul.f32 %v692, %v1196
        %v1461 = vmul.f32 %v693, %v1196
        %v1462 = vmul.f32 %v694, %v1196
        %v1463 = vmul.f32 %v695, %v1206
        %v1464 = vmul.f32 %v696, %v1206
        %v1465 = vmul.f32 %v697, %v1206
        %v1466 = vmul.f32 %v698, %v1206
        %v1467 = vmul.f32 %v699, %v1216
        %v1468 = vmul.f32 %v700, %v1216
        %v1469 = vmul.f32 %v701, %v1216
        %v1470 = vmul.f32 %v702, %v1216
        %v1471 = vmul.f32 %v703, %v1226
        %v1472 = vmul.f32 %v704, %v1226
        %v1473 = vmul.f32 %v705, %v1226
        %v1474 = vmul.f32 %v706, %v1226
        %v1475 = vmul.f32 %v707, %v1236
        %v1476 = vmul.f32 %v708, %v1236
        %v1477 = vmul.f32 %v709, %v1236
        %v1478 = vmul.f32 %v710, %v1236
        %v1479 = vmul.f32 %v711, %v1246
        %v1480 = vmul.f32 %v712, %v1246
        %v1481 = vmul.f32 %v713, %v1246
        %v1482 = vmul.f32 %v714, %v1246
        %v1483 = vmul.f32 %v715, %v1256
        %v1484 = vmul.f32 %v716, %v1256
        %v1485 = vmul.f32 %v717, %v1256
        %v1486 = vmul.f32 %v718, %v1256
        %v1487 = vmul.f32 %v719, %v1266
        %v1488 = vmul.f32 %v720, %v1266
        %v1489 = vmul.f32 %v721, %v1266
        %v1490 = vmul.f32 %v722, %v1266
        %v1491 = vmul.f32 %v723, %v1276
        %v1492 = vmul.f32 %v724, %v1276
        %v1493 = vmul.f32 %v725, %v1276
        %v1494 = vmul.f32 %v726, %v1276
        %v1495 = vmul.f32 %v727, %v1286
        %v1496 = vmul.f32 %v728, %v1286
        %v1497 = vmul.f32 %v729, %v1286
        %v1498 = vmul.f32 %v730, %v1286
        %v1499 = vmul.f32 %v731, %v1296
        %v1500 = vmul.f32 %v732, %v1296
        %v1501 = vmul.f32 %v733, %v1296
        %v1502 = vmul.f32 %v734, %v1296
        %v1503 = vmul.f32 %v735, %v1306
        %v1504 = vmul.f32 %v736, %v1306
        %v1505 = vmul.f32 %v737, %v1306
        %v1506 = vmul.f32 %v738, %v1306
        %v1507 = vmul.f32 %v739, %v1316
        %v1508 = vmul.f32 %v740, %v1316
        %v1509 = vmul.f32 %v741, %v1316
        %v1510 = vmul.f32 %v742, %v1316
        %v1511 = vmul.f32 %v743, %v1326
        %v1512 = vmul.f32 %v744, %v1326
        %v1513 = vmul.f32 %v745, %v1326
        %v1514 = vmul.f32 %v746, %v1326
        %v1515 = vmul.f32 %v747, %v1336
        %v1516 = vmul.f32 %v748, %v1336
        %v1517 = vmul.f32 %v749, %v1336
        %v1518 = vmul.f32 %v750, %v1336
        %v1519 = vmul.f32 %v751, %v1346
        %v1520 = vmul.f32 %v752, %v1346
        %v1521 = vmul.f32 %v753, %v1346
        %v1522 = vmul.f32 %v754, %v1346
        %v1523 = vmul.f32 %v755, %v1356
        %v1524 = vmul.f32 %v756, %v1356
        %v1525 = vmul.f32 %v757, %v1356
        %v1526 = vmul.f32 %v758, %v1356
        %v1527 = vmul.f32 %v759, %v1366
        %v1528 = vmul.f32 %v760, %v1366
        %v1529 = vmul.f32 %v761, %v1366
        %v1530 = vmul.f32 %v762, %v1366
        %v1531 = vmul.f32 %v763, %v1376
        %v1532 = vmul.f32 %v764, %v1376
        %v1533 = vmul.f32 %v765, %v1376
        %v1534 = vmul.f32 %v766, %v1376
        %v1535 = vmul.f32 %v767, %v1386
        %v1536 = vmul.f32 %v768, %v1386
        %v1537 = vmul.f32 %v769, %v1386
        %v1538 = vmul.f32 %v770, %v1386
        %v1539 = vmul.f32 %v771, %v1396
        %v1540 = vmul.f32 %v772, %v1396
        %v1541 = vmul.f32 %v773, %v1396
        %v1542 = vmul.f32 %v774, %v1396
        %v1543 = vmul.f32 %v775, %v1406
        %v1544 = vmul.f32 %v776, %v1406
        %v1545 = vmul.f32 %v777, %v1406
        %v1546 = vmul.f32 %v778, %v1406
        %v1547 = vmul.f32 %v779, %v1416
        %v1548 = vmul.f32 %v780, %v1416
        %v1549 = vmul.f32 %v781, %v1416
        %v1550 = vmul.f32 %v782, %v1416
        %v1551 = vmul.f32 %v783, %v1426
        %v1552 = vmul.f32 %v784, %v1426
        %v1553 = vmul.f32 %v785, %v1426
        %v1554 = vmul.f32 %v786, %v1426
        %v1555 = vpack.c.bf16 %v1431, %v1427
        %v1556 = vpack.c.bf16 %v1432, %v1428
        %v1557 = vpack.c.bf16 %v1433, %v1429
        %v1558 = vpack.c.bf16 %v1434, %v1430
        %v1559 = vpack.c.bf16 %v1439, %v1435
        %v1560 = vpack.c.bf16 %v1440, %v1436
        %v1561 = vpack.c.bf16 %v1441, %v1437
        %v1562 = vpack.c.bf16 %v1442, %v1438
        %v1563 = vpack.c.bf16 %v1447, %v1443
        %v1564 = vpack.c.bf16 %v1448, %v1444
        %v1565 = vpack.c.bf16 %v1449, %v1445
        %v1566 = vpack.c.bf16 %v1450, %v1446
        %v1567 = vpack.c.bf16 %v1455, %v1451
        %v1568 = vpack.c.bf16 %v1456, %v1452
        %v1569 = vpack.c.bf16 %v1457, %v1453
        %v1570 = vpack.c.bf16 %v1458, %v1454
        %v1571 = vpack.c.bf16 %v1463, %v1459
        %v1572 = vpack.c.bf16 %v1464, %v1460
        %v1573 = vpack.c.bf16 %v1465, %v1461
        %v1574 = vpack.c.bf16 %v1466, %v1462
        %v1575 = vpack.c.bf16 %v1471, %v1467
        %v1576 = vpack.c.bf16 %v1472, %v1468
        %v1577 = vpack.c.bf16 %v1473, %v1469
        %v1578 = vpack.c.bf16 %v1474, %v1470
        %v1579 = vpack.c.bf16 %v1479, %v1475
        %v1580 = vpack.c.bf16 %v1480, %v1476
        %v1581 = vpack.c.bf16 %v1481, %v1477
        %v1582 = vpack.c.bf16 %v1482, %v1478
        %v1583 = vpack.c.bf16 %v1487, %v1483
        %v1584 = vpack.c.bf16 %v1488, %v1484
        %v1585 = vpack.c.bf16 %v1489, %v1485
        %v1586 = vpack.c.bf16 %v1490, %v1486
        %v1587 = vpack.c.bf16 %v1495, %v1491
        %v1588 = vpack.c.bf16 %v1496, %v1492
        %v1589 = vpack.c.bf16 %v1497, %v1493
        %v1590 = vpack.c.bf16 %v1498, %v1494
        %v1591 = vpack.c.bf16 %v1503, %v1499
        %v1592 = vpack.c.bf16 %v1504, %v1500
        %v1593 = vpack.c.bf16 %v1505, %v1501
        %v1594 = vpack.c.bf16 %v1506, %v1502
        %v1595 = vpack.c.bf16 %v1511, %v1507
        %v1596 = vpack.c.bf16 %v1512, %v1508
        %v1597 = vpack.c.bf16 %v1513, %v1509
        %v1598 = vpack.c.bf16 %v1514, %v1510
        %v1599 = vpack.c.bf16 %v1519, %v1515
        %v1600 = vpack.c.bf16 %v1520, %v1516
        %v1601 = vpack.c.bf16 %v1521, %v1517
        %v1602 = vpack.c.bf16 %v1522, %v1518
        %v1603 = vpack.c.bf16 %v1527, %v1523
        %v1604 = vpack.c.bf16 %v1528, %v1524
        %v1605 = vpack.c.bf16 %v1529, %v1525
        %v1606 = vpack.c.bf16 %v1530, %v1526
        %v1607 = vpack.c.bf16 %v1535, %v1531
        %v1608 = vpack.c.bf16 %v1536, %v1532
        %v1609 = vpack.c.bf16 %v1537, %v1533
        %v1610 = vpack.c.bf16 %v1538, %v1534
        %v1611 = vpack.c.bf16 %v1543, %v1539
        %v1612 = vpack.c.bf16 %v1544, %v1540
        %v1613 = vpack.c.bf16 %v1545, %v1541
        %v1614 = vpack.c.bf16 %v1546, %v1542
        %v1615 = vpack.c.bf16 %v1551, %v1547
        %v1616 = vpack.c.bf16 %v1552, %v1548
        %v1617 = vpack.c.bf16 %v1553, %v1549
        %v1618 = vpack.c.bf16 %v1554, %v1550
        %v1619 = vld [vmem:[#allocation7] sm:$0xff]
        %v1620 = vld [vmem:[#allocation7 + $0x8] sm:$0xff]
        %v1621 = vld [vmem:[#allocation7 + $0x10] sm:$0xff]
        %v1622 = vld [vmem:[#allocation7 + $0x18] sm:$0xff]
        %v1623 = vld [vmem:[#allocation7 + $0x20] sm:$0xff]
        %v1624 = vld [vmem:[#allocation7 + $0x28] sm:$0xff]
        %v1625 = vld [vmem:[#allocation7 + $0x30] sm:$0xff]
        %v1626 = vld [vmem:[#allocation7 + $0x38] sm:$0xff]
        %v1627 = vld [vmem:[#allocation7 + $0x40] sm:$0xff]
        %v1628 = vld [vmem:[#allocation7 + $0x48] sm:$0xff]
        %v1629 = vld [vmem:[#allocation7 + $0x50] sm:$0xff]
        %v1630 = vld [vmem:[#allocation7 + $0x58] sm:$0xff]
        %v1631 = vld [vmem:[#allocation7 + $0x60] sm:$0xff]
        %v1632 = vld [vmem:[#allocation7 + $0x68] sm:$0xff]
        %v1633 = vld [vmem:[#allocation7 + $0x70] sm:$0xff]
        %v1634 = vld [vmem:[#allocation7 + $0x78] sm:$0xff]
        %v1635 = vld [vmem:[#allocation7 + $0x80] sm:$0xff]
        %v1636 = vld [vmem:[#allocation7 + $0x88] sm:$0xff]
        %v1637 = vld [vmem:[#allocation7 + $0x90] sm:$0xff]
        %v1638 = vld [vmem:[#allocation7 + $0x98] sm:$0xff]
        %v1639 = vld [vmem:[#allocation7 + $0xa0] sm:$0xff]
        %v1640 = vld [vmem:[#allocation7 + $0xa8] sm:$0xff]
        %v1641 = vld [vmem:[#allocation7 + $0xb0] sm:$0xff]
        %v1642 = vld [vmem:[#allocation7 + $0xb8] sm:$0xff]
        %v1643 = vld [vmem:[#allocation7 + $0xc0] sm:$0xff]
        %v1644 = vld [vmem:[#allocation7 + $0xc8] sm:$0xff]
        %v1645 = vld [vmem:[#allocation7 + $0xd0] sm:$0xff]
        %v1646 = vld [vmem:[#allocation7 + $0xd8] sm:$0xff]
        %v1647 = vld [vmem:[#allocation7 + $0xe0] sm:$0xff]
        %v1648 = vld [vmem:[#allocation7 + $0xe8] sm:$0xff]
        %v1649 = vld [vmem:[#allocation7 + $0xf0] sm:$0xff]
        %v1650 = vld [vmem:[#allocation7 + $0xf8] sm:$0xff]
        %v1651 = vld [vmem:[#allocation7 + $0x100] sm:$0xff]
        %v1652 = vld [vmem:[#allocation7 + $0x108] sm:$0xff]
        %v1653 = vld [vmem:[#allocation7 + $0x110] sm:$0xff]
        %v1654 = vld [vmem:[#allocation7 + $0x118] sm:$0xff]
        %v1655 = vld [vmem:[#allocation7 + $0x120] sm:$0xff]
        %v1656 = vld [vmem:[#allocation7 + $0x128] sm:$0xff]
        %v1657 = vld [vmem:[#allocation7 + $0x130] sm:$0xff]
        %v1658 = vld [vmem:[#allocation7 + $0x138] sm:$0xff]
        %v1659 = vld [vmem:[#allocation7 + $0x140] sm:$0xff]
        %v1660 = vld [vmem:[#allocation7 + $0x148] sm:$0xff]
        %v1661 = vld [vmem:[#allocation7 + $0x150] sm:$0xff]
        %v1662 = vld [vmem:[#allocation7 + $0x158] sm:$0xff]
        %v1663 = vld [vmem:[#allocation7 + $0x160] sm:$0xff]
        %v1664 = vld [vmem:[#allocation7 + $0x168] sm:$0xff]
        %v1665 = vld [vmem:[#allocation7 + $0x170] sm:$0xff]
        %v1666 = vld [vmem:[#allocation7 + $0x178] sm:$0xff]
        %v1667 = vld [vmem:[#allocation7 + $0x180] sm:$0xff]
        %v1668 = vld [vmem:[#allocation7 + $0x188] sm:$0xff]
        %v1669 = vld [vmem:[#allocation7 + $0x190] sm:$0xff]
        %v1670 = vld [vmem:[#allocation7 + $0x198] sm:$0xff]
        %v1671 = vld [vmem:[#allocation7 + $0x1a0] sm:$0xff]
        %v1672 = vld [vmem:[#allocation7 + $0x1a8] sm:$0xff]
        %v1673 = vld [vmem:[#allocation7 + $0x1b0] sm:$0xff]
        %v1674 = vld [vmem:[#allocation7 + $0x1b8] sm:$0xff]
        %v1675 = vld [vmem:[#allocation7 + $0x1c0] sm:$0xff]
        %v1676 = vld [vmem:[#allocation7 + $0x1c8] sm:$0xff]
        %v1677 = vld [vmem:[#allocation7 + $0x1d0] sm:$0xff]
        %v1678 = vld [vmem:[#allocation7 + $0x1d8] sm:$0xff]
        %v1679 = vld [vmem:[#allocation7 + $0x1e0] sm:$0xff]
        %v1680 = vld [vmem:[#allocation7 + $0x1e8] sm:$0xff]
        %v1681 = vld [vmem:[#allocation7 + $0x1f0] sm:$0xff]
        %v1682 = vld [vmem:[#allocation7 + $0x1f8] sm:$0xff]
        %v1683 = vld [vmem:[%s3] sm:$0x3]
        %v1685 = vperm.slane %v1683, 0
        %v1686 = vperm.slane %v1683, 1
        %v1753 = vunpack.c.l.b16 %v1619
        %v1754 = vunpack.c.h.b16 %v1619
        %v1755 = vunpack.c.l.b16 %v1620
        %v1756 = vunpack.c.h.b16 %v1620
        %v1757 = vunpack.c.l.b16 %v1621
        %v1758 = vunpack.c.h.b16 %v1621
        %v1759 = vunpack.c.l.b16 %v1622
        %v1760 = vunpack.c.h.b16 %v1622
        %v1761 = vunpack.c.l.b16 %v1623
        %v1762 = vunpack.c.h.b16 %v1623
        %v1763 = vunpack.c.l.b16 %v1624
        %v1764 = vunpack.c.h.b16 %v1624
        %v1765 = vunpack.c.l.b16 %v1625
        %v1766 = vunpack.c.h.b16 %v1625
        %v1767 = vunpack.c.l.b16 %v1626
        %v1768 = vunpack.c.h.b16 %v1626
        %v1769 = vunpack.c.l.b16 %v1627
        %v1770 = vunpack.c.h.b16 %v1627
        %v1771 = vunpack.c.l.b16 %v1628
        %v1772 = vunpack.c.h.b16 %v1628
        %v1773 = vunpack.c.l.b16 %v1629
        %v1774 = vunpack.c.h.b16 %v1629
        %v1775 = vunpack.c.l.b16 %v1630
        %v1776 = vunpack.c.h.b16 %v1630
        %v1777 = vunpack.c.l.b16 %v1631
        %v1778 = vunpack.c.h.b16 %v1631
        %v1779 = vunpack.c.l.b16 %v1632
        %v1780 = vunpack.c.h.b16 %v1632
        %v1781 = vunpack.c.l.b16 %v1633
        %v1782 = vunpack.c.h.b16 %v1633
        %v1783 = vunpack.c.l.b16 %v1634
        %v1784 = vunpack.c.h.b16 %v1634
        %v1785 = vunpack.c.l.b16 %v1635
        %v1786 = vunpack.c.h.b16 %v1635
        %v1787 = vunpack.c.l.b16 %v1636
        %v1788 = vunpack.c.h.b16 %v1636
        %v1789 = vunpack.c.l.b16 %v1637
        %v1790 = vunpack.c.h.b16 %v1637
        %v1791 = vunpack.c.l.b16 %v1638
        %v1792 = vunpack.c.h.b16 %v1638
        %v1793 = vunpack.c.l.b16 %v1639
        %v1794 = vunpack.c.h.b16 %v1639
        %v1795 = vunpack.c.l.b16 %v1640
        %v1796 = vunpack.c.h.b16 %v1640
        %v1797 = vunpack.c.l.b16 %v1641
        %v1798 = vunpack.c.h.b16 %v1641
        %v1799 = vunpack.c.l.b16 %v1642
        %v1800 = vunpack.c.h.b16 %v1642
        %v1801 = vunpack.c.l.b16 %v1643
        %v1802 = vunpack.c.h.b16 %v1643
        %v1803 = vunpack.c.l.b16 %v1644
        %v1804 = vunpack.c.h.b16 %v1644
        %v1805 = vunpack.c.l.b16 %v1645
        %v1806 = vunpack.c.h.b16 %v1645
        %v1807 = vunpack.c.l.b16 %v1646
        %v1808 = vunpack.c.h.b16 %v1646
        %v1809 = vunpack.c.l.b16 %v1647
        %v1810 = vunpack.c.h.b16 %v1647
        %v1811 = vunpack.c.l.b16 %v1648
        %v1812 = vunpack.c.h.b16 %v1648
        %v1813 = vunpack.c.l.b16 %v1649
        %v1814 = vunpack.c.h.b16 %v1649
        %v1815 = vunpack.c.l.b16 %v1650
        %v1816 = vunpack.c.h.b16 %v1650
        %v1817 = vunpack.c.l.b16 %v1651
        %v1818 = vunpack.c.h.b16 %v1651
        %v1819 = vunpack.c.l.b16 %v1652
        %v1820 = vunpack.c.h.b16 %v1652
        %v1821 = vunpack.c.l.b16 %v1653
        %v1822 = vunpack.c.h.b16 %v1653
        %v1823 = vunpack.c.l.b16 %v1654
        %v1824 = vunpack.c.h.b16 %v1654
        %v1825 = vunpack.c.l.b16 %v1655
        %v1826 = vunpack.c.h.b16 %v1655
        %v1827 = vunpack.c.l.b16 %v1656
        %v1828 = vunpack.c.h.b16 %v1656
        %v1829 = vunpack.c.l.b16 %v1657
        %v1830 = vunpack.c.h.b16 %v1657
        %v1831 = vunpack.c.l.b16 %v1658
        %v1832 = vunpack.c.h.b16 %v1658
        %v1833 = vunpack.c.l.b16 %v1659
        %v1834 = vunpack.c.h.b16 %v1659
        %v1835 = vunpack.c.l.b16 %v1660
        %v1836 = vunpack.c.h.b16 %v1660
        %v1837 = vunpack.c.l.b16 %v1661
        %v1838 = vunpack.c.h.b16 %v1661
        %v1839 = vunpack.c.l.b16 %v1662
        %v1840 = vunpack.c.h.b16 %v1662
        %v1841 = vunpack.c.l.b16 %v1663
        %v1842 = vunpack.c.h.b16 %v1663
        %v1843 = vunpack.c.l.b16 %v1664
        %v1844 = vunpack.c.h.b16 %v1664
        %v1845 = vunpack.c.l.b16 %v1665
        %v1846 = vunpack.c.h.b16 %v1665
        %v1847 = vunpack.c.l.b16 %v1666
        %v1848 = vunpack.c.h.b16 %v1666
        %v1849 = vunpack.c.l.b16 %v1667
        %v1850 = vunpack.c.h.b16 %v1667
        %v1851 = vunpack.c.l.b16 %v1668
        %v1852 = vunpack.c.h.b16 %v1668
        %v1853 = vunpack.c.l.b16 %v1669
        %v1854 = vunpack.c.h.b16 %v1669
        %v1855 = vunpack.c.l.b16 %v1670
        %v1856 = vunpack.c.h.b16 %v1670
        %v1857 = vunpack.c.l.b16 %v1671
        %v1858 = vunpack.c.h.b16 %v1671
        %v1859 = vunpack.c.l.b16 %v1672
        %v1860 = vunpack.c.h.b16 %v1672
        %v1861 = vunpack.c.l.b16 %v1673
        %v1862 = vunpack.c.h.b16 %v1673
        %v1863 = vunpack.c.l.b16 %v1674
        %v1864 = vunpack.c.h.b16 %v1674
        %v1865 = vunpack.c.l.b16 %v1675
        %v1866 = vunpack.c.h.b16 %v1675
        %v1867 = vunpack.c.l.b16 %v1676
        %v1868 = vunpack.c.h.b16 %v1676
        %v1869 = vunpack.c.l.b16 %v1677
        %v1870 = vunpack.c.h.b16 %v1677
        %v1871 = vunpack.c.l.b16 %v1678
        %v1872 = vunpack.c.h.b16 %v1678
        %v1873 = vunpack.c.l.b16 %v1679
        %v1874 = vunpack.c.h.b16 %v1679
        %v1875 = vunpack.c.l.b16 %v1680
        %v1876 = vunpack.c.h.b16 %v1680
        %v1877 = vunpack.c.l.b16 %v1681
        %v1878 = vunpack.c.h.b16 %v1681
        %v1879 = vunpack.c.l.b16 %v1682
        %v1880 = vunpack.c.h.b16 %v1682
        %v1881 = vpack.c.b16 %v1755, %v1753
        %v1882 = vpack.c.b16 %v1756, %v1754
        %v1883 = vpack.c.b16 %v1759, %v1757
        %v1884 = vpack.c.b16 %v1760, %v1758
        %v1885 = vpack.c.b16 %v1763, %v1761
        %v1886 = vpack.c.b16 %v1764, %v1762
        %v1887 = vpack.c.b16 %v1767, %v1765
        %v1888 = vpack.c.b16 %v1768, %v1766
        %v1889 = vpack.c.b16 %v1771, %v1769
        %v1890 = vpack.c.b16 %v1772, %v1770
        %v1891 = vpack.c.b16 %v1775, %v1773
        %v1892 = vpack.c.b16 %v1776, %v1774
        %v1893 = vpack.c.b16 %v1779, %v1777
        %v1894 = vpack.c.b16 %v1780, %v1778
        %v1895 = vpack.c.b16 %v1783, %v1781
        %v1896 = vpack.c.b16 %v1784, %v1782
        %v1897 = vpack.c.b16 %v1787, %v1785
        %v1898 = vpack.c.b16 %v1788, %v1786
        %v1899 = vpack.c.b16 %v1791, %v1789
        %v1900 = vpack.c.b16 %v1792, %v1790
        %v1901 = vpack.c.b16 %v1795, %v1793
        %v1902 = vpack.c.b16 %v1796, %v1794
        %v1903 = vpack.c.b16 %v1799, %v1797
        %v1904 = vpack.c.b16 %v1800, %v1798
        %v1905 = vpack.c.b16 %v1803, %v1801
        %v1906 = vpack.c.b16 %v1804, %v1802
        %v1907 = vpack.c.b16 %v1807, %v1805
        %v1908 = vpack.c.b16 %v1808, %v1806
        %v1909 = vpack.c.b16 %v1811, %v1809
        %v1910 = vpack.c.b16 %v1812, %v1810
        %v1911 = vpack.c.b16 %v1815, %v1813
        %v1912 = vpack.c.b16 %v1816, %v1814
        %v1913 = vpack.c.b16 %v1819, %v1817
        %v1914 = vpack.c.b16 %v1820, %v1818
        %v1915 = vpack.c.b16 %v1823, %v1821
        %v1916 = vpack.c.b16 %v1824, %v1822
        %v1917 = vpack.c.b16 %v1827, %v1825
        %v1918 = vpack.c.b16 %v1828, %v1826
        %v1919 = vpack.c.b16 %v1831, %v1829
        %v1920 = vpack.c.b16 %v1832, %v1830
        %v1921 = vpack.c.b16 %v1835, %v1833
        %v1922 = vpack.c.b16 %v1836, %v1834
        %v1923 = vpack.c.b16 %v1839, %v1837
        %v1924 = vpack.c.b16 %v1840, %v1838
        %v1925 = vpack.c.b16 %v1843, %v1841
        %v1926 = vpack.c.b16 %v1844, %v1842
        %v1927 = vpack.c.b16 %v1847, %v1845
        %v1928 = vpack.c.b16 %v1848, %v1846
        %v1929 = vpack.c.b16 %v1851, %v1849
        %v1930 = vpack.c.b16 %v1852, %v1850
        %v1931 = vpack.c.b16 %v1855, %v1853
        %v1932 = vpack.c.b16 %v1856, %v1854
        %v1933 = vpack.c.b16 %v1859, %v1857
        %v1934 = vpack.c.b16 %v1860, %v1858
        %v1935 = vpack.c.b16 %v1863, %v1861
        %v1936 = vpack.c.b16 %v1864, %v1862
        %v1937 = vpack.c.b16 %v1867, %v1865
        %v1938 = vpack.c.b16 %v1868, %v1866
        %v1939 = vpack.c.b16 %v1871, %v1869
        %v1940 = vpack.c.b16 %v1872, %v1870
        %v1941 = vpack.c.b16 %v1875, %v1873
        %v1942 = vpack.c.b16 %v1876, %v1874
        %v1943 = vpack.c.b16 %v1879, %v1877
        %v1944 = vpack.c.b16 %v1880, %v1878
        %2009 = vmatpush.bf16.msra.mxu0 %v1895
        %2010 = vmatpush.bf16.msra.mxu0 %v1893
        %2011 = vmatpush.bf16.msra.mxu0 %v1891
        %2012 = vmatpush.bf16.msra.mxu0 %v1889
        %2013 = vmatpush.bf16.msra.mxu0 %v1887
        %2014 = vmatpush.bf16.msra.mxu0 %v1885
        %2015 = vmatpush.bf16.msra.mxu0 %v1883
        %2016 = vmatpush.bf16.msra.mxu0 %v1881
        %2017 = vmatmul.bf16.gmra.mxu0 %v1555
        %v2018 = vpop.f32.mrf.mxu0
        %v2019 = vadd.f32 %v1685, %v2018
        %v2020 = vpop.f32.mrf.mxu0
        %v2021 = vadd.f32 %v1685, %v2020
        %2022 = vmatmul.bf16.gmra.mxu0 %v1559
        %v2023 = vpop.f32.mrf.mxu0
        %v2024 = vadd.f32 %v1685, %v2023
        %v2025 = vpop.f32.mrf.mxu0
        %v2026 = vadd.f32 %v1685, %v2025
        %2027 = vmatmul.bf16.gmra.mxu0 %v1563
        %v2028 = vpop.f32.mrf.mxu0
        %v2029 = vadd.f32 %v1685, %v2028
        %v2030 = vpop.f32.mrf.mxu0
        %v2031 = vadd.f32 %v1685, %v2030
        %2032 = vmatmul.bf16.gmra.mxu0 %v1567
        %v2033 = vpop.f32.mrf.mxu0
        %v2034 = vadd.f32 %v1685, %v2033
        %v2035 = vpop.f32.mrf.mxu0
        %v2036 = vadd.f32 %v1685, %v2035
        %2037 = vmatmul.bf16.gmra.mxu0 %v1571
        %v2038 = vpop.f32.mrf.mxu0
        %v2039 = vadd.f32 %v1685, %v2038
        %v2040 = vpop.f32.mrf.mxu0
        %v2041 = vadd.f32 %v1685, %v2040
        %2042 = vmatmul.bf16.gmra.mxu0 %v1575
        %v2043 = vpop.f32.mrf.mxu0
        %v2044 = vadd.f32 %v1685, %v2043
        %v2045 = vpop.f32.mrf.mxu0
        %v2046 = vadd.f32 %v1685, %v2045
        %2047 = vmatmul.bf16.gmra.mxu0 %v1579
        %v2048 = vpop.f32.mrf.mxu0
        %v2049 = vadd.f32 %v1685, %v2048
        %v2050 = vpop.f32.mrf.mxu0
        %v2051 = vadd.f32 %v1685, %v2050
        %2052 = vmatmul.bf16.gmra.mxu0 %v1583
        %v2053 = vpop.f32.mrf.mxu0
        %v2054 = vadd.f32 %v1685, %v2053
        %v2055 = vpop.f32.mrf.mxu0
        %v2056 = vadd.f32 %v1685, %v2055
        %2057 = vmatmul.bf16.gmra.mxu0 %v1587
        %v2058 = vpop.f32.mrf.mxu0
        %v2059 = vadd.f32 %v1685, %v2058
        %v2060 = vpop.f32.mrf.mxu0
        %v2061 = vadd.f32 %v1685, %v2060
        %2062 = vmatmul.bf16.gmra.mxu0 %v1591
        %v2063 = vpop.f32.mrf.mxu0
        %v2064 = vadd.f32 %v1685, %v2063
        %v2065 = vpop.f32.mrf.mxu0
        %v2066 = vadd.f32 %v1685, %v2065
        %2067 = vmatmul.bf16.gmra.mxu0 %v1595
        %v2068 = vpop.f32.mrf.mxu0
        %v2069 = vadd.f32 %v1685, %v2068
        %v2070 = vpop.f32.mrf.mxu0
        %v2071 = vadd.f32 %v1685, %v2070
        %2072 = vmatmul.bf16.gmra.mxu0 %v1599
        %v2073 = vpop.f32.mrf.mxu0
        %v2074 = vadd.f32 %v1685, %v2073
        %v2075 = vpop.f32.mrf.mxu0
        %v2076 = vadd.f32 %v1685, %v2075
        %2077 = vmatmul.bf16.gmra.mxu0 %v1603
        %v2078 = vpop.f32.mrf.mxu0
        %v2079 = vadd.f32 %v1685, %v2078
        %v2080 = vpop.f32.mrf.mxu0
        %v2081 = vadd.f32 %v1685, %v2080
        %2082 = vmatmul.bf16.gmra.mxu0 %v1607
        %v2083 = vpop.f32.mrf.mxu0
        %v2084 = vadd.f32 %v1685, %v2083
        %v2085 = vpop.f32.mrf.mxu0
        %v2086 = vadd.f32 %v1685, %v2085
        %2087 = vmatmul.bf16.gmra.mxu0 %v1611
        %v2088 = vpop.f32.mrf.mxu0
        %v2089 = vadd.f32 %v1685, %v2088
        %v2090 = vpop.f32.mrf.mxu0
        %v2091 = vadd.f32 %v1685, %v2090
        %2092 = vmatmul.bf16.gmra.mxu0 %v1615
        %v2093 = vpop.f32.mrf.mxu0
        %v2094 = vadd.f32 %v1685, %v2093
        %v2095 = vpop.f32.mrf.mxu0
        %v2096 = vadd.f32 %v1685, %v2095
        %2097 = vdwg.mxu0
        %2098 = vmatpush.bf16.msra.mxu0 %v1911
        %2099 = vmatpush.bf16.msra.mxu0 %v1909
        %2100 = vmatpush.bf16.msra.mxu0 %v1907
        %2101 = vmatpush.bf16.msra.mxu0 %v1905
        %2102 = vmatpush.bf16.msra.mxu0 %v1903
        %2103 = vmatpush.bf16.msra.mxu0 %v1901
        %2104 = vmatpush.bf16.msra.mxu0 %v1899
        %2105 = vmatpush.bf16.msra.mxu0 %v1897
        %2106 = vmatmul.bf16.gmra.mxu0 %v1556
        %v2107 = vpop.f32.mrf.mxu0
        %v2108 = vadd.f32 %v2019, %v2107
        %v2109 = vpop.f32.mrf.mxu0
        %v2110 = vadd.f32 %v2021, %v2109
        %2111 = vmatmul.bf16.gmra.mxu0 %v1560
        %v2112 = vpop.f32.mrf.mxu0
        %v2113 = vadd.f32 %v2024, %v2112
        %v2114 = vpop.f32.mrf.mxu0
        %v2115 = vadd.f32 %v2026, %v2114
        %2116 = vmatmul.bf16.gmra.mxu0 %v1564
        %v2117 = vpop.f32.mrf.mxu0
        %v2118 = vadd.f32 %v2029, %v2117
        %v2119 = vpop.f32.mrf.mxu0
        %v2120 = vadd.f32 %v2031, %v2119
        %2121 = vmatmul.bf16.gmra.mxu0 %v1568
        %v2122 = vpop.f32.mrf.mxu0
        %v2123 = vadd.f32 %v2034, %v2122
        %v2124 = vpop.f32.mrf.mxu0
        %v2125 = vadd.f32 %v2036, %v2124
        %2126 = vmatmul.bf16.gmra.mxu0 %v1572
        %v2127 = vpop.f32.mrf.mxu0
        %v2128 = vadd.f32 %v2039, %v2127
        %v2129 = vpop.f32.mrf.mxu0
        %v2130 = vadd.f32 %v2041, %v2129
        %2131 = vmatmul.bf16.gmra.mxu0 %v1576
        %v2132 = vpop.f32.mrf.mxu0
        %v2133 = vadd.f32 %v2044, %v2132
        %v2134 = vpop.f32.mrf.mxu0
        %v2135 = vadd.f32 %v2046, %v2134
        %2136 = vmatmul.bf16.gmra.mxu0 %v1580
        %v2137 = vpop.f32.mrf.mxu0
        %v2138 = vadd.f32 %v2049, %v2137
        %v2139 = vpop.f32.mrf.mxu0
        %v2140 = vadd.f32 %v2051, %v2139
        %2141 = vmatmul.bf16.gmra.mxu0 %v1584
        %v2142 = vpop.f32.mrf.mxu0
        %v2143 = vadd.f32 %v2054, %v2142
        %v2144 = vpop.f32.mrf.mxu0
        %v2145 = vadd.f32 %v2056, %v2144
        %2146 = vmatmul.bf16.gmra.mxu0 %v1588
        %v2147 = vpop.f32.mrf.mxu0
        %v2148 = vadd.f32 %v2059, %v2147
        %v2149 = vpop.f32.mrf.mxu0
        %v2150 = vadd.f32 %v2061, %v2149
        %2151 = vmatmul.bf16.gmra.mxu0 %v1592
        %v2152 = vpop.f32.mrf.mxu0
        %v2153 = vadd.f32 %v2064, %v2152
        %v2154 = vpop.f32.mrf.mxu0
        %v2155 = vadd.f32 %v2066, %v2154
        %2156 = vmatmul.bf16.gmra.mxu0 %v1596
        %v2157 = vpop.f32.mrf.mxu0
        %v2158 = vadd.f32 %v2069, %v2157
        %v2159 = vpop.f32.mrf.mxu0
        %v2160 = vadd.f32 %v2071, %v2159
        %2161 = vmatmul.bf16.gmra.mxu0 %v1600
        %v2162 = vpop.f32.mrf.mxu0
        %v2163 = vadd.f32 %v2074, %v2162
        %v2164 = vpop.f32.mrf.mxu0
        %v2165 = vadd.f32 %v2076, %v2164
        %2166 = vmatmul.bf16.gmra.mxu0 %v1604
        %v2167 = vpop.f32.mrf.mxu0
        %v2168 = vadd.f32 %v2079, %v2167
        %v2169 = vpop.f32.mrf.mxu0
        %v2170 = vadd.f32 %v2081, %v2169
        %2171 = vmatmul.bf16.gmra.mxu0 %v1608
        %v2172 = vpop.f32.mrf.mxu0
        %v2173 = vadd.f32 %v2084, %v2172
        %v2174 = vpop.f32.mrf.mxu0
        %v2175 = vadd.f32 %v2086, %v2174
        %2176 = vmatmul.bf16.gmra.mxu0 %v1612
        %v2177 = vpop.f32.mrf.mxu0
        %v2178 = vadd.f32 %v2089, %v2177
        %v2179 = vpop.f32.mrf.mxu0
        %v2180 = vadd.f32 %v2091, %v2179
        %2181 = vmatmul.bf16.gmra.mxu0 %v1616
        %v2182 = vpop.f32.mrf.mxu0
        %v2183 = vadd.f32 %v2094, %v2182
        %v2184 = vpop.f32.mrf.mxu0
        %v2185 = vadd.f32 %v2096, %v2184
        %2186 = vdwg.mxu0
        %2187 = vmatpush.bf16.msra.mxu0 %v1927
        %2188 = vmatpush.bf16.msra.mxu0 %v1925
        %2189 = vmatpush.bf16.msra.mxu0 %v1923
        %2190 = vmatpush.bf16.msra.mxu0 %v1921
        %2191 = vmatpush.bf16.msra.mxu0 %v1919
        %2192 = vmatpush.bf16.msra.mxu0 %v1917
        %2193 = vmatpush.bf16.msra.mxu0 %v1915
        %2194 = vmatpush.bf16.msra.mxu0 %v1913
        %2195 = vmatmul.bf16.gmra.mxu0 %v1557
        %v2196 = vpop.f32.mrf.mxu0
        %v2197 = vadd.f32 %v2108, %v2196
        %v2198 = vpop.f32.mrf.mxu0
        %v2199 = vadd.f32 %v2110, %v2198
        %2200 = vmatmul.bf16.gmra.mxu0 %v1561
        %v2201 = vpop.f32.mrf.mxu0
        %v2202 = vadd.f32 %v2113, %v2201
        %v2203 = vpop.f32.mrf.mxu0
        %v2204 = vadd.f32 %v2115, %v2203
        %2205 = vmatmul.bf16.gmra.mxu0 %v1565
        %v2206 = vpop.f32.mrf.mxu0
        %v2207 = vadd.f32 %v2118, %v2206
        %v2208 = vpop.f32.mrf.mxu0
        %v2209 = vadd.f32 %v2120, %v2208
        %2210 = vmatmul.bf16.gmra.mxu0 %v1569
        %v2211 = vpop.f32.mrf.mxu0
        %v2212 = vadd.f32 %v2123, %v2211
        %v2213 = vpop.f32.mrf.mxu0
        %v2214 = vadd.f32 %v2125, %v2213
        %2215 = vmatmul.bf16.gmra.mxu0 %v1573
        %v2216 = vpop.f32.mrf.mxu0
        %v2217 = vadd.f32 %v2128, %v2216
        %v2218 = vpop.f32.mrf.mxu0
        %v2219 = vadd.f32 %v2130, %v2218
        %2220 = vmatmul.bf16.gmra.mxu0 %v1577
        %v2221 = vpop.f32.mrf.mxu0
        %v2222 = vadd.f32 %v2133, %v2221
        %v2223 = vpop.f32.mrf.mxu0
        %v2224 = vadd.f32 %v2135, %v2223
        %2225 = vmatmul.bf16.gmra.mxu0 %v1581
        %v2226 = vpop.f32.mrf.mxu0
        %v2227 = vadd.f32 %v2138, %v2226
        %v2228 = vpop.f32.mrf.mxu0
        %v2229 = vadd.f32 %v2140, %v2228
        %2230 = vmatmul.bf16.gmra.mxu0 %v1585
        %v2231 = vpop.f32.mrf.mxu0
        %v2232 = vadd.f32 %v2143, %v2231
        %v2233 = vpop.f32.mrf.mxu0
        %v2234 = vadd.f32 %v2145, %v2233
        %2235 = vmatmul.bf16.gmra.mxu0 %v1589
        %v2236 = vpop.f32.mrf.mxu0
        %v2237 = vadd.f32 %v2148, %v2236
        %v2238 = vpop.f32.mrf.mxu0
        %v2239 = vadd.f32 %v2150, %v2238
        %2240 = vmatmul.bf16.gmra.mxu0 %v1593
        %v2241 = vpop.f32.mrf.mxu0
        %v2242 = vadd.f32 %v2153, %v2241
        %v2243 = vpop.f32.mrf.mxu0
        %v2244 = vadd.f32 %v2155, %v2243
        %2245 = vmatmul.bf16.gmra.mxu0 %v1597
        %v2246 = vpop.f32.mrf.mxu0
        %v2247 = vadd.f32 %v2158, %v2246
        %v2248 = vpop.f32.mrf.mxu0
        %v2249 = vadd.f32 %v2160, %v2248
        %2250 = vmatmul.bf16.gmra.mxu0 %v1601
        %v2251 = vpop.f32.mrf.mxu0
        %v2252 = vadd.f32 %v2163, %v2251
        %v2253 = vpop.f32.mrf.mxu0
        %v2254 = vadd.f32 %v2165, %v2253
        %2255 = vmatmul.bf16.gmra.mxu0 %v1605
        %v2256 = vpop.f32.mrf.mxu0
        %v2257 = vadd.f32 %v2168, %v2256
        %v2258 = vpop.f32.mrf.mxu0
        %v2259 = vadd.f32 %v2170, %v2258
        %2260 = vmatmul.bf16.gmra.mxu0 %v1609
        %v2261 = vpop.f32.mrf.mxu0
        %v2262 = vadd.f32 %v2173, %v2261
        %v2263 = vpop.f32.mrf.mxu0
        %v2264 = vadd.f32 %v2175, %v2263
        %2265 = vmatmul.bf16.gmra.mxu0 %v1613
        %v2266 = vpop.f32.mrf.mxu0
        %v2267 = vadd.f32 %v2178, %v2266
        %v2268 = vpop.f32.mrf.mxu0
        %v2269 = vadd.f32 %v2180, %v2268
        %2270 = vmatmul.bf16.gmra.mxu0 %v1617
        %v2271 = vpop.f32.mrf.mxu0
        %v2272 = vadd.f32 %v2183, %v2271
        %v2273 = vpop.f32.mrf.mxu0
        %v2274 = vadd.f32 %v2185, %v2273
        %2275 = vdwg.mxu0
        %2276 = vmatpush.bf16.msra.mxu0 %v1943
        %2277 = vmatpush.bf16.msra.mxu0 %v1941
        %2278 = vmatpush.bf16.msra.mxu0 %v1939
        %2279 = vmatpush.bf16.msra.mxu0 %v1937
        %2280 = vmatpush.bf16.msra.mxu0 %v1935
        %2281 = vmatpush.bf16.msra.mxu0 %v1933
        %2282 = vmatpush.bf16.msra.mxu0 %v1931
        %2283 = vmatpush.bf16.msra.mxu0 %v1929
        %2284 = vmatmul.bf16.gmra.mxu0 %v1558
        %v2285 = vpop.f32.mrf.mxu0
        %v2286 = vadd.f32 %v2197, %v2285
        %v2287 = vpop.f32.mrf.mxu0
        %v2288 = vadd.f32 %v2199, %v2287
        %2289 = vmatmul.bf16.gmra.mxu0 %v1562
        %v2290 = vpop.f32.mrf.mxu0
        %v2291 = vadd.f32 %v2202, %v2290
        %v2292 = vpop.f32.mrf.mxu0
        %v2293 = vadd.f32 %v2204, %v2292
        %2294 = vmatmul.bf16.gmra.mxu0 %v1566
        %v2295 = vpop.f32.mrf.mxu0
        %v2296 = vadd.f32 %v2207, %v2295
        %v2297 = vpop.f32.mrf.mxu0
        %v2298 = vadd.f32 %v2209, %v2297
        %2299 = vmatmul.bf16.gmra.mxu0 %v1570
        %v2300 = vpop.f32.mrf.mxu0
        %v2301 = vadd.f32 %v2212, %v2300
        %v2302 = vpop.f32.mrf.mxu0
        %v2303 = vadd.f32 %v2214, %v2302
        %2304 = vmatmul.bf16.gmra.mxu0 %v1574
        %v2305 = vpop.f32.mrf.mxu0
        %v2306 = vadd.f32 %v2217, %v2305
        %v2307 = vpop.f32.mrf.mxu0
        %v2308 = vadd.f32 %v2219, %v2307
        %2309 = vmatmul.bf16.gmra.mxu0 %v1578
        %v2310 = vpop.f32.mrf.mxu0
        %v2311 = vadd.f32 %v2222, %v2310
        %v2312 = vpop.f32.mrf.mxu0
        %v2313 = vadd.f32 %v2224, %v2312
        %2314 = vmatmul.bf16.gmra.mxu0 %v1582
        %v2315 = vpop.f32.mrf.mxu0
        %v2316 = vadd.f32 %v2227, %v2315
        %v2317 = vpop.f32.mrf.mxu0
        %v2318 = vadd.f32 %v2229, %v2317
        %2319 = vmatmul.bf16.gmra.mxu0 %v1586
        %v2320 = vpop.f32.mrf.mxu0
        %v2321 = vadd.f32 %v2232, %v2320
        %v2322 = vpop.f32.mrf.mxu0
        %v2323 = vadd.f32 %v2234, %v2322
        %2324 = vmatmul.bf16.gmra.mxu0 %v1590
        %v2325 = vpop.f32.mrf.mxu0
        %v2326 = vadd.f32 %v2237, %v2325
        %v2327 = vpop.f32.mrf.mxu0
        %v2328 = vadd.f32 %v2239, %v2327
        %2329 = vmatmul.bf16.gmra.mxu0 %v1594
        %v2330 = vpop.f32.mrf.mxu0
        %v2331 = vadd.f32 %v2242, %v2330
        %v2332 = vpop.f32.mrf.mxu0
        %v2333 = vadd.f32 %v2244, %v2332
        %2334 = vmatmul.bf16.gmra.mxu0 %v1598
        %v2335 = vpop.f32.mrf.mxu0
        %v2336 = vadd.f32 %v2247, %v2335
        %v2337 = vpop.f32.mrf.mxu0
        %v2338 = vadd.f32 %v2249, %v2337
        %2339 = vmatmul.bf16.gmra.mxu0 %v1602
        %v2340 = vpop.f32.mrf.mxu0
        %v2341 = vadd.f32 %v2252, %v2340
        %v2342 = vpop.f32.mrf.mxu0
        %v2343 = vadd.f32 %v2254, %v2342
        %2344 = vmatmul.bf16.gmra.mxu0 %v1606
        %v2345 = vpop.f32.mrf.mxu0
        %v2346 = vadd.f32 %v2257, %v2345
        %v2347 = vpop.f32.mrf.mxu0
        %v2348 = vadd.f32 %v2259, %v2347
        %2349 = vmatmul.bf16.gmra.mxu0 %v1610
        %v2350 = vpop.f32.mrf.mxu0
        %v2351 = vadd.f32 %v2262, %v2350
        %v2352 = vpop.f32.mrf.mxu0
        %v2353 = vadd.f32 %v2264, %v2352
        %2354 = vmatmul.bf16.gmra.mxu0 %v1614
        %v2355 = vpop.f32.mrf.mxu0
        %v2356 = vadd.f32 %v2267, %v2355
        %v2357 = vpop.f32.mrf.mxu0
        %v2358 = vadd.f32 %v2269, %v2357
        %2359 = vmatmul.bf16.gmra.mxu0 %v1618
        %v2360 = vpop.f32.mrf.mxu0
        %v2361 = vadd.f32 %v2272, %v2360
        %v2362 = vpop.f32.mrf.mxu0
        %v2363 = vadd.f32 %v2274, %v2362
        %2364 = vdwg.mxu0
        %2365 = vmatpush.bf16.msra.mxu0 %v1896
        %2366 = vmatpush.bf16.msra.mxu0 %v1894
        %2367 = vmatpush.bf16.msra.mxu0 %v1892
        %2368 = vmatpush.bf16.msra.mxu0 %v1890
        %2369 = vmatpush.bf16.msra.mxu0 %v1888
        %2370 = vmatpush.bf16.msra.mxu0 %v1886
        %2371 = vmatpush.bf16.msra.mxu0 %v1884
        %2372 = vmatpush.bf16.msra.mxu0 %v1882
        %2373 = vmatmul.bf16.gmra.mxu0 %v1555
        %v2374 = vpop.f32.mrf.mxu0
        %v2375 = vadd.f32 %v1686, %v2374
        %v2376 = vpop.f32.mrf.mxu0
        %v2377 = vadd.f32 %v1686, %v2376
        %2378 = vmatmul.bf16.gmra.mxu0 %v1559
        %v2379 = vpop.f32.mrf.mxu0
        %v2380 = vadd.f32 %v1686, %v2379
        %v2381 = vpop.f32.mrf.mxu0
        %v2382 = vadd.f32 %v1686, %v2381
        %2383 = vmatmul.bf16.gmra.mxu0 %v1563
        %v2384 = vpop.f32.mrf.mxu0
        %v2385 = vadd.f32 %v1686, %v2384
        %v2386 = vpop.f32.mrf.mxu0
        %v2387 = vadd.f32 %v1686, %v2386
        %2388 = vmatmul.bf16.gmra.mxu0 %v1567
        %v2389 = vpop.f32.mrf.mxu0
        %v2390 = vadd.f32 %v1686, %v2389
        %v2391 = vpop.f32.mrf.mxu0
        %v2392 = vadd.f32 %v1686, %v2391
        %2393 = vmatmul.bf16.gmra.mxu0 %v1571
        %v2394 = vpop.f32.mrf.mxu0
        %v2395 = vadd.f32 %v1686, %v2394
        %v2396 = vpop.f32.mrf.mxu0
        %v2397 = vadd.f32 %v1686, %v2396
        %2398 = vmatmul.bf16.gmra.mxu0 %v1575
        %v2399 = vpop.f32.mrf.mxu0
        %v2400 = vadd.f32 %v1686, %v2399
        %v2401 = vpop.f32.mrf.mxu0
        %v2402 = vadd.f32 %v1686, %v2401
        %2403 = vmatmul.bf16.gmra.mxu0 %v1579
        %v2404 = vpop.f32.mrf.mxu0
        %v2405 = vadd.f32 %v1686, %v2404
        %v2406 = vpop.f32.mrf.mxu0
        %v2407 = vadd.f32 %v1686, %v2406
        %2408 = vmatmul.bf16.gmra.mxu0 %v1583
        %v2409 = vpop.f32.mrf.mxu0
        %v2410 = vadd.f32 %v1686, %v2409
        %v2411 = vpop.f32.mrf.mxu0
        %v2412 = vadd.f32 %v1686, %v2411
        %2413 = vmatmul.bf16.gmra.mxu0 %v1587
        %v2414 = vpop.f32.mrf.mxu0
        %v2415 = vadd.f32 %v1686, %v2414
        %v2416 = vpop.f32.mrf.mxu0
        %v2417 = vadd.f32 %v1686, %v2416
        %2418 = vmatmul.bf16.gmra.mxu0 %v1591
        %v2419 = vpop.f32.mrf.mxu0
        %v2420 = vadd.f32 %v1686, %v2419
        %v2421 = vpop.f32.mrf.mxu0
        %v2422 = vadd.f32 %v1686, %v2421
        %2423 = vmatmul.bf16.gmra.mxu0 %v1595
        %v2424 = vpop.f32.mrf.mxu0
        %v2425 = vadd.f32 %v1686, %v2424
        %v2426 = vpop.f32.mrf.mxu0
        %v2427 = vadd.f32 %v1686, %v2426
        %2428 = vmatmul.bf16.gmra.mxu0 %v1599
        %v2429 = vpop.f32.mrf.mxu0
        %v2430 = vadd.f32 %v1686, %v2429
        %v2431 = vpop.f32.mrf.mxu0
        %v2432 = vadd.f32 %v1686, %v2431
        %2433 = vmatmul.bf16.gmra.mxu0 %v1603
        %v2434 = vpop.f32.mrf.mxu0
        %v2435 = vadd.f32 %v1686, %v2434
        %v2436 = vpop.f32.mrf.mxu0
        %v2437 = vadd.f32 %v1686, %v2436
        %2438 = vmatmul.bf16.gmra.mxu0 %v1607
        %v2439 = vpop.f32.mrf.mxu0
        %v2440 = vadd.f32 %v1686, %v2439
        %v2441 = vpop.f32.mrf.mxu0
        %v2442 = vadd.f32 %v1686, %v2441
        %2443 = vmatmul.bf16.gmra.mxu0 %v1611
        %v2444 = vpop.f32.mrf.mxu0
        %v2445 = vadd.f32 %v1686, %v2444
        %v2446 = vpop.f32.mrf.mxu0
        %v2447 = vadd.f32 %v1686, %v2446
        %2448 = vmatmul.bf16.gmra.mxu0 %v1615
        %v2449 = vpop.f32.mrf.mxu0
        %v2450 = vadd.f32 %v1686, %v2449
        %v2451 = vpop.f32.mrf.mxu0
        %v2452 = vadd.f32 %v1686, %v2451
        %2453 = vdwg.mxu0
        %2454 = vmatpush.bf16.msra.mxu0 %v1912
        %2455 = vmatpush.bf16.msra.mxu0 %v1910
        %2456 = vmatpush.bf16.msra.mxu0 %v1908
        %2457 = vmatpush.bf16.msra.mxu0 %v1906
        %2458 = vmatpush.bf16.msra.mxu0 %v1904
        %2459 = vmatpush.bf16.msra.mxu0 %v1902
        %2460 = vmatpush.bf16.msra.mxu0 %v1900
        %2461 = vmatpush.bf16.msra.mxu0 %v1898
        %2462 = vmatmul.bf16.gmra.mxu0 %v1556
        %v2463 = vpop.f32.mrf.mxu0
        %v2464 = vadd.f32 %v2375, %v2463
        %v2465 = vpop.f32.mrf.mxu0
        %v2466 = vadd.f32 %v2377, %v2465
        %2467 = vmatmul.bf16.gmra.mxu0 %v1560
        %v2468 = vpop.f32.mrf.mxu0
        %v2469 = vadd.f32 %v2380, %v2468
        %v2470 = vpop.f32.mrf.mxu0
        %v2471 = vadd.f32 %v2382, %v2470
        %2472 = vmatmul.bf16.gmra.mxu0 %v1564
        %v2473 = vpop.f32.mrf.mxu0
        %v2474 = vadd.f32 %v2385, %v2473
        %v2475 = vpop.f32.mrf.mxu0
        %v2476 = vadd.f32 %v2387, %v2475
        %2477 = vmatmul.bf16.gmra.mxu0 %v1568
        %v2478 = vpop.f32.mrf.mxu0
        %v2479 = vadd.f32 %v2390, %v2478
        %v2480 = vpop.f32.mrf.mxu0
        %v2481 = vadd.f32 %v2392, %v2480
        %2482 = vmatmul.bf16.gmra.mxu0 %v1572
        %v2483 = vpop.f32.mrf.mxu0
        %v2484 = vadd.f32 %v2395, %v2483
        %v2485 = vpop.f32.mrf.mxu0
        %v2486 = vadd.f32 %v2397, %v2485
        %2487 = vmatmul.bf16.gmra.mxu0 %v1576
        %v2488 = vpop.f32.mrf.mxu0
        %v2489 = vadd.f32 %v2400, %v2488
        %v2490 = vpop.f32.mrf.mxu0
        %v2491 = vadd.f32 %v2402, %v2490
        %2492 = vmatmul.bf16.gmra.mxu0 %v1580
        %v2493 = vpop.f32.mrf.mxu0
        %v2494 = vadd.f32 %v2405, %v2493
        %v2495 = vpop.f32.mrf.mxu0
        %v2496 = vadd.f32 %v2407, %v2495
        %2497 = vmatmul.bf16.gmra.mxu0 %v1584
        %v2498 = vpop.f32.mrf.mxu0
        %v2499 = vadd.f32 %v2410, %v2498
        %v2500 = vpop.f32.mrf.mxu0
        %v2501 = vadd.f32 %v2412, %v2500
        %2502 = vmatmul.bf16.gmra.mxu0 %v1588
        %v2503 = vpop.f32.mrf.mxu0
        %v2504 = vadd.f32 %v2415, %v2503
        %v2505 = vpop.f32.mrf.mxu0
        %v2506 = vadd.f32 %v2417, %v2505
        %2507 = vmatmul.bf16.gmra.mxu0 %v1592
        %v2508 = vpop.f32.mrf.mxu0
        %v2509 = vadd.f32 %v2420, %v2508
        %v2510 = vpop.f32.mrf.mxu0
        %v2511 = vadd.f32 %v2422, %v2510
        %2512 = vmatmul.bf16.gmra.mxu0 %v1596
        %v2513 = vpop.f32.mrf.mxu0
        %v2514 = vadd.f32 %v2425, %v2513
        %v2515 = vpop.f32.mrf.mxu0
        %v2516 = vadd.f32 %v2427, %v2515
        %2517 = vmatmul.bf16.gmra.mxu0 %v1600
        %v2518 = vpop.f32.mrf.mxu0
        %v2519 = vadd.f32 %v2430, %v2518
        %v2520 = vpop.f32.mrf.mxu0
        %v2521 = vadd.f32 %v2432, %v2520
        %2522 = vmatmul.bf16.gmra.mxu0 %v1604
        %v2523 = vpop.f32.mrf.mxu0
        %v2524 = vadd.f32 %v2435, %v2523
        %v2525 = vpop.f32.mrf.mxu0
        %v2526 = vadd.f32 %v2437, %v2525
        %2527 = vmatmul.bf16.gmra.mxu0 %v1608
        %v2528 = vpop.f32.mrf.mxu0
        %v2529 = vadd.f32 %v2440, %v2528
        %v2530 = vpop.f32.mrf.mxu0
        %v2531 = vadd.f32 %v2442, %v2530
        %2532 = vmatmul.bf16.gmra.mxu0 %v1612
        %v2533 = vpop.f32.mrf.mxu0
        %v2534 = vadd.f32 %v2445, %v2533
        %v2535 = vpop.f32.mrf.mxu0
        %v2536 = vadd.f32 %v2447, %v2535
        %2537 = vmatmul.bf16.gmra.mxu0 %v1616
        %v2538 = vpop.f32.mrf.mxu0
        %v2539 = vadd.f32 %v2450, %v2538
        %v2540 = vpop.f32.mrf.mxu0
        %v2541 = vadd.f32 %v2452, %v2540
        %2542 = vdwg.mxu0
        %2543 = vmatpush.bf16.msra.mxu0 %v1928
        %2544 = vmatpush.bf16.msra.mxu0 %v1926
        %2545 = vmatpush.bf16.msra.mxu0 %v1924
        %2546 = vmatpush.bf16.msra.mxu0 %v1922
        %2547 = vmatpush.bf16.msra.mxu0 %v1920
        %2548 = vmatpush.bf16.msra.mxu0 %v1918
        %2549 = vmatpush.bf16.msra.mxu0 %v1916
        %2550 = vmatpush.bf16.msra.mxu0 %v1914
        %2551 = vmatmul.bf16.gmra.mxu0 %v1557
        %v2552 = vpop.f32.mrf.mxu0
        %v2553 = vadd.f32 %v2464, %v2552
        %v2554 = vpop.f32.mrf.mxu0
        %v2555 = vadd.f32 %v2466, %v2554
        %2556 = vmatmul.bf16.gmra.mxu0 %v1561
        %v2557 = vpop.f32.mrf.mxu0
        %v2558 = vadd.f32 %v2469, %v2557
        %v2559 = vpop.f32.mrf.mxu0
        %v2560 = vadd.f32 %v2471, %v2559
        %2561 = vmatmul.bf16.gmra.mxu0 %v1565
        %v2562 = vpop.f32.mrf.mxu0
        %v2563 = vadd.f32 %v2474, %v2562
        %v2564 = vpop.f32.mrf.mxu0
        %v2565 = vadd.f32 %v2476, %v2564
        %2566 = vmatmul.bf16.gmra.mxu0 %v1569
        %v2567 = vpop.f32.mrf.mxu0
        %v2568 = vadd.f32 %v2479, %v2567
        %v2569 = vpop.f32.mrf.mxu0
        %v2570 = vadd.f32 %v2481, %v2569
        %2571 = vmatmul.bf16.gmra.mxu0 %v1573
        %v2572 = vpop.f32.mrf.mxu0
        %v2573 = vadd.f32 %v2484, %v2572
        %v2574 = vpop.f32.mrf.mxu0
        %v2575 = vadd.f32 %v2486, %v2574
        %2576 = vmatmul.bf16.gmra.mxu0 %v1577
        %v2577 = vpop.f32.mrf.mxu0
        %v2578 = vadd.f32 %v2489, %v2577
        %v2579 = vpop.f32.mrf.mxu0
        %v2580 = vadd.f32 %v2491, %v2579
        %2581 = vmatmul.bf16.gmra.mxu0 %v1581
        %v2582 = vpop.f32.mrf.mxu0
        %v2583 = vadd.f32 %v2494, %v2582
        %v2584 = vpop.f32.mrf.mxu0
        %v2585 = vadd.f32 %v2496, %v2584
        %2586 = vmatmul.bf16.gmra.mxu0 %v1585
        %v2587 = vpop.f32.mrf.mxu0
        %v2588 = vadd.f32 %v2499, %v2587
        %v2589 = vpop.f32.mrf.mxu0
        %v2590 = vadd.f32 %v2501, %v2589
        %2591 = vmatmul.bf16.gmra.mxu0 %v1589
        %v2592 = vpop.f32.mrf.mxu0
        %v2593 = vadd.f32 %v2504, %v2592
        %v2594 = vpop.f32.mrf.mxu0
        %v2595 = vadd.f32 %v2506, %v2594
        %2596 = vmatmul.bf16.gmra.mxu0 %v1593
        %v2597 = vpop.f32.mrf.mxu0
        %v2598 = vadd.f32 %v2509, %v2597
        %v2599 = vpop.f32.mrf.mxu0
        %v2600 = vadd.f32 %v2511, %v2599
        %2601 = vmatmul.bf16.gmra.mxu0 %v1597
        %v2602 = vpop.f32.mrf.mxu0
        %v2603 = vadd.f32 %v2514, %v2602
        %v2604 = vpop.f32.mrf.mxu0
        %v2605 = vadd.f32 %v2516, %v2604
        %2606 = vmatmul.bf16.gmra.mxu0 %v1601
        %v2607 = vpop.f32.mrf.mxu0
        %v2608 = vadd.f32 %v2519, %v2607
        %v2609 = vpop.f32.mrf.mxu0
        %v2610 = vadd.f32 %v2521, %v2609
        %2611 = vmatmul.bf16.gmra.mxu0 %v1605
        %v2612 = vpop.f32.mrf.mxu0
        %v2613 = vadd.f32 %v2524, %v2612
        %v2614 = vpop.f32.mrf.mxu0
        %v2615 = vadd.f32 %v2526, %v2614
        %2616 = vmatmul.bf16.gmra.mxu0 %v1609
        %v2617 = vpop.f32.mrf.mxu0
        %v2618 = vadd.f32 %v2529, %v2617
        %v2619 = vpop.f32.mrf.mxu0
        %v2620 = vadd.f32 %v2531, %v2619
        %2621 = vmatmul.bf16.gmra.mxu0 %v1613
        %v2622 = vpop.f32.mrf.mxu0
        %v2623 = vadd.f32 %v2534, %v2622
        %v2624 = vpop.f32.mrf.mxu0
        %v2625 = vadd.f32 %v2536, %v2624
        %2626 = vmatmul.bf16.gmra.mxu0 %v1617
        %v2627 = vpop.f32.mrf.mxu0
        %v2628 = vadd.f32 %v2539, %v2627
        %v2629 = vpop.f32.mrf.mxu0
        %v2630 = vadd.f32 %v2541, %v2629
        %2631 = vdwg.mxu0
        %2632 = vmatpush.bf16.msra.mxu0 %v1944
        %2633 = vmatpush.bf16.msra.mxu0 %v1942
        %2634 = vmatpush.bf16.msra.mxu0 %v1940
        %2635 = vmatpush.bf16.msra.mxu0 %v1938
        %2636 = vmatpush.bf16.msra.mxu0 %v1936
        %2637 = vmatpush.bf16.msra.mxu0 %v1934
        %2638 = vmatpush.bf16.msra.mxu0 %v1932
        %2639 = vmatpush.bf16.msra.mxu0 %v1930
        %2640 = vmatmul.bf16.gmra.mxu0 %v1558
        %v2641 = vpop.f32.mrf.mxu0
        %v2642 = vadd.f32 %v2553, %v2641
        %v2643 = vpop.f32.mrf.mxu0
        %v2644 = vadd.f32 %v2555, %v2643
        %2645 = vmatmul.bf16.gmra.mxu0 %v1562
        %v2646 = vpop.f32.mrf.mxu0
        %v2647 = vadd.f32 %v2558, %v2646
        %v2648 = vpop.f32.mrf.mxu0
        %v2649 = vadd.f32 %v2560, %v2648
        %2650 = vmatmul.bf16.gmra.mxu0 %v1566
        %v2651 = vpop.f32.mrf.mxu0
        %v2652 = vadd.f32 %v2563, %v2651
        %v2653 = vpop.f32.mrf.mxu0
        %v2654 = vadd.f32 %v2565, %v2653
        %2655 = vmatmul.bf16.gmra.mxu0 %v1570
        %v2656 = vpop.f32.mrf.mxu0
        %v2657 = vadd.f32 %v2568, %v2656
        %v2658 = vpop.f32.mrf.mxu0
        %v2659 = vadd.f32 %v2570, %v2658
        %2660 = vmatmul.bf16.gmra.mxu0 %v1574
        %v2661 = vpop.f32.mrf.mxu0
        %v2662 = vadd.f32 %v2573, %v2661
        %v2663 = vpop.f32.mrf.mxu0
        %v2664 = vadd.f32 %v2575, %v2663
        %2665 = vmatmul.bf16.gmra.mxu0 %v1578
        %v2666 = vpop.f32.mrf.mxu0
        %v2667 = vadd.f32 %v2578, %v2666
        %v2668 = vpop.f32.mrf.mxu0
        %v2669 = vadd.f32 %v2580, %v2668
        %2670 = vmatmul.bf16.gmra.mxu0 %v1582
        %v2671 = vpop.f32.mrf.mxu0
        %v2672 = vadd.f32 %v2583, %v2671
        %v2673 = vpop.f32.mrf.mxu0
        %v2674 = vadd.f32 %v2585, %v2673
        %2675 = vmatmul.bf16.gmra.mxu0 %v1586
        %v2676 = vpop.f32.mrf.mxu0
        %v2677 = vadd.f32 %v2588, %v2676
        %v2678 = vpop.f32.mrf.mxu0
        %v2679 = vadd.f32 %v2590, %v2678
        %2680 = vmatmul.bf16.gmra.mxu0 %v1590
        %v2681 = vpop.f32.mrf.mxu0
        %v2682 = vadd.f32 %v2593, %v2681
        %v2683 = vpop.f32.mrf.mxu0
        %v2684 = vadd.f32 %v2595, %v2683
        %2685 = vmatmul.bf16.gmra.mxu0 %v1594
        %v2686 = vpop.f32.mrf.mxu0
        %v2687 = vadd.f32 %v2598, %v2686
        %v2688 = vpop.f32.mrf.mxu0
        %v2689 = vadd.f32 %v2600, %v2688
        %2690 = vmatmul.bf16.gmra.mxu0 %v1598
        %v2691 = vpop.f32.mrf.mxu0
        %v2692 = vadd.f32 %v2603, %v2691
        %v2693 = vpop.f32.mrf.mxu0
        %v2694 = vadd.f32 %v2605, %v2693
        %2695 = vmatmul.bf16.gmra.mxu0 %v1602
        %v2696 = vpop.f32.mrf.mxu0
        %v2697 = vadd.f32 %v2608, %v2696
        %v2698 = vpop.f32.mrf.mxu0
        %v2699 = vadd.f32 %v2610, %v2698
        %2700 = vmatmul.bf16.gmra.mxu0 %v1606
        %v2701 = vpop.f32.mrf.mxu0
        %v2702 = vadd.f32 %v2613, %v2701
        %v2703 = vpop.f32.mrf.mxu0
        %v2704 = vadd.f32 %v2615, %v2703
        %2705 = vmatmul.bf16.gmra.mxu0 %v1610
        %v2706 = vpop.f32.mrf.mxu0
        %v2707 = vadd.f32 %v2618, %v2706
        %v2708 = vpop.f32.mrf.mxu0
        %v2709 = vadd.f32 %v2620, %v2708
        %2710 = vmatmul.bf16.gmra.mxu0 %v1614
        %v2711 = vpop.f32.mrf.mxu0
        %v2712 = vadd.f32 %v2623, %v2711
        %v2713 = vpop.f32.mrf.mxu0
        %v2714 = vadd.f32 %v2625, %v2713
        %2715 = vmatmul.bf16.gmra.mxu0 %v1618
        %v2716 = vpop.f32.mrf.mxu0
        %v2717 = vadd.f32 %v2628, %v2716
        %v2718 = vpop.f32.mrf.mxu0
        %v2719 = vadd.f32 %v2630, %v2718
        %2720 = vdwg.mxu0
        %v2721 = vtanh.pop %v2286
        %v2722 = vtanh.pop %v2642
        %v2723 = vtanh.pop %v2288
        %v2724 = vtanh.pop %v2644
        %v2725 = vtanh.pop %v2291
        %v2726 = vtanh.pop %v2647
        %v2727 = vtanh.pop %v2293
        %v2728 = vtanh.pop %v2649
        %v2729 = vtanh.pop %v2296
        %v2730 = vtanh.pop %v2652
        %v2731 = vtanh.pop %v2298
        %v2732 = vtanh.pop %v2654
        %v2733 = vtanh.pop %v2301
        %v2734 = vtanh.pop %v2657
        %v2735 = vtanh.pop %v2303
        %v2736 = vtanh.pop %v2659
        %v2737 = vtanh.pop %v2306
        %v2738 = vtanh.pop %v2662
        %v2739 = vtanh.pop %v2308
        %v2740 = vtanh.pop %v2664
        %v2741 = vtanh.pop %v2311
        %v2742 = vtanh.pop %v2667
        %v2743 = vtanh.pop %v2313
        %v2744 = vtanh.pop %v2669
        %v2745 = vtanh.pop %v2316
        %v2746 = vtanh.pop %v2672
        %v2747 = vtanh.pop %v2318
        %v2748 = vtanh.pop %v2674
        %v2749 = vtanh.pop %v2321
        %v2750 = vtanh.pop %v2677
        %v2751 = vtanh.pop %v2323
        %v2752 = vtanh.pop %v2679
        %v2753 = vtanh.pop %v2326
        %v2754 = vtanh.pop %v2682
        %v2755 = vtanh.pop %v2328
        %v2756 = vtanh.pop %v2684
        %v2757 = vtanh.pop %v2331
        %v2758 = vtanh.pop %v2687
        %v2759 = vtanh.pop %v2333
        %v2760 = vtanh.pop %v2689
        %v2761 = vtanh.pop %v2336
        %v2762 = vtanh.pop %v2692
        %v2763 = vtanh.pop %v2338
        %v2764 = vtanh.pop %v2694
        %v2765 = vtanh.pop %v2341
        %v2766 = vtanh.pop %v2697
        %v2767 = vtanh.pop %v2343
        %v2768 = vtanh.pop %v2699
        %v2769 = vtanh.pop %v2346
        %v2770 = vtanh.pop %v2702
        %v2771 = vtanh.pop %v2348
        %v2772 = vtanh.pop %v2704
        %v2773 = vtanh.pop %v2351
        %v2774 = vtanh.pop %v2707
        %v2775 = vtanh.pop %v2353
        %v2776 = vtanh.pop %v2709
        %v2777 = vtanh.pop %v2356
        %v2778 = vtanh.pop %v2712
        %v2779 = vtanh.pop %v2358
        %v2780 = vtanh.pop %v2714
        %v2781 = vtanh.pop %v2361
        %v2782 = vtanh.pop %v2717
        %v2783 = vtanh.pop %v2363
        %v2784 = vtanh.pop %v2719
        %v2785 = vpack.c.bf16 %v2723, %v2721
        %v2786 = vpack.c.bf16 %v2724, %v2722
        %v2787 = vpack.c.bf16 %v2727, %v2725
        %v2788 = vpack.c.bf16 %v2728, %v2726
        %v2789 = vpack.c.bf16 %v2731, %v2729
        %v2790 = vpack.c.bf16 %v2732, %v2730
        %v2791 = vpack.c.bf16 %v2735, %v2733
        %v2792 = vpack.c.bf16 %v2736, %v2734
        %v2793 = vpack.c.bf16 %v2739, %v2737
        %v2794 = vpack.c.bf16 %v2740, %v2738
        %v2795 = vpack.c.bf16 %v2743, %v2741
        %v2796 = vpack.c.bf16 %v2744, %v2742
        %v2797 = vpack.c.bf16 %v2747, %v2745
        %v2798 = vpack.c.bf16 %v2748, %v2746
        %v2799 = vpack.c.bf16 %v2751, %v2749
        %v2800 = vpack.c.bf16 %v2752, %v2750
        %v2801 = vpack.c.bf16 %v2755, %v2753
        %v2802 = vpack.c.bf16 %v2756, %v2754
        %v2803 = vpack.c.bf16 %v2759, %v2757
        %v2804 = vpack.c.bf16 %v2760, %v2758
        %v2805 = vpack.c.bf16 %v2763, %v2761
        %v2806 = vpack.c.bf16 %v2764, %v2762
        %v2807 = vpack.c.bf16 %v2767, %v2765
        %v2808 = vpack.c.bf16 %v2768, %v2766
        %v2809 = vpack.c.bf16 %v2771, %v2769
        %v2810 = vpack.c.bf16 %v2772, %v2770
        %v2811 = vpack.c.bf16 %v2775, %v2773
        %v2812 = vpack.c.bf16 %v2776, %v2774
        %v2813 = vpack.c.bf16 %v2779, %v2777
        %v2814 = vpack.c.bf16 %v2780, %v2778
        %v2815 = vpack.c.bf16 %v2783, %v2781
        %v2816 = vpack.c.bf16 %v2784, %v2782
        %v2817 = vld [vmem:[#allocation8] sm:$0xff]
        %v2818 = vld [vmem:[#allocation8 + $0x8] sm:$0xff]
        %v2819 = vld [vmem:[#allocation8 + $0x10] sm:$0xff]
        %v2820 = vld [vmem:[#allocation8 + $0x18] sm:$0xff]
        %v2821 = vld [vmem:[#allocation8 + $0x20] sm:$0xff]
        %v2822 = vld [vmem:[#allocation8 + $0x28] sm:$0xff]
        %v2823 = vld [vmem:[#allocation8 + $0x30] sm:$0xff]
        %v2824 = vld [vmem:[#allocation8 + $0x38] sm:$0xff]
        %v2825 = vld [vmem:[#allocation8 + $0x40] sm:$0xff]
        %v2826 = vld [vmem:[#allocation8 + $0x48] sm:$0xff]
        %v2827 = vld [vmem:[#allocation8 + $0x50] sm:$0xff]
        %v2828 = vld [vmem:[#allocation8 + $0x58] sm:$0xff]
        %v2829 = vld [vmem:[#allocation8 + $0x60] sm:$0xff]
        %v2830 = vld [vmem:[#allocation8 + $0x68] sm:$0xff]
        %v2831 = vld [vmem:[#allocation8 + $0x70] sm:$0xff]
        %v2832 = vld [vmem:[#allocation8 + $0x78] sm:$0xff]
        %v2833 = vld [vmem:[#allocation8 + $0x80] sm:$0xff]
        %v2834 = vld [vmem:[#allocation8 + $0x88] sm:$0xff]
        %v2835 = vld [vmem:[#allocation8 + $0x90] sm:$0xff]
        %v2836 = vld [vmem:[#allocation8 + $0x98] sm:$0xff]
        %v2837 = vld [vmem:[#allocation8 + $0xa0] sm:$0xff]
        %v2838 = vld [vmem:[#allocation8 + $0xa8] sm:$0xff]
        %v2839 = vld [vmem:[#allocation8 + $0xb0] sm:$0xff]
        %v2840 = vld [vmem:[#allocation8 + $0xb8] sm:$0xff]
        %v2841 = vld [vmem:[#allocation8 + $0xc0] sm:$0xff]
        %v2842 = vld [vmem:[#allocation8 + $0xc8] sm:$0xff]
        %v2843 = vld [vmem:[#allocation8 + $0xd0] sm:$0xff]
        %v2844 = vld [vmem:[#allocation8 + $0xd8] sm:$0xff]
        %v2845 = vld [vmem:[#allocation8 + $0xe0] sm:$0xff]
        %v2846 = vld [vmem:[#allocation8 + $0xe8] sm:$0xff]
        %v2847 = vld [vmem:[#allocation8 + $0xf0] sm:$0xff]
        %v2848 = vld [vmem:[#allocation8 + $0xf8] sm:$0xff]
        %v2849 = vld [vmem:[#allocation10] sm:$0x3]
        %v2851 = vperm.slane %v2849, 0
        %v2852 = vperm.slane %v2849, 1
        %v2887 = vunpack.c.l.b16 %v2817
        %v2888 = vunpack.c.h.b16 %v2817
        %v2889 = vunpack.c.l.b16 %v2818
        %v2890 = vunpack.c.h.b16 %v2818
        %v2891 = vunpack.c.l.b16 %v2819
        %v2892 = vunpack.c.h.b16 %v2819
        %v2893 = vunpack.c.l.b16 %v2820
        %v2894 = vunpack.c.h.b16 %v2820
        %v2895 = vunpack.c.l.b16 %v2821
        %v2896 = vunpack.c.h.b16 %v2821
        %v2897 = vunpack.c.l.b16 %v2822
        %v2898 = vunpack.c.h.b16 %v2822
        %v2899 = vunpack.c.l.b16 %v2823
        %v2900 = vunpack.c.h.b16 %v2823
        %v2901 = vunpack.c.l.b16 %v2824
        %v2902 = vunpack.c.h.b16 %v2824
        %v2903 = vunpack.c.l.b16 %v2825
        %v2904 = vunpack.c.h.b16 %v2825
        %v2905 = vunpack.c.l.b16 %v2826
        %v2906 = vunpack.c.h.b16 %v2826
        %v2907 = vunpack.c.l.b16 %v2827
        %v2908 = vunpack.c.h.b16 %v2827
        %v2909 = vunpack.c.l.b16 %v2828
        %v2910 = vunpack.c.h.b16 %v2828
        %v2911 = vunpack.c.l.b16 %v2829
        %v2912 = vunpack.c.h.b16 %v2829
        %v2913 = vunpack.c.l.b16 %v2830
        %v2914 = vunpack.c.h.b16 %v2830
        %v2915 = vunpack.c.l.b16 %v2831
        %v2916 = vunpack.c.h.b16 %v2831
        %v2917 = vunpack.c.l.b16 %v2832
        %v2918 = vunpack.c.h.b16 %v2832
        %v2919 = vunpack.c.l.b16 %v2833
        %v2920 = vunpack.c.h.b16 %v2833
        %v2921 = vunpack.c.l.b16 %v2834
        %v2922 = vunpack.c.h.b16 %v2834
        %v2923 = vunpack.c.l.b16 %v2835
        %v2924 = vunpack.c.h.b16 %v2835
        %v2925 = vunpack.c.l.b16 %v2836
        %v2926 = vunpack.c.h.b16 %v2836
        %v2927 = vunpack.c.l.b16 %v2837
        %v2928 = vunpack.c.h.b16 %v2837
        %v2929 = vunpack.c.l.b16 %v2838
        %v2930 = vunpack.c.h.b16 %v2838
        %v2931 = vunpack.c.l.b16 %v2839
        %v2932 = vunpack.c.h.b16 %v2839
        %v2933 = vunpack.c.l.b16 %v2840
        %v2934 = vunpack.c.h.b16 %v2840
        %v2935 = vunpack.c.l.b16 %v2841
        %v2936 = vunpack.c.h.b16 %v2841
        %v2937 = vunpack.c.l.b16 %v2842
        %v2938 = vunpack.c.h.b16 %v2842
        %v2939 = vunpack.c.l.b16 %v2843
        %v2940 = vunpack.c.h.b16 %v2843
        %v2941 = vunpack.c.l.b16 %v2844
        %v2942 = vunpack.c.h.b16 %v2844
        %v2943 = vunpack.c.l.b16 %v2845
        %v2944 = vunpack.c.h.b16 %v2845
        %v2945 = vunpack.c.l.b16 %v2846
        %v2946 = vunpack.c.h.b16 %v2846
        %v2947 = vunpack.c.l.b16 %v2847
        %v2948 = vunpack.c.h.b16 %v2847
        %v2949 = vunpack.c.l.b16 %v2848
        %v2950 = vunpack.c.h.b16 %v2848
        %v2951 = vpack.c.b16 %v2889, %v2887
        %v2952 = vpack.c.b16 %v2890, %v2888
        %v2953 = vpack.c.b16 %v2893, %v2891
        %v2954 = vpack.c.b16 %v2894, %v2892
        %v2955 = vpack.c.b16 %v2897, %v2895
        %v2956 = vpack.c.b16 %v2898, %v2896
        %v2957 = vpack.c.b16 %v2901, %v2899
        %v2958 = vpack.c.b16 %v2902, %v2900
        %v2959 = vpack.c.b16 %v2905, %v2903
        %v2960 = vpack.c.b16 %v2906, %v2904
        %v2961 = vpack.c.b16 %v2909, %v2907
        %v2962 = vpack.c.b16 %v2910, %v2908
        %v2963 = vpack.c.b16 %v2913, %v2911
        %v2964 = vpack.c.b16 %v2914, %v2912
        %v2965 = vpack.c.b16 %v2917, %v2915
        %v2966 = vpack.c.b16 %v2918, %v2916
        %v2967 = vpack.c.b16 %v2921, %v2919
        %v2968 = vpack.c.b16 %v2922, %v2920
        %v2969 = vpack.c.b16 %v2925, %v2923
        %v2970 = vpack.c.b16 %v2926, %v2924
        %v2971 = vpack.c.b16 %v2929, %v2927
        %v2972 = vpack.c.b16 %v2930, %v2928
        %v2973 = vpack.c.b16 %v2933, %v2931
        %v2974 = vpack.c.b16 %v2934, %v2932
        %v2975 = vpack.c.b16 %v2937, %v2935
        %v2976 = vpack.c.b16 %v2938, %v2936
        %v2977 = vpack.c.b16 %v2941, %v2939
        %v2978 = vpack.c.b16 %v2942, %v2940
        %v2979 = vpack.c.b16 %v2945, %v2943
        %v2980 = vpack.c.b16 %v2946, %v2944
        %v2981 = vpack.c.b16 %v2949, %v2947
        %v2982 = vpack.c.b16 %v2950, %v2948
        %3015 = vmatpush.bf16.msra.mxu0 %v2965
        %3016 = vmatpush.bf16.msra.mxu0 %v2963
        %3017 = vmatpush.bf16.msra.mxu0 %v2961
        %3018 = vmatpush.bf16.msra.mxu0 %v2959
        %3019 = vmatpush.bf16.msra.mxu0 %v2957
        %3020 = vmatpush.bf16.msra.mxu0 %v2955
        %3021 = vmatpush.bf16.msra.mxu0 %v2953
        %3022 = vmatpush.bf16.msra.mxu0 %v2951
        %3023 = vmatmul.bf16.gmra.mxu0 %v2785
        %v3024 = vpop.f32.mrf.mxu0
        %v3025 = vadd.f32 %v2851, %v3024
        %v3026 = vpop.f32.mrf.mxu0
        %v3027 = vadd.f32 %v2851, %v3026
        %3028 = vmatmul.bf16.gmra.mxu0 %v2787
        %v3029 = vpop.f32.mrf.mxu0
        %v3030 = vadd.f32 %v2851, %v3029
        %v3031 = vpop.f32.mrf.mxu0
        %v3032 = vadd.f32 %v2851, %v3031
        %3033 = vmatmul.bf16.gmra.mxu0 %v2789
        %v3034 = vpop.f32.mrf.mxu0
        %v3035 = vadd.f32 %v2851, %v3034
        %v3036 = vpop.f32.mrf.mxu0
        %v3037 = vadd.f32 %v2851, %v3036
        %3038 = vmatmul.bf16.gmra.mxu0 %v2791
        %v3039 = vpop.f32.mrf.mxu0
        %v3040 = vadd.f32 %v2851, %v3039
        %v3041 = vpop.f32.mrf.mxu0
        %v3042 = vadd.f32 %v2851, %v3041
        %3043 = vmatmul.bf16.gmra.mxu0 %v2793
        %v3044 = vpop.f32.mrf.mxu0
        %v3045 = vadd.f32 %v2851, %v3044
        %v3046 = vpop.f32.mrf.mxu0
        %v3047 = vadd.f32 %v2851, %v3046
        %3048 = vmatmul.bf16.gmra.mxu0 %v2795
        %v3049 = vpop.f32.mrf.mxu0
        %v3050 = vadd.f32 %v2851, %v3049
        %v3051 = vpop.f32.mrf.mxu0
        %v3052 = vadd.f32 %v2851, %v3051
        %3053 = vmatmul.bf16.gmra.mxu0 %v2797
        %v3054 = vpop.f32.mrf.mxu0
        %v3055 = vadd.f32 %v2851, %v3054
        %v3056 = vpop.f32.mrf.mxu0
        %v3057 = vadd.f32 %v2851, %v3056
        %3058 = vmatmul.bf16.gmra.mxu0 %v2799
        %v3059 = vpop.f32.mrf.mxu0
        %v3060 = vadd.f32 %v2851, %v3059
        %v3061 = vpop.f32.mrf.mxu0
        %v3062 = vadd.f32 %v2851, %v3061
        %3063 = vmatmul.bf16.gmra.mxu0 %v2801
        %v3064 = vpop.f32.mrf.mxu0
        %v3065 = vadd.f32 %v2851, %v3064
        %v3066 = vpop.f32.mrf.mxu0
        %v3067 = vadd.f32 %v2851, %v3066
        %3068 = vmatmul.bf16.gmra.mxu0 %v2803
        %v3069 = vpop.f32.mrf.mxu0
        %v3070 = vadd.f32 %v2851, %v3069
        %v3071 = vpop.f32.mrf.mxu0
        %v3072 = vadd.f32 %v2851, %v3071
        %3073 = vmatmul.bf16.gmra.mxu0 %v2805
        %v3074 = vpop.f32.mrf.mxu0
        %v3075 = vadd.f32 %v2851, %v3074
        %v3076 = vpop.f32.mrf.mxu0
        %v3077 = vadd.f32 %v2851, %v3076
        %3078 = vmatmul.bf16.gmra.mxu0 %v2807
        %v3079 = vpop.f32.mrf.mxu0
        %v3080 = vadd.f32 %v2851, %v3079
        %v3081 = vpop.f32.mrf.mxu0
        %v3082 = vadd.f32 %v2851, %v3081
        %3083 = vmatmul.bf16.gmra.mxu0 %v2809
        %v3084 = vpop.f32.mrf.mxu0
        %v3085 = vadd.f32 %v2851, %v3084
        %v3086 = vpop.f32.mrf.mxu0
        %v3087 = vadd.f32 %v2851, %v3086
        %3088 = vmatmul.bf16.gmra.mxu0 %v2811
        %v3089 = vpop.f32.mrf.mxu0
        %v3090 = vadd.f32 %v2851, %v3089
        %v3091 = vpop.f32.mrf.mxu0
        %v3092 = vadd.f32 %v2851, %v3091
        %3093 = vmatmul.bf16.gmra.mxu0 %v2813
        %v3094 = vpop.f32.mrf.mxu0
        %v3095 = vadd.f32 %v2851, %v3094
        %v3096 = vpop.f32.mrf.mxu0
        %v3097 = vadd.f32 %v2851, %v3096
        %3098 = vmatmul.bf16.gmra.mxu0 %v2815
        %v3099 = vpop.f32.mrf.mxu0
        %v3100 = vadd.f32 %v2851, %v3099
        %v3101 = vpop.f32.mrf.mxu0
        %v3102 = vadd.f32 %v2851, %v3101
        %3103 = vdwg.mxu0
        %3104 = vmatpush.bf16.msra.mxu0 %v2981
        %3105 = vmatpush.bf16.msra.mxu0 %v2979
        %3106 = vmatpush.bf16.msra.mxu0 %v2977
        %3107 = vmatpush.bf16.msra.mxu0 %v2975
        %3108 = vmatpush.bf16.msra.mxu0 %v2973
        %3109 = vmatpush.bf16.msra.mxu0 %v2971
        %3110 = vmatpush.bf16.msra.mxu0 %v2969
        %3111 = vmatpush.bf16.msra.mxu0 %v2967
        %3112 = vmatmul.bf16.gmra.mxu0 %v2786
        %v3113 = vpop.f32.mrf.mxu0
        %v3114 = vadd.f32 %v3025, %v3113
        %v3115 = vpop.f32.mrf.mxu0
        %v3116 = vadd.f32 %v3027, %v3115
        %3117 = vmatmul.bf16.gmra.mxu0 %v2788
        %v3118 = vpop.f32.mrf.mxu0
        %v3119 = vadd.f32 %v3030, %v3118
        %v3120 = vpop.f32.mrf.mxu0
        %v3121 = vadd.f32 %v3032, %v3120
        %3122 = vmatmul.bf16.gmra.mxu0 %v2790
        %v3123 = vpop.f32.mrf.mxu0
        %v3124 = vadd.f32 %v3035, %v3123
        %v3125 = vpop.f32.mrf.mxu0
        %v3126 = vadd.f32 %v3037, %v3125
        %3127 = vmatmul.bf16.gmra.mxu0 %v2792
        %v3128 = vpop.f32.mrf.mxu0
        %v3129 = vadd.f32 %v3040, %v3128
        %v3130 = vpop.f32.mrf.mxu0
        %v3131 = vadd.f32 %v3042, %v3130
        %3132 = vmatmul.bf16.gmra.mxu0 %v2794
        %v3133 = vpop.f32.mrf.mxu0
        %v3134 = vadd.f32 %v3045, %v3133
        %v3135 = vpop.f32.mrf.mxu0
        %v3136 = vadd.f32 %v3047, %v3135
        %3137 = vmatmul.bf16.gmra.mxu0 %v2796
        %v3138 = vpop.f32.mrf.mxu0
        %v3139 = vadd.f32 %v3050, %v3138
        %v3140 = vpop.f32.mrf.mxu0
        %v3141 = vadd.f32 %v3052, %v3140
        %3142 = vmatmul.bf16.gmra.mxu0 %v2798
        %v3143 = vpop.f32.mrf.mxu0
        %v3144 = vadd.f32 %v3055, %v3143
        %v3145 = vpop.f32.mrf.mxu0
        %v3146 = vadd.f32 %v3057, %v3145
        %3147 = vmatmul.bf16.gmra.mxu0 %v2800
        %v3148 = vpop.f32.mrf.mxu0
        %v3149 = vadd.f32 %v3060, %v3148
        %v3150 = vpop.f32.mrf.mxu0
        %v3151 = vadd.f32 %v3062, %v3150
        %3152 = vmatmul.bf16.gmra.mxu0 %v2802
        %v3153 = vpop.f32.mrf.mxu0
        %v3154 = vadd.f32 %v3065, %v3153
        %v3155 = vpop.f32.mrf.mxu0
        %v3156 = vadd.f32 %v3067, %v3155
        %3157 = vmatmul.bf16.gmra.mxu0 %v2804
        %v3158 = vpop.f32.mrf.mxu0
        %v3159 = vadd.f32 %v3070, %v3158
        %v3160 = vpop.f32.mrf.mxu0
        %v3161 = vadd.f32 %v3072, %v3160
        %3162 = vmatmul.bf16.gmra.mxu0 %v2806
        %v3163 = vpop.f32.mrf.mxu0
        %v3164 = vadd.f32 %v3075, %v3163
        %v3165 = vpop.f32.mrf.mxu0
        %v3166 = vadd.f32 %v3077, %v3165
        %3167 = vmatmul.bf16.gmra.mxu0 %v2808
        %v3168 = vpop.f32.mrf.mxu0
        %v3169 = vadd.f32 %v3080, %v3168
        %v3170 = vpop.f32.mrf.mxu0
        %v3171 = vadd.f32 %v3082, %v3170
        %3172 = vmatmul.bf16.gmra.mxu0 %v2810
        %v3173 = vpop.f32.mrf.mxu0
        %v3174 = vadd.f32 %v3085, %v3173
        %v3175 = vpop.f32.mrf.mxu0
        %v3176 = vadd.f32 %v3087, %v3175
        %3177 = vmatmul.bf16.gmra.mxu0 %v2812
        %v3178 = vpop.f32.mrf.mxu0
        %v3179 = vadd.f32 %v3090, %v3178
        %v3180 = vpop.f32.mrf.mxu0
        %v3181 = vadd.f32 %v3092, %v3180
        %3182 = vmatmul.bf16.gmra.mxu0 %v2814
        %v3183 = vpop.f32.mrf.mxu0
        %v3184 = vadd.f32 %v3095, %v3183
        %v3185 = vpop.f32.mrf.mxu0
        %v3186 = vadd.f32 %v3097, %v3185
        %3187 = vmatmul.bf16.gmra.mxu0 %v2816
        %v3188 = vpop.f32.mrf.mxu0
        %v3189 = vadd.f32 %v3100, %v3188
        %v3190 = vpop.f32.mrf.mxu0
        %v3191 = vadd.f32 %v3102, %v3190
        %3192 = vdwg.mxu0
        %3193 = vmatpush.bf16.msra.mxu0 %v2966
        %3194 = vmatpush.bf16.msra.mxu0 %v2964
        %3195 = vmatpush.bf16.msra.mxu0 %v2962
        %3196 = vmatpush.bf16.msra.mxu0 %v2960
        %3197 = vmatpush.bf16.msra.mxu0 %v2958
        %3198 = vmatpush.bf16.msra.mxu0 %v2956
        %3199 = vmatpush.bf16.msra.mxu0 %v2954
        %3200 = vmatpush.bf16.msra.mxu0 %v2952
        %3201 = vmatmul.bf16.gmra.mxu0 %v2785
        %v3202 = vpop.f32.mrf.mxu0
        %v3203 = vadd.f32 %v2852, %v3202
        %v3204 = vpop.f32.mrf.mxu0
        %v3205 = vadd.f32 %v2852, %v3204
        %3206 = vmatmul.bf16.gmra.mxu0 %v2787
        %v3207 = vpop.f32.mrf.mxu0
        %v3208 = vadd.f32 %v2852, %v3207
        %v3209 = vpop.f32.mrf.mxu0
        %v3210 = vadd.f32 %v2852, %v3209
        %3211 = vmatmul.bf16.gmra.mxu0 %v2789
        %v3212 = vpop.f32.mrf.mxu0
        %v3213 = vadd.f32 %v2852, %v3212
        %v3214 = vpop.f32.mrf.mxu0
        %v3215 = vadd.f32 %v2852, %v3214
        %3216 = vmatmul.bf16.gmra.mxu0 %v2791
        %v3217 = vpop.f32.mrf.mxu0
        %v3218 = vadd.f32 %v2852, %v3217
        %v3219 = vpop.f32.mrf.mxu0
        %v3220 = vadd.f32 %v2852, %v3219
        %3221 = vmatmul.bf16.gmra.mxu0 %v2793
        %v3222 = vpop.f32.mrf.mxu0
        %v3223 = vadd.f32 %v2852, %v3222
        %v3224 = vpop.f32.mrf.mxu0
        %v3225 = vadd.f32 %v2852, %v3224
        %3226 = vmatmul.bf16.gmra.mxu0 %v2795
        %v3227 = vpop.f32.mrf.mxu0
        %v3228 = vadd.f32 %v2852, %v3227
        %v3229 = vpop.f32.mrf.mxu0
        %v3230 = vadd.f32 %v2852, %v3229
        %3231 = vmatmul.bf16.gmra.mxu0 %v2797
        %v3232 = vpop.f32.mrf.mxu0
        %v3233 = vadd.f32 %v2852, %v3232
        %v3234 = vpop.f32.mrf.mxu0
        %v3235 = vadd.f32 %v2852, %v3234
        %3236 = vmatmul.bf16.gmra.mxu0 %v2799
        %v3237 = vpop.f32.mrf.mxu0
        %v3238 = vadd.f32 %v2852, %v3237
        %v3239 = vpop.f32.mrf.mxu0
        %v3240 = vadd.f32 %v2852, %v3239
        %3241 = vmatmul.bf16.gmra.mxu0 %v2801
        %v3242 = vpop.f32.mrf.mxu0
        %v3243 = vadd.f32 %v2852, %v3242
        %v3244 = vpop.f32.mrf.mxu0
        %v3245 = vadd.f32 %v2852, %v3244
        %3246 = vmatmul.bf16.gmra.mxu0 %v2803
        %v3247 = vpop.f32.mrf.mxu0
        %v3248 = vadd.f32 %v2852, %v3247
        %v3249 = vpop.f32.mrf.mxu0
        %v3250 = vadd.f32 %v2852, %v3249
        %3251 = vmatmul.bf16.gmra.mxu0 %v2805
        %v3252 = vpop.f32.mrf.mxu0
        %v3253 = vadd.f32 %v2852, %v3252
        %v3254 = vpop.f32.mrf.mxu0
        %v3255 = vadd.f32 %v2852, %v3254
        %3256 = vmatmul.bf16.gmra.mxu0 %v2807
        %v3257 = vpop.f32.mrf.mxu0
        %v3258 = vadd.f32 %v2852, %v3257
        %v3259 = vpop.f32.mrf.mxu0
        %v3260 = vadd.f32 %v2852, %v3259
        %3261 = vmatmul.bf16.gmra.mxu0 %v2809
        %v3262 = vpop.f32.mrf.mxu0
        %v3263 = vadd.f32 %v2852, %v3262
        %v3264 = vpop.f32.mrf.mxu0
        %v3265 = vadd.f32 %v2852, %v3264
        %3266 = vmatmul.bf16.gmra.mxu0 %v2811
        %v3267 = vpop.f32.mrf.mxu0
        %v3268 = vadd.f32 %v2852, %v3267
        %v3269 = vpop.f32.mrf.mxu0
        %v3270 = vadd.f32 %v2852, %v3269
        %3271 = vmatmul.bf16.gmra.mxu0 %v2813
        %v3272 = vpop.f32.mrf.mxu0
        %v3273 = vadd.f32 %v2852, %v3272
        %v3274 = vpop.f32.mrf.mxu0
        %v3275 = vadd.f32 %v2852, %v3274
        %3276 = vmatmul.bf16.gmra.mxu0 %v2815
        %v3277 = vpop.f32.mrf.mxu0
        %v3278 = vadd.f32 %v2852, %v3277
        %v3279 = vpop.f32.mrf.mxu0
        %v3280 = vadd.f32 %v2852, %v3279
        %3281 = vdwg.mxu0
        %3282 = vmatpush.bf16.msra.mxu0 %v2982
        %3283 = vmatpush.bf16.msra.mxu0 %v2980
        %3284 = vmatpush.bf16.msra.mxu0 %v2978
        %3285 = vmatpush.bf16.msra.mxu0 %v2976
        %3286 = vmatpush.bf16.msra.mxu0 %v2974
        %3287 = vmatpush.bf16.msra.mxu0 %v2972
        %3288 = vmatpush.bf16.msra.mxu0 %v2970
        %3289 = vmatpush.bf16.msra.mxu0 %v2968
        %3290 = vmatmul.bf16.gmra.mxu0 %v2786
        %v3291 = vpop.f32.mrf.mxu0
        %v3292 = vadd.f32 %v3203, %v3291
        %v3293 = vpop.f32.mrf.mxu0
        %v3294 = vadd.f32 %v3205, %v3293
        %3295 = vmatmul.bf16.gmra.mxu0 %v2788
        %v3296 = vpop.f32.mrf.mxu0
        %v3297 = vadd.f32 %v3208, %v3296
        %v3298 = vpop.f32.mrf.mxu0
        %v3299 = vadd.f32 %v3210, %v3298
        %3300 = vmatmul.bf16.gmra.mxu0 %v2790
        %v3301 = vpop.f32.mrf.mxu0
        %v3302 = vadd.f32 %v3213, %v3301
        %v3303 = vpop.f32.mrf.mxu0
        %v3304 = vadd.f32 %v3215, %v3303
        %3305 = vmatmul.bf16.gmra.mxu0 %v2792
        %v3306 = vpop.f32.mrf.mxu0
        %v3307 = vadd.f32 %v3218, %v3306
        %v3308 = vpop.f32.mrf.mxu0
        %v3309 = vadd.f32 %v3220, %v3308
        %3310 = vmatmul.bf16.gmra.mxu0 %v2794
        %v3311 = vpop.f32.mrf.mxu0
        %v3312 = vadd.f32 %v3223, %v3311
        %v3313 = vpop.f32.mrf.mxu0
        %v3314 = vadd.f32 %v3225, %v3313
        %3315 = vmatmul.bf16.gmra.mxu0 %v2796
        %v3316 = vpop.f32.mrf.mxu0
        %v3317 = vadd.f32 %v3228, %v3316
        %v3318 = vpop.f32.mrf.mxu0
        %v3319 = vadd.f32 %v3230, %v3318
        %3320 = vmatmul.bf16.gmra.mxu0 %v2798
        %v3321 = vpop.f32.mrf.mxu0
        %v3322 = vadd.f32 %v3233, %v3321
        %v3323 = vpop.f32.mrf.mxu0
        %v3324 = vadd.f32 %v3235, %v3323
        %3325 = vmatmul.bf16.gmra.mxu0 %v2800
        %v3326 = vpop.f32.mrf.mxu0
        %v3327 = vadd.f32 %v3238, %v3326
        %v3328 = vpop.f32.mrf.mxu0
        %v3329 = vadd.f32 %v3240, %v3328
        %3330 = vmatmul.bf16.gmra.mxu0 %v2802
        %v3331 = vpop.f32.mrf.mxu0
        %v3332 = vadd.f32 %v3243, %v3331
        %v3333 = vpop.f32.mrf.mxu0
        %v3334 = vadd.f32 %v3245, %v3333
        %3335 = vmatmul.bf16.gmra.mxu0 %v2804
        %v3336 = vpop.f32.mrf.mxu0
        %v3337 = vadd.f32 %v3248, %v3336
        %v3338 = vpop.f32.mrf.mxu0
        %v3339 = vadd.f32 %v3250, %v3338
        %3340 = vmatmul.bf16.gmra.mxu0 %v2806
        %v3341 = vpop.f32.mrf.mxu0
        %v3342 = vadd.f32 %v3253, %v3341
        %v3343 = vpop.f32.mrf.mxu0
        %v3344 = vadd.f32 %v3255, %v3343
        %3345 = vmatmul.bf16.gmra.mxu0 %v2808
        %v3346 = vpop.f32.mrf.mxu0
        %v3347 = vadd.f32 %v3258, %v3346
        %v3348 = vpop.f32.mrf.mxu0
        %v3349 = vadd.f32 %v3260, %v3348
        %3350 = vmatmul.bf16.gmra.mxu0 %v2810
        %v3351 = vpop.f32.mrf.mxu0
        %v3352 = vadd.f32 %v3263, %v3351
        %v3353 = vpop.f32.mrf.mxu0
        %v3354 = vadd.f32 %v3265, %v3353
        %3355 = vmatmul.bf16.gmra.mxu0 %v2812
        %v3356 = vpop.f32.mrf.mxu0
        %v3357 = vadd.f32 %v3268, %v3356
        %v3358 = vpop.f32.mrf.mxu0
        %v3359 = vadd.f32 %v3270, %v3358
        %3360 = vmatmul.bf16.gmra.mxu0 %v2814
        %v3361 = vpop.f32.mrf.mxu0
        %v3362 = vadd.f32 %v3273, %v3361
        %v3363 = vpop.f32.mrf.mxu0
        %v3364 = vadd.f32 %v3275, %v3363
        %3365 = vmatmul.bf16.gmra.mxu0 %v2816
        %v3366 = vpop.f32.mrf.mxu0
        %v3367 = vadd.f32 %v3278, %v3366
        %v3368 = vpop.f32.mrf.mxu0
        %v3369 = vadd.f32 %v3280, %v3368
        %3370 = vdwg.mxu0
        %v3371 = vld [vmem:[%s503] sm:$0xff]
        %v3372 = vld [vmem:[%s503 + $0x8] sm:$0xff]
        %v3373 = vld [vmem:[%s503 + $0x10] sm:$0xff]
        %v3374 = vld [vmem:[%s503 + $0x18] sm:$0xff]
        %v3375 = vld [vmem:[%s503 + $0x20] sm:$0xff]
        %v3376 = vld [vmem:[%s503 + $0x28] sm:$0xff]
        %v3377 = vld [vmem:[%s503 + $0x30] sm:$0xff]
        %v3378 = vld [vmem:[%s503 + $0x38] sm:$0xff]
        %v3379 = vld [vmem:[%s503 + $0x40] sm:$0xff]
        %v3380 = vld [vmem:[%s503 + $0x48] sm:$0xff]
        %v3381 = vld [vmem:[%s503 + $0x50] sm:$0xff]
        %v3382 = vld [vmem:[%s503 + $0x58] sm:$0xff]
        %v3383 = vld [vmem:[%s503 + $0x60] sm:$0xff]
        %v3384 = vld [vmem:[%s503 + $0x68] sm:$0xff]
        %v3385 = vld [vmem:[%s503 + $0x70] sm:$0xff]
        %v3386 = vld [vmem:[%s503 + $0x78] sm:$0xff]
        %v3387 = vld [vmem:[%s503 + $0x80] sm:$0xff]
        %v3388 = vld [vmem:[%s503 + $0x88] sm:$0xff]
        %v3389 = vld [vmem:[%s503 + $0x90] sm:$0xff]
        %v3390 = vld [vmem:[%s503 + $0x98] sm:$0xff]
        %v3391 = vld [vmem:[%s503 + $0xa0] sm:$0xff]
        %v3392 = vld [vmem:[%s503 + $0xa8] sm:$0xff]
        %v3393 = vld [vmem:[%s503 + $0xb0] sm:$0xff]
        %v3394 = vld [vmem:[%s503 + $0xb8] sm:$0xff]
        %v3395 = vld [vmem:[%s503 + $0xc0] sm:$0xff]
        %v3396 = vld [vmem:[%s503 + $0xc8] sm:$0xff]
        %v3397 = vld [vmem:[%s503 + $0xd0] sm:$0xff]
        %v3398 = vld [vmem:[%s503 + $0xd8] sm:$0xff]
        %v3399 = vld [vmem:[%s503 + $0xe0] sm:$0xff]
        %v3400 = vld [vmem:[%s503 + $0xe8] sm:$0xff]
        %v3401 = vld [vmem:[%s503 + $0xf0] sm:$0xff]
        %v3402 = vld [vmem:[%s503 + $0xf8] sm:$0xff]
        %v3403 = vmul.f32 %v3292, 0.5
        %v3404 = vmul.f32 %v3294, 0.5
        %v3405 = vmul.f32 %v3297, 0.5
        %v3406 = vmul.f32 %v3299, 0.5
        %v3407 = vmul.f32 %v3302, 0.5
        %v3408 = vmul.f32 %v3304, 0.5
        %v3409 = vmul.f32 %v3307, 0.5
        %v3410 = vmul.f32 %v3309, 0.5
        %v3411 = vmul.f32 %v3312, 0.5
        %v3412 = vmul.f32 %v3314, 0.5
        %v3413 = vmul.f32 %v3317, 0.5
        %v3414 = vmul.f32 %v3319, 0.5
        %v3415 = vmul.f32 %v3322, 0.5
        %v3416 = vmul.f32 %v3324, 0.5
        %v3417 = vmul.f32 %v3327, 0.5
        %v3418 = vmul.f32 %v3329, 0.5
        %v3419 = vmul.f32 %v3332, 0.5
        %v3420 = vmul.f32 %v3334, 0.5
        %v3421 = vmul.f32 %v3337, 0.5
        %v3422 = vmul.f32 %v3339, 0.5
        %v3423 = vmul.f32 %v3342, 0.5
        %v3424 = vmul.f32 %v3344, 0.5
        %v3425 = vmul.f32 %v3347, 0.5
        %v3426 = vmul.f32 %v3349, 0.5
        %v3427 = vmul.f32 %v3352, 0.5
        %v3428 = vmul.f32 %v3354, 0.5
        %v3429 = vmul.f32 %v3357, 0.5
        %v3430 = vmul.f32 %v3359, 0.5
        %v3431 = vmul.f32 %v3362, 0.5
        %v3432 = vmul.f32 %v3364, 0.5
        %v3433 = vmul.f32 %v3367, 0.5
        %v3434 = vmul.f32 %v3369, 0.5
        %v3435 = vmul.f32 %v3403, 1.442695
        %v3436 = vpow.pop %v3435
        %v3437 = vmul.f32 %v3404, 1.442695
        %v3438 = vpow.pop %v3437
        %v3439 = vmul.f32 %v3405, 1.442695
        %v3440 = vpow.pop %v3439
        %v3441 = vmul.f32 %v3406, 1.442695
        %v3442 = vpow.pop %v3441
        %v3443 = vmul.f32 %v3407, 1.442695
        %v3444 = vpow.pop %v3443
        %v3445 = vmul.f32 %v3408, 1.442695
        %v3446 = vpow.pop %v3445
        %v3447 = vmul.f32 %v3409, 1.442695
        %v3448 = vpow.pop %v3447
        %v3449 = vmul.f32 %v3410, 1.442695
        %v3450 = vpow.pop %v3449
        %v3451 = vmul.f32 %v3411, 1.442695
        %v3452 = vpow.pop %v3451
        %v3453 = vmul.f32 %v3412, 1.442695
        %v3454 = vpow.pop %v3453
        %v3455 = vmul.f32 %v3413, 1.442695
        %v3456 = vpow.pop %v3455
        %v3457 = vmul.f32 %v3414, 1.442695
        %v3458 = vpow.pop %v3457
        %v3459 = vmul.f32 %v3415, 1.442695
        %v3460 = vpow.pop %v3459
        %v3461 = vmul.f32 %v3416, 1.442695
        %v3462 = vpow.pop %v3461
        %v3463 = vmul.f32 %v3417, 1.442695
        %v3464 = vpow.pop %v3463
        %v3465 = vmul.f32 %v3418, 1.442695
        %v3466 = vpow.pop %v3465
        %v3467 = vmul.f32 %v3419, 1.442695
        %v3468 = vpow.pop %v3467
        %v3469 = vmul.f32 %v3420, 1.442695
        %v3470 = vpow.pop %v3469
        %v3471 = vmul.f32 %v3421, 1.442695
        %v3472 = vpow.pop %v3471
        %v3473 = vmul.f32 %v3422, 1.442695
        %v3474 = vpow.pop %v3473
        %v3475 = vmul.f32 %v3423, 1.442695
        %v3476 = vpow.pop %v3475
        %v3477 = vmul.f32 %v3424, 1.442695
        %v3478 = vpow.pop %v3477
        %v3479 = vmul.f32 %v3425, 1.442695
        %v3480 = vpow.pop %v3479
        %v3481 = vmul.f32 %v3426, 1.442695
        %v3482 = vpow.pop %v3481
        %v3483 = vmul.f32 %v3427, 1.442695
        %v3484 = vpow.pop %v3483
        %v3485 = vmul.f32 %v3428, 1.442695
        %v3486 = vpow.pop %v3485
        %v3487 = vmul.f32 %v3429, 1.442695
        %v3488 = vpow.pop %v3487
        %v3489 = vmul.f32 %v3430, 1.442695
        %v3490 = vpow.pop %v3489
        %v3491 = vmul.f32 %v3431, 1.442695
        %v3492 = vpow.pop %v3491
        %v3493 = vmul.f32 %v3432, 1.442695
        %v3494 = vpow.pop %v3493
        %v3495 = vmul.f32 %v3433, 1.442695
        %v3496 = vpow.pop %v3495
        %v3497 = vmul.f32 %v3434, 1.442695
        %v3498 = vpow.pop %v3497
        %v3499 = vmul.f32 %v3371, %v3436
        %v3500 = vmul.f32 %v3372, %v3438
        %v3501 = vmul.f32 %v3373, %v3440
        %v3502 = vmul.f32 %v3374, %v3442
        %v3503 = vmul.f32 %v3375, %v3444
        %v3504 = vmul.f32 %v3376, %v3446
        %v3505 = vmul.f32 %v3377, %v3448
        %v3506 = vmul.f32 %v3378, %v3450
        %v3507 = vmul.f32 %v3379, %v3452
        %v3508 = vmul.f32 %v3380, %v3454
        %v3509 = vmul.f32 %v3381, %v3456
        %v3510 = vmul.f32 %v3382, %v3458
        %v3511 = vmul.f32 %v3383, %v3460
        %v3512 = vmul.f32 %v3384, %v3462
        %v3513 = vmul.f32 %v3385, %v3464
        %v3514 = vmul.f32 %v3386, %v3466
        %v3515 = vmul.f32 %v3387, %v3468
        %v3516 = vmul.f32 %v3388, %v3470
        %v3517 = vmul.f32 %v3389, %v3472
        %v3518 = vmul.f32 %v3390, %v3474
        %v3519 = vmul.f32 %v3391, %v3476
        %v3520 = vmul.f32 %v3392, %v3478
        %v3521 = vmul.f32 %v3393, %v3480
        %v3522 = vmul.f32 %v3394, %v3482
        %v3523 = vmul.f32 %v3395, %v3484
        %v3524 = vmul.f32 %v3396, %v3486
        %v3525 = vmul.f32 %v3397, %v3488
        %v3526 = vmul.f32 %v3398, %v3490
        %v3527 = vmul.f32 %v3399, %v3492
        %v3528 = vmul.f32 %v3400, %v3494
        %v3529 = vmul.f32 %v3401, %v3496
        %v3530 = vmul.f32 %v3402, %v3498
        %v3531 = vadd.f32 %v3499, %v3114
        %v3532 = vadd.f32 %v3500, %v3116
        %v3533 = vadd.f32 %v3501, %v3119
        %v3534 = vadd.f32 %v3502, %v3121
        %v3535 = vadd.f32 %v3503, %v3124
        %v3536 = vadd.f32 %v3504, %v3126
        %v3537 = vadd.f32 %v3505, %v3129
        %v3538 = vadd.f32 %v3506, %v3131
        %v3539 = vadd.f32 %v3507, %v3134
        %v3540 = vadd.f32 %v3508, %v3136
        %v3541 = vadd.f32 %v3509, %v3139
        %v3542 = vadd.f32 %v3510, %v3141
        %v3543 = vadd.f32 %v3511, %v3144
        %v3544 = vadd.f32 %v3512, %v3146
        %v3545 = vadd.f32 %v3513, %v3149
        %v3546 = vadd.f32 %v3514, %v3151
        %v3547 = vadd.f32 %v3515, %v3154
        %v3548 = vadd.f32 %v3516, %v3156
        %v3549 = vadd.f32 %v3517, %v3159
        %v3550 = vadd.f32 %v3518, %v3161
        %v3551 = vadd.f32 %v3519, %v3164
        %v3552 = vadd.f32 %v3520, %v3166
        %v3553 = vadd.f32 %v3521, %v3169
        %v3554 = vadd.f32 %v3522, %v3171
        %v3555 = vadd.f32 %v3523, %v3174
        %v3556 = vadd.f32 %v3524, %v3176
        %v3557 = vadd.f32 %v3525, %v3179
        %v3558 = vadd.f32 %v3526, %v3181
        %v3559 = vadd.f32 %v3527, %v3184
        %v3560 = vadd.f32 %v3528, %v3186
        %v3561 = vadd.f32 %v3529, %v3189
        %v3562 = vadd.f32 %v3530, %v3191
        %v3563 = vpack.c.bf16 %v3532, %v3531
        %v3564 = vpack.c.bf16 %v3534, %v3533
        %v3565 = vpack.c.bf16 %v3536, %v3535
        %v3566 = vpack.c.bf16 %v3538, %v3537
        %v3567 = vpack.c.bf16 %v3540, %v3539
        %v3568 = vpack.c.bf16 %v3542, %v3541
        %v3569 = vpack.c.bf16 %v3544, %v3543
        %v3570 = vpack.c.bf16 %v3546, %v3545
        %v3571 = vpack.c.bf16 %v3548, %v3547
        %v3572 = vpack.c.bf16 %v3550, %v3549
        %v3573 = vpack.c.bf16 %v3552, %v3551
        %v3574 = vpack.c.bf16 %v3554, %v3553
        %v3575 = vpack.c.bf16 %v3556, %v3555
        %v3576 = vpack.c.bf16 %v3558, %v3557
        %v3577 = vpack.c.bf16 %v3560, %v3559
        %v3578 = vpack.c.bf16 %v3562, %v3561
        %v3579 = vld [vmem:[#allocation11] sm:$0xff]
        %v3580 = vld [vmem:[#allocation11 + $0x8] sm:$0xff]
        %v3581 = vld [vmem:[#allocation11 + $0x10] sm:$0xff]
        %v3582 = vld [vmem:[#allocation11 + $0x18] sm:$0xff]
        %v3583 = vld [vmem:[#allocation11 + $0x20] sm:$0xff]
        %v3584 = vld [vmem:[#allocation11 + $0x28] sm:$0xff]
        %v3585 = vld [vmem:[#allocation11 + $0x30] sm:$0xff]
        %v3586 = vld [vmem:[#allocation11 + $0x38] sm:$0xff]
        %v3587 = vld [vmem:[#allocation11 + $0x40] sm:$0xff]
        %v3588 = vld [vmem:[#allocation11 + $0x48] sm:$0xff]
        %v3589 = vld [vmem:[#allocation11 + $0x50] sm:$0xff]
        %v3590 = vld [vmem:[#allocation11 + $0x58] sm:$0xff]
        %v3591 = vld [vmem:[#allocation11 + $0x60] sm:$0xff]
        %v3592 = vld [vmem:[#allocation11 + $0x68] sm:$0xff]
        %v3593 = vld [vmem:[#allocation11 + $0x70] sm:$0xff]
        %v3594 = vld [vmem:[#allocation11 + $0x78] sm:$0xff]
        %v3595 = vld [vmem:[#allocation13] sm:$0x3]
        %v3597 = vperm.slane %v3595, 0
        %v3598 = vperm.slane %v3595, 1
        %v3617 = vunpack.c.l.b16 %v3579
        %v3618 = vunpack.c.h.b16 %v3579
        %v3619 = vunpack.c.l.b16 %v3580
        %v3620 = vunpack.c.h.b16 %v3580
        %v3621 = vunpack.c.l.b16 %v3581
        %v3622 = vunpack.c.h.b16 %v3581
        %v3623 = vunpack.c.l.b16 %v3582
        %v3624 = vunpack.c.h.b16 %v3582
        %v3625 = vunpack.c.l.b16 %v3583
        %v3626 = vunpack.c.h.b16 %v3583
        %v3627 = vunpack.c.l.b16 %v3584
        %v3628 = vunpack.c.h.b16 %v3584
        %v3629 = vunpack.c.l.b16 %v3585
        %v3630 = vunpack.c.h.b16 %v3585
        %v3631 = vunpack.c.l.b16 %v3586
        %v3632 = vunpack.c.h.b16 %v3586
        %v3633 = vunpack.c.l.b16 %v3587
        %v3634 = vunpack.c.h.b16 %v3587
        %v3635 = vunpack.c.l.b16 %v3588
        %v3636 = vunpack.c.h.b16 %v3588
        %v3637 = vunpack.c.l.b16 %v3589
        %v3638 = vunpack.c.h.b16 %v3589
        %v3639 = vunpack.c.l.b16 %v3590
        %v3640 = vunpack.c.h.b16 %v3590
        %v3641 = vunpack.c.l.b16 %v3591
        %v3642 = vunpack.c.h.b16 %v3591
        %v3643 = vunpack.c.l.b16 %v3592
        %v3644 = vunpack.c.h.b16 %v3592
        %v3645 = vunpack.c.l.b16 %v3593
        %v3646 = vunpack.c.h.b16 %v3593
        %v3647 = vunpack.c.l.b16 %v3594
        %v3648 = vunpack.c.h.b16 %v3594
        %v3649 = vpack.c.b16 %v3619, %v3617
        %v3650 = vpack.c.b16 %v3620, %v3618
        %v3651 = vpack.c.b16 %v3623, %v3621
        %v3652 = vpack.c.b16 %v3624, %v3622
        %v3653 = vpack.c.b16 %v3627, %v3625
        %v3654 = vpack.c.b16 %v3628, %v3626
        %v3655 = vpack.c.b16 %v3631, %v3629
        %v3656 = vpack.c.b16 %v3632, %v3630
        %v3657 = vpack.c.b16 %v3635, %v3633
        %v3658 = vpack.c.b16 %v3636, %v3634
        %v3659 = vpack.c.b16 %v3639, %v3637
        %v3660 = vpack.c.b16 %v3640, %v3638
        %v3661 = vpack.c.b16 %v3643, %v3641
        %v3662 = vpack.c.b16 %v3644, %v3642
        %v3663 = vpack.c.b16 %v3647, %v3645
        %v3664 = vpack.c.b16 %v3648, %v3646
        %3681 = vmatpush.bf16.msra.mxu0 %v3663
        %3682 = vmatpush.bf16.msra.mxu0 %v3661
        %3683 = vmatpush.bf16.msra.mxu0 %v3659
        %3684 = vmatpush.bf16.msra.mxu0 %v3657
        %3685 = vmatpush.bf16.msra.mxu0 %v3655
        %3686 = vmatpush.bf16.msra.mxu0 %v3653
        %3687 = vmatpush.bf16.msra.mxu0 %v3651
        %3688 = vmatpush.bf16.msra.mxu0 %v3649
        %3689 = vmatmul.bf16.gmra.mxu0 %v3563
        %v3690 = vpop.f32.mrf.mxu0
        %v3691 = vadd.f32 %v3597, %v3690
        %v3692 = vpop.f32.mrf.mxu0
        %v3693 = vadd.f32 %v3597, %v3692
        %3694 = vmatmul.bf16.gmra.mxu0 %v3564
        %v3695 = vpop.f32.mrf.mxu0
        %v3696 = vadd.f32 %v3597, %v3695
        %v3697 = vpop.f32.mrf.mxu0
        %v3698 = vadd.f32 %v3597, %v3697
        %3699 = vmatmul.bf16.gmra.mxu0 %v3565
        %v3700 = vpop.f32.mrf.mxu0
        %v3701 = vadd.f32 %v3597, %v3700
        %v3702 = vpop.f32.mrf.mxu0
        %v3703 = vadd.f32 %v3597, %v3702
        %3704 = vmatmul.bf16.gmra.mxu0 %v3566
        %v3705 = vpop.f32.mrf.mxu0
        %v3706 = vadd.f32 %v3597, %v3705
        %v3707 = vpop.f32.mrf.mxu0
        %v3708 = vadd.f32 %v3597, %v3707
        %3709 = vmatmul.bf16.gmra.mxu0 %v3567
        %v3710 = vpop.f32.mrf.mxu0
        %v3711 = vadd.f32 %v3597, %v3710
        %v3712 = vpop.f32.mrf.mxu0
        %v3713 = vadd.f32 %v3597, %v3712
        %3714 = vmatmul.bf16.gmra.mxu0 %v3568
        %v3715 = vpop.f32.mrf.mxu0
        %v3716 = vadd.f32 %v3597, %v3715
        %v3717 = vpop.f32.mrf.mxu0
        %v3718 = vadd.f32 %v3597, %v3717
        %3719 = vmatmul.bf16.gmra.mxu0 %v3569
        %v3720 = vpop.f32.mrf.mxu0
        %v3721 = vadd.f32 %v3597, %v3720
        %v3722 = vpop.f32.mrf.mxu0
        %v3723 = vadd.f32 %v3597, %v3722
        %3724 = vmatmul.bf16.gmra.mxu0 %v3570
        %v3725 = vpop.f32.mrf.mxu0
        %v3726 = vadd.f32 %v3597, %v3725
        %v3727 = vpop.f32.mrf.mxu0
        %v3728 = vadd.f32 %v3597, %v3727
        %3729 = vmatmul.bf16.gmra.mxu0 %v3571
        %v3730 = vpop.f32.mrf.mxu0
        %v3731 = vadd.f32 %v3597, %v3730
        %v3732 = vpop.f32.mrf.mxu0
        %v3733 = vadd.f32 %v3597, %v3732
        %3734 = vmatmul.bf16.gmra.mxu0 %v3572
        %v3735 = vpop.f32.mrf.mxu0
        %v3736 = vadd.f32 %v3597, %v3735
        %v3737 = vpop.f32.mrf.mxu0
        %v3738 = vadd.f32 %v3597, %v3737
        %3739 = vmatmul.bf16.gmra.mxu0 %v3573
        %v3740 = vpop.f32.mrf.mxu0
        %v3741 = vadd.f32 %v3597, %v3740
        %v3742 = vpop.f32.mrf.mxu0
        %v3743 = vadd.f32 %v3597, %v3742
        %3744 = vmatmul.bf16.gmra.mxu0 %v3574
        %v3745 = vpop.f32.mrf.mxu0
        %v3746 = vadd.f32 %v3597, %v3745
        %v3747 = vpop.f32.mrf.mxu0
        %v3748 = vadd.f32 %v3597, %v3747
        %3749 = vmatmul.bf16.gmra.mxu0 %v3575
        %v3750 = vpop.f32.mrf.mxu0
        %v3751 = vadd.f32 %v3597, %v3750
        %v3752 = vpop.f32.mrf.mxu0
        %v3753 = vadd.f32 %v3597, %v3752
        %3754 = vmatmul.bf16.gmra.mxu0 %v3576
        %v3755 = vpop.f32.mrf.mxu0
        %v3756 = vadd.f32 %v3597, %v3755
        %v3757 = vpop.f32.mrf.mxu0
        %v3758 = vadd.f32 %v3597, %v3757
        %3759 = vmatmul.bf16.gmra.mxu0 %v3577
        %v3760 = vpop.f32.mrf.mxu0
        %v3761 = vadd.f32 %v3597, %v3760
        %v3762 = vpop.f32.mrf.mxu0
        %v3763 = vadd.f32 %v3597, %v3762
        %3764 = vmatmul.bf16.gmra.mxu0 %v3578
        %v3765 = vpop.f32.mrf.mxu0
        %v3766 = vadd.f32 %v3597, %v3765
        %v3767 = vpop.f32.mrf.mxu0
        %v3768 = vadd.f32 %v3597, %v3767
        %3769 = vdwg.mxu0
        %3770 = vmatpush.bf16.msra.mxu0 %v3664
        %3771 = vmatpush.bf16.msra.mxu0 %v3662
        %3772 = vmatpush.bf16.msra.mxu0 %v3660
        %3773 = vmatpush.bf16.msra.mxu0 %v3658
        %3774 = vmatpush.bf16.msra.mxu0 %v3656
        %3775 = vmatpush.bf16.msra.mxu0 %v3654
        %3776 = vmatpush.bf16.msra.mxu0 %v3652
        %3777 = vmatpush.bf16.msra.mxu0 %v3650
        %3778 = vmatmul.bf16.gmra.mxu0 %v3563
        %v3779 = vpop.f32.mrf.mxu0
        %v3780 = vadd.f32 %v3598, %v3779
        %v3781 = vpop.f32.mrf.mxu0
        %v3782 = vadd.f32 %v3598, %v3781
        %3783 = vmatmul.bf16.gmra.mxu0 %v3564
        %v3784 = vpop.f32.mrf.mxu0
        %v3785 = vadd.f32 %v3598, %v3784
        %v3786 = vpop.f32.mrf.mxu0
        %v3787 = vadd.f32 %v3598, %v3786
        %3788 = vmatmul.bf16.gmra.mxu0 %v3565
        %v3789 = vpop.f32.mrf.mxu0
        %v3790 = vadd.f32 %v3598, %v3789
        %v3791 = vpop.f32.mrf.mxu0
        %v3792 = vadd.f32 %v3598, %v3791
        %3793 = vmatmul.bf16.gmra.mxu0 %v3566
        %v3794 = vpop.f32.mrf.mxu0
        %v3795 = vadd.f32 %v3598, %v3794
        %v3796 = vpop.f32.mrf.mxu0
        %v3797 = vadd.f32 %v3598, %v3796
        %3798 = vmatmul.bf16.gmra.mxu0 %v3567
        %v3799 = vpop.f32.mrf.mxu0
        %v3800 = vadd.f32 %v3598, %v3799
        %v3801 = vpop.f32.mrf.mxu0
        %v3802 = vadd.f32 %v3598, %v3801
        %3803 = vmatmul.bf16.gmra.mxu0 %v3568
        %v3804 = vpop.f32.mrf.mxu0
        %v3805 = vadd.f32 %v3598, %v3804
        %v3806 = vpop.f32.mrf.mxu0
        %v3807 = vadd.f32 %v3598, %v3806
        %3808 = vmatmul.bf16.gmra.mxu0 %v3569
        %v3809 = vpop.f32.mrf.mxu0
        %v3810 = vadd.f32 %v3598, %v3809
        %v3811 = vpop.f32.mrf.mxu0
        %v3812 = vadd.f32 %v3598, %v3811
        %3813 = vmatmul.bf16.gmra.mxu0 %v3570
        %v3814 = vpop.f32.mrf.mxu0
        %v3815 = vadd.f32 %v3598, %v3814
        %v3816 = vpop.f32.mrf.mxu0
        %v3817 = vadd.f32 %v3598, %v3816
        %3818 = vmatmul.bf16.gmra.mxu0 %v3571
        %v3819 = vpop.f32.mrf.mxu0
        %v3820 = vadd.f32 %v3598, %v3819
        %v3821 = vpop.f32.mrf.mxu0
        %v3822 = vadd.f32 %v3598, %v3821
        %3823 = vmatmul.bf16.gmra.mxu0 %v3572
        %v3824 = vpop.f32.mrf.mxu0
        %v3825 = vadd.f32 %v3598, %v3824
        %v3826 = vpop.f32.mrf.mxu0
        %v3827 = vadd.f32 %v3598, %v3826
        %3828 = vmatmul.bf16.gmra.mxu0 %v3573
        %v3829 = vpop.f32.mrf.mxu0
        %v3830 = vadd.f32 %v3598, %v3829
        %v3831 = vpop.f32.mrf.mxu0
        %v3832 = vadd.f32 %v3598, %v3831
        %3833 = vmatmul.bf16.gmra.mxu0 %v3574
        %v3834 = vpop.f32.mrf.mxu0
        %v3835 = vadd.f32 %v3598, %v3834
        %v3836 = vpop.f32.mrf.mxu0
        %v3837 = vadd.f32 %v3598, %v3836
        %3838 = vmatmul.bf16.gmra.mxu0 %v3575
        %v3839 = vpop.f32.mrf.mxu0
        %v3840 = vadd.f32 %v3598, %v3839
        %v3841 = vpop.f32.mrf.mxu0
        %v3842 = vadd.f32 %v3598, %v3841
        %3843 = vmatmul.bf16.gmra.mxu0 %v3576
        %v3844 = vpop.f32.mrf.mxu0
        %v3845 = vadd.f32 %v3598, %v3844
        %v3846 = vpop.f32.mrf.mxu0
        %v3847 = vadd.f32 %v3598, %v3846
        %3848 = vmatmul.bf16.gmra.mxu0 %v3577
        %v3849 = vpop.f32.mrf.mxu0
        %v3850 = vadd.f32 %v3598, %v3849
        %v3851 = vpop.f32.mrf.mxu0
        %v3852 = vadd.f32 %v3598, %v3851
        %3853 = vmatmul.bf16.gmra.mxu0 %v3578
        %v3854 = vpop.f32.mrf.mxu0
        %v3855 = vadd.f32 %v3598, %v3854
        %v3856 = vpop.f32.mrf.mxu0
        %v3857 = vadd.f32 %v3598, %v3856
        %3858 = vdwg.mxu0
        %v3859 = vtanh.pop %v3691
        %v3860 = vtanh.pop %v3780
        %v3861 = vtanh.pop %v3693
        %v3862 = vtanh.pop %v3782
        %v3863 = vtanh.pop %v3696
        %v3864 = vtanh.pop %v3785
        %v3865 = vtanh.pop %v3698
        %v3866 = vtanh.pop %v3787
        %v3867 = vtanh.pop %v3701
        %v3868 = vtanh.pop %v3790
        %v3869 = vtanh.pop %v3703
        %v3870 = vtanh.pop %v3792
        %v3871 = vtanh.pop %v3706
        %v3872 = vtanh.pop %v3795
        %v3873 = vtanh.pop %v3708
        %v3874 = vtanh.pop %v3797
        %v3875 = vtanh.pop %v3711
        %v3876 = vtanh.pop %v3800
        %v3877 = vtanh.pop %v3713
        %v3878 = vtanh.pop %v3802
        %v3879 = vtanh.pop %v3716
        %v3880 = vtanh.pop %v3805
        %v3881 = vtanh.pop %v3718
        %v3882 = vtanh.pop %v3807
        %v3883 = vtanh.pop %v3721
        %v3884 = vtanh.pop %v3810
        %v3885 = vtanh.pop %v3723
        %v3886 = vtanh.pop %v3812
        %v3887 = vtanh.pop %v3726
        %v3888 = vtanh.pop %v3815
        %v3889 = vtanh.pop %v3728
        %v3890 = vtanh.pop %v3817
        %v3891 = vtanh.pop %v3731
        %v3892 = vtanh.pop %v3820
        %v3893 = vtanh.pop %v3733
        %v3894 = vtanh.pop %v3822
        %v3895 = vtanh.pop %v3736
        %v3896 = vtanh.pop %v3825
        %v3897 = vtanh.pop %v3738
        %v3898 = vtanh.pop %v3827
        %v3899 = vtanh.pop %v3741
        %v3900 = vtanh.pop %v3830
        %v3901 = vtanh.pop %v3743
        %v3902 = vtanh.pop %v3832
        %v3903 = vtanh.pop %v3746
        %v3904 = vtanh.pop %v3835
        %v3905 = vtanh.pop %v3748
        %v3906 = vtanh.pop %v3837
        %v3907 = vtanh.pop %v3751
        %v3908 = vtanh.pop %v3840
        %v3909 = vtanh.pop %v3753
        %v3910 = vtanh.pop %v3842
        %v3911 = vtanh.pop %v3756
        %v3912 = vtanh.pop %v3845
        %v3913 = vtanh.pop %v3758
        %v3914 = vtanh.pop %v3847
        %v3915 = vtanh.pop %v3761
        %v3916 = vtanh.pop %v3850
        %v3917 = vtanh.pop %v3763
        %v3918 = vtanh.pop %v3852
        %v3919 = vtanh.pop %v3766
        %v3920 = vtanh.pop %v3855
        %v3921 = vtanh.pop %v3768
        %v3922 = vtanh.pop %v3857
        %v3923 = vpack.c.bf16 %v3861, %v3859
        %v3924 = vpack.c.bf16 %v3862, %v3860
        %v3925 = vpack.c.bf16 %v3865, %v3863
        %v3926 = vpack.c.bf16 %v3866, %v3864
        %v3927 = vpack.c.bf16 %v3869, %v3867
        %v3928 = vpack.c.bf16 %v3870, %v3868
        %v3929 = vpack.c.bf16 %v3873, %v3871
        %v3930 = vpack.c.bf16 %v3874, %v3872
        %v3931 = vpack.c.bf16 %v3877, %v3875
        %v3932 = vpack.c.bf16 %v3878, %v3876
        %v3933 = vpack.c.bf16 %v3881, %v3879
        %v3934 = vpack.c.bf16 %v3882, %v3880
        %v3935 = vpack.c.bf16 %v3885, %v3883
        %v3936 = vpack.c.bf16 %v3886, %v3884
        %v3937 = vpack.c.bf16 %v3889, %v3887
        %v3938 = vpack.c.bf16 %v3890, %v3888
        %v3939 = vpack.c.bf16 %v3893, %v3891
        %v3940 = vpack.c.bf16 %v3894, %v3892
        %v3941 = vpack.c.bf16 %v3897, %v3895
        %v3942 = vpack.c.bf16 %v3898, %v3896
        %v3943 = vpack.c.bf16 %v3901, %v3899
        %v3944 = vpack.c.bf16 %v3902, %v3900
        %v3945 = vpack.c.bf16 %v3905, %v3903
        %v3946 = vpack.c.bf16 %v3906, %v3904
        %v3947 = vpack.c.bf16 %v3909, %v3907
        %v3948 = vpack.c.bf16 %v3910, %v3908
        %v3949 = vpack.c.bf16 %v3913, %v3911
        %v3950 = vpack.c.bf16 %v3914, %v3912
        %v3951 = vpack.c.bf16 %v3917, %v3915
        %v3952 = vpack.c.bf16 %v3918, %v3916
        %v3953 = vpack.c.bf16 %v3921, %v3919
        %v3954 = vpack.c.bf16 %v3922, %v3920
        %v3955 = vld [vmem:[#allocation14] sm:$0xff]
        %v3956 = vld [vmem:[#allocation14 + $0x8] sm:$0xff]
        %v3957 = vld [vmem:[#allocation14 + $0x10] sm:$0xff]
        %v3958 = vld [vmem:[#allocation14 + $0x18] sm:$0xff]
        %v3959 = vld [vmem:[#allocation14 + $0x20] sm:$0xff]
        %v3960 = vld [vmem:[#allocation14 + $0x28] sm:$0xff]
        %v3961 = vld [vmem:[#allocation14 + $0x30] sm:$0xff]
        %v3962 = vld [vmem:[#allocation14 + $0x38] sm:$0xff]
        %v3963 = vld [vmem:[#allocation14 + $0x40] sm:$0xff]
        %v3964 = vld [vmem:[#allocation14 + $0x48] sm:$0xff]
        %v3965 = vld [vmem:[#allocation14 + $0x50] sm:$0xff]
        %v3966 = vld [vmem:[#allocation14 + $0x58] sm:$0xff]
        %v3967 = vld [vmem:[#allocation14 + $0x60] sm:$0xff]
        %v3968 = vld [vmem:[#allocation14 + $0x68] sm:$0xff]
        %v3969 = vld [vmem:[#allocation14 + $0x70] sm:$0xff]
        %v3970 = vld [vmem:[#allocation14 + $0x78] sm:$0xff]
        %v3971 = vld [vmem:[#allocation14 + $0x80] sm:$0xff]
        %v3972 = vld [vmem:[#allocation14 + $0x88] sm:$0xff]
        %v3973 = vld [vmem:[#allocation14 + $0x90] sm:$0xff]
        %v3974 = vld [vmem:[#allocation14 + $0x98] sm:$0xff]
        %v3975 = vld [vmem:[#allocation14 + $0xa0] sm:$0xff]
        %v3976 = vld [vmem:[#allocation14 + $0xa8] sm:$0xff]
        %v3977 = vld [vmem:[#allocation14 + $0xb0] sm:$0xff]
        %v3978 = vld [vmem:[#allocation14 + $0xb8] sm:$0xff]
        %v3979 = vld [vmem:[#allocation14 + $0xc0] sm:$0xff]
        %v3980 = vld [vmem:[#allocation14 + $0xc8] sm:$0xff]
        %v3981 = vld [vmem:[#allocation14 + $0xd0] sm:$0xff]
        %v3982 = vld [vmem:[#allocation14 + $0xd8] sm:$0xff]
        %v3983 = vld [vmem:[#allocation14 + $0xe0] sm:$0xff]
        %v3984 = vld [vmem:[#allocation14 + $0xe8] sm:$0xff]
        %v3985 = vld [vmem:[#allocation14 + $0xf0] sm:$0xff]
        %v3986 = vld [vmem:[#allocation14 + $0xf8] sm:$0xff]
        %v3987 = vld [vmem:[#allocation14 + $0x100] sm:$0xff]
        %v3988 = vld [vmem:[#allocation14 + $0x108] sm:$0xff]
        %v3989 = vld [vmem:[#allocation14 + $0x110] sm:$0xff]
        %v3990 = vld [vmem:[#allocation14 + $0x118] sm:$0xff]
        %v3991 = vld [vmem:[#allocation14 + $0x120] sm:$0xff]
        %v3992 = vld [vmem:[#allocation14 + $0x128] sm:$0xff]
        %v3993 = vld [vmem:[#allocation14 + $0x130] sm:$0xff]
        %v3994 = vld [vmem:[#allocation14 + $0x138] sm:$0xff]
        %v3995 = vld [vmem:[#allocation14 + $0x140] sm:$0xff]
        %v3996 = vld [vmem:[#allocation14 + $0x148] sm:$0xff]
        %v3997 = vld [vmem:[#allocation14 + $0x150] sm:$0xff]
        %v3998 = vld [vmem:[#allocation14 + $0x158] sm:$0xff]
        %v3999 = vld [vmem:[#allocation14 + $0x160] sm:$0xff]
        %v4000 = vld [vmem:[#allocation14 + $0x168] sm:$0xff]
        %v4001 = vld [vmem:[#allocation14 + $0x170] sm:$0xff]
        %v4002 = vld [vmem:[#allocation14 + $0x178] sm:$0xff]
        %v4003 = vld [vmem:[#allocation14 + $0x180] sm:$0xff]
        %v4004 = vld [vmem:[#allocation14 + $0x188] sm:$0xff]
        %v4005 = vld [vmem:[#allocation14 + $0x190] sm:$0xff]
        %v4006 = vld [vmem:[#allocation14 + $0x198] sm:$0xff]
        %v4007 = vld [vmem:[#allocation14 + $0x1a0] sm:$0xff]
        %v4008 = vld [vmem:[#allocation14 + $0x1a8] sm:$0xff]
        %v4009 = vld [vmem:[#allocation14 + $0x1b0] sm:$0xff]
        %v4010 = vld [vmem:[#allocation14 + $0x1b8] sm:$0xff]
        %v4011 = vld [vmem:[#allocation14 + $0x1c0] sm:$0xff]
        %v4012 = vld [vmem:[#allocation14 + $0x1c8] sm:$0xff]
        %v4013 = vld [vmem:[#allocation14 + $0x1d0] sm:$0xff]
        %v4014 = vld [vmem:[#allocation14 + $0x1d8] sm:$0xff]
        %v4015 = vld [vmem:[#allocation14 + $0x1e0] sm:$0xff]
        %v4016 = vld [vmem:[#allocation14 + $0x1e8] sm:$0xff]
        %v4017 = vld [vmem:[#allocation14 + $0x1f0] sm:$0xff]
        %v4018 = vld [vmem:[#allocation14 + $0x1f8] sm:$0xff]
        %v4019 = vld [vmem:[%s9] sm:$0xf]
        %v4021 = vperm.slane %v4019, 0
        %v4022 = vperm.slane %v4019, 1
        %v4023 = vperm.slane %v4019, 2
        %v4024 = vperm.slane %v4019, 3
        %v4093 = vunpack.c.l.b16 %v3955
        %v4094 = vunpack.c.h.b16 %v3955
        %v4095 = vunpack.c.l.b16 %v3956
        %v4096 = vunpack.c.h.b16 %v3956
        %v4097 = vunpack.c.l.b16 %v3957
        %v4098 = vunpack.c.h.b16 %v3957
        %v4099 = vunpack.c.l.b16 %v3958
        %v4100 = vunpack.c.h.b16 %v3958
        %v4101 = vunpack.c.l.b16 %v3959
        %v4102 = vunpack.c.h.b16 %v3959
        %v4103 = vunpack.c.l.b16 %v3960
        %v4104 = vunpack.c.h.b16 %v3960
        %v4105 = vunpack.c.l.b16 %v3961
        %v4106 = vunpack.c.h.b16 %v3961
        %v4107 = vunpack.c.l.b16 %v3962
        %v4108 = vunpack.c.h.b16 %v3962
        %v4109 = vunpack.c.l.b16 %v3963
        %v4110 = vunpack.c.h.b16 %v3963
        %v4111 = vunpack.c.l.b16 %v3964
        %v4112 = vunpack.c.h.b16 %v3964
        %v4113 = vunpack.c.l.b16 %v3965
        %v4114 = vunpack.c.h.b16 %v3965
        %v4115 = vunpack.c.l.b16 %v3966
        %v4116 = vunpack.c.h.b16 %v3966
        %v4117 = vunpack.c.l.b16 %v3967
        %v4118 = vunpack.c.h.b16 %v3967
        %v4119 = vunpack.c.l.b16 %v3968
        %v4120 = vunpack.c.h.b16 %v3968
        %v4121 = vunpack.c.l.b16 %v3969
        %v4122 = vunpack.c.h.b16 %v3969
        %v4123 = vunpack.c.l.b16 %v3970
        %v4124 = vunpack.c.h.b16 %v3970
        %v4125 = vunpack.c.l.b16 %v3971
        %v4126 = vunpack.c.h.b16 %v3971
        %v4127 = vunpack.c.l.b16 %v3972
        %v4128 = vunpack.c.h.b16 %v3972
        %v4129 = vunpack.c.l.b16 %v3973
        %v4130 = vunpack.c.h.b16 %v3973
        %v4131 = vunpack.c.l.b16 %v3974
        %v4132 = vunpack.c.h.b16 %v3974
        %v4133 = vunpack.c.l.b16 %v3975
        %v4134 = vunpack.c.h.b16 %v3975
        %v4135 = vunpack.c.l.b16 %v3976
        %v4136 = vunpack.c.h.b16 %v3976
        %v4137 = vunpack.c.l.b16 %v3977
        %v4138 = vunpack.c.h.b16 %v3977
        %v4139 = vunpack.c.l.b16 %v3978
        %v4140 = vunpack.c.h.b16 %v3978
        %v4141 = vunpack.c.l.b16 %v3979
        %v4142 = vunpack.c.h.b16 %v3979
        %v4143 = vunpack.c.l.b16 %v3980
        %v4144 = vunpack.c.h.b16 %v3980
        %v4145 = vunpack.c.l.b16 %v3981
        %v4146 = vunpack.c.h.b16 %v3981
        %v4147 = vunpack.c.l.b16 %v3982
        %v4148 = vunpack.c.h.b16 %v3982
        %v4149 = vunpack.c.l.b16 %v3983
        %v4150 = vunpack.c.h.b16 %v3983
        %v4151 = vunpack.c.l.b16 %v3984
        %v4152 = vunpack.c.h.b16 %v3984
        %v4153 = vunpack.c.l.b16 %v3985
        %v4154 = vunpack.c.h.b16 %v3985
        %v4155 = vunpack.c.l.b16 %v3986
        %v4156 = vunpack.c.h.b16 %v3986
        %v4157 = vunpack.c.l.b16 %v3987
        %v4158 = vunpack.c.h.b16 %v3987
        %v4159 = vunpack.c.l.b16 %v3988
        %v4160 = vunpack.c.h.b16 %v3988
        %v4161 = vunpack.c.l.b16 %v3989
        %v4162 = vunpack.c.h.b16 %v3989
        %v4163 = vunpack.c.l.b16 %v3990
        %v4164 = vunpack.c.h.b16 %v3990
        %v4165 = vunpack.c.l.b16 %v3991
        %v4166 = vunpack.c.h.b16 %v3991
        %v4167 = vunpack.c.l.b16 %v3992
        %v4168 = vunpack.c.h.b16 %v3992
        %v4169 = vunpack.c.l.b16 %v3993
        %v4170 = vunpack.c.h.b16 %v3993
        %v4171 = vunpack.c.l.b16 %v3994
        %v4172 = vunpack.c.h.b16 %v3994
        %v4173 = vunpack.c.l.b16 %v3995
        %v4174 = vunpack.c.h.b16 %v3995
        %v4175 = vunpack.c.l.b16 %v3996
        %v4176 = vunpack.c.h.b16 %v3996
        %v4177 = vunpack.c.l.b16 %v3997
        %v4178 = vunpack.c.h.b16 %v3997
        %v4179 = vunpack.c.l.b16 %v3998
        %v4180 = vunpack.c.h.b16 %v3998
        %v4181 = vunpack.c.l.b16 %v3999
        %v4182 = vunpack.c.h.b16 %v3999
        %v4183 = vunpack.c.l.b16 %v4000
        %v4184 = vunpack.c.h.b16 %v4000
        %v4185 = vunpack.c.l.b16 %v4001
        %v4186 = vunpack.c.h.b16 %v4001
        %v4187 = vunpack.c.l.b16 %v4002
        %v4188 = vunpack.c.h.b16 %v4002
        %v4189 = vunpack.c.l.b16 %v4003
        %v4190 = vunpack.c.h.b16 %v4003
        %v4191 = vunpack.c.l.b16 %v4004
        %v4192 = vunpack.c.h.b16 %v4004
        %v4193 = vunpack.c.l.b16 %v4005
        %v4194 = vunpack.c.h.b16 %v4005
        %v4195 = vunpack.c.l.b16 %v4006
        %v4196 = vunpack.c.h.b16 %v4006
        %v4197 = vunpack.c.l.b16 %v4007
        %v4198 = vunpack.c.h.b16 %v4007
        %v4199 = vunpack.c.l.b16 %v4008
        %v4200 = vunpack.c.h.b16 %v4008
        %v4201 = vunpack.c.l.b16 %v4009
        %v4202 = vunpack.c.h.b16 %v4009
        %v4203 = vunpack.c.l.b16 %v4010
        %v4204 = vunpack.c.h.b16 %v4010
        %v4205 = vunpack.c.l.b16 %v4011
        %v4206 = vunpack.c.h.b16 %v4011
        %v4207 = vunpack.c.l.b16 %v4012
        %v4208 = vunpack.c.h.b16 %v4012
        %v4209 = vunpack.c.l.b16 %v4013
        %v4210 = vunpack.c.h.b16 %v4013
        %v4211 = vunpack.c.l.b16 %v4014
        %v4212 = vunpack.c.h.b16 %v4014
        %v4213 = vunpack.c.l.b16 %v4015
        %v4214 = vunpack.c.h.b16 %v4015
        %v4215 = vunpack.c.l.b16 %v4016
        %v4216 = vunpack.c.h.b16 %v4016
        %v4217 = vunpack.c.l.b16 %v4017
        %v4218 = vunpack.c.h.b16 %v4017
        %v4219 = vunpack.c.l.b16 %v4018
        %v4220 = vunpack.c.h.b16 %v4018
        %v4221 = vpack.c.b16 %v4097, %v4093
        %v4222 = vpack.c.b16 %v4098, %v4094
        %v4223 = vpack.c.b16 %v4099, %v4095
        %v4224 = vpack.c.b16 %v4100, %v4096
        %v4225 = vpack.c.b16 %v4105, %v4101
        %v4226 = vpack.c.b16 %v4106, %v4102
        %v4227 = vpack.c.b16 %v4107, %v4103
        %v4228 = vpack.c.b16 %v4108, %v4104
        %v4229 = vpack.c.b16 %v4113, %v4109
        %v4230 = vpack.c.b16 %v4114, %v4110
        %v4231 = vpack.c.b16 %v4115, %v4111
        %v4232 = vpack.c.b16 %v4116, %v4112
        %v4233 = vpack.c.b16 %v4121, %v4117
        %v4234 = vpack.c.b16 %v4122, %v4118
        %v4235 = vpack.c.b16 %v4123, %v4119
        %v4236 = vpack.c.b16 %v4124, %v4120
        %v4237 = vpack.c.b16 %v4129, %v4125
        %v4238 = vpack.c.b16 %v4130, %v4126
        %v4239 = vpack.c.b16 %v4131, %v4127
        %v4240 = vpack.c.b16 %v4132, %v4128
        %v4241 = vpack.c.b16 %v4137, %v4133
        %v4242 = vpack.c.b16 %v4138, %v4134
        %v4243 = vpack.c.b16 %v4139, %v4135
        %v4244 = vpack.c.b16 %v4140, %v4136
        %v4245 = vpack.c.b16 %v4145, %v4141
        %v4246 = vpack.c.b16 %v4146, %v4142
        %v4247 = vpack.c.b16 %v4147, %v4143
        %v4248 = vpack.c.b16 %v4148, %v4144
        %v4249 = vpack.c.b16 %v4153, %v4149
        %v4250 = vpack.c.b16 %v4154, %v4150
        %v4251 = vpack.c.b16 %v4155, %v4151
        %v4252 = vpack.c.b16 %v4156, %v4152
        %v4253 = vpack.c.b16 %v4161, %v4157
        %v4254 = vpack.c.b16 %v4162, %v4158
        %v4255 = vpack.c.b16 %v4163, %v4159
        %v4256 = vpack.c.b16 %v4164, %v4160
        %v4257 = vpack.c.b16 %v4169, %v4165
        %v4258 = vpack.c.b16 %v4170, %v4166
        %v4259 = vpack.c.b16 %v4171, %v4167
        %v4260 = vpack.c.b16 %v4172, %v4168
        %v4261 = vpack.c.b16 %v4177, %v4173
        %v4262 = vpack.c.b16 %v4178, %v4174
        %v4263 = vpack.c.b16 %v4179, %v4175
        %v4264 = vpack.c.b16 %v4180, %v4176
        %v4265 = vpack.c.b16 %v4185, %v4181
        %v4266 = vpack.c.b16 %v4186, %v4182
        %v4267 = vpack.c.b16 %v4187, %v4183
        %v4268 = vpack.c.b16 %v4188, %v4184
        %v4269 = vpack.c.b16 %v4193, %v4189
        %v4270 = vpack.c.b16 %v4194, %v4190
        %v4271 = vpack.c.b16 %v4195, %v4191
        %v4272 = vpack.c.b16 %v4196, %v4192
        %v4273 = vpack.c.b16 %v4201, %v4197
        %v4274 = vpack.c.b16 %v4202, %v4198
        %v4275 = vpack.c.b16 %v4203, %v4199
        %v4276 = vpack.c.b16 %v4204, %v4200
        %v4277 = vpack.c.b16 %v4209, %v4205
        %v4278 = vpack.c.b16 %v4210, %v4206
        %v4279 = vpack.c.b16 %v4211, %v4207
        %v4280 = vpack.c.b16 %v4212, %v4208
        %v4281 = vpack.c.b16 %v4217, %v4213
        %v4282 = vpack.c.b16 %v4218, %v4214
        %v4283 = vpack.c.b16 %v4219, %v4215
        %v4284 = vpack.c.b16 %v4220, %v4216
        %4349 = vmatpush.bf16.msra.mxu0 %v4249
        %4350 = vmatpush.bf16.msra.mxu0 %v4245
        %4351 = vmatpush.bf16.msra.mxu0 %v4241
        %4352 = vmatpush.bf16.msra.mxu0 %v4237
        %4353 = vmatpush.bf16.msra.mxu0 %v4233
        %4354 = vmatpush.bf16.msra.mxu0 %v4229
        %4355 = vmatpush.bf16.msra.mxu0 %v4225
        %4356 = vmatpush.bf16.msra.mxu0 %v4221
        %4357 = vmatmul.bf16.gmra.mxu0 %v3923
        %v4358 = vpop.f32.mrf.mxu0
        %v4359 = vadd.f32 %v4021, %v4358
        %v4360 = vpop.f32.mrf.mxu0
        %v4361 = vadd.f32 %v4021, %v4360
        %4362 = vmatmul.bf16.gmra.mxu0 %v3925
        %v4363 = vpop.f32.mrf.mxu0
        %v4364 = vadd.f32 %v4021, %v4363
        %v4365 = vpop.f32.mrf.mxu0
        %v4366 = vadd.f32 %v4021, %v4365
        %4367 = vmatmul.bf16.gmra.mxu0 %v3927
        %v4368 = vpop.f32.mrf.mxu0
        %v4369 = vadd.f32 %v4021, %v4368
        %v4370 = vpop.f32.mrf.mxu0
        %v4371 = vadd.f32 %v4021, %v4370
        %4372 = vmatmul.bf16.gmra.mxu0 %v3929
        %v4373 = vpop.f32.mrf.mxu0
        %v4374 = vadd.f32 %v4021, %v4373
        %v4375 = vpop.f32.mrf.mxu0
        %v4376 = vadd.f32 %v4021, %v4375
        %4377 = vmatmul.bf16.gmra.mxu0 %v3931
        %v4378 = vpop.f32.mrf.mxu0
        %v4379 = vadd.f32 %v4021, %v4378
        %v4380 = vpop.f32.mrf.mxu0
        %v4381 = vadd.f32 %v4021, %v4380
        %4382 = vmatmul.bf16.gmra.mxu0 %v3933
        %v4383 = vpop.f32.mrf.mxu0
        %v4384 = vadd.f32 %v4021, %v4383
        %v4385 = vpop.f32.mrf.mxu0
        %v4386 = vadd.f32 %v4021, %v4385
        %4387 = vmatmul.bf16.gmra.mxu0 %v3935
        %v4388 = vpop.f32.mrf.mxu0
        %v4389 = vadd.f32 %v4021, %v4388
        %v4390 = vpop.f32.mrf.mxu0
        %v4391 = vadd.f32 %v4021, %v4390
        %4392 = vmatmul.bf16.gmra.mxu0 %v3937
        %v4393 = vpop.f32.mrf.mxu0
        %v4394 = vadd.f32 %v4021, %v4393
        %v4395 = vpop.f32.mrf.mxu0
        %v4396 = vadd.f32 %v4021, %v4395
        %4397 = vmatmul.bf16.gmra.mxu0 %v3939
        %v4398 = vpop.f32.mrf.mxu0
        %v4399 = vadd.f32 %v4021, %v4398
        %v4400 = vpop.f32.mrf.mxu0
        %v4401 = vadd.f32 %v4021, %v4400
        %4402 = vmatmul.bf16.gmra.mxu0 %v3941
        %v4403 = vpop.f32.mrf.mxu0
        %v4404 = vadd.f32 %v4021, %v4403
        %v4405 = vpop.f32.mrf.mxu0
        %v4406 = vadd.f32 %v4021, %v4405
        %4407 = vmatmul.bf16.gmra.mxu0 %v3943
        %v4408 = vpop.f32.mrf.mxu0
        %v4409 = vadd.f32 %v4021, %v4408
        %v4410 = vpop.f32.mrf.mxu0
        %v4411 = vadd.f32 %v4021, %v4410
        %4412 = vmatmul.bf16.gmra.mxu0 %v3945
        %v4413 = vpop.f32.mrf.mxu0
        %v4414 = vadd.f32 %v4021, %v4413
        %v4415 = vpop.f32.mrf.mxu0
        %v4416 = vadd.f32 %v4021, %v4415
        %4417 = vmatmul.bf16.gmra.mxu0 %v3947
        %v4418 = vpop.f32.mrf.mxu0
        %v4419 = vadd.f32 %v4021, %v4418
        %v4420 = vpop.f32.mrf.mxu0
        %v4421 = vadd.f32 %v4021, %v4420
        %4422 = vmatmul.bf16.gmra.mxu0 %v3949
        %v4423 = vpop.f32.mrf.mxu0
        %v4424 = vadd.f32 %v4021, %v4423
        %v4425 = vpop.f32.mrf.mxu0
        %v4426 = vadd.f32 %v4021, %v4425
        %4427 = vmatmul.bf16.gmra.mxu0 %v3951
        %v4428 = vpop.f32.mrf.mxu0
        %v4429 = vadd.f32 %v4021, %v4428
        %v4430 = vpop.f32.mrf.mxu0
        %v4431 = vadd.f32 %v4021, %v4430
        %4432 = vmatmul.bf16.gmra.mxu0 %v3953
        %v4433 = vpop.f32.mrf.mxu0
        %v4434 = vadd.f32 %v4021, %v4433
        %v4435 = vpop.f32.mrf.mxu0
        %v4436 = vadd.f32 %v4021, %v4435
        %4437 = vdwg.mxu0
        %4438 = vmatpush.bf16.msra.mxu0 %v4281
        %4439 = vmatpush.bf16.msra.mxu0 %v4277
        %4440 = vmatpush.bf16.msra.mxu0 %v4273
        %4441 = vmatpush.bf16.msra.mxu0 %v4269
        %4442 = vmatpush.bf16.msra.mxu0 %v4265
        %4443 = vmatpush.bf16.msra.mxu0 %v4261
        %4444 = vmatpush.bf16.msra.mxu0 %v4257
        %4445 = vmatpush.bf16.msra.mxu0 %v4253
        %4446 = vmatmul.bf16.gmra.mxu0 %v3924
        %v4447 = vpop.f32.mrf.mxu0
        %v4448 = vadd.f32 %v4359, %v4447
        %v4449 = vpop.f32.mrf.mxu0
        %v4450 = vadd.f32 %v4361, %v4449
        %4451 = vmatmul.bf16.gmra.mxu0 %v3926
        %v4452 = vpop.f32.mrf.mxu0
        %v4453 = vadd.f32 %v4364, %v4452
        %v4454 = vpop.f32.mrf.mxu0
        %v4455 = vadd.f32 %v4366, %v4454
        %4456 = vmatmul.bf16.gmra.mxu0 %v3928
        %v4457 = vpop.f32.mrf.mxu0
        %v4458 = vadd.f32 %v4369, %v4457
        %v4459 = vpop.f32.mrf.mxu0
        %v4460 = vadd.f32 %v4371, %v4459
        %4461 = vmatmul.bf16.gmra.mxu0 %v3930
        %v4462 = vpop.f32.mrf.mxu0
        %v4463 = vadd.f32 %v4374, %v4462
        %v4464 = vpop.f32.mrf.mxu0
        %v4465 = vadd.f32 %v4376, %v4464
        %4466 = vmatmul.bf16.gmra.mxu0 %v3932
        %v4467 = vpop.f32.mrf.mxu0
        %v4468 = vadd.f32 %v4379, %v4467
        %v4469 = vpop.f32.mrf.mxu0
        %v4470 = vadd.f32 %v4381, %v4469
        %4471 = vmatmul.bf16.gmra.mxu0 %v3934
        %v4472 = vpop.f32.mrf.mxu0
        %v4473 = vadd.f32 %v4384, %v4472
        %v4474 = vpop.f32.mrf.mxu0
        %v4475 = vadd.f32 %v4386, %v4474
        %4476 = vmatmul.bf16.gmra.mxu0 %v3936
        %v4477 = vpop.f32.mrf.mxu0
        %v4478 = vadd.f32 %v4389, %v4477
        %v4479 = vpop.f32.mrf.mxu0
        %v4480 = vadd.f32 %v4391, %v4479
        %4481 = vmatmul.bf16.gmra.mxu0 %v3938
        %v4482 = vpop.f32.mrf.mxu0
        %v4483 = vadd.f32 %v4394, %v4482
        %v4484 = vpop.f32.mrf.mxu0
        %v4485 = vadd.f32 %v4396, %v4484
        %4486 = vmatmul.bf16.gmra.mxu0 %v3940
        %v4487 = vpop.f32.mrf.mxu0
        %v4488 = vadd.f32 %v4399, %v4487
        %v4489 = vpop.f32.mrf.mxu0
        %v4490 = vadd.f32 %v4401, %v4489
        %4491 = vmatmul.bf16.gmra.mxu0 %v3942
        %v4492 = vpop.f32.mrf.mxu0
        %v4493 = vadd.f32 %v4404, %v4492
        %v4494 = vpop.f32.mrf.mxu0
        %v4495 = vadd.f32 %v4406, %v4494
        %4496 = vmatmul.bf16.gmra.mxu0 %v3944
        %v4497 = vpop.f32.mrf.mxu0
        %v4498 = vadd.f32 %v4409, %v4497
        %v4499 = vpop.f32.mrf.mxu0
        %v4500 = vadd.f32 %v4411, %v4499
        %4501 = vmatmul.bf16.gmra.mxu0 %v3946
        %v4502 = vpop.f32.mrf.mxu0
        %v4503 = vadd.f32 %v4414, %v4502
        %v4504 = vpop.f32.mrf.mxu0
        %v4505 = vadd.f32 %v4416, %v4504
        %4506 = vmatmul.bf16.gmra.mxu0 %v3948
        %v4507 = vpop.f32.mrf.mxu0
        %v4508 = vadd.f32 %v4419, %v4507
        %v4509 = vpop.f32.mrf.mxu0
        %v4510 = vadd.f32 %v4421, %v4509
        %4511 = vmatmul.bf16.gmra.mxu0 %v3950
        %v4512 = vpop.f32.mrf.mxu0
        %v4513 = vadd.f32 %v4424, %v4512
        %v4514 = vpop.f32.mrf.mxu0
        %v4515 = vadd.f32 %v4426, %v4514
        %4516 = vmatmul.bf16.gmra.mxu0 %v3952
        %v4517 = vpop.f32.mrf.mxu0
        %v4518 = vadd.f32 %v4429, %v4517
        %v4519 = vpop.f32.mrf.mxu0
        %v4520 = vadd.f32 %v4431, %v4519
        %4521 = vmatmul.bf16.gmra.mxu0 %v3954
        %v4522 = vpop.f32.mrf.mxu0
        %v4523 = vadd.f32 %v4434, %v4522
        %v4524 = vpop.f32.mrf.mxu0
        %v4525 = vadd.f32 %v4436, %v4524
        %4526 = vdwg.mxu0
        %4527 = vmatpush.bf16.msra.mxu0 %v4250
        %4528 = vmatpush.bf16.msra.mxu0 %v4246
        %4529 = vmatpush.bf16.msra.mxu0 %v4242
        %4530 = vmatpush.bf16.msra.mxu0 %v4238
        %4531 = vmatpush.bf16.msra.mxu0 %v4234
        %4532 = vmatpush.bf16.msra.mxu0 %v4230
        %4533 = vmatpush.bf16.msra.mxu0 %v4226
        %4534 = vmatpush.bf16.msra.mxu0 %v4222
        %4535 = vmatmul.bf16.gmra.mxu0 %v3923
        %v4536 = vpop.f32.mrf.mxu0
        %v4537 = vadd.f32 %v4022, %v4536
        %v4538 = vpop.f32.mrf.mxu0
        %v4539 = vadd.f32 %v4022, %v4538
        %4540 = vmatmul.bf16.gmra.mxu0 %v3925
        %v4541 = vpop.f32.mrf.mxu0
        %v4542 = vadd.f32 %v4022, %v4541
        %v4543 = vpop.f32.mrf.mxu0
        %v4544 = vadd.f32 %v4022, %v4543
        %4545 = vmatmul.bf16.gmra.mxu0 %v3927
        %v4546 = vpop.f32.mrf.mxu0
        %v4547 = vadd.f32 %v4022, %v4546
        %v4548 = vpop.f32.mrf.mxu0
        %v4549 = vadd.f32 %v4022, %v4548
        %4550 = vmatmul.bf16.gmra.mxu0 %v3929
        %v4551 = vpop.f32.mrf.mxu0
        %v4552 = vadd.f32 %v4022, %v4551
        %v4553 = vpop.f32.mrf.mxu0
        %v4554 = vadd.f32 %v4022, %v4553
        %4555 = vmatmul.bf16.gmra.mxu0 %v3931
        %v4556 = vpop.f32.mrf.mxu0
        %v4557 = vadd.f32 %v4022, %v4556
        %v4558 = vpop.f32.mrf.mxu0
        %v4559 = vadd.f32 %v4022, %v4558
        %4560 = vmatmul.bf16.gmra.mxu0 %v3933
        %v4561 = vpop.f32.mrf.mxu0
        %v4562 = vadd.f32 %v4022, %v4561
        %v4563 = vpop.f32.mrf.mxu0
        %v4564 = vadd.f32 %v4022, %v4563
        %4565 = vmatmul.bf16.gmra.mxu0 %v3935
        %v4566 = vpop.f32.mrf.mxu0
        %v4567 = vadd.f32 %v4022, %v4566
        %v4568 = vpop.f32.mrf.mxu0
        %v4569 = vadd.f32 %v4022, %v4568
        %4570 = vmatmul.bf16.gmra.mxu0 %v3937
        %v4571 = vpop.f32.mrf.mxu0
        %v4572 = vadd.f32 %v4022, %v4571
        %v4573 = vpop.f32.mrf.mxu0
        %v4574 = vadd.f32 %v4022, %v4573
        %4575 = vmatmul.bf16.gmra.mxu0 %v3939
        %v4576 = vpop.f32.mrf.mxu0
        %v4577 = vadd.f32 %v4022, %v4576
        %v4578 = vpop.f32.mrf.mxu0
        %v4579 = vadd.f32 %v4022, %v4578
        %4580 = vmatmul.bf16.gmra.mxu0 %v3941
        %v4581 = vpop.f32.mrf.mxu0
        %v4582 = vadd.f32 %v4022, %v4581
        %v4583 = vpop.f32.mrf.mxu0
        %v4584 = vadd.f32 %v4022, %v4583
        %4585 = vmatmul.bf16.gmra.mxu0 %v3943
        %v4586 = vpop.f32.mrf.mxu0
        %v4587 = vadd.f32 %v4022, %v4586
        %v4588 = vpop.f32.mrf.mxu0
        %v4589 = vadd.f32 %v4022, %v4588
        %4590 = vmatmul.bf16.gmra.mxu0 %v3945
        %v4591 = vpop.f32.mrf.mxu0
        %v4592 = vadd.f32 %v4022, %v4591
        %v4593 = vpop.f32.mrf.mxu0
        %v4594 = vadd.f32 %v4022, %v4593
        %4595 = vmatmul.bf16.gmra.mxu0 %v3947
        %v4596 = vpop.f32.mrf.mxu0
        %v4597 = vadd.f32 %v4022, %v4596
        %v4598 = vpop.f32.mrf.mxu0
        %v4599 = vadd.f32 %v4022, %v4598
        %4600 = vmatmul.bf16.gmra.mxu0 %v3949
        %v4601 = vpop.f32.mrf.mxu0
        %v4602 = vadd.f32 %v4022, %v4601
        %v4603 = vpop.f32.mrf.mxu0
        %v4604 = vadd.f32 %v4022, %v4603
        %4605 = vmatmul.bf16.gmra.mxu0 %v3951
        %v4606 = vpop.f32.mrf.mxu0
        %v4607 = vadd.f32 %v4022, %v4606
        %v4608 = vpop.f32.mrf.mxu0
        %v4609 = vadd.f32 %v4022, %v4608
        %4610 = vmatmul.bf16.gmra.mxu0 %v3953
        %v4611 = vpop.f32.mrf.mxu0
        %v4612 = vadd.f32 %v4022, %v4611
        %v4613 = vpop.f32.mrf.mxu0
        %v4614 = vadd.f32 %v4022, %v4613
        %4615 = vdwg.mxu0
        %4616 = vmatpush.bf16.msra.mxu0 %v4282
        %4617 = vmatpush.bf16.msra.mxu0 %v4278
        %4618 = vmatpush.bf16.msra.mxu0 %v4274
        %4619 = vmatpush.bf16.msra.mxu0 %v4270
        %4620 = vmatpush.bf16.msra.mxu0 %v4266
        %4621 = vmatpush.bf16.msra.mxu0 %v4262
        %4622 = vmatpush.bf16.msra.mxu0 %v4258
        %4623 = vmatpush.bf16.msra.mxu0 %v4254
        %4624 = vmatmul.bf16.gmra.mxu0 %v3924
        %v4625 = vpop.f32.mrf.mxu0
        %v4626 = vadd.f32 %v4537, %v4625
        %v4627 = vpop.f32.mrf.mxu0
        %v4628 = vadd.f32 %v4539, %v4627
        %4629 = vmatmul.bf16.gmra.mxu0 %v3926
        %v4630 = vpop.f32.mrf.mxu0
        %v4631 = vadd.f32 %v4542, %v4630
        %v4632 = vpop.f32.mrf.mxu0
        %v4633 = vadd.f32 %v4544, %v4632
        %4634 = vmatmul.bf16.gmra.mxu0 %v3928
        %v4635 = vpop.f32.mrf.mxu0
        %v4636 = vadd.f32 %v4547, %v4635
        %v4637 = vpop.f32.mrf.mxu0
        %v4638 = vadd.f32 %v4549, %v4637
        %4639 = vmatmul.bf16.gmra.mxu0 %v3930
        %v4640 = vpop.f32.mrf.mxu0
        %v4641 = vadd.f32 %v4552, %v4640
        %v4642 = vpop.f32.mrf.mxu0
        %v4643 = vadd.f32 %v4554, %v4642
        %4644 = vmatmul.bf16.gmra.mxu0 %v3932
        %v4645 = vpop.f32.mrf.mxu0
        %v4646 = vadd.f32 %v4557, %v4645
        %v4647 = vpop.f32.mrf.mxu0
        %v4648 = vadd.f32 %v4559, %v4647
        %4649 = vmatmul.bf16.gmra.mxu0 %v3934
        %v4650 = vpop.f32.mrf.mxu0
        %v4651 = vadd.f32 %v4562, %v4650
        %v4652 = vpop.f32.mrf.mxu0
        %v4653 = vadd.f32 %v4564, %v4652
        %4654 = vmatmul.bf16.gmra.mxu0 %v3936
        %v4655 = vpop.f32.mrf.mxu0
        %v4656 = vadd.f32 %v4567, %v4655
        %v4657 = vpop.f32.mrf.mxu0
        %v4658 = vadd.f32 %v4569, %v4657
        %4659 = vmatmul.bf16.gmra.mxu0 %v3938
        %v4660 = vpop.f32.mrf.mxu0
        %v4661 = vadd.f32 %v4572, %v4660
        %v4662 = vpop.f32.mrf.mxu0
        %v4663 = vadd.f32 %v4574, %v4662
        %4664 = vmatmul.bf16.gmra.mxu0 %v3940
        %v4665 = vpop.f32.mrf.mxu0
        %v4666 = vadd.f32 %v4577, %v4665
        %v4667 = vpop.f32.mrf.mxu0
        %v4668 = vadd.f32 %v4579, %v4667
        %4669 = vmatmul.bf16.gmra.mxu0 %v3942
        %v4670 = vpop.f32.mrf.mxu0
        %v4671 = vadd.f32 %v4582, %v4670
        %v4672 = vpop.f32.mrf.mxu0
        %v4673 = vadd.f32 %v4584, %v4672
        %4674 = vmatmul.bf16.gmra.mxu0 %v3944
        %v4675 = vpop.f32.mrf.mxu0
        %v4676 = vadd.f32 %v4587, %v4675
        %v4677 = vpop.f32.mrf.mxu0
        %v4678 = vadd.f32 %v4589, %v4677
        %4679 = vmatmul.bf16.gmra.mxu0 %v3946
        %v4680 = vpop.f32.mrf.mxu0
        %v4681 = vadd.f32 %v4592, %v4680
        %v4682 = vpop.f32.mrf.mxu0
        %v4683 = vadd.f32 %v4594, %v4682
        %4684 = vmatmul.bf16.gmra.mxu0 %v3948
        %v4685 = vpop.f32.mrf.mxu0
        %v4686 = vadd.f32 %v4597, %v4685
        %v4687 = vpop.f32.mrf.mxu0
        %v4688 = vadd.f32 %v4599, %v4687
        %4689 = vmatmul.bf16.gmra.mxu0 %v3950
        %v4690 = vpop.f32.mrf.mxu0
        %v4691 = vadd.f32 %v4602, %v4690
        %v4692 = vpop.f32.mrf.mxu0
        %v4693 = vadd.f32 %v4604, %v4692
        %4694 = vmatmul.bf16.gmra.mxu0 %v3952
        %v4695 = vpop.f32.mrf.mxu0
        %v4696 = vadd.f32 %v4607, %v4695
        %v4697 = vpop.f32.mrf.mxu0
        %v4698 = vadd.f32 %v4609, %v4697
        %4699 = vmatmul.bf16.gmra.mxu0 %v3954
        %v4700 = vpop.f32.mrf.mxu0
        %v4701 = vadd.f32 %v4612, %v4700
        %v4702 = vpop.f32.mrf.mxu0
        %v4703 = vadd.f32 %v4614, %v4702
        %4704 = vdwg.mxu0
        %4705 = vmatpush.bf16.msra.mxu0 %v4251
        %4706 = vmatpush.bf16.msra.mxu0 %v4247
        %4707 = vmatpush.bf16.msra.mxu0 %v4243
        %4708 = vmatpush.bf16.msra.mxu0 %v4239
        %4709 = vmatpush.bf16.msra.mxu0 %v4235
        %4710 = vmatpush.bf16.msra.mxu0 %v4231
        %4711 = vmatpush.bf16.msra.mxu0 %v4227
        %4712 = vmatpush.bf16.msra.mxu0 %v4223
        %4713 = vmatmul.bf16.gmra.mxu0 %v3923
        %v4714 = vpop.f32.mrf.mxu0
        %v4715 = vadd.f32 %v4023, %v4714
        %v4716 = vpop.f32.mrf.mxu0
        %v4717 = vadd.f32 %v4023, %v4716
        %4718 = vmatmul.bf16.gmra.mxu0 %v3925
        %v4719 = vpop.f32.mrf.mxu0
        %v4720 = vadd.f32 %v4023, %v4719
        %v4721 = vpop.f32.mrf.mxu0
        %v4722 = vadd.f32 %v4023, %v4721
        %4723 = vmatmul.bf16.gmra.mxu0 %v3927
        %v4724 = vpop.f32.mrf.mxu0
        %v4725 = vadd.f32 %v4023, %v4724
        %v4726 = vpop.f32.mrf.mxu0
        %v4727 = vadd.f32 %v4023, %v4726
        %4728 = vmatmul.bf16.gmra.mxu0 %v3929
        %v4729 = vpop.f32.mrf.mxu0
        %v4730 = vadd.f32 %v4023, %v4729
        %v4731 = vpop.f32.mrf.mxu0
        %v4732 = vadd.f32 %v4023, %v4731
        %4733 = vmatmul.bf16.gmra.mxu0 %v3931
        %v4734 = vpop.f32.mrf.mxu0
        %v4735 = vadd.f32 %v4023, %v4734
        %v4736 = vpop.f32.mrf.mxu0
        %v4737 = vadd.f32 %v4023, %v4736
        %4738 = vmatmul.bf16.gmra.mxu0 %v3933
        %v4739 = vpop.f32.mrf.mxu0
        %v4740 = vadd.f32 %v4023, %v4739
        %v4741 = vpop.f32.mrf.mxu0
        %v4742 = vadd.f32 %v4023, %v4741
        %4743 = vmatmul.bf16.gmra.mxu0 %v3935
        %v4744 = vpop.f32.mrf.mxu0
        %v4745 = vadd.f32 %v4023, %v4744
        %v4746 = vpop.f32.mrf.mxu0
        %v4747 = vadd.f32 %v4023, %v4746
        %4748 = vmatmul.bf16.gmra.mxu0 %v3937
        %v4749 = vpop.f32.mrf.mxu0
        %v4750 = vadd.f32 %v4023, %v4749
        %v4751 = vpop.f32.mrf.mxu0
        %v4752 = vadd.f32 %v4023, %v4751
        %4753 = vmatmul.bf16.gmra.mxu0 %v3939
        %v4754 = vpop.f32.mrf.mxu0
        %v4755 = vadd.f32 %v4023, %v4754
        %v4756 = vpop.f32.mrf.mxu0
        %v4757 = vadd.f32 %v4023, %v4756
        %4758 = vmatmul.bf16.gmra.mxu0 %v3941
        %v4759 = vpop.f32.mrf.mxu0
        %v4760 = vadd.f32 %v4023, %v4759
        %v4761 = vpop.f32.mrf.mxu0
        %v4762 = vadd.f32 %v4023, %v4761
        %4763 = vmatmul.bf16.gmra.mxu0 %v3943
        %v4764 = vpop.f32.mrf.mxu0
        %v4765 = vadd.f32 %v4023, %v4764
        %v4766 = vpop.f32.mrf.mxu0
        %v4767 = vadd.f32 %v4023, %v4766
        %4768 = vmatmul.bf16.gmra.mxu0 %v3945
        %v4769 = vpop.f32.mrf.mxu0
        %v4770 = vadd.f32 %v4023, %v4769
        %v4771 = vpop.f32.mrf.mxu0
        %v4772 = vadd.f32 %v4023, %v4771
        %4773 = vmatmul.bf16.gmra.mxu0 %v3947
        %v4774 = vpop.f32.mrf.mxu0
        %v4775 = vadd.f32 %v4023, %v4774
        %v4776 = vpop.f32.mrf.mxu0
        %v4777 = vadd.f32 %v4023, %v4776
        %4778 = vmatmul.bf16.gmra.mxu0 %v3949
        %v4779 = vpop.f32.mrf.mxu0
        %v4780 = vadd.f32 %v4023, %v4779
        %v4781 = vpop.f32.mrf.mxu0
        %v4782 = vadd.f32 %v4023, %v4781
        %4783 = vmatmul.bf16.gmra.mxu0 %v3951
        %v4784 = vpop.f32.mrf.mxu0
        %v4785 = vadd.f32 %v4023, %v4784
        %v4786 = vpop.f32.mrf.mxu0
        %v4787 = vadd.f32 %v4023, %v4786
        %4788 = vmatmul.bf16.gmra.mxu0 %v3953
        %v4789 = vpop.f32.mrf.mxu0
        %v4790 = vadd.f32 %v4023, %v4789
        %v4791 = vpop.f32.mrf.mxu0
        %v4792 = vadd.f32 %v4023, %v4791
        %4793 = vdwg.mxu0
        %4794 = vmatpush.bf16.msra.mxu0 %v4283
        %4795 = vmatpush.bf16.msra.mxu0 %v4279
        %4796 = vmatpush.bf16.msra.mxu0 %v4275
        %4797 = vmatpush.bf16.msra.mxu0 %v4271
        %4798 = vmatpush.bf16.msra.mxu0 %v4267
        %4799 = vmatpush.bf16.msra.mxu0 %v4263
        %4800 = vmatpush.bf16.msra.mxu0 %v4259
        %4801 = vmatpush.bf16.msra.mxu0 %v4255
        %4802 = vmatmul.bf16.gmra.mxu0 %v3924
        %v4803 = vpop.f32.mrf.mxu0
        %v4804 = vadd.f32 %v4715, %v4803
        %v4805 = vpop.f32.mrf.mxu0
        %v4806 = vadd.f32 %v4717, %v4805
        %4807 = vmatmul.bf16.gmra.mxu0 %v3926
        %v4808 = vpop.f32.mrf.mxu0
        %v4809 = vadd.f32 %v4720, %v4808
        %v4810 = vpop.f32.mrf.mxu0
        %v4811 = vadd.f32 %v4722, %v4810
        %4812 = vmatmul.bf16.gmra.mxu0 %v3928
        %v4813 = vpop.f32.mrf.mxu0
        %v4814 = vadd.f32 %v4725, %v4813
        %v4815 = vpop.f32.mrf.mxu0
        %v4816 = vadd.f32 %v4727, %v4815
        %4817 = vmatmul.bf16.gmra.mxu0 %v3930
        %v4818 = vpop.f32.mrf.mxu0
        %v4819 = vadd.f32 %v4730, %v4818
        %v4820 = vpop.f32.mrf.mxu0
        %v4821 = vadd.f32 %v4732, %v4820
        %4822 = vmatmul.bf16.gmra.mxu0 %v3932
        %v4823 = vpop.f32.mrf.mxu0
        %v4824 = vadd.f32 %v4735, %v4823
        %v4825 = vpop.f32.mrf.mxu0
        %v4826 = vadd.f32 %v4737, %v4825
        %4827 = vmatmul.bf16.gmra.mxu0 %v3934
        %v4828 = vpop.f32.mrf.mxu0
        %v4829 = vadd.f32 %v4740, %v4828
        %v4830 = vpop.f32.mrf.mxu0
        %v4831 = vadd.f32 %v4742, %v4830
        %4832 = vmatmul.bf16.gmra.mxu0 %v3936
        %v4833 = vpop.f32.mrf.mxu0
        %v4834 = vadd.f32 %v4745, %v4833
        %v4835 = vpop.f32.mrf.mxu0
        %v4836 = vadd.f32 %v4747, %v4835
        %4837 = vmatmul.bf16.gmra.mxu0 %v3938
        %v4838 = vpop.f32.mrf.mxu0
        %v4839 = vadd.f32 %v4750, %v4838
        %v4840 = vpop.f32.mrf.mxu0
        %v4841 = vadd.f32 %v4752, %v4840
        %4842 = vmatmul.bf16.gmra.mxu0 %v3940
        %v4843 = vpop.f32.mrf.mxu0
        %v4844 = vadd.f32 %v4755, %v4843
        %v4845 = vpop.f32.mrf.mxu0
        %v4846 = vadd.f32 %v4757, %v4845
        %4847 = vmatmul.bf16.gmra.mxu0 %v3942
        %v4848 = vpop.f32.mrf.mxu0
        %v4849 = vadd.f32 %v4760, %v4848
        %v4850 = vpop.f32.mrf.mxu0
        %v4851 = vadd.f32 %v4762, %v4850
        %4852 = vmatmul.bf16.gmra.mxu0 %v3944
        %v4853 = vpop.f32.mrf.mxu0
        %v4854 = vadd.f32 %v4765, %v4853
        %v4855 = vpop.f32.mrf.mxu0
        %v4856 = vadd.f32 %v4767, %v4855
        %4857 = vmatmul.bf16.gmra.mxu0 %v3946
        %v4858 = vpop.f32.mrf.mxu0
        %v4859 = vadd.f32 %v4770, %v4858
        %v4860 = vpop.f32.mrf.mxu0
        %v4861 = vadd.f32 %v4772, %v4860
        %4862 = vmatmul.bf16.gmra.mxu0 %v3948
        %v4863 = vpop.f32.mrf.mxu0
        %v4864 = vadd.f32 %v4775, %v4863
        %v4865 = vpop.f32.mrf.mxu0
        %v4866 = vadd.f32 %v4777, %v4865
        %4867 = vmatmul.bf16.gmra.mxu0 %v3950
        %v4868 = vpop.f32.mrf.mxu0
        %v4869 = vadd.f32 %v4780, %v4868
        %v4870 = vpop.f32.mrf.mxu0
        %v4871 = vadd.f32 %v4782, %v4870
        %4872 = vmatmul.bf16.gmra.mxu0 %v3952
        %v4873 = vpop.f32.mrf.mxu0
        %v4874 = vadd.f32 %v4785, %v4873
        %v4875 = vpop.f32.mrf.mxu0
        %v4876 = vadd.f32 %v4787, %v4875
        %4877 = vmatmul.bf16.gmra.mxu0 %v3954
        %v4878 = vpop.f32.mrf.mxu0
        %v4879 = vadd.f32 %v4790, %v4878
        %v4880 = vpop.f32.mrf.mxu0
        %v4881 = vadd.f32 %v4792, %v4880
        %4882 = vdwg.mxu0
        %4883 = vmatpush.bf16.msra.mxu0 %v4252
        %4884 = vmatpush.bf16.msra.mxu0 %v4248
        %4885 = vmatpush.bf16.msra.mxu0 %v4244
        %4886 = vmatpush.bf16.msra.mxu0 %v4240
        %4887 = vmatpush.bf16.msra.mxu0 %v4236
        %4888 = vmatpush.bf16.msra.mxu0 %v4232
        %4889 = vmatpush.bf16.msra.mxu0 %v4228
        %4890 = vmatpush.bf16.msra.mxu0 %v4224
        %4891 = vmatmul.bf16.gmra.mxu0 %v3923
        %v4892 = vpop.f32.mrf.mxu0
        %v4893 = vadd.f32 %v4024, %v4892
        %v4894 = vpop.f32.mrf.mxu0
        %v4895 = vadd.f32 %v4024, %v4894
        %4896 = vmatmul.bf16.gmra.mxu0 %v3925
        %v4897 = vpop.f32.mrf.mxu0
        %v4898 = vadd.f32 %v4024, %v4897
        %v4899 = vpop.f32.mrf.mxu0
        %v4900 = vadd.f32 %v4024, %v4899
        %4901 = vmatmul.bf16.gmra.mxu0 %v3927
        %v4902 = vpop.f32.mrf.mxu0
        %v4903 = vadd.f32 %v4024, %v4902
        %v4904 = vpop.f32.mrf.mxu0
        %v4905 = vadd.f32 %v4024, %v4904
        %4906 = vmatmul.bf16.gmra.mxu0 %v3929
        %v4907 = vpop.f32.mrf.mxu0
        %v4908 = vadd.f32 %v4024, %v4907
        %v4909 = vpop.f32.mrf.mxu0
        %v4910 = vadd.f32 %v4024, %v4909
        %4911 = vmatmul.bf16.gmra.mxu0 %v3931
        %v4912 = vpop.f32.mrf.mxu0
        %v4913 = vadd.f32 %v4024, %v4912
        %v4914 = vpop.f32.mrf.mxu0
        %v4915 = vadd.f32 %v4024, %v4914
        %4916 = vmatmul.bf16.gmra.mxu0 %v3933
        %v4917 = vpop.f32.mrf.mxu0
        %v4918 = vadd.f32 %v4024, %v4917
        %v4919 = vpop.f32.mrf.mxu0
        %v4920 = vadd.f32 %v4024, %v4919
        %4921 = vmatmul.bf16.gmra.mxu0 %v3935
        %v4922 = vpop.f32.mrf.mxu0
        %v4923 = vadd.f32 %v4024, %v4922
        %v4924 = vpop.f32.mrf.mxu0
        %v4925 = vadd.f32 %v4024, %v4924
        %4926 = vmatmul.bf16.gmra.mxu0 %v3937
        %v4927 = vpop.f32.mrf.mxu0
        %v4928 = vadd.f32 %v4024, %v4927
        %v4929 = vpop.f32.mrf.mxu0
        %v4930 = vadd.f32 %v4024, %v4929
        %4931 = vmatmul.bf16.gmra.mxu0 %v3939
        %v4932 = vpop.f32.mrf.mxu0
        %v4933 = vadd.f32 %v4024, %v4932
        %v4934 = vpop.f32.mrf.mxu0
        %v4935 = vadd.f32 %v4024, %v4934
        %4936 = vmatmul.bf16.gmra.mxu0 %v3941
        %v4937 = vpop.f32.mrf.mxu0
        %v4938 = vadd.f32 %v4024, %v4937
        %v4939 = vpop.f32.mrf.mxu0
        %v4940 = vadd.f32 %v4024, %v4939
        %4941 = vmatmul.bf16.gmra.mxu0 %v3943
        %v4942 = vpop.f32.mrf.mxu0
        %v4943 = vadd.f32 %v4024, %v4942
        %v4944 = vpop.f32.mrf.mxu0
        %v4945 = vadd.f32 %v4024, %v4944
        %4946 = vmatmul.bf16.gmra.mxu0 %v3945
        %v4947 = vpop.f32.mrf.mxu0
        %v4948 = vadd.f32 %v4024, %v4947
        %v4949 = vpop.f32.mrf.mxu0
        %v4950 = vadd.f32 %v4024, %v4949
        %4951 = vmatmul.bf16.gmra.mxu0 %v3947
        %v4952 = vpop.f32.mrf.mxu0
        %v4953 = vadd.f32 %v4024, %v4952
        %v4954 = vpop.f32.mrf.mxu0
        %v4955 = vadd.f32 %v4024, %v4954
        %4956 = vmatmul.bf16.gmra.mxu0 %v3949
        %v4957 = vpop.f32.mrf.mxu0
        %v4958 = vadd.f32 %v4024, %v4957
        %v4959 = vpop.f32.mrf.mxu0
        %v4960 = vadd.f32 %v4024, %v4959
        %4961 = vmatmul.bf16.gmra.mxu0 %v3951
        %v4962 = vpop.f32.mrf.mxu0
        %v4963 = vadd.f32 %v4024, %v4962
        %v4964 = vpop.f32.mrf.mxu0
        %v4965 = vadd.f32 %v4024, %v4964
        %4966 = vmatmul.bf16.gmra.mxu0 %v3953
        %v4967 = vpop.f32.mrf.mxu0
        %v4968 = vadd.f32 %v4024, %v4967
        %v4969 = vpop.f32.mrf.mxu0
        %v4970 = vadd.f32 %v4024, %v4969
        %4971 = vdwg.mxu0
        %4972 = vmatpush.bf16.msra.mxu0 %v4284
        %4973 = vmatpush.bf16.msra.mxu0 %v4280
        %4974 = vmatpush.bf16.msra.mxu0 %v4276
        %4975 = vmatpush.bf16.msra.mxu0 %v4272
        %4976 = vmatpush.bf16.msra.mxu0 %v4268
        %4977 = vmatpush.bf16.msra.mxu0 %v4264
        %4978 = vmatpush.bf16.msra.mxu0 %v4260
        %4979 = vmatpush.bf16.msra.mxu0 %v4256
        %4980 = vmatmul.bf16.gmra.mxu0 %v3924
        %v4981 = vpop.f32.mrf.mxu0
        %v4982 = vadd.f32 %v4893, %v4981
        %v4983 = vpop.f32.mrf.mxu0
        %v4984 = vadd.f32 %v4895, %v4983
        %4985 = vmatmul.bf16.gmra.mxu0 %v3926
        %v4986 = vpop.f32.mrf.mxu0
        %v4987 = vadd.f32 %v4898, %v4986
        %v4988 = vpop.f32.mrf.mxu0
        %v4989 = vadd.f32 %v4900, %v4988
        %4990 = vmatmul.bf16.gmra.mxu0 %v3928
        %v4991 = vpop.f32.mrf.mxu0
        %v4992 = vadd.f32 %v4903, %v4991
        %v4993 = vpop.f32.mrf.mxu0
        %v4994 = vadd.f32 %v4905, %v4993
        %4995 = vmatmul.bf16.gmra.mxu0 %v3930
        %v4996 = vpop.f32.mrf.mxu0
        %v4997 = vadd.f32 %v4908, %v4996
        %v4998 = vpop.f32.mrf.mxu0
        %v4999 = vadd.f32 %v4910, %v4998
        %5000 = vmatmul.bf16.gmra.mxu0 %v3932
        %v5001 = vpop.f32.mrf.mxu0
        %v5002 = vadd.f32 %v4913, %v5001
        %v5003 = vpop.f32.mrf.mxu0
        %v5004 = vadd.f32 %v4915, %v5003
        %5005 = vmatmul.bf16.gmra.mxu0 %v3934
        %v5006 = vpop.f32.mrf.mxu0
        %v5007 = vadd.f32 %v4918, %v5006
        %v5008 = vpop.f32.mrf.mxu0
        %v5009 = vadd.f32 %v4920, %v5008
        %5010 = vmatmul.bf16.gmra.mxu0 %v3936
        %v5011 = vpop.f32.mrf.mxu0
        %v5012 = vadd.f32 %v4923, %v5011
        %v5013 = vpop.f32.mrf.mxu0
        %v5014 = vadd.f32 %v4925, %v5013
        %5015 = vmatmul.bf16.gmra.mxu0 %v3938
        %v5016 = vpop.f32.mrf.mxu0
        %v5017 = vadd.f32 %v4928, %v5016
        %v5018 = vpop.f32.mrf.mxu0
        %v5019 = vadd.f32 %v4930, %v5018
        %5020 = vmatmul.bf16.gmra.mxu0 %v3940
        %v5021 = vpop.f32.mrf.mxu0
        %v5022 = vadd.f32 %v4933, %v5021
        %v5023 = vpop.f32.mrf.mxu0
        %v5024 = vadd.f32 %v4935, %v5023
        %5025 = vmatmul.bf16.gmra.mxu0 %v3942
        %v5026 = vpop.f32.mrf.mxu0
        %v5027 = vadd.f32 %v4938, %v5026
        %v5028 = vpop.f32.mrf.mxu0
        %v5029 = vadd.f32 %v4940, %v5028
        %5030 = vmatmul.bf16.gmra.mxu0 %v3944
        %v5031 = vpop.f32.mrf.mxu0
        %v5032 = vadd.f32 %v4943, %v5031
        %v5033 = vpop.f32.mrf.mxu0
        %v5034 = vadd.f32 %v4945, %v5033
        %5035 = vmatmul.bf16.gmra.mxu0 %v3946
        %v5036 = vpop.f32.mrf.mxu0
        %v5037 = vadd.f32 %v4948, %v5036
        %v5038 = vpop.f32.mrf.mxu0
        %v5039 = vadd.f32 %v4950, %v5038
        %5040 = vmatmul.bf16.gmra.mxu0 %v3948
        %v5041 = vpop.f32.mrf.mxu0
        %v5042 = vadd.f32 %v4953, %v5041
        %v5043 = vpop.f32.mrf.mxu0
        %v5044 = vadd.f32 %v4955, %v5043
        %5045 = vmatmul.bf16.gmra.mxu0 %v3950
        %v5046 = vpop.f32.mrf.mxu0
        %v5047 = vadd.f32 %v4958, %v5046
        %v5048 = vpop.f32.mrf.mxu0
        %v5049 = vadd.f32 %v4960, %v5048
        %5050 = vmatmul.bf16.gmra.mxu0 %v3952
        %v5051 = vpop.f32.mrf.mxu0
        %v5052 = vadd.f32 %v4963, %v5051
        %v5053 = vpop.f32.mrf.mxu0
        %v5054 = vadd.f32 %v4965, %v5053
        %5055 = vmatmul.bf16.gmra.mxu0 %v3954
        %v5056 = vpop.f32.mrf.mxu0
        %v5057 = vadd.f32 %v4968, %v5056
        %v5058 = vpop.f32.mrf.mxu0
        %v5059 = vadd.f32 %v4970, %v5058
        %5060 = vdwg.mxu0
        %5061 = vst [vmem:[%s575] sm:$0xff] %v4448
        %5062 = vst [vmem:[%s575 + $0x8] sm:$0xff] %v4626
        %5063 = vst [vmem:[%s575 + $0x10] sm:$0xff] %v4804
        %5064 = vst [vmem:[%s575 + $0x18] sm:$0xff] %v4982
        %5065 = vst [vmem:[%s575 + $0x20] sm:$0xff] %v4450
        %5066 = vst [vmem:[%s575 + $0x28] sm:$0xff] %v4628
        %5067 = vst [vmem:[%s575 + $0x30] sm:$0xff] %v4806
        %5068 = vst [vmem:[%s575 + $0x38] sm:$0xff] %v4984
        %5069 = vst [vmem:[%s575 + $0x40] sm:$0xff] %v4453
        %5070 = vst [vmem:[%s575 + $0x48] sm:$0xff] %v4631
        %5071 = vst [vmem:[%s575 + $0x50] sm:$0xff] %v4809
        %5072 = vst [vmem:[%s575 + $0x58] sm:$0xff] %v4987
        %5073 = vst [vmem:[%s575 + $0x60] sm:$0xff] %v4455
        %5074 = vst [vmem:[%s575 + $0x68] sm:$0xff] %v4633
        %5075 = vst [vmem:[%s575 + $0x70] sm:$0xff] %v4811
        %5076 = vst [vmem:[%s575 + $0x78] sm:$0xff] %v4989
        %5077 = vst [vmem:[%s575 + $0x80] sm:$0xff] %v4458
        %5078 = vst [vmem:[%s575 + $0x88] sm:$0xff] %v4636
        %5079 = vst [vmem:[%s575 + $0x90] sm:$0xff] %v4814
        %5080 = vst [vmem:[%s575 + $0x98] sm:$0xff] %v4992
        %5081 = vst [vmem:[%s575 + $0xa0] sm:$0xff] %v4460
        %5082 = vst [vmem:[%s575 + $0xa8] sm:$0xff] %v4638
        %5083 = vst [vmem:[%s575 + $0xb0] sm:$0xff] %v4816
        %5084 = vst [vmem:[%s575 + $0xb8] sm:$0xff] %v4994
        %5085 = vst [vmem:[%s575 + $0xc0] sm:$0xff] %v4463
        %5086 = vst [vmem:[%s575 + $0xc8] sm:$0xff] %v4641
        %5087 = vst [vmem:[%s575 + $0xd0] sm:$0xff] %v4819
        %5088 = vst [vmem:[%s575 + $0xd8] sm:$0xff] %v4997
        %5089 = vst [vmem:[%s575 + $0xe0] sm:$0xff] %v4465
        %5090 = vst [vmem:[%s575 + $0xe8] sm:$0xff] %v4643
        %5091 = vst [vmem:[%s575 + $0xf0] sm:$0xff] %v4821
        %5092 = vst [vmem:[%s575 + $0xf8] sm:$0xff] %v4999
        %5093 = vst [vmem:[%s575 + $0x100] sm:$0xff] %v4468
        %5094 = vst [vmem:[%s575 + $0x108] sm:$0xff] %v4646
        %5095 = vst [vmem:[%s575 + $0x110] sm:$0xff] %v4824
        %5096 = vst [vmem:[%s575 + $0x118] sm:$0xff] %v5002
        %5097 = vst [vmem:[%s575 + $0x120] sm:$0xff] %v4470
        %5098 = vst [vmem:[%s575 + $0x128] sm:$0xff] %v4648
        %5099 = vst [vmem:[%s575 + $0x130] sm:$0xff] %v4826
        %5100 = vst [vmem:[%s575 + $0x138] sm:$0xff] %v5004
        %5101 = vst [vmem:[%s575 + $0x140] sm:$0xff] %v4473
        %5102 = vst [vmem:[%s575 + $0x148] sm:$0xff] %v4651
        %5103 = vst [vmem:[%s575 + $0x150] sm:$0xff] %v4829
        %5104 = vst [vmem:[%s575 + $0x158] sm:$0xff] %v5007
        %5105 = vst [vmem:[%s575 + $0x160] sm:$0xff] %v4475
        %5106 = vst [vmem:[%s575 + $0x168] sm:$0xff] %v4653
        %5107 = vst [vmem:[%s575 + $0x170] sm:$0xff] %v4831
        %5108 = vst [vmem:[%s575 + $0x178] sm:$0xff] %v5009
        %5109 = vst [vmem:[%s575 + $0x180] sm:$0xff] %v4478
        %5110 = vst [vmem:[%s575 + $0x188] sm:$0xff] %v4656
        %5111 = vst [vmem:[%s575 + $0x190] sm:$0xff] %v4834
        %5112 = vst [vmem:[%s575 + $0x198] sm:$0xff] %v5012
        %5113 = vst [vmem:[%s575 + $0x1a0] sm:$0xff] %v4480
        %5114 = vst [vmem:[%s575 + $0x1a8] sm:$0xff] %v4658
        %5115 = vst [vmem:[%s575 + $0x1b0] sm:$0xff] %v4836
        %5116 = vst [vmem:[%s575 + $0x1b8] sm:$0xff] %v5014
        %5117 = vst [vmem:[%s575 + $0x1c0] sm:$0xff] %v4483
        %5118 = vst [vmem:[%s575 + $0x1c8] sm:$0xff] %v4661
        %5119 = vst [vmem:[%s575 + $0x1d0] sm:$0xff] %v4839
        %5120 = vst [vmem:[%s575 + $0x1d8] sm:$0xff] %v5017
        %5121 = vst [vmem:[%s575 + $0x1e0] sm:$0xff] %v4485
        %5122 = vst [vmem:[%s575 + $0x1e8] sm:$0xff] %v4663
        %5123 = vst [vmem:[%s575 + $0x1f0] sm:$0xff] %v4841
        %5124 = vst [vmem:[%s575 + $0x1f8] sm:$0xff] %v5019
        %5125 = vst [vmem:[%s575 + $0x200] sm:$0xff] %v4488
        %5126 = vst [vmem:[%s575 + $0x208] sm:$0xff] %v4666
        %5127 = vst [vmem:[%s575 + $0x210] sm:$0xff] %v4844
        %5128 = vst [vmem:[%s575 + $0x218] sm:$0xff] %v5022
        %5129 = vst [vmem:[%s575 + $0x220] sm:$0xff] %v4490
        %5130 = vst [vmem:[%s575 + $0x228] sm:$0xff] %v4668
        %5131 = vst [vmem:[%s575 + $0x230] sm:$0xff] %v4846
        %5132 = vst [vmem:[%s575 + $0x238] sm:$0xff] %v5024
        %5133 = vst [vmem:[%s575 + $0x240] sm:$0xff] %v4493
        %5134 = vst [vmem:[%s575 + $0x248] sm:$0xff] %v4671
        %5135 = vst [vmem:[%s575 + $0x250] sm:$0xff] %v4849
        %5136 = vst [vmem:[%s575 + $0x258] sm:$0xff] %v5027
        %5137 = vst [vmem:[%s575 + $0x260] sm:$0xff] %v4495
        %5138 = vst [vmem:[%s575 + $0x268] sm:$0xff] %v4673
        %5139 = vst [vmem:[%s575 + $0x270] sm:$0xff] %v4851
        %5140 = vst [vmem:[%s575 + $0x278] sm:$0xff] %v5029
        %5141 = vst [vmem:[%s575 + $0x280] sm:$0xff] %v4498
        %5142 = vst [vmem:[%s575 + $0x288] sm:$0xff] %v4676
        %5143 = vst [vmem:[%s575 + $0x290] sm:$0xff] %v4854
        %5144 = vst [vmem:[%s575 + $0x298] sm:$0xff] %v5032
        %5145 = vst [vmem:[%s575 + $0x2a0] sm:$0xff] %v4500
        %5146 = vst [vmem:[%s575 + $0x2a8] sm:$0xff] %v4678
        %5147 = vst [vmem:[%s575 + $0x2b0] sm:$0xff] %v4856
        %5148 = vst [vmem:[%s575 + $0x2b8] sm:$0xff] %v5034
        %5149 = vst [vmem:[%s575 + $0x2c0] sm:$0xff] %v4503
        %5150 = vst [vmem:[%s575 + $0x2c8] sm:$0xff] %v4681
        %5151 = vst [vmem:[%s575 + $0x2d0] sm:$0xff] %v4859
        %5152 = vst [vmem:[%s575 + $0x2d8] sm:$0xff] %v5037
        %5153 = vst [vmem:[%s575 + $0x2e0] sm:$0xff] %v4505
        %5154 = vst [vmem:[%s575 + $0x2e8] sm:$0xff] %v4683
        %5155 = vst [vmem:[%s575 + $0x2f0] sm:$0xff] %v4861
        %5156 = vst [vmem:[%s575 + $0x2f8] sm:$0xff] %v5039
        %5157 = vst [vmem:[%s575 + $0x300] sm:$0xff] %v4508
        %5158 = vst [vmem:[%s575 + $0x308] sm:$0xff] %v4686
        %5159 = vst [vmem:[%s575 + $0x310] sm:$0xff] %v4864
        %5160 = vst [vmem:[%s575 + $0x318] sm:$0xff] %v5042
        %5161 = vst [vmem:[%s575 + $0x320] sm:$0xff] %v4510
        %5162 = vst [vmem:[%s575 + $0x328] sm:$0xff] %v4688
        %5163 = vst [vmem:[%s575 + $0x330] sm:$0xff] %v4866
        %5164 = vst [vmem:[%s575 + $0x338] sm:$0xff] %v5044
        %5165 = vst [vmem:[%s575 + $0x340] sm:$0xff] %v4513
        %5166 = vst [vmem:[%s575 + $0x348] sm:$0xff] %v4691
        %5167 = vst [vmem:[%s575 + $0x350] sm:$0xff] %v4869
        %5168 = vst [vmem:[%s575 + $0x358] sm:$0xff] %v5047
        %5169 = vst [vmem:[%s575 + $0x360] sm:$0xff] %v4515
        %5170 = vst [vmem:[%s575 + $0x368] sm:$0xff] %v4693
        %5171 = vst [vmem:[%s575 + $0x370] sm:$0xff] %v4871
        %5172 = vst [vmem:[%s575 + $0x378] sm:$0xff] %v5049
        %5173 = vst [vmem:[%s575 + $0x380] sm:$0xff] %v4518
        %5174 = vst [vmem:[%s575 + $0x388] sm:$0xff] %v4696
        %5175 = vst [vmem:[%s575 + $0x390] sm:$0xff] %v4874
        %5176 = vst [vmem:[%s575 + $0x398] sm:$0xff] %v5052
        %5177 = vst [vmem:[%s575 + $0x3a0] sm:$0xff] %v4520
        %5178 = vst [vmem:[%s575 + $0x3a8] sm:$0xff] %v4698
        %5179 = vst [vmem:[%s575 + $0x3b0] sm:$0xff] %v4876
        %5180 = vst [vmem:[%s575 + $0x3b8] sm:$0xff] %v5054
        %5181 = vst [vmem:[%s575 + $0x3c0] sm:$0xff] %v4523
        %5182 = vst [vmem:[%s575 + $0x3c8] sm:$0xff] %v4701
        %5183 = vst [vmem:[%s575 + $0x3d0] sm:$0xff] %v4879
        %5184 = vst [vmem:[%s575 + $0x3d8] sm:$0xff] %v5057
        %5185 = vst [vmem:[%s575 + $0x3e0] sm:$0xff] %v4525
        %5186 = vst [vmem:[%s575 + $0x3e8] sm:$0xff] %v4703
        %5187 = vst [vmem:[%s575 + $0x3f0] sm:$0xff] %v4881
        %5188 = vst [vmem:[%s575 + $0x3f8] sm:$0xff] %v5059
        %5189 = vst [vmem:[%s582] sm:$0xff] %v3114
        %5190 = vst [vmem:[%s582 + $0x8] sm:$0xff] %v3116
        %5191 = vst [vmem:[%s582 + $0x10] sm:$0xff] %v3119
        %5192 = vst [vmem:[%s582 + $0x18] sm:$0xff] %v3121
        %5193 = vst [vmem:[%s582 + $0x20] sm:$0xff] %v3124
        %5194 = vst [vmem:[%s582 + $0x28] sm:$0xff] %v3126
        %5195 = vst [vmem:[%s582 + $0x30] sm:$0xff] %v3129
        %5196 = vst [vmem:[%s582 + $0x38] sm:$0xff] %v3131
        %5197 = vst [vmem:[%s582 + $0x40] sm:$0xff] %v3134
        %5198 = vst [vmem:[%s582 + $0x48] sm:$0xff] %v3136
        %5199 = vst [vmem:[%s582 + $0x50] sm:$0xff] %v3139
        %5200 = vst [vmem:[%s582 + $0x58] sm:$0xff] %v3141
        %5201 = vst [vmem:[%s582 + $0x60] sm:$0xff] %v3144
        %5202 = vst [vmem:[%s582 + $0x68] sm:$0xff] %v3146
        %5203 = vst [vmem:[%s582 + $0x70] sm:$0xff] %v3149
        %5204 = vst [vmem:[%s582 + $0x78] sm:$0xff] %v3151
        %5205 = vst [vmem:[%s582 + $0x80] sm:$0xff] %v3154
        %5206 = vst [vmem:[%s582 + $0x88] sm:$0xff] %v3156
        %5207 = vst [vmem:[%s582 + $0x90] sm:$0xff] %v3159
        %5208 = vst [vmem:[%s582 + $0x98] sm:$0xff] %v3161
        %5209 = vst [vmem:[%s582 + $0xa0] sm:$0xff] %v3164
        %5210 = vst [vmem:[%s582 + $0xa8] sm:$0xff] %v3166
        %5211 = vst [vmem:[%s582 + $0xb0] sm:$0xff] %v3169
        %5212 = vst [vmem:[%s582 + $0xb8] sm:$0xff] %v3171
        %5213 = vst [vmem:[%s582 + $0xc0] sm:$0xff] %v3174
        %5214 = vst [vmem:[%s582 + $0xc8] sm:$0xff] %v3176
        %5215 = vst [vmem:[%s582 + $0xd0] sm:$0xff] %v3179
        %5216 = vst [vmem:[%s582 + $0xd8] sm:$0xff] %v3181
        %5217 = vst [vmem:[%s582 + $0xe0] sm:$0xff] %v3184
        %5218 = vst [vmem:[%s582 + $0xe8] sm:$0xff] %v3186
        %5219 = vst [vmem:[%s582 + $0xf0] sm:$0xff] %v3189
        %5220 = vst [vmem:[%s582 + $0xf8] sm:$0xff] %v3191
        %5221 = vst [vmem:[%s589] sm:$0xff] %v3292
        %5222 = vst [vmem:[%s589 + $0x8] sm:$0xff] %v3294
        %5223 = vst [vmem:[%s589 + $0x10] sm:$0xff] %v3297
        %5224 = vst [vmem:[%s589 + $0x18] sm:$0xff] %v3299
        %5225 = vst [vmem:[%s589 + $0x20] sm:$0xff] %v3302
        %5226 = vst [vmem:[%s589 + $0x28] sm:$0xff] %v3304
        %5227 = vst [vmem:[%s589 + $0x30] sm:$0xff] %v3307
        %5228 = vst [vmem:[%s589 + $0x38] sm:$0xff] %v3309
        %5229 = vst [vmem:[%s589 + $0x40] sm:$0xff] %v3312
        %5230 = vst [vmem:[%s589 + $0x48] sm:$0xff] %v3314
        %5231 = vst [vmem:[%s589 + $0x50] sm:$0xff] %v3317
        %5232 = vst [vmem:[%s589 + $0x58] sm:$0xff] %v3319
        %5233 = vst [vmem:[%s589 + $0x60] sm:$0xff] %v3322
        %5234 = vst [vmem:[%s589 + $0x68] sm:$0xff] %v3324
        %5235 = vst [vmem:[%s589 + $0x70] sm:$0xff] %v3327
        %5236 = vst [vmem:[%s589 + $0x78] sm:$0xff] %v3329
        %5237 = vst [vmem:[%s589 + $0x80] sm:$0xff] %v3332
        %5238 = vst [vmem:[%s589 + $0x88] sm:$0xff] %v3334
        %5239 = vst [vmem:[%s589 + $0x90] sm:$0xff] %v3337
        %5240 = vst [vmem:[%s589 + $0x98] sm:$0xff] %v3339
        %5241 = vst [vmem:[%s589 + $0xa0] sm:$0xff] %v3342
        %5242 = vst [vmem:[%s589 + $0xa8] sm:$0xff] %v3344
        %5243 = vst [vmem:[%s589 + $0xb0] sm:$0xff] %v3347
        %5244 = vst [vmem:[%s589 + $0xb8] sm:$0xff] %v3349
        %5245 = vst [vmem:[%s589 + $0xc0] sm:$0xff] %v3352
        %5246 = vst [vmem:[%s589 + $0xc8] sm:$0xff] %v3354
        %5247 = vst [vmem:[%s589 + $0xd0] sm:$0xff] %v3357
        %5248 = vst [vmem:[%s589 + $0xd8] sm:$0xff] %v3359
        %5249 = vst [vmem:[%s589 + $0xe0] sm:$0xff] %v3362
        %5250 = vst [vmem:[%s589 + $0xe8] sm:$0xff] %v3364
        %5251 = vst [vmem:[%s589 + $0xf0] sm:$0xff] %v3367
        %5252 = vst [vmem:[%s589 + $0xf8] sm:$0xff] %v3369
        %s5253 = sand.u32 %s267, 1
        %s5254 = scalar_lea.sflag [#allocation4], %s5253
        %s5255 = sand.u32 %s267, 1
        %s5256 = smul.addr %s5255, 1024
        %s5257 = scalar_lea.vmem [#allocation16], %s5256
        %s5258 = sand.u32 %s39, 1
        %s5259 = scalar_lea.sflag [#allocation18], %s5258
        %s5260 = sand.u32 %s293, 1
        %s5261 = smul.addr %s5260, 256
        %s5262 = scalar_lea.vmem [#allocation17], %s5261
        %s5263 = sand.u32 %s39, 1
        %s5264 = scalar_lea.sflag [#allocation18], %s5263
        %s5265 = sand.u32 %s319, 1
        %s5266 = smul.addr %s5265, 256
        %s5267 = scalar_lea.vmem [#allocation19], %s5266
        // Predicated region
        $region93: #{tpu_custom_call.1} parent=59 // pred_check
          %p5268 = pneg %p277
        $region94: #{tpu_custom_call.1} parent=59 // pred_check_branch
          %5270 = sbr.rel (%p5268) target = $region96
        $region95: #{tpu_custom_call.1} parent=59 // pred_region
          %s5271 = smul.u32 32, %s39
          %5273 = vsyncadd %s5254, 0
          %s5274 = smul.addr %s5271, 4
          %s5275 = smul.addr %s5274, 8
          %s5276 = scalar_lea.hbm %s10, %s5275
          %s5277 = sshll.u32 %s5257, 4
          %s5278 = int_to_ptr.vmem [resolvable:$true] %s5277
          %s5279 = sshll.u32 %s5276, 4
          %s5280 = int_to_ptr.hbm [resolvable:$true] %s5279
          %5285 = dma.vmem_to_hbm [thread:$0]  %s5278, 16384, %s5280, %s5254, 512, 512, 32
        $region96: #{tpu_custom_call.1} parent=59 // pred_fallthru
          _
        // Predicated region
        $region97: #{tpu_custom_call.1} parent=59 // pred_check
          %p5286 = pneg %p303
        $region98: #{tpu_custom_call.1} parent=59 // pred_check_branch
          %5288 = sbr.rel (%p5286) target = $region100
        $region99: #{tpu_custom_call.1} parent=59 // pred_region
          %s5289 = smul.u32 32, %s39
          %5291 = vsyncadd %s5259, 0
          %s5292 = smul.addr %s5289, 8
          %s5293 = scalar_lea.hbm %s11, %s5292
          %s5294 = sshll.u32 %s5262, 4
          %s5295 = int_to_ptr.vmem [resolvable:$true] %s5294
          %s5296 = sshll.u32 %s5293, 4
          %s5297 = int_to_ptr.hbm [resolvable:$true] %s5296
          %5302 = dma.vmem_to_hbm [thread:$0]  %s5295, 4096, %s5297, %s5259, 128, 128, 8
        $region100: #{tpu_custom_call.1} parent=59 // pred_fallthru
          _
        // Predicated region
        $region101: #{tpu_custom_call.1} parent=59 // pred_check
          %p5303 = pneg %p329
        $region102: #{tpu_custom_call.1} parent=59 // pred_check_branch
          %5305 = sbr.rel (%p5303) target = $region104
        $region103: #{tpu_custom_call.1} parent=59 // pred_region
          %s5306 = smul.u32 32, %s39
          %5308 = vsyncadd %s5264, 0
          %s5309 = smul.addr %s5306, 8
          %s5310 = scalar_lea.hbm %s12, %s5309
          %s5311 = sshll.u32 %s5267, 4
          %s5312 = int_to_ptr.vmem [resolvable:$true] %s5311
          %s5313 = sshll.u32 %s5310, 4
          %s5314 = int_to_ptr.hbm [resolvable:$true] %s5313
          %5319 = dma.vmem_to_hbm [thread:$0]  %s5312, 4096, %s5314, %s5264, 128, 128, 8
        $region104: #{tpu_custom_call.1} parent=59 // pred_fallthru
          _
      $region60: #{tpu_custom_call.1} parent=5 // pred_fallthru
        _
      %p5320 = scmp.le.s32.totalorder 2, %s34
      // Predicated region
      $region105: #{tpu_custom_call.1} parent=5 // pred_check
        %p5321 = pneg %p5320
      $region106: #{tpu_custom_call.1} parent=5 // pred_check_branch
        %5323 = sbr.rel (%p5321) target = $region108
      $region107: #{tpu_custom_call.1} parent=5 // pred_region
        %s5324 = ssub.s32 %s34, 2
        // Predicated region
        $region109: #{tpu_custom_call.1} parent=107 // pred_check
          %p5325 = pneg %p283
        $region110: #{tpu_custom_call.1} parent=107 // pred_check_branch
          %5327 = sbr.rel (%p5325) target = $region112
        $region111: #{tpu_custom_call.1} parent=107 // pred_region
          %s5328 = sand.u32 %s268, 1
          %s5329 = scalar_lea.sflag [#allocation4], %s5328
          %s5330 = sand.u32 %s268, 1
          %s5331 = smul.addr %s5330, 1024
          %s5332 = scalar_lea.vmem [#allocation16], %s5331
          %5334 = dma.done %s5329, 16384
        $region112: #{tpu_custom_call.1} parent=107 // pred_fallthru
          _
        // Predicated region
        $region113: #{tpu_custom_call.1} parent=107 // pred_check
          %p5335 = pneg %p309
        $region114: #{tpu_custom_call.1} parent=107 // pred_check_branch
          %5337 = sbr.rel (%p5335) target = $region116
        $region115: #{tpu_custom_call.1} parent=107 // pred_region
          %s5338 = sand.u32 %s40, 1
          %s5339 = scalar_lea.sflag [#allocation18], %s5338
          %s5340 = sand.u32 %s294, 1
          %s5341 = smul.addr %s5340, 256
          %s5342 = scalar_lea.vmem [#allocation17], %s5341
          %5344 = dma.done %s5339, 4096
        $region116: #{tpu_custom_call.1} parent=107 // pred_fallthru
          _
        // Predicated region
        $region117: #{tpu_custom_call.1} parent=107 // pred_check
          %p5345 = pneg %p335
        $region118: #{tpu_custom_call.1} parent=107 // pred_check_branch
          %5347 = sbr.rel (%p5345) target = $region120
        $region119: #{tpu_custom_call.1} parent=107 // pred_region
          %s5348 = sand.u32 %s40, 1
          %s5349 = scalar_lea.sflag [#allocation18], %s5348
          %s5350 = sand.u32 %s320, 1
          %s5351 = smul.addr %s5350, 256
          %s5352 = scalar_lea.vmem [#allocation19], %s5351
          %5354 = dma.done %s5349, 4096
        $region120: #{tpu_custom_call.1} parent=107 // pred_fallthru
          _
      $region108: #{tpu_custom_call.1} parent=5 // pred_fallthru
        _
    $region6: #{tpu_custom_call.1} parent=1 // loop_footer
      %s38 = sadd.s32 1, %s34
    $region7: #{tpu_custom_call.1} parent=1 // loop_footer_branch
      %33 = sbr.rel target = $region3
    $region8: #{tpu_custom_call.1} parent=1 // loop_exit
      _
    %5355 = vsyncpa [#allocation3], 1
    %s5356 = scalar_lea.sflag [#allocation3], 1
    %5357 = vsyncpa %s5356, 1
    %5358 = vsyncpa [#allocation6], 1
    %s5359 = scalar_lea.sflag [#allocation6], 1
    %5360 = vsyncpa %s5359, 1
    %5361 = vsyncpa [#allocation9], 1
    %5362 = vsyncpa [#allocation12], 1
    %5363 = vsyncpa [#allocation15], 1
    %5364 = vsyncpa [#allocation4], 1
    %s5365 = scalar_lea.sflag [#allocation4], 1
    %5366 = vsyncpa %s5365, 1
    %5367 = vsyncpa [#allocation18], 1
    %s5368 = scalar_lea.sflag [#allocation18], 1
    %5369 = vsyncpa %s5368, 1

// kernel: tpu_custom_call.1
$region0: #{tpu_custom_call.1}
  #allocation0 [shape = 'u32[]', space=smem, size = 0x4, offset = 0x4, fixed_abs, tag = 'smem constant byte address 0x4 - core index']
  #allocation1 [shape = 'u32[72,128]{1,0:T(1,128)}', space=vmem, size = 0x9000, scoped, tag = 'internal scratch']
  %s0 = inlined_call_operand.hbm [shape: bf16[512,512], index: 0, kind: input, shape index: {}]
  %s1 = inlined_call_operand.hbm [shape: f32[512,128], index: 1, kind: input, shape index: {}]
  %s2 = inlined_call_operand.hbm [shape: bf16[512,256], index: 2, kind: input, shape index: {}]
  %s3 = inlined_call_operand.vmem [shape: f32[1,256], index: 3, kind: input, shape index: {}]
  %s4 = inlined_call_operand.hbm [shape: bf16[256,256], index: 4, kind: input, shape index: {}]
  %s5 = inlined_call_operand.hbm [shape: f32[1,256], index: 5, kind: input, shape index: {}]
  %s6 = inlined_call_operand.hbm [shape: bf16[128,256], index: 6, kind: input, shape index: {}]
  %s7 = inlined_call_operand.hbm [shape: f32[1,256], index: 7, kind: input, shape index: {}]
  %s8 = inlined_call_operand.hbm [shape: bf16[256,512], index: 8, kind: input, shape index: {}]
  %s9 = inlined_call_operand.vmem [shape: f32[1,512], index: 9, kind: input, shape index: {}]
  %s10 = inlined_call_operand.hbm [shape: f32[512,512], index: 10, kind: output, shape index: {0}]
  %s11 = inlined_call_operand.hbm [shape: f32[512,128], index: 11, kind: output, shape index: {1}]
  %s12 = inlined_call_operand.hbm [shape: f32[512,128], index: 12, kind: output, shape index: {2}]
  %13 = xla_tuple %s10, %s11, %s12
  %s14 = sld [smem:[#allocation0]]
  $region121: #{tpu_custom_call.1} parent=0
    _
  %s16 = ssub.s32 1, %s14
  %s17 = scalar_select 0, %s16, %s14
  $region1: #{tpu_custom_call.1} parent=0
    #allocation2 [shape = 'u8[524288]{0}', space=vmem, size = 0x80000, scoped, tag = 'input window, operand 0']
    #allocation3 [shape = 's32[2]{0}', space=sflag, size = 0x8, scoped, tag = 'scoped memory for tpu_custom_call.1']
    #allocation4 [shape = 's32[2]{0}', space=sflag, size = 0x8, scoped, tag = 'scoped memory for tpu_custom_call.1']
    #allocation5 [shape = 'u8[262144]{0}', space=vmem, size = 0x40000, scoped, tag = 'input window, operand 1']
    #allocation6 [shape = 's32[2]{0}', space=sflag, size = 0x8, scoped, tag = 'scoped memory for tpu_custom_call.1']
    #allocation7 [shape = 'u8[262144]{0}', space=vmem, size = 0x40000, scoped, tag = 'input window, operand 2, single buffered']
    #allocation8 [shape = 'u8[131072]{0}', space=vmem, size = 0x20000, scoped, tag = 'input window, operand 4, single buffered']
    #allocation9 [shape = 's32[1]{0}', space=sflag, size = 0x4, scoped, tag = 'scoped memory for tpu_custom_call.1']
    #allocation10 [shape = 'u8[1024]{0}', space=vmem, size = 0x400, scoped, tag = 'input window, operand 5, single buffered']
    #allocation11 [shape = 'u8[65536]{0}', space=vmem, size = 0x10000, scoped, tag = 'input window, operand 6, single buffered']
    #allocation12 [shape = 's32[1]{0}', space=sflag, size = 0x4, scoped, tag = 'scoped memory for tpu_custom_call.1']
    #allocation13 [shape = 'u8[1024]{0}', space=vmem, size = 0x400, scoped, tag = 'input window, operand 7, single buffered']
    #allocation14 [shape = 'u8[262144]{0}', space=vmem, size = 0x40000, scoped, tag = 'input window, operand 8, single buffered']
    #allocation15 [shape = 's32[1]{0}', space=sflag, size = 0x4, scoped, tag = 'scoped memory for tpu_custom_call.1']
    #allocation16 [shape = 'u8[1048576]{0}', space=vmem, size = 0x100000, scoped, tag = 'output window, operand 0']
    #allocation17 [shape = 'u8[262144]{0}', space=vmem, size = 0x40000, scoped, tag = 'output window, operand 1']
    #allocation18 [shape = 's32[2]{0}', space=sflag, size = 0x8, scoped, tag = 'scoped memory for tpu_custom_call.1']
    #allocation19 [shape = 'u8[262144]{0}', space=vmem, size = 0x40000, scoped, tag = 'output window, operand 2']
    %18 = vsyncpa [#allocation3], 0
    %s19 = scalar_lea.sflag [#allocation3], 1
    %20 = vsyncpa %s19, 0
    %21 = vsyncpa [#allocation6], 0
    %s22 = scalar_lea.sflag [#allocation6], 1
    %23 = vsyncpa %s22, 0
    %24 = vsyncpa [#allocation9], 0
    %25 = vsyncpa [#allocation12], 0
    %26 = vsyncpa [#allocation15], 0
    %27 = vsyncpa [#allocation4], 0
    %s28 = scalar_lea.sflag [#allocation4], 1
    %29 = vsyncpa %s28, 0
    %30 = vsyncpa [#allocation18], 0
    %s31 = scalar_lea.sflag [#allocation18], 1
    %32 = vsyncpa %s31, 0
    loop: start=0, step=1, limit=4
    $region2: #{tpu_custom_call.1} parent=1 // loop_pre_header
      _
    $region3: #{tpu_custom_call.1} parent=1 // loop_header
      %s34 = sphi 0, %s38
      %p35 = scmp.ge.s32.totalorder %s34, 4
      %s44 = sphi 0, %s46
      %s47 = sphi 0, %s44
      %s48 = sphi 0, %s47
      %s64 = sphi 0, %s48
      %s70 = sphi 0, %s72
      %s73 = sphi 0, %s70
      %s74 = sphi 0, %s73
      %s90 = sphi 0, %s74
      %s94 = sphi 0, %s94
      %s96 = sphi 0, %s94
      %s97 = sphi 0, %s96
      %s111 = sphi 0, %s97
      %s115 = sphi 0, %s115
      %s117 = sphi 0, %s115
      %s118 = sphi 0, %s117
      %s132 = sphi 0, %s118
      %s136 = sphi 0, %s136
      %s138 = sphi 0, %s136
      %s139 = sphi 0, %s138
      %s153 = sphi 0, %s139
      %s157 = sphi 0, %s157
      %s159 = sphi 0, %s157
      %s160 = sphi 0, %s159
      %s174 = sphi 0, %s160
      %s178 = sphi 0, %s178
      %s180 = sphi 0, %s178
      %s181 = sphi 0, %s180
      %s195 = sphi 0, %s181
      %s199 = sphi 0, %s199
      %s201 = sphi 0, %s199
      %s202 = sphi 0, %s201
      %s216 = sphi 0, %s202
      %s220 = sphi 0, %s220
      %s222 = sphi 0, %s220
      %s223 = sphi 0, %s222
      %s237 = sphi 0, %s223
      %s241 = sphi 0, %s241
      %s243 = sphi 0, %s241
      %s244 = sphi 0, %s243
      %s258 = sphi 0, %s244
      %s264 = sphi 0, %s266
      %s267 = sphi 0, %s264
      %s268 = sphi 0, %s267
      %s284 = sphi 0, %s268
      %s290 = sphi 0, %s292
      %s293 = sphi 0, %s290
      %s294 = sphi 0, %s293
      %s310 = sphi 0, %s294
      %s316 = sphi 0, %s318
      %s319 = sphi 0, %s316
      %s320 = sphi 0, %s319
      %s336 = sphi 0, %s320
    $region4: #{tpu_custom_call.1} parent=1 // loop_header_branch
      %37 = sbr.rel (%p35) target = $region8
    $region5: #{tpu_custom_call.1} parent=1 // loop_body
      %s39 = ssub.s32 %s34, 1
      %s40 = ssub.s32 %s34, 2
      %s41 = sadd.s32 %s34, 1
      %s42 = ssub.s32 %s34, %s41
      %p43 = scmp.eq.s32.totalorder %s42, 0
      %s45 = sadd.s32 %s44, 1
      %s46 = scalar_select %p43, %s44, %s45
      %p49 = pneg %p43
      %p50 = scmp.eq.s32.totalorder %s34, 1
      %p51 = por %p49, %p50
      %p52 = scmp.ne.s32.totalorder %s44, %s47
      %p53 = scmp.eq.s32.totalorder %s34, 0
      %p54 = por %p52, %p53
      %p55 = scmp.ne.s32.totalorder %s44, %s47
      %p56 = scmp.eq.s32.totalorder %s39, 1
      %p57 = por %p55, %p56
      %p58 = scmp.ne.s32.totalorder %s47, %s48
      %p59 = scmp.eq.s32.totalorder %s39, 0
      %p60 = por %p58, %p59
      %p61 = scmp.ne.s32.totalorder %s47, %s48
      %p62 = scmp.eq.s32.totalorder %s40, 1
      %p63 = por %p61, %p62
      %p65 = scmp.ne.s32.totalorder %s48, %s64
      %p66 = scmp.eq.s32.totalorder %s40, 0
      %p67 = por %p65, %p66
      %s68 = ssub.s32 %s34, %s41
      %p69 = scmp.eq.s32.totalorder %s68, 0
      %s71 = sadd.s32 %s70, 1
      %s72 = scalar_select %p69, %s70, %s71
      %p75 = pneg %p69
      %p76 = scmp.eq.s32.totalorder %s34, 1
      %p77 = por %p75, %p76
      %p78 = scmp.ne.s32.totalorder %s70, %s73
      %p79 = scmp.eq.s32.totalorder %s34, 0
      %p80 = por %p78, %p79
      %p81 = scmp.ne.s32.totalorder %s70, %s73
      %p82 = scmp.eq.s32.totalorder %s39, 1
      %p83 = por %p81, %p82
      %p84 = scmp.ne.s32.totalorder %s73, %s74
      %p85 = scmp.eq.s32.totalorder %s39, 0
      %p86 = por %p84, %p85
      %p87 = scmp.ne.s32.totalorder %s73, %s74
      %p88 = scmp.eq.s32.totalorder %s40, 1
      %p89 = por %p87, %p88
      %p91 = scmp.ne.s32.totalorder %s74, %s90
      %p92 = scmp.eq.s32.totalorder %s40, 0
      %p93 = por %p91, %p92
      %s95 = sadd.s32 %s94, 1
      %p98 = scmp.eq.s32.totalorder %s34, 1
      %p99 = scmp.ne.s32.totalorder %s94, %s96
      %p100 = scmp.eq.s32.totalorder %s34, 0
      %p101 = por %p99, %p100
      %p102 = scmp.ne.s32.totalorder %s94, %s96
      %p103 = scmp.eq.s32.totalorder %s39, 1
      %p104 = por %p102, %p103
      %p105 = scmp.ne.s32.totalorder %s96, %s97
      %p106 = scmp.eq.s32.totalorder %s39, 0
      %p107 = por %p105, %p106
      %p108 = scmp.ne.s32.totalorder %s96, %s97
      %p109 = scmp.eq.s32.totalorder %s40, 1
      %p110 = por %p108, %p109
      %p112 = scmp.ne.s32.totalorder %s97, %s111
      %p113 = scmp.eq.s32.totalorder %s40, 0
      %p114 = por %p112, %p113
      %s116 = sadd.s32 %s115, 1
      %p119 = scmp.eq.s32.totalorder %s34, 1
      %p120 = scmp.ne.s32.totalorder %s115, %s117
      %p121 = scmp.eq.s32.totalorder %s34, 0
      %p122 = por %p120, %p121
      %p123 = scmp.ne.s32.totalorder %s115, %s117
      %p124 = scmp.eq.s32.totalorder %s39, 1
      %p125 = por %p123, %p124
      %p126 = scmp.ne.s32.totalorder %s117, %s118
      %p127 = scmp.eq.s32.totalorder %s39, 0
      %p128 = por %p126, %p127
      %p129 = scmp.ne.s32.totalorder %s117, %s118
      %p130 = scmp.eq.s32.totalorder %s40, 1
      %p131 = por %p129, %p130
      %p133 = scmp.ne.s32.totalorder %s118, %s132
      %p134 = scmp.eq.s32.totalorder %s40, 0
      %p135 = por %p133, %p134
      %s137 = sadd.s32 %s136, 1
      %p140 = scmp.eq.s32.totalorder %s34, 1
      %p141 = scmp.ne.s32.totalorder %s136, %s138
      %p142 = scmp.eq.s32.totalorder %s34, 0
      %p143 = por %p141, %p142
      %p144 = scmp.ne.s32.totalorder %s136, %s138
      %p145 = scmp.eq.s32.totalorder %s39, 1
      %p146 = por %p144, %p145
      %p147 = scmp.ne.s32.totalorder %s138, %s139
      %p148 = scmp.eq.s32.totalorder %s39, 0
      %p149 = por %p147, %p148
      %p150 = scmp.ne.s32.totalorder %s138, %s139
      %p151 = scmp.eq.s32.totalorder %s40, 1
      %p152 = por %p150, %p151
      %p154 = scmp.ne.s32.totalorder %s139, %s153
      %p155 = scmp.eq.s32.totalorder %s40, 0
      %p156 = por %p154, %p155
      %s158 = sadd.s32 %s157, 1
      %p161 = scmp.eq.s32.totalorder %s34, 1
      %p162 = scmp.ne.s32.totalorder %s157, %s159
      %p163 = scmp.eq.s32.totalorder %s34, 0
      %p164 = por %p162, %p163
      %p165 = scmp.ne.s32.totalorder %s157, %s159
      %p166 = scmp.eq.s32.totalorder %s39, 1
      %p167 = por %p165, %p166
      %p168 = scmp.ne.s32.totalorder %s159, %s160
      %p169 = scmp.eq.s32.totalorder %s39, 0
      %p170 = por %p168, %p169
      %p171 = scmp.ne.s32.totalorder %s159, %s160
      %p172 = scmp.eq.s32.totalorder %s40, 1
      %p173 = por %p171, %p172
      %p175 = scmp.ne.s32.totalorder %s160, %s174
      %p176 = scmp.eq.s32.totalorder %s40, 0
      %p177 = por %p175, %p176
      %s179 = sadd.s32 %s178, 1
      %p182 = scmp.eq.s32.totalorder %s34, 1
      %p183 = scmp.ne.s32.totalorder %s178, %s180
      %p184 = scmp.eq.s32.totalorder %s34, 0
      %p185 = por %p183, %p184
      %p186 = scmp.ne.s32.totalorder %s178, %s180
      %p187 = scmp.eq.s32.totalorder %s39, 1
      %p188 = por %p186, %p187
      %p189 = scmp.ne.s32.totalorder %s180, %s181
      %p190 = scmp.eq.s32.totalorder %s39, 0
      %p191 = por %p189, %p190
      %p192 = scmp.ne.s32.totalorder %s180, %s181
      %p193 = scmp.eq.s32.totalorder %s40, 1
      %p194 = por %p192, %p193
      %p196 = scmp.ne.s32.totalorder %s181, %s195
      %p197 = scmp.eq.s32.totalorder %s40, 0
      %p198 = por %p196, %p197
      %s200 = sadd.s32 %s199, 1
      %p203 = scmp.eq.s32.totalorder %s34, 1
      %p204 = scmp.ne.s32.totalorder %s199, %s201
      %p205 = scmp.eq.s32.totalorder %s34, 0
      %p206 = por %p204, %p205
      %p207 = scmp.ne.s32.totalorder %s199, %s201
      %p208 = scmp.eq.s32.totalorder %s39, 1
      %p209 = por %p207, %p208
      %p210 = scmp.ne.s32.totalorder %s201, %s202
      %p211 = scmp.eq.s32.totalorder %s39, 0
      %p212 = por %p210, %p211
      %p213 = scmp.ne.s32.totalorder %s201, %s202
      %p214 = scmp.eq.s32.totalorder %s40, 1
      %p215 = por %p213, %p214
      %p217 = scmp.ne.s32.totalorder %s202, %s216
      %p218 = scmp.eq.s32.totalorder %s40, 0
      %p219 = por %p217, %p218
      %s221 = sadd.s32 %s220, 1
      %p224 = scmp.eq.s32.totalorder %s34, 1
      %p225 = scmp.ne.s32.totalorder %s220, %s222
      %p226 = scmp.eq.s32.totalorder %s34, 0
      %p227 = por %p225, %p226
      %p228 = scmp.ne.s32.totalorder %s220, %s222
      %p229 = scmp.eq.s32.totalorder %s39, 1
      %p230 = por %p228, %p229
      %p231 = scmp.ne.s32.totalorder %s222, %s223
      %p232 = scmp.eq.s32.totalorder %s39, 0
      %p233 = por %p231, %p232
      %p234 = scmp.ne.s32.totalorder %s222, %s223
      %p235 = scmp.eq.s32.totalorder %s40, 1
      %p236 = por %p234, %p235
      %p238 = scmp.ne.s32.totalorder %s223, %s237
      %p239 = scmp.eq.s32.totalorder %s40, 0
      %p240 = por %p238, %p239
      %s242 = sadd.s32 %s241, 1
      %p245 = scmp.eq.s32.totalorder %s34, 1
      %p246 = scmp.ne.s32.totalorder %s241, %s243
      %p247 = scmp.eq.s32.totalorder %s34, 0
      %p248 = por %p246, %p247
      %p249 = scmp.ne.s32.totalorder %s241, %s243
      %p250 = scmp.eq.s32.totalorder %s39, 1
      %p251 = por %p249, %p250
      %p252 = scmp.ne.s32.totalorder %s243, %s244
      %p253 = scmp.eq.s32.totalorder %s39, 0
      %p254 = por %p252, %p253
      %p255 = scmp.ne.s32.totalorder %s243, %s244
      %p256 = scmp.eq.s32.totalorder %s40, 1
      %p257 = por %p255, %p256
      %p259 = scmp.ne.s32.totalorder %s244, %s258
      %p260 = scmp.eq.s32.totalorder %s40, 0
      %p261 = por %p259, %p260
      %s262 = ssub.s32 %s34, %s41
      %p263 = scmp.eq.s32.totalorder %s262, 0
      %s265 = sadd.s32 %s264, 1
      %s266 = scalar_select %p263, %s264, %s265
      %p269 = pneg %p263
      %p270 = scmp.eq.s32.totalorder %s34, 1
      %p271 = por %p269, %p270
      %p272 = scmp.ne.s32.totalorder %s264, %s267
      %p273 = scmp.eq.s32.totalorder %s34, 0
      %p274 = por %p272, %p273
      %p275 = scmp.ne.s32.totalorder %s264, %s267
      %p276 = scmp.eq.s32.totalorder %s39, 1
      %p277 = por %p275, %p276
      %p278 = scmp.ne.s32.totalorder %s267, %s268
      %p279 = scmp.eq.s32.totalorder %s39, 0
      %p280 = por %p278, %p279
      %p281 = scmp.ne.s32.totalorder %s267, %s268
      %p282 = scmp.eq.s32.totalorder %s40, 1
      %p283 = por %p281, %p282
      %p285 = scmp.ne.s32.totalorder %s268, %s284
      %p286 = scmp.eq.s32.totalorder %s40, 0
      %p287 = por %p285, %p286
      %s288 = ssub.s32 %s34, %s41
      %p289 = scmp.eq.s32.totalorder %s288, 0
      %s291 = sadd.s32 %s290, 1
      %s292 = scalar_select %p289, %s290, %s291
      %p295 = pneg %p289
      %p296 = scmp.eq.s32.totalorder %s34, 1
      %p297 = por %p295, %p296
      %p298 = scmp.ne.s32.totalorder %s290, %s293
      %p299 = scmp.eq.s32.totalorder %s34, 0
      %p300 = por %p298, %p299
      %p301 = scmp.ne.s32.totalorder %s290, %s293
      %p302 = scmp.eq.s32.totalorder %s39, 1
      %p303 = por %p301, %p302
      %p304 = scmp.ne.s32.totalorder %s293, %s294
      %p305 = scmp.eq.s32.totalorder %s39, 0
      %p306 = por %p304, %p305
      %p307 = scmp.ne.s32.totalorder %s293, %s294
      %p308 = scmp.eq.s32.totalorder %s40, 1
      %p309 = por %p307, %p308
      %p311 = scmp.ne.s32.totalorder %s294, %s310
      %p312 = scmp.eq.s32.totalorder %s40, 0
      %p313 = por %p311, %p312
      %s314 = ssub.s32 %s34, %s41
      %p315 = scmp.eq.s32.totalorder %s314, 0
      %s317 = sadd.s32 %s316, 1
      %s318 = scalar_select %p315, %s316, %s317
      %p321 = pneg %p315
      %p322 = scmp.eq.s32.totalorder %s34, 1
      %p323 = por %p321, %p322
      %p324 = scmp.ne.s32.totalorder %s316, %s319
      %p325 = scmp.eq.s32.totalorder %s34, 0
      %p326 = por %p324, %p325
      %p327 = scmp.ne.s32.totalorder %s316, %s319
      %p328 = scmp.eq.s32.totalorder %s39, 1
      %p329 = por %p327, %p328
      %p330 = scmp.ne.s32.totalorder %s319, %s320
      %p331 = scmp.eq.s32.totalorder %s39, 0
      %p332 = por %p330, %p331
      %p333 = scmp.ne.s32.totalorder %s319, %s320
      %p334 = scmp.eq.s32.totalorder %s40, 1
      %p335 = por %p333, %p334
      %p337 = scmp.ne.s32.totalorder %s320, %s336
      %p338 = scmp.eq.s32.totalorder %s40, 0
      %p339 = por %p337, %p338
      %p340 = scmp.le.s32.totalorder 1, %s34
      %p341 = scmp.lt.s32.totalorder %s34, 3
      %p342 = pnand %p340, %p341
      %p343 = pneg %p342
      // Predicated region
      $region9: #{tpu_custom_call.1} parent=5 // pred_check
        _
      $region10: #{tpu_custom_call.1} parent=5 // pred_check_branch
        %345 = sbr.rel (%p342) target = $region12
      $region11: #{tpu_custom_call.1} parent=5 // pred_region
        %s346 = ssub.s32 %s34, 1
        // Predicated region
        $region13: #{tpu_custom_call.1} parent=11 // pred_check
          %p347 = pneg %p107
        $region14: #{tpu_custom_call.1} parent=11 // pred_check_branch
          %349 = sbr.rel (%p347) target = $region16
        $region15: #{tpu_custom_call.1} parent=11 // pred_region
          %351 = vsyncadd [#allocation6], 0
          %s352 = sshll.u32 %s2, 4
          %s353 = int_to_ptr.hbm [resolvable:$true] %s352
          %s354 = sshll.u32 [#allocation7], 4
          %s355 = int_to_ptr.vmem [resolvable:$true] %s354
          %360 = dma.hbm_to_vmem [thread:$0]  %s353, 8192, %s355, [#allocation6], 128, 128, 8
        $region16: #{tpu_custom_call.1} parent=11 // pred_fallthru
          _
        // Predicated region
        $region17: #{tpu_custom_call.1} parent=11 // pred_check
          %p361 = pneg %p128
        $region18: #{tpu_custom_call.1} parent=11 // pred_check_branch
          %363 = sbr.rel (%p361) target = $region20
        $region19: #{tpu_custom_call.1} parent=11 // pred_region
          _
        $region20: #{tpu_custom_call.1} parent=11 // pred_fallthru
          _
        // Predicated region
        $region21: #{tpu_custom_call.1} parent=11 // pred_check
          %p364 = pneg %p149
        $region22: #{tpu_custom_call.1} parent=11 // pred_check_branch
          %366 = sbr.rel (%p364) target = $region24
        $region23: #{tpu_custom_call.1} parent=11 // pred_region
          %368 = vsyncadd [#allocation9], 0
          %s369 = sshll.u32 %s4, 4
          %s370 = int_to_ptr.hbm [resolvable:$true] %s369
          %s371 = sshll.u32 [#allocation8], 4
          %s372 = int_to_ptr.vmem [resolvable:$true] %s371
          %377 = dma.hbm_to_vmem [thread:$0]  %s370, 4096, %s372, [#allocation9], 128, 128, 8
        $region24: #{tpu_custom_call.1} parent=11 // pred_fallthru
          _
        // Predicated region
        $region25: #{tpu_custom_call.1} parent=11 // pred_check
          %p378 = pneg %p170
        $region26: #{tpu_custom_call.1} parent=11 // pred_check_branch
          %380 = sbr.rel (%p378) target = $region28
        $region27: #{tpu_custom_call.1} parent=11 // pred_region
          %382 = vsyncadd [#allocation9], 0
          %s384 = sshll.u32 %s5, 4
          %s385 = int_to_ptr.hbm [resolvable:$true] %s384
          %s386 = sshll.u32 [#allocation10], 4
          %s387 = int_to_ptr.vmem [resolvable:$true] %s386
          %389 = dma.hbm_to_vmem [thread:$0]  %s385, 32, %s387, [#allocation9]
        $region28: #{tpu_custom_call.1} parent=11 // pred_fallthru
          _
        // Predicated region
        $region29: #{tpu_custom_call.1} parent=11 // pred_check
          %p390 = pneg %p191
        $region30: #{tpu_custom_call.1} parent=11 // pred_check_branch
          %392 = sbr.rel (%p390) target = $region32
        $region31: #{tpu_custom_call.1} parent=11 // pred_region
          %394 = vsyncadd [#allocation12], 0
          %s395 = sshll.u32 %s6, 4
          %s396 = int_to_ptr.hbm [resolvable:$true] %s395
          %s397 = sshll.u32 [#allocation11], 4
          %s398 = int_to_ptr.vmem [resolvable:$true] %s397
          %403 = dma.hbm_to_vmem [thread:$0]  %s396, 2048, %s398, [#allocation12], 128, 128, 8
        $region32: #{tpu_custom_call.1} parent=11 // pred_fallthru
          _
        // Predicated region
        $region33: #{tpu_custom_call.1} parent=11 // pred_check
          %p404 = pneg %p212
        $region34: #{tpu_custom_call.1} parent=11 // pred_check_branch
          %406 = sbr.rel (%p404) target = $region36
        $region35: #{tpu_custom_call.1} parent=11 // pred_region
          %408 = vsyncadd [#allocation12], 0
          %s410 = sshll.u32 %s7, 4
          %s411 = int_to_ptr.hbm [resolvable:$true] %s410
          %s412 = sshll.u32 [#allocation13], 4
          %s413 = int_to_ptr.vmem [resolvable:$true] %s412
          %415 = dma.hbm_to_vmem [thread:$0]  %s411, 32, %s413, [#allocation12]
        $region36: #{tpu_custom_call.1} parent=11 // pred_fallthru
          _
        // Predicated region
        $region37: #{tpu_custom_call.1} parent=11 // pred_check
          %p416 = pneg %p233
        $region38: #{tpu_custom_call.1} parent=11 // pred_check_branch
          %418 = sbr.rel (%p416) target = $region40
        $region39: #{tpu_custom_call.1} parent=11 // pred_region
          %420 = vsyncadd [#allocation15], 0
          %s421 = sshll.u32 %s8, 4
          %s422 = int_to_ptr.hbm [resolvable:$true] %s421
          %s423 = sshll.u32 [#allocation14], 4
          %s424 = int_to_ptr.vmem [resolvable:$true] %s423
          %429 = dma.hbm_to_vmem [thread:$0]  %s422, 8192, %s424, [#allocation15], 256, 256, 16
        $region40: #{tpu_custom_call.1} parent=11 // pred_fallthru
          _
        // Predicated region
        $region41: #{tpu_custom_call.1} parent=11 // pred_check
          %p430 = pneg %p254
        $region42: #{tpu_custom_call.1} parent=11 // pred_check_branch
          %432 = sbr.rel (%p430) target = $region44
        $region43: #{tpu_custom_call.1} parent=11 // pred_region
          _
        $region44: #{tpu_custom_call.1} parent=11 // pred_fallthru
          _
      $region12: #{tpu_custom_call.1} parent=5 // pred_fallthru
        _
      %p433 = scmp.lt.s32.totalorder %s34, 2
      // Predicated region
      $region45: #{tpu_custom_call.1} parent=5 // pred_check
        %p434 = pneg %p433
      $region46: #{tpu_custom_call.1} parent=5 // pred_check_branch
        %436 = sbr.rel (%p434) target = $region48
      $region47: #{tpu_custom_call.1} parent=5 // pred_region
        // Predicated region
        $region49: #{tpu_custom_call.1} parent=47 // pred_check
          %p437 = pneg %p54
        $region50: #{tpu_custom_call.1} parent=47 // pred_check_branch
          %439 = sbr.rel (%p437) target = $region52
        $region51: #{tpu_custom_call.1} parent=47 // pred_region
          %s440 = sand.u32 %s44, 1
          %s441 = scalar_lea.sflag [#allocation3], %s440
          %s442 = sand.u32 %s44, 1
          %s443 = smul.addr %s442, 512
          %s444 = scalar_lea.vmem [#allocation2], %s443
          %s445 = smul.u32 32, %s34
          %447 = vsyncadd %s441, 0
          %s448 = smul.addr %s445, 4
          %s449 = smul.addr %s448, 4
          %s450 = scalar_lea.hbm %s0, %s449
          %s451 = sshll.u32 %s450, 4
          %s452 = int_to_ptr.hbm [resolvable:$true] %s451
          %s453 = sshll.u32 %s444, 4
          %s454 = int_to_ptr.vmem [resolvable:$true] %s453
          %459 = dma.hbm_to_vmem [thread:$0]  %s452, 8192, %s454, %s441, 256, 256, 16
        $region52: #{tpu_custom_call.1} parent=47 // pred_fallthru
          _
        // Predicated region
        $region53: #{tpu_custom_call.1} parent=47 // pred_check
          %p460 = pneg %p80
        $region54: #{tpu_custom_call.1} parent=47 // pred_check_branch
          %462 = sbr.rel (%p460) target = $region56
        $region55: #{tpu_custom_call.1} parent=47 // pred_region
          %s463 = sand.u32 %s34, 1
          %s464 = scalar_lea.sflag [#allocation6], %s463
          %s465 = sand.u32 %s70, 1
          %s466 = smul.addr %s465, 256
          %s467 = scalar_lea.vmem [#allocation5], %s466
          %s468 = smul.u32 32, %s34
          %470 = vsyncadd %s464, 0
          %s471 = smul.addr %s468, 8
          %s472 = scalar_lea.hbm %s1, %s471
          %s473 = sshll.u32 %s472, 4
          %s474 = int_to_ptr.hbm [resolvable:$true] %s473
          %s475 = sshll.u32 %s467, 4
          %s476 = int_to_ptr.vmem [resolvable:$true] %s475
          %481 = dma.hbm_to_vmem [thread:$0]  %s474, 4096, %s476, %s464, 128, 128, 8
        $region56: #{tpu_custom_call.1} parent=47 // pred_fallthru
          _
      $region48: #{tpu_custom_call.1} parent=5 // pred_fallthru
        _
      %p482 = scmp.le.s32.totalorder 1, %s34
      %p483 = scmp.lt.s32.totalorder %s34, 3
      %p484 = pnand %p482, %p483
      %p485 = pneg %p484
      // Predicated region
      $region57: #{tpu_custom_call.1} parent=5 // pred_check
        _
      $region58: #{tpu_custom_call.1} parent=5 // pred_check_branch
        %487 = sbr.rel (%p484) target = $region60
      $region59: #{tpu_custom_call.1} parent=5 // pred_region
        %s488 = ssub.s32 %s34, 1
        %s489 = sand.u32 %s47, 1
        %s490 = scalar_lea.sflag [#allocation3], %s489
        %s491 = sand.u32 %s47, 1
        %s492 = smul.addr %s491, 512
        %s493 = scalar_lea.vmem [#allocation2], %s492
        // Predicated region
        $region61: #{tpu_custom_call.1} parent=59 // pred_check
          %p494 = pneg %p60
        $region62: #{tpu_custom_call.1} parent=59 // pred_check_branch
          %496 = sbr.rel (%p494) target = $region64
        $region63: #{tpu_custom_call.1} parent=59 // pred_region
          %498 = dma.done %s490, 8192
        $region64: #{tpu_custom_call.1} parent=59 // pred_fallthru
          _
        %s499 = sand.u32 %s39, 1
        %s500 = scalar_lea.sflag [#allocation6], %s499
        %s501 = sand.u32 %s73, 1
        %s502 = smul.addr %s501, 256
        %s503 = scalar_lea.vmem [#allocation5], %s502
        // Predicated region
        $region65: #{tpu_custom_call.1} parent=59 // pred_check
          %p504 = pneg %p86
        $region66: #{tpu_custom_call.1} parent=59 // pred_check_branch
          %506 = sbr.rel (%p504) target = $region68
        $region67: #{tpu_custom_call.1} parent=59 // pred_region
          %508 = dma.done %s500, 4096
        $region68: #{tpu_custom_call.1} parent=59 // pred_fallthru
          _
        // Predicated region
        $region69: #{tpu_custom_call.1} parent=59 // pred_check
          %p509 = pneg %p107
        $region70: #{tpu_custom_call.1} parent=59 // pred_check_branch
          %511 = sbr.rel (%p509) target = $region72
        $region71: #{tpu_custom_call.1} parent=59 // pred_region
          %513 = dma.done [#allocation6], 8192
        $region72: #{tpu_custom_call.1} parent=59 // pred_fallthru
          _
        // Predicated region
        $region73: #{tpu_custom_call.1} parent=59 // pred_check
          %p514 = pneg %p149
        $region74: #{tpu_custom_call.1} parent=59 // pred_check_branch
          %516 = sbr.rel (%p514) target = $region76
        $region75: #{tpu_custom_call.1} parent=59 // pred_region
          %518 = dma.done [#allocation9], 4096
        $region76: #{tpu_custom_call.1} parent=59 // pred_fallthru
          _
        // Predicated region
        $region77: #{tpu_custom_call.1} parent=59 // pred_check
          %p519 = pneg %p170
        $region78: #{tpu_custom_call.1} parent=59 // pred_check_branch
          %521 = sbr.rel (%p519) target = $region80
        $region79: #{tpu_custom_call.1} parent=59 // pred_region
          %523 = dma.done [#allocation9], 32
        $region80: #{tpu_custom_call.1} parent=59 // pred_fallthru
          _
        // Predicated region
        $region81: #{tpu_custom_call.1} parent=59 // pred_check
          %p524 = pneg %p191
        $region82: #{tpu_custom_call.1} parent=59 // pred_check_branch
          %526 = sbr.rel (%p524) target = $region84
        $region83: #{tpu_custom_call.1} parent=59 // pred_region
          %528 = dma.done [#allocation12], 2048
        $region84: #{tpu_custom_call.1} parent=59 // pred_fallthru
          _
        // Predicated region
        $region85: #{tpu_custom_call.1} parent=59 // pred_check
          %p529 = pneg %p212
        $region86: #{tpu_custom_call.1} parent=59 // pred_check_branch
          %531 = sbr.rel (%p529) target = $region88
        $region87: #{tpu_custom_call.1} parent=59 // pred_region
          %533 = dma.done [#allocation12], 32
        $region88: #{tpu_custom_call.1} parent=59 // pred_fallthru
          _
        // Predicated region
        $region89: #{tpu_custom_call.1} parent=59 // pred_check
          %p534 = pneg %p233
        $region90: #{tpu_custom_call.1} parent=59 // pred_check_branch
          %536 = sbr.rel (%p534) target = $region92
        $region91: #{tpu_custom_call.1} parent=59 // pred_region
          %538 = dma.done [#allocation15], 8192
        $region92: #{tpu_custom_call.1} parent=59 // pred_fallthru
          _
        %s539 = sand.u32 %s47, 1
        %s540 = scalar_lea.sflag [#allocation3], %s539
        %s541 = sand.u32 %s47, 1
        %s542 = smul.addr %s541, 512
        %s543 = scalar_lea.vmem [#allocation2], %s542
        %p544 = pneg %p60
        %p545 = pneg %p57
        %s546 = sand.u32 %s39, 1
        %s547 = scalar_lea.sflag [#allocation6], %s546
        %s548 = sand.u32 %s73, 1
        %s549 = smul.addr %s548, 256
        %s550 = scalar_lea.vmem [#allocation5], %s549
        %p551 = pneg %p86
        %p552 = pneg %p83
        %p553 = pneg %p107
        %p554 = pneg %p104
        %p555 = pneg %p128
        %p556 = pneg %p125
        %p557 = pneg %p149
        %p558 = pneg %p146
        %p559 = pneg %p170
        %p560 = pneg %p167
        %p561 = pneg %p191
        %p562 = pneg %p188
        %p563 = pneg %p212
        %p564 = pneg %p209
        %p565 = pneg %p233
        %p566 = pneg %p230
        %p567 = pneg %p254
        %p568 = pneg %p251
        %p569 = pneg %p280
        %p570 = pneg %p277
        %s571 = sand.u32 %s267, 1
        %s572 = scalar_lea.sflag [#allocation4], %s571
        %s573 = sand.u32 %s267, 1
        %s574 = smul.addr %s573, 1024
        %s575 = scalar_lea.vmem [#allocation16], %s574
        %p576 = pneg %p306
        %p577 = pneg %p303
        %s578 = sand.u32 %s39, 1
        %s579 = scalar_lea.sflag [#allocation18], %s578
        %s580 = sand.u32 %s293, 1
        %s581 = smul.addr %s580, 256
        %s582 = scalar_lea.vmem [#allocation17], %s581
        %p583 = pneg %p332
        %p584 = pneg %p329
        %s585 = sand.u32 %s39, 1
        %s586 = scalar_lea.sflag [#allocation18], %s585
        %s587 = sand.u32 %s319, 1
        %s588 = smul.addr %s587, 256
        %s589 = scalar_lea.vmem [#allocation19], %s588
        %s590 = smul.u32 32, %s39
        %s591 = smul.u32 32, %s39
        %s592 = smul.u32 32, %s39
        %s593 = smul.u32 32, %s39
        %s594 = smul.u32 32, %s39
        %v595 = vld [vmem:[%s493] sm:$0xff]
        %v596 = vld [vmem:[%s493 + $0x8] sm:$0xff]
        %v597 = vld [vmem:[%s493 + $0x10] sm:$0xff]
        %v598 = vld [vmem:[%s493 + $0x18] sm:$0xff]
        %v599 = vld [vmem:[%s493 + $0x20] sm:$0xff]
        %v600 = vld [vmem:[%s493 + $0x28] sm:$0xff]
        %v601 = vld [vmem:[%s493 + $0x30] sm:$0xff]
        %v602 = vld [vmem:[%s493 + $0x38] sm:$0xff]
        %v603 = vld [vmem:[%s493 + $0x40] sm:$0xff]
        %v604 = vld [vmem:[%s493 + $0x48] sm:$0xff]
        %v605 = vld [vmem:[%s493 + $0x50] sm:$0xff]
        %v606 = vld [vmem:[%s493 + $0x58] sm:$0xff]
        %v607 = vld [vmem:[%s493 + $0x60] sm:$0xff]
        %v608 = vld [vmem:[%s493 + $0x68] sm:$0xff]
        %v609 = vld [vmem:[%s493 + $0x70] sm:$0xff]
        %v610 = vld [vmem:[%s493 + $0x78] sm:$0xff]
        %v611 = vld [vmem:[%s493 + $0x80] sm:$0xff]
        %v612 = vld [vmem:[%s493 + $0x88] sm:$0xff]
        %v613 = vld [vmem:[%s493 + $0x90] sm:$0xff]
        %v614 = vld [vmem:[%s493 + $0x98] sm:$0xff]
        %v615 = vld [vmem:[%s493 + $0xa0] sm:$0xff]
        %v616 = vld [vmem:[%s493 + $0xa8] sm:$0xff]
        %v617 = vld [vmem:[%s493 + $0xb0] sm:$0xff]
        %v618 = vld [vmem:[%s493 + $0xb8] sm:$0xff]
        %v619 = vld [vmem:[%s493 + $0xc0] sm:$0xff]
        %v620 = vld [vmem:[%s493 + $0xc8] sm:$0xff]
        %v621 = vld [vmem:[%s493 + $0xd0] sm:$0xff]
        %v622 = vld [vmem:[%s493 + $0xd8] sm:$0xff]
        %v623 = vld [vmem:[%s493 + $0xe0] sm:$0xff]
        %v624 = vld [vmem:[%s493 + $0xe8] sm:$0xff]
        %v625 = vld [vmem:[%s493 + $0xf0] sm:$0xff]
        %v626 = vld [vmem:[%s493 + $0xf8] sm:$0xff]
        %v627 = vld [vmem:[%s493 + $0x100] sm:$0xff]
        %v628 = vld [vmem:[%s493 + $0x108] sm:$0xff]
        %v629 = vld [vmem:[%s493 + $0x110] sm:$0xff]
        %v630 = vld [vmem:[%s493 + $0x118] sm:$0xff]
        %v631 = vld [vmem:[%s493 + $0x120] sm:$0xff]
        %v632 = vld [vmem:[%s493 + $0x128] sm:$0xff]
        %v633 = vld [vmem:[%s493 + $0x130] sm:$0xff]
        %v634 = vld [vmem:[%s493 + $0x138] sm:$0xff]
        %v635 = vld [vmem:[%s493 + $0x140] sm:$0xff]
        %v636 = vld [vmem:[%s493 + $0x148] sm:$0xff]
        %v637 = vld [vmem:[%s493 + $0x150] sm:$0xff]
        %v638 = vld [vmem:[%s493 + $0x158] sm:$0xff]
        %v639 = vld [vmem:[%s493 + $0x160] sm:$0xff]
        %v640 = vld [vmem:[%s493 + $0x168] sm:$0xff]
        %v641 = vld [vmem:[%s493 + $0x170] sm:$0xff]
        %v642 = vld [vmem:[%s493 + $0x178] sm:$0xff]
        %v643 = vld [vmem:[%s493 + $0x180] sm:$0xff]
        %v644 = vld [vmem:[%s493 + $0x188] sm:$0xff]
        %v645 = vld [vmem:[%s493 + $0x190] sm:$0xff]
        %v646 = vld [vmem:[%s493 + $0x198] sm:$0xff]
        %v647 = vld [vmem:[%s493 + $0x1a0] sm:$0xff]
        %v648 = vld [vmem:[%s493 + $0x1a8] sm:$0xff]
        %v649 = vld [vmem:[%s493 + $0x1b0] sm:$0xff]
        %v650 = vld [vmem:[%s493 + $0x1b8] sm:$0xff]
        %v651 = vld [vmem:[%s493 + $0x1c0] sm:$0xff]
        %v652 = vld [vmem:[%s493 + $0x1c8] sm:$0xff]
        %v653 = vld [vmem:[%s493 + $0x1d0] sm:$0xff]
        %v654 = vld [vmem:[%s493 + $0x1d8] sm:$0xff]
        %v655 = vld [vmem:[%s493 + $0x1e0] sm:$0xff]
        %v656 = vld [vmem:[%s493 + $0x1e8] sm:$0xff]
        %v657 = vld [vmem:[%s493 + $0x1f0] sm:$0xff]
        %v658 = vld [vmem:[%s493 + $0x1f8] sm:$0xff]
        %v659 = vunpack.c.l.bf16 %v595
        %v660 = vunpack.c.h.bf16 %v595
        %v661 = vunpack.c.l.bf16 %v596
        %v662 = vunpack.c.h.bf16 %v596
        %v663 = vunpack.c.l.bf16 %v597
        %v664 = vunpack.c.h.bf16 %v597
        %v665 = vunpack.c.l.bf16 %v598
        %v666 = vunpack.c.h.bf16 %v598
        %v667 = vunpack.c.l.bf16 %v599
        %v668 = vunpack.c.h.bf16 %v599
        %v669 = vunpack.c.l.bf16 %v600
        %v670 = vunpack.c.h.bf16 %v600
        %v671 = vunpack.c.l.bf16 %v601
        %v672 = vunpack.c.h.bf16 %v601
        %v673 = vunpack.c.l.bf16 %v602
        %v674 = vunpack.c.h.bf16 %v602
        %v675 = vunpack.c.l.bf16 %v603
        %v676 = vunpack.c.h.bf16 %v603
        %v677 = vunpack.c.l.bf16 %v604
        %v678 = vunpack.c.h.bf16 %v604
        %v679 = vunpack.c.l.bf16 %v605
        %v680 = vunpack.c.h.bf16 %v605
        %v681 = vunpack.c.l.bf16 %v606
        %v682 = vunpack.c.h.bf16 %v606
        %v683 = vunpack.c.l.bf16 %v607
        %v684 = vunpack.c.h.bf16 %v607
        %v685 = vunpack.c.l.bf16 %v608
        %v686 = vunpack.c.h.bf16 %v608
        %v687 = vunpack.c.l.bf16 %v609
        %v688 = vunpack.c.h.bf16 %v609
        %v689 = vunpack.c.l.bf16 %v610
        %v690 = vunpack.c.h.bf16 %v610
        %v691 = vunpack.c.l.bf16 %v611
        %v692 = vunpack.c.h.bf16 %v611
        %v693 = vunpack.c.l.bf16 %v612
        %v694 = vunpack.c.h.bf16 %v612
        %v695 = vunpack.c.l.bf16 %v613
        %v696 = vunpack.c.h.bf16 %v613
        %v697 = vunpack.c.l.bf16 %v614
        %v698 = vunpack.c.h.bf16 %v614
        %v699 = vunpack.c.l.bf16 %v615
        %v700 = vunpack.c.h.bf16 %v615
        %v701 = vunpack.c.l.bf16 %v616
        %v702 = vunpack.c.h.bf16 %v616
        %v703 = vunpack.c.l.bf16 %v617
        %v704 = vunpack.c.h.bf16 %v617
        %v705 = vunpack.c.l.bf16 %v618
        %v706 = vunpack.c.h.bf16 %v618
        %v707 = vunpack.c.l.bf16 %v619
        %v708 = vunpack.c.h.bf16 %v619
        %v709 = vunpack.c.l.bf16 %v620
        %v710 = vunpack.c.h.bf16 %v620
        %v711 = vunpack.c.l.bf16 %v621
        %v712 = vunpack.c.h.bf16 %v621
        %v713 = vunpack.c.l.bf16 %v622
        %v714 = vunpack.c.h.bf16 %v622
        %v715 = vunpack.c.l.bf16 %v623
        %v716 = vunpack.c.h.bf16 %v623
        %v717 = vunpack.c.l.bf16 %v624
        %v718 = vunpack.c.h.bf16 %v624
        %v719 = vunpack.c.l.bf16 %v625
        %v720 = vunpack.c.h.bf16 %v625
        %v721 = vunpack.c.l.bf16 %v626
        %v722 = vunpack.c.h.bf16 %v626
        %v723 = vunpack.c.l.bf16 %v627
        %v724 = vunpack.c.h.bf16 %v627
        %v725 = vunpack.c.l.bf16 %v628
        %v726 = vunpack.c.h.bf16 %v628
        %v727 = vunpack.c.l.bf16 %v629
        %v728 = vunpack.c.h.bf16 %v629
        %v729 = vunpack.c.l.bf16 %v630
        %v730 = vunpack.c.h.bf16 %v630
        %v731 = vunpack.c.l.bf16 %v631
        %v732 = vunpack.c.h.bf16 %v631
        %v733 = vunpack.c.l.bf16 %v632
        %v734 = vunpack.c.h.bf16 %v632
        %v735 = vunpack.c.l.bf16 %v633
        %v736 = vunpack.c.h.bf16 %v633
        %v737 = vunpack.c.l.bf16 %v634
        %v738 = vunpack.c.h.bf16 %v634
        %v739 = vunpack.c.l.bf16 %v635
        %v740 = vunpack.c.h.bf16 %v635
        %v741 = vunpack.c.l.bf16 %v636
        %v742 = vunpack.c.h.bf16 %v636
        %v743 = vunpack.c.l.bf16 %v637
        %v744 = vunpack.c.h.bf16 %v637
        %v745 = vunpack.c.l.bf16 %v638
        %v746 = vunpack.c.h.bf16 %v638
        %v747 = vunpack.c.l.bf16 %v639
        %v748 = vunpack.c.h.bf16 %v639
        %v749 = vunpack.c.l.bf16 %v640
        %v750 = vunpack.c.h.bf16 %v640
        %v751 = vunpack.c.l.bf16 %v641
        %v752 = vunpack.c.h.bf16 %v641
        %v753 = vunpack.c.l.bf16 %v642
        %v754 = vunpack.c.h.bf16 %v642
        %v755 = vunpack.c.l.bf16 %v643
        %v756 = vunpack.c.h.bf16 %v643
        %v757 = vunpack.c.l.bf16 %v644
        %v758 = vunpack.c.h.bf16 %v644
        %v759 = vunpack.c.l.bf16 %v645
        %v760 = vunpack.c.h.bf16 %v645
        %v761 = vunpack.c.l.bf16 %v646
        %v762 = vunpack.c.h.bf16 %v646
        %v763 = vunpack.c.l.bf16 %v647
        %v764 = vunpack.c.h.bf16 %v647
        %v765 = vunpack.c.l.bf16 %v648
        %v766 = vunpack.c.h.bf16 %v648
        %v767 = vunpack.c.l.bf16 %v649
        %v768 = vunpack.c.h.bf16 %v649
        %v769 = vunpack.c.l.bf16 %v650
        %v770 = vunpack.c.h.bf16 %v650
        %v771 = vunpack.c.l.bf16 %v651
        %v772 = vunpack.c.h.bf16 %v651
        %v773 = vunpack.c.l.bf16 %v652
        %v774 = vunpack.c.h.bf16 %v652
        %v775 = vunpack.c.l.bf16 %v653
        %v776 = vunpack.c.h.bf16 %v653
        %v777 = vunpack.c.l.bf16 %v654
        %v778 = vunpack.c.h.bf16 %v654
        %v779 = vunpack.c.l.bf16 %v655
        %v780 = vunpack.c.h.bf16 %v655
        %v781 = vunpack.c.l.bf16 %v656
        %v782 = vunpack.c.h.bf16 %v656
        %v783 = vunpack.c.l.bf16 %v657
        %v784 = vunpack.c.h.bf16 %v657
        %v785 = vunpack.c.l.bf16 %v658
        %v786 = vunpack.c.h.bf16 %v658
        %v787 = vmul.f32 %v659, %v659
        %v788 = vmul.f32 %v660, %v660
        %v789 = vmul.f32 %v661, %v661
        %v790 = vmul.f32 %v662, %v662
        %v791 = vmul.f32 %v663, %v663
        %v792 = vmul.f32 %v664, %v664
        %v793 = vmul.f32 %v665, %v665
        %v794 = vmul.f32 %v666, %v666
        %v795 = vmul.f32 %v667, %v667
        %v796 = vmul.f32 %v668, %v668
        %v797 = vmul.f32 %v669, %v669
        %v798 = vmul.f32 %v670, %v670
        %v799 = vmul.f32 %v671, %v671
        %v800 = vmul.f32 %v672, %v672
        %v801 = vmul.f32 %v673, %v673
        %v802 = vmul.f32 %v674, %v674
        %v803 = vmul.f32 %v675, %v675
        %v804 = vmul.f32 %v676, %v676
        %v805 = vmul.f32 %v677, %v677
        %v806 = vmul.f32 %v678, %v678
        %v807 = vmul.f32 %v679, %v679
        %v808 = vmul.f32 %v680, %v680
        %v809 = vmul.f32 %v681, %v681
        %v810 = vmul.f32 %v682, %v682
        %v811 = vmul.f32 %v683, %v683
        %v812 = vmul.f32 %v684, %v684
        %v813 = vmul.f32 %v685, %v685
        %v814 = vmul.f32 %v686, %v686
        %v815 = vmul.f32 %v687, %v687
        %v816 = vmul.f32 %v688, %v688
        %v817 = vmul.f32 %v689, %v689
        %v818 = vmul.f32 %v690, %v690
        %v819 = vmul.f32 %v691, %v691
        %v820 = vmul.f32 %v692, %v692
        %v821 = vmul.f32 %v693, %v693
        %v822 = vmul.f32 %v694, %v694
        %v823 = vmul.f32 %v695, %v695
        %v824 = vmul.f32 %v696, %v696
        %v825 = vmul.f32 %v697, %v697
        %v826 = vmul.f32 %v698, %v698
        %v827 = vmul.f32 %v699, %v699
        %v828 = vmul.f32 %v700, %v700
        %v829 = vmul.f32 %v701, %v701
        %v830 = vmul.f32 %v702, %v702
        %v831 = vmul.f32 %v703, %v703
        %v832 = vmul.f32 %v704, %v704
        %v833 = vmul.f32 %v705, %v705
        %v834 = vmul.f32 %v706, %v706
        %v835 = vmul.f32 %v707, %v707
        %v836 = vmul.f32 %v708, %v708
        %v837 = vmul.f32 %v709, %v709
        %v838 = vmul.f32 %v710, %v710
        %v839 = vmul.f32 %v711, %v711
        %v840 = vmul.f32 %v712, %v712
        %v841 = vmul.f32 %v713, %v713
        %v842 = vmul.f32 %v714, %v714
        %v843 = vmul.f32 %v715, %v715
        %v844 = vmul.f32 %v716, %v716
        %v845 = vmul.f32 %v717, %v717
        %v846 = vmul.f32 %v718, %v718
        %v847 = vmul.f32 %v719, %v719
        %v848 = vmul.f32 %v720, %v720
        %v849 = vmul.f32 %v721, %v721
        %v850 = vmul.f32 %v722, %v722
        %v851 = vmul.f32 %v723, %v723
        %v852 = vmul.f32 %v724, %v724
        %v853 = vmul.f32 %v725, %v725
        %v854 = vmul.f32 %v726, %v726
        %v855 = vmul.f32 %v727, %v727
        %v856 = vmul.f32 %v728, %v728
        %v857 = vmul.f32 %v729, %v729
        %v858 = vmul.f32 %v730, %v730
        %v859 = vmul.f32 %v731, %v731
        %v860 = vmul.f32 %v732, %v732
        %v861 = vmul.f32 %v733, %v733
        %v862 = vmul.f32 %v734, %v734
        %v863 = vmul.f32 %v735, %v735
        %v864 = vmul.f32 %v736, %v736
        %v865 = vmul.f32 %v737, %v737
        %v866 = vmul.f32 %v738, %v738
        %v867 = vmul.f32 %v739, %v739
        %v868 = vmul.f32 %v740, %v740
        %v869 = vmul.f32 %v741, %v741
        %v870 = vmul.f32 %v742, %v742
        %v871 = vmul.f32 %v743, %v743
        %v872 = vmul.f32 %v744, %v744
        %v873 = vmul.f32 %v745, %v745
        %v874 = vmul.f32 %v746, %v746
        %v875 = vmul.f32 %v747, %v747
        %v876 = vmul.f32 %v748, %v748
        %v877 = vmul.f32 %v749, %v749
        %v878 = vmul.f32 %v750, %v750
        %v879 = vmul.f32 %v751, %v751
        %v880 = vmul.f32 %v752, %v752
        %v881 = vmul.f32 %v753, %v753
        %v882 = vmul.f32 %v754, %v754
        %v883 = vmul.f32 %v755, %v755
        %v884 = vmul.f32 %v756, %v756
        %v885 = vmul.f32 %v757, %v757
        %v886 = vmul.f32 %v758, %v758
        %v887 = vmul.f32 %v759, %v759
        %v888 = vmul.f32 %v760, %v760
        %v889 = vmul.f32 %v761, %v761
        %v890 = vmul.f32 %v762, %v762
        %v891 = vmul.f32 %v763, %v763
        %v892 = vmul.f32 %v764, %v764
        %v893 = vmul.f32 %v765, %v765
        %v894 = vmul.f32 %v766, %v766
        %v895 = vmul.f32 %v767, %v767
        %v896 = vmul.f32 %v768, %v768
        %v897 = vmul.f32 %v769, %v769
        %v898 = vmul.f32 %v770, %v770
        %v899 = vmul.f32 %v771, %v771
        %v900 = vmul.f32 %v772, %v772
        %v901 = vmul.f32 %v773, %v773
        %v902 = vmul.f32 %v774, %v774
        %v903 = vmul.f32 %v775, %v775
        %v904 = vmul.f32 %v776, %v776
        %v905 = vmul.f32 %v777, %v777
        %v906 = vmul.f32 %v778, %v778
        %v907 = vmul.f32 %v779, %v779
        %v908 = vmul.f32 %v780, %v780
        %v909 = vmul.f32 %v781, %v781
        %v910 = vmul.f32 %v782, %v782
        %v911 = vmul.f32 %v783, %v783
        %v912 = vmul.f32 %v784, %v784
        %v913 = vmul.f32 %v785, %v785
        %v914 = vmul.f32 %v786, %v786
        %v915 = vadd.f32 %v787, %v788
        %v916 = vadd.f32 %v915, %v789
        %v917 = vadd.f32 %v916, %v790
        %918 = vadd.xlane.f32.xlu0 %v917
        %v919 = vpop.xlane.xlu0 %918
        %v920 = vadd.f32 %v791, %v792
        %v921 = vadd.f32 %v920, %v793
        %v922 = vadd.f32 %v921, %v794
        %923 = vadd.xlane.f32.xlu0 %v922
        %v924 = vpop.xlane.xlu0 %923
        %v925 = vadd.f32 %v795, %v796
        %v926 = vadd.f32 %v925, %v797
        %v927 = vadd.f32 %v926, %v798
        %928 = vadd.xlane.f32.xlu0 %v927
        %v929 = vpop.xlane.xlu0 %928
        %v930 = vadd.f32 %v799, %v800
        %v931 = vadd.f32 %v930, %v801
        %v932 = vadd.f32 %v931, %v802
        %933 = vadd.xlane.f32.xlu0 %v932
        %v934 = vpop.xlane.xlu0 %933
        %v935 = vadd.f32 %v803, %v804
        %v936 = vadd.f32 %v935, %v805
        %v937 = vadd.f32 %v936, %v806
        %938 = vadd.xlane.f32.xlu0 %v937
        %v939 = vpop.xlane.xlu0 %938
        %v940 = vadd.f32 %v807, %v808
        %v941 = vadd.f32 %v940, %v809
        %v942 = vadd.f32 %v941, %v810
        %943 = vadd.xlane.f32.xlu0 %v942
        %v944 = vpop.xlane.xlu0 %943
        %v945 = vadd.f32 %v811, %v812
        %v946 = vadd.f32 %v945, %v813
        %v947 = vadd.f32 %v946, %v814
        %948 = vadd.xlane.f32.xlu0 %v947
        %v949 = vpop.xlane.xlu0 %948
        %v950 = vadd.f32 %v815, %v816
        %v951 = vadd.f32 %v950, %v817
        %v952 = vadd.f32 %v951, %v818
        %953 = vadd.xlane.f32.xlu0 %v952
        %v954 = vpop.xlane.xlu0 %953
        %v955 = vadd.f32 %v819, %v820
        %v956 = vadd.f32 %v955, %v821
        %v957 = vadd.f32 %v956, %v822
        %958 = vadd.xlane.f32.xlu0 %v957
        %v959 = vpop.xlane.xlu0 %958
        %v960 = vadd.f32 %v823, %v824
        %v961 = vadd.f32 %v960, %v825
        %v962 = vadd.f32 %v961, %v826
        %963 = vadd.xlane.f32.xlu0 %v962
        %v964 = vpop.xlane.xlu0 %963
        %v965 = vadd.f32 %v827, %v828
        %v966 = vadd.f32 %v965, %v829
        %v967 = vadd.f32 %v966, %v830
        %968 = vadd.xlane.f32.xlu0 %v967
        %v969 = vpop.xlane.xlu0 %968
        %v970 = vadd.f32 %v831, %v832
        %v971 = vadd.f32 %v970, %v833
        %v972 = vadd.f32 %v971, %v834
        %973 = vadd.xlane.f32.xlu0 %v972
        %v974 = vpop.xlane.xlu0 %973
        %v975 = vadd.f32 %v835, %v836
        %v976 = vadd.f32 %v975, %v837
        %v977 = vadd.f32 %v976, %v838
        %978 = vadd.xlane.f32.xlu0 %v977
        %v979 = vpop.xlane.xlu0 %978
        %v980 = vadd.f32 %v839, %v840
        %v981 = vadd.f32 %v980, %v841
        %v982 = vadd.f32 %v981, %v842
        %983 = vadd.xlane.f32.xlu0 %v982
        %v984 = vpop.xlane.xlu0 %983
        %v985 = vadd.f32 %v843, %v844
        %v986 = vadd.f32 %v985, %v845
        %v987 = vadd.f32 %v986, %v846
        %988 = vadd.xlane.f32.xlu0 %v987
        %v989 = vpop.xlane.xlu0 %988
        %v990 = vadd.f32 %v847, %v848
        %v991 = vadd.f32 %v990, %v849
        %v992 = vadd.f32 %v991, %v850
        %993 = vadd.xlane.f32.xlu0 %v992
        %v994 = vpop.xlane.xlu0 %993
        %v995 = vadd.f32 %v851, %v852
        %v996 = vadd.f32 %v995, %v853
        %v997 = vadd.f32 %v996, %v854
        %998 = vadd.xlane.f32.xlu0 %v997
        %v999 = vpop.xlane.xlu0 %998
        %v1000 = vadd.f32 %v855, %v856
        %v1001 = vadd.f32 %v1000, %v857
        %v1002 = vadd.f32 %v1001, %v858
        %1003 = vadd.xlane.f32.xlu0 %v1002
        %v1004 = vpop.xlane.xlu0 %1003
        %v1005 = vadd.f32 %v859, %v860
        %v1006 = vadd.f32 %v1005, %v861
        %v1007 = vadd.f32 %v1006, %v862
        %1008 = vadd.xlane.f32.xlu0 %v1007
        %v1009 = vpop.xlane.xlu0 %1008
        %v1010 = vadd.f32 %v863, %v864
        %v1011 = vadd.f32 %v1010, %v865
        %v1012 = vadd.f32 %v1011, %v866
        %1013 = vadd.xlane.f32.xlu0 %v1012
        %v1014 = vpop.xlane.xlu0 %1013
        %v1015 = vadd.f32 %v867, %v868
        %v1016 = vadd.f32 %v1015, %v869
        %v1017 = vadd.f32 %v1016, %v870
        %1018 = vadd.xlane.f32.xlu0 %v1017
        %v1019 = vpop.xlane.xlu0 %1018
        %v1020 = vadd.f32 %v871, %v872
        %v1021 = vadd.f32 %v1020, %v873
        %v1022 = vadd.f32 %v1021, %v874
        %1023 = vadd.xlane.f32.xlu0 %v1022
        %v1024 = vpop.xlane.xlu0 %1023
        %v1025 = vadd.f32 %v875, %v876
        %v1026 = vadd.f32 %v1025, %v877
        %v1027 = vadd.f32 %v1026, %v878
        %1028 = vadd.xlane.f32.xlu0 %v1027
        %v1029 = vpop.xlane.xlu0 %1028
        %v1030 = vadd.f32 %v879, %v880
        %v1031 = vadd.f32 %v1030, %v881
        %v1032 = vadd.f32 %v1031, %v882
        %1033 = vadd.xlane.f32.xlu0 %v1032
        %v1034 = vpop.xlane.xlu0 %1033
        %v1035 = vadd.f32 %v883, %v884
        %v1036 = vadd.f32 %v1035, %v885
        %v1037 = vadd.f32 %v1036, %v886
        %1038 = vadd.xlane.f32.xlu0 %v1037
        %v1039 = vpop.xlane.xlu0 %1038
        %v1040 = vadd.f32 %v887, %v888
        %v1041 = vadd.f32 %v1040, %v889
        %v1042 = vadd.f32 %v1041, %v890
        %1043 = vadd.xlane.f32.xlu0 %v1042
        %v1044 = vpop.xlane.xlu0 %1043
        %v1045 = vadd.f32 %v891, %v892
        %v1046 = vadd.f32 %v1045, %v893
        %v1047 = vadd.f32 %v1046, %v894
        %1048 = vadd.xlane.f32.xlu0 %v1047
        %v1049 = vpop.xlane.xlu0 %1048
        %v1050 = vadd.f32 %v895, %v896
        %v1051 = vadd.f32 %v1050, %v897
        %v1052 = vadd.f32 %v1051, %v898
        %1053 = vadd.xlane.f32.xlu0 %v1052
        %v1054 = vpop.xlane.xlu0 %1053
        %v1055 = vadd.f32 %v899, %v900
        %v1056 = vadd.f32 %v1055, %v901
        %v1057 = vadd.f32 %v1056, %v902
        %1058 = vadd.xlane.f32.xlu0 %v1057
        %v1059 = vpop.xlane.xlu0 %1058
        %v1060 = vadd.f32 %v903, %v904
        %v1061 = vadd.f32 %v1060, %v905
        %v1062 = vadd.f32 %v1061, %v906
        %1063 = vadd.xlane.f32.xlu0 %v1062
        %v1064 = vpop.xlane.xlu0 %1063
        %v1065 = vadd.f32 %v907, %v908
        %v1066 = vadd.f32 %v1065, %v909
        %v1067 = vadd.f32 %v1066, %v910
        %1068 = vadd.xlane.f32.xlu0 %v1067
        %v1069 = vpop.xlane.xlu0 %1068
        %v1070 = vadd.f32 %v911, %v912
        %v1071 = vadd.f32 %v1070, %v913
        %v1072 = vadd.f32 %v1071, %v914
        %1073 = vadd.xlane.f32.xlu0 %v1072
        %v1074 = vpop.xlane.xlu0 %1073
        %v1075 = vmax.f32 %v919, 1e-24
        %v1076 = vmax.f32 %v924, 1e-24
        %v1077 = vmax.f32 %v929, 1e-24
        %v1078 = vmax.f32 %v934, 1e-24
        %v1079 = vmax.f32 %v939, 1e-24
        %v1080 = vmax.f32 %v944, 1e-24
        %v1081 = vmax.f32 %v949, 1e-24
        %v1082 = vmax.f32 %v954, 1e-24
        %v1083 = vmax.f32 %v959, 1e-24
        %v1084 = vmax.f32 %v964, 1e-24
        %v1085 = vmax.f32 %v969, 1e-24
        %v1086 = vmax.f32 %v974, 1e-24
        %v1087 = vmax.f32 %v979, 1e-24
        %v1088 = vmax.f32 %v984, 1e-24
        %v1089 = vmax.f32 %v989, 1e-24
        %v1090 = vmax.f32 %v994, 1e-24
        %v1091 = vmax.f32 %v999, 1e-24
        %v1092 = vmax.f32 %v1004, 1e-24
        %v1093 = vmax.f32 %v1009, 1e-24
        %v1094 = vmax.f32 %v1014, 1e-24
        %v1095 = vmax.f32 %v1019, 1e-24
        %v1096 = vmax.f32 %v1024, 1e-24
        %v1097 = vmax.f32 %v1029, 1e-24
        %v1098 = vmax.f32 %v1034, 1e-24
        %v1099 = vmax.f32 %v1039, 1e-24
        %v1100 = vmax.f32 %v1044, 1e-24
        %v1101 = vmax.f32 %v1049, 1e-24
        %v1102 = vmax.f32 %v1054, 1e-24
        %v1103 = vmax.f32 %v1059, 1e-24
        %v1104 = vmax.f32 %v1064, 1e-24
        %v1105 = vmax.f32 %v1069, 1e-24
        %v1106 = vmax.f32 %v1074, 1e-24
        %v1107 = vrsqrt.pop %v1075
        %v1108 = vmul.f32 %v1107, %v1075
        %v1109 = vmul.f32 %v1108, %v1107
        %v1110 = vmul.f32 0.5, %v1109
        %v1111 = vsub.f32 1.5, %v1110
        %v1112 = vmul.f32 %v1107, %v1111
        %vm1113 = vweird.f32 %v1075
        %vm1114 = vweird.f32 %v1107
        %vm1115 = vmor %vm1113, %vm1114
        %v1116 = vsel %vm1115, %v1107, %v1112
        %v1117 = vrsqrt.pop %v1076
        %v1118 = vmul.f32 %v1117, %v1076
        %v1119 = vmul.f32 %v1118, %v1117
        %v1120 = vmul.f32 0.5, %v1119
        %v1121 = vsub.f32 1.5, %v1120
        %v1122 = vmul.f32 %v1117, %v1121
        %vm1123 = vweird.f32 %v1076
        %vm1124 = vweird.f32 %v1117
        %vm1125 = vmor %vm1123, %vm1124
        %v1126 = vsel %vm1125, %v1117, %v1122
        %v1127 = vrsqrt.pop %v1077
        %v1128 = vmul.f32 %v1127, %v1077
        %v1129 = vmul.f32 %v1128, %v1127
        %v1130 = vmul.f32 0.5, %v1129
        %v1131 = vsub.f32 1.5, %v1130
        %v1132 = vmul.f32 %v1127, %v1131
        %vm1133 = vweird.f32 %v1077
        %vm1134 = vweird.f32 %v1127
        %vm1135 = vmor %vm1133, %vm1134
        %v1136 = vsel %vm1135, %v1127, %v1132
        %v1137 = vrsqrt.pop %v1078
        %v1138 = vmul.f32 %v1137, %v1078
        %v1139 = vmul.f32 %v1138, %v1137
        %v1140 = vmul.f32 0.5, %v1139
        %v1141 = vsub.f32 1.5, %v1140
        %v1142 = vmul.f32 %v1137, %v1141
        %vm1143 = vweird.f32 %v1078
        %vm1144 = vweird.f32 %v1137
        %vm1145 = vmor %vm1143, %vm1144
        %v1146 = vsel %vm1145, %v1137, %v1142
        %v1147 = vrsqrt.pop %v1079
        %v1148 = vmul.f32 %v1147, %v1079
        %v1149 = vmul.f32 %v1148, %v1147
        %v1150 = vmul.f32 0.5, %v1149
        %v1151 = vsub.f32 1.5, %v1150
        %v1152 = vmul.f32 %v1147, %v1151
        %vm1153 = vweird.f32 %v1079
        %vm1154 = vweird.f32 %v1147
        %vm1155 = vmor %vm1153, %vm1154
        %v1156 = vsel %vm1155, %v1147, %v1152
        %v1157 = vrsqrt.pop %v1080
        %v1158 = vmul.f32 %v1157, %v1080
        %v1159 = vmul.f32 %v1158, %v1157
        %v1160 = vmul.f32 0.5, %v1159
        %v1161 = vsub.f32 1.5, %v1160
        %v1162 = vmul.f32 %v1157, %v1161
        %vm1163 = vweird.f32 %v1080
        %vm1164 = vweird.f32 %v1157
        %vm1165 = vmor %vm1163, %vm1164
        %v1166 = vsel %vm1165, %v1157, %v1162
        %v1167 = vrsqrt.pop %v1081
        %v1168 = vmul.f32 %v1167, %v1081
        %v1169 = vmul.f32 %v1168, %v1167
        %v1170 = vmul.f32 0.5, %v1169
        %v1171 = vsub.f32 1.5, %v1170
        %v1172 = vmul.f32 %v1167, %v1171
        %vm1173 = vweird.f32 %v1081
        %vm1174 = vweird.f32 %v1167
        %vm1175 = vmor %vm1173, %vm1174
        %v1176 = vsel %vm1175, %v1167, %v1172
        %v1177 = vrsqrt.pop %v1082
        %v1178 = vmul.f32 %v1177, %v1082
        %v1179 = vmul.f32 %v1178, %v1177
        %v1180 = vmul.f32 0.5, %v1179
        %v1181 = vsub.f32 1.5, %v1180
        %v1182 = vmul.f32 %v1177, %v1181
        %vm1183 = vweird.f32 %v1082
        %vm1184 = vweird.f32 %v1177
        %vm1185 = vmor %vm1183, %vm1184
        %v1186 = vsel %vm1185, %v1177, %v1182
        %v1187 = vrsqrt.pop %v1083
        %v1188 = vmul.f32 %v1187, %v1083
        %v1189 = vmul.f32 %v1188, %v1187
        %v1190 = vmul.f32 0.5, %v1189
        %v1191 = vsub.f32 1.5, %v1190
        %v1192 = vmul.f32 %v1187, %v1191
        %vm1193 = vweird.f32 %v1083
        %vm1194 = vweird.f32 %v1187
        %vm1195 = vmor %vm1193, %vm1194
        %v1196 = vsel %vm1195, %v1187, %v1192
        %v1197 = vrsqrt.pop %v1084
        %v1198 = vmul.f32 %v1197, %v1084
        %v1199 = vmul.f32 %v1198, %v1197
        %v1200 = vmul.f32 0.5, %v1199
        %v1201 = vsub.f32 1.5, %v1200
        %v1202 = vmul.f32 %v1197, %v1201
        %vm1203 = vweird.f32 %v1084
        %vm1204 = vweird.f32 %v1197
        %vm1205 = vmor %vm1203, %vm1204
        %v1206 = vsel %vm1205, %v1197, %v1202
        %v1207 = vrsqrt.pop %v1085
        %v1208 = vmul.f32 %v1207, %v1085
        %v1209 = vmul.f32 %v1208, %v1207
        %v1210 = vmul.f32 0.5, %v1209
        %v1211 = vsub.f32 1.5, %v1210
        %v1212 = vmul.f32 %v1207, %v1211
        %vm1213 = vweird.f32 %v1085
        %vm1214 = vweird.f32 %v1207
        %vm1215 = vmor %vm1213, %vm1214
        %v1216 = vsel %vm1215, %v1207, %v1212
        %v1217 = vrsqrt.pop %v1086
        %v1218 = vmul.f32 %v1217, %v1086
        %v1219 = vmul.f32 %v1218, %v1217
        %v1220 = vmul.f32 0.5, %v1219
        %v1221 = vsub.f32 1.5, %v1220
        %v1222 = vmul.f32 %v1217, %v1221
        %vm1223 = vweird.f32 %v1086
        %vm1224 = vweird.f32 %v1217
        %vm1225 = vmor %vm1223, %vm1224
        %v1226 = vsel %vm1225, %v1217, %v1222
        %v1227 = vrsqrt.pop %v1087
        %v1228 = vmul.f32 %v1227, %v1087
        %v1229 = vmul.f32 %v1228, %v1227
        %v1230 = vmul.f32 0.5, %v1229
        %v1231 = vsub.f32 1.5, %v1230
        %v1232 = vmul.f32 %v1227, %v1231
        %vm1233 = vweird.f32 %v1087
        %vm1234 = vweird.f32 %v1227
        %vm1235 = vmor %vm1233, %vm1234
        %v1236 = vsel %vm1235, %v1227, %v1232
        %v1237 = vrsqrt.pop %v1088
        %v1238 = vmul.f32 %v1237, %v1088
        %v1239 = vmul.f32 %v1238, %v1237
        %v1240 = vmul.f32 0.5, %v1239
        %v1241 = vsub.f32 1.5, %v1240
        %v1242 = vmul.f32 %v1237, %v1241
        %vm1243 = vweird.f32 %v1088
        %vm1244 = vweird.f32 %v1237
        %vm1245 = vmor %vm1243, %vm1244
        %v1246 = vsel %vm1245, %v1237, %v1242
        %v1247 = vrsqrt.pop %v1089
        %v1248 = vmul.f32 %v1247, %v1089
        %v1249 = vmul.f32 %v1248, %v1247
        %v1250 = vmul.f32 0.5, %v1249
        %v1251 = vsub.f32 1.5, %v1250
        %v1252 = vmul.f32 %v1247, %v1251
        %vm1253 = vweird.f32 %v1089
        %vm1254 = vweird.f32 %v1247
        %vm1255 = vmor %vm1253, %vm1254
        %v1256 = vsel %vm1255, %v1247, %v1252
        %v1257 = vrsqrt.pop %v1090
        %v1258 = vmul.f32 %v1257, %v1090
        %v1259 = vmul.f32 %v1258, %v1257
        %v1260 = vmul.f32 0.5, %v1259
        %v1261 = vsub.f32 1.5, %v1260
        %v1262 = vmul.f32 %v1257, %v1261
        %vm1263 = vweird.f32 %v1090
        %vm1264 = vweird.f32 %v1257
        %vm1265 = vmor %vm1263, %vm1264
        %v1266 = vsel %vm1265, %v1257, %v1262
        %v1267 = vrsqrt.pop %v1091
        %v1268 = vmul.f32 %v1267, %v1091
        %v1269 = vmul.f32 %v1268, %v1267
        %v1270 = vmul.f32 0.5, %v1269
        %v1271 = vsub.f32 1.5, %v1270
        %v1272 = vmul.f32 %v1267, %v1271
        %vm1273 = vweird.f32 %v1091
        %vm1274 = vweird.f32 %v1267
        %vm1275 = vmor %vm1273, %vm1274
        %v1276 = vsel %vm1275, %v1267, %v1272
        %v1277 = vrsqrt.pop %v1092
        %v1278 = vmul.f32 %v1277, %v1092
        %v1279 = vmul.f32 %v1278, %v1277
        %v1280 = vmul.f32 0.5, %v1279
        %v1281 = vsub.f32 1.5, %v1280
        %v1282 = vmul.f32 %v1277, %v1281
        %vm1283 = vweird.f32 %v1092
        %vm1284 = vweird.f32 %v1277
        %vm1285 = vmor %vm1283, %vm1284
        %v1286 = vsel %vm1285, %v1277, %v1282
        %v1287 = vrsqrt.pop %v1093
        %v1288 = vmul.f32 %v1287, %v1093
        %v1289 = vmul.f32 %v1288, %v1287
        %v1290 = vmul.f32 0.5, %v1289
        %v1291 = vsub.f32 1.5, %v1290
        %v1292 = vmul.f32 %v1287, %v1291
        %vm1293 = vweird.f32 %v1093
        %vm1294 = vweird.f32 %v1287
        %vm1295 = vmor %vm1293, %vm1294
        %v1296 = vsel %vm1295, %v1287, %v1292
        %v1297 = vrsqrt.pop %v1094
        %v1298 = vmul.f32 %v1297, %v1094
        %v1299 = vmul.f32 %v1298, %v1297
        %v1300 = vmul.f32 0.5, %v1299
        %v1301 = vsub.f32 1.5, %v1300
        %v1302 = vmul.f32 %v1297, %v1301
        %vm1303 = vweird.f32 %v1094
        %vm1304 = vweird.f32 %v1297
        %vm1305 = vmor %vm1303, %vm1304
        %v1306 = vsel %vm1305, %v1297, %v1302
        %v1307 = vrsqrt.pop %v1095
        %v1308 = vmul.f32 %v1307, %v1095
        %v1309 = vmul.f32 %v1308, %v1307
        %v1310 = vmul.f32 0.5, %v1309
        %v1311 = vsub.f32 1.5, %v1310
        %v1312 = vmul.f32 %v1307, %v1311
        %vm1313 = vweird.f32 %v1095
        %vm1314 = vweird.f32 %v1307
        %vm1315 = vmor %vm1313, %vm1314
        %v1316 = vsel %vm1315, %v1307, %v1312
        %v1317 = vrsqrt.pop %v1096
        %v1318 = vmul.f32 %v1317, %v1096
        %v1319 = vmul.f32 %v1318, %v1317
        %v1320 = vmul.f32 0.5, %v1319
        %v1321 = vsub.f32 1.5, %v1320
        %v1322 = vmul.f32 %v1317, %v1321
        %vm1323 = vweird.f32 %v1096
        %vm1324 = vweird.f32 %v1317
        %vm1325 = vmor %vm1323, %vm1324
        %v1326 = vsel %vm1325, %v1317, %v1322
        %v1327 = vrsqrt.pop %v1097
        %v1328 = vmul.f32 %v1327, %v1097
        %v1329 = vmul.f32 %v1328, %v1327
        %v1330 = vmul.f32 0.5, %v1329
        %v1331 = vsub.f32 1.5, %v1330
        %v1332 = vmul.f32 %v1327, %v1331
        %vm1333 = vweird.f32 %v1097
        %vm1334 = vweird.f32 %v1327
        %vm1335 = vmor %vm1333, %vm1334
        %v1336 = vsel %vm1335, %v1327, %v1332
        %v1337 = vrsqrt.pop %v1098
        %v1338 = vmul.f32 %v1337, %v1098
        %v1339 = vmul.f32 %v1338, %v1337
        %v1340 = vmul.f32 0.5, %v1339
        %v1341 = vsub.f32 1.5, %v1340
        %v1342 = vmul.f32 %v1337, %v1341
        %vm1343 = vweird.f32 %v1098
        %vm1344 = vweird.f32 %v1337
        %vm1345 = vmor %vm1343, %vm1344
        %v1346 = vsel %vm1345, %v1337, %v1342
        %v1347 = vrsqrt.pop %v1099
        %v1348 = vmul.f32 %v1347, %v1099
        %v1349 = vmul.f32 %v1348, %v1347
        %v1350 = vmul.f32 0.5, %v1349
        %v1351 = vsub.f32 1.5, %v1350
        %v1352 = vmul.f32 %v1347, %v1351
        %vm1353 = vweird.f32 %v1099
        %vm1354 = vweird.f32 %v1347
        %vm1355 = vmor %vm1353, %vm1354
        %v1356 = vsel %vm1355, %v1347, %v1352
        %v1357 = vrsqrt.pop %v1100
        %v1358 = vmul.f32 %v1357, %v1100
        %v1359 = vmul.f32 %v1358, %v1357
        %v1360 = vmul.f32 0.5, %v1359
        %v1361 = vsub.f32 1.5, %v1360
        %v1362 = vmul.f32 %v1357, %v1361
        %vm1363 = vweird.f32 %v1100
        %vm1364 = vweird.f32 %v1357
        %vm1365 = vmor %vm1363, %vm1364
        %v1366 = vsel %vm1365, %v1357, %v1362
        %v1367 = vrsqrt.pop %v1101
        %v1368 = vmul.f32 %v1367, %v1101
        %v1369 = vmul.f32 %v1368, %v1367
        %v1370 = vmul.f32 0.5, %v1369
        %v1371 = vsub.f32 1.5, %v1370
        %v1372 = vmul.f32 %v1367, %v1371
        %vm1373 = vweird.f32 %v1101
        %vm1374 = vweird.f32 %v1367
        %vm1375 = vmor %vm1373, %vm1374
        %v1376 = vsel %vm1375, %v1367, %v1372
        %v1377 = vrsqrt.pop %v1102
        %v1378 = vmul.f32 %v1377, %v1102
        %v1379 = vmul.f32 %v1378, %v1377
        %v1380 = vmul.f32 0.5, %v1379
        %v1381 = vsub.f32 1.5, %v1380
        %v1382 = vmul.f32 %v1377, %v1381
        %vm1383 = vweird.f32 %v1102
        %vm1384 = vweird.f32 %v1377
        %vm1385 = vmor %vm1383, %vm1384
        %v1386 = vsel %vm1385, %v1377, %v1382
        %v1387 = vrsqrt.pop %v1103
        %v1388 = vmul.f32 %v1387, %v1103
        %v1389 = vmul.f32 %v1388, %v1387
        %v1390 = vmul.f32 0.5, %v1389
        %v1391 = vsub.f32 1.5, %v1390
        %v1392 = vmul.f32 %v1387, %v1391
        %vm1393 = vweird.f32 %v1103
        %vm1394 = vweird.f32 %v1387
        %vm1395 = vmor %vm1393, %vm1394
        %v1396 = vsel %vm1395, %v1387, %v1392
        %v1397 = vrsqrt.pop %v1104
        %v1398 = vmul.f32 %v1397, %v1104
        %v1399 = vmul.f32 %v1398, %v1397
        %v1400 = vmul.f32 0.5, %v1399
        %v1401 = vsub.f32 1.5, %v1400
        %v1402 = vmul.f32 %v1397, %v1401
        %vm1403 = vweird.f32 %v1104
        %vm1404 = vweird.f32 %v1397
        %vm1405 = vmor %vm1403, %vm1404
        %v1406 = vsel %vm1405, %v1397, %v1402
        %v1407 = vrsqrt.pop %v1105
        %v1408 = vmul.f32 %v1407, %v1105
        %v1409 = vmul.f32 %v1408, %v1407
        %v1410 = vmul.f32 0.5, %v1409
        %v1411 = vsub.f32 1.5, %v1410
        %v1412 = vmul.f32 %v1407, %v1411
        %vm1413 = vweird.f32 %v1105
        %vm1414 = vweird.f32 %v1407
        %vm1415 = vmor %vm1413, %vm1414
        %v1416 = vsel %vm1415, %v1407, %v1412
        %v1417 = vrsqrt.pop %v1106
        %v1418 = vmul.f32 %v1417, %v1106
        %v1419 = vmul.f32 %v1418, %v1417
        %v1420 = vmul.f32 0.5, %v1419
        %v1421 = vsub.f32 1.5, %v1420
        %v1422 = vmul.f32 %v1417, %v1421
        %vm1423 = vweird.f32 %v1106
        %vm1424 = vweird.f32 %v1417
        %vm1425 = vmor %vm1423, %vm1424
        %v1426 = vsel %vm1425, %v1417, %v1422
        %v1427 = vmul.f32 %v659, %v1116
        %v1428 = vmul.f32 %v660, %v1116
        %v1429 = vmul.f32 %v661, %v1116
        %v1430 = vmul.f32 %v662, %v1116
        %v1431 = vmul.f32 %v663, %v1126
        %v1432 = vmul.f32 %v664, %v1126
        %v1433 = vmul.f32 %v665, %v1126
        %v1434 = vmul.f32 %v666, %v1126
        %v1435 = vmul.f32 %v667, %v1136
        %v1436 = vmul.f32 %v668, %v1136
        %v1437 = vmul.f32 %v669, %v1136
        %v1438 = vmul.f32 %v670, %v1136
        %v1439 = vmul.f32 %v671, %v1146
        %v1440 = vmul.f32 %v672, %v1146
        %v1441 = vmul.f32 %v673, %v1146
        %v1442 = vmul.f32 %v674, %v1146
        %v1443 = vmul.f32 %v675, %v1156
        %v1444 = vmul.f32 %v676, %v1156
        %v1445 = vmul.f32 %v677, %v1156
        %v1446 = vmul.f32 %v678, %v1156
        %v1447 = vmul.f32 %v679, %v1166
        %v1448 = vmul.f32 %v680, %v1166
        %v1449 = vmul.f32 %v681, %v1166
        %v1450 = vmul.f32 %v682, %v1166
        %v1451 = vmul.f32 %v683, %v1176
        %v1452 = vmul.f32 %v684, %v1176
        %v1453 = vmul.f32 %v685, %v1176
        %v1454 = vmul.f32 %v686, %v1176
        %v1455 = vmul.f32 %v687, %v1186
        %v1456 = vmul.f32 %v688, %v1186
        %v1457 = vmul.f32 %v689, %v1186
        %v1458 = vmul.f32 %v690, %v1186
        %v1459 = vmul.f32 %v691, %v1196
        %v1460 = vmul.f32 %v692, %v1196
        %v1461 = vmul.f32 %v693, %v1196
        %v1462 = vmul.f32 %v694, %v1196
        %v1463 = vmul.f32 %v695, %v1206
        %v1464 = vmul.f32 %v696, %v1206
        %v1465 = vmul.f32 %v697, %v1206
        %v1466 = vmul.f32 %v698, %v1206
        %v1467 = vmul.f32 %v699, %v1216
        %v1468 = vmul.f32 %v700, %v1216
        %v1469 = vmul.f32 %v701, %v1216
        %v1470 = vmul.f32 %v702, %v1216
        %v1471 = vmul.f32 %v703, %v1226
        %v1472 = vmul.f32 %v704, %v1226
        %v1473 = vmul.f32 %v705, %v1226
        %v1474 = vmul.f32 %v706, %v1226
        %v1475 = vmul.f32 %v707, %v1236
        %v1476 = vmul.f32 %v708, %v1236
        %v1477 = vmul.f32 %v709, %v1236
        %v1478 = vmul.f32 %v710, %v1236
        %v1479 = vmul.f32 %v711, %v1246
        %v1480 = vmul.f32 %v712, %v1246
        %v1481 = vmul.f32 %v713, %v1246
        %v1482 = vmul.f32 %v714, %v1246
        %v1483 = vmul.f32 %v715, %v1256
        %v1484 = vmul.f32 %v716, %v1256
        %v1485 = vmul.f32 %v717, %v1256
        %v1486 = vmul.f32 %v718, %v1256
        %v1487 = vmul.f32 %v719, %v1266
        %v1488 = vmul.f32 %v720, %v1266
        %v1489 = vmul.f32 %v721, %v1266
        %v1490 = vmul.f32 %v722, %v1266
        %v1491 = vmul.f32 %v723, %v1276
        %v1492 = vmul.f32 %v724, %v1276
        %v1493 = vmul.f32 %v725, %v1276
        %v1494 = vmul.f32 %v726, %v1276
        %v1495 = vmul.f32 %v727, %v1286
        %v1496 = vmul.f32 %v728, %v1286
        %v1497 = vmul.f32 %v729, %v1286
        %v1498 = vmul.f32 %v730, %v1286
        %v1499 = vmul.f32 %v731, %v1296
        %v1500 = vmul.f32 %v732, %v1296
        %v1501 = vmul.f32 %v733, %v1296
        %v1502 = vmul.f32 %v734, %v1296
        %v1503 = vmul.f32 %v735, %v1306
        %v1504 = vmul.f32 %v736, %v1306
        %v1505 = vmul.f32 %v737, %v1306
        %v1506 = vmul.f32 %v738, %v1306
        %v1507 = vmul.f32 %v739, %v1316
        %v1508 = vmul.f32 %v740, %v1316
        %v1509 = vmul.f32 %v741, %v1316
        %v1510 = vmul.f32 %v742, %v1316
        %v1511 = vmul.f32 %v743, %v1326
        %v1512 = vmul.f32 %v744, %v1326
        %v1513 = vmul.f32 %v745, %v1326
        %v1514 = vmul.f32 %v746, %v1326
        %v1515 = vmul.f32 %v747, %v1336
        %v1516 = vmul.f32 %v748, %v1336
        %v1517 = vmul.f32 %v749, %v1336
        %v1518 = vmul.f32 %v750, %v1336
        %v1519 = vmul.f32 %v751, %v1346
        %v1520 = vmul.f32 %v752, %v1346
        %v1521 = vmul.f32 %v753, %v1346
        %v1522 = vmul.f32 %v754, %v1346
        %v1523 = vmul.f32 %v755, %v1356
        %v1524 = vmul.f32 %v756, %v1356
        %v1525 = vmul.f32 %v757, %v1356
        %v1526 = vmul.f32 %v758, %v1356
        %v1527 = vmul.f32 %v759, %v1366
        %v1528 = vmul.f32 %v760, %v1366
        %v1529 = vmul.f32 %v761, %v1366
        %v1530 = vmul.f32 %v762, %v1366
        %v1531 = vmul.f32 %v763, %v1376
        %v1532 = vmul.f32 %v764, %v1376
        %v1533 = vmul.f32 %v765, %v1376
        %v1534 = vmul.f32 %v766, %v1376
        %v1535 = vmul.f32 %v767, %v1386
        %v1536 = vmul.f32 %v768, %v1386
        %v1537 = vmul.f32 %v769, %v1386
        %v1538 = vmul.f32 %v770, %v1386
        %v1539 = vmul.f32 %v771, %v1396
        %v1540 = vmul.f32 %v772, %v1396
        %v1541 = vmul.f32 %v773, %v1396
        %v1542 = vmul.f32 %v774, %v1396
        %v1543 = vmul.f32 %v775, %v1406
        %v1544 = vmul.f32 %v776, %v1406
        %v1545 = vmul.f32 %v777, %v1406
        %v1546 = vmul.f32 %v778, %v1406
        %v1547 = vmul.f32 %v779, %v1416
        %v1548 = vmul.f32 %v780, %v1416
        %v1549 = vmul.f32 %v781, %v1416
        %v1550 = vmul.f32 %v782, %v1416
        %v1551 = vmul.f32 %v783, %v1426
        %v1552 = vmul.f32 %v784, %v1426
        %v1553 = vmul.f32 %v785, %v1426
        %v1554 = vmul.f32 %v786, %v1426
        %v1555 = vpack.c.bf16 %v1431, %v1427
        %v1556 = vpack.c.bf16 %v1432, %v1428
        %v1557 = vpack.c.bf16 %v1433, %v1429
        %v1558 = vpack.c.bf16 %v1434, %v1430
        %v1559 = vpack.c.bf16 %v1439, %v1435
        %v1560 = vpack.c.bf16 %v1440, %v1436
        %v1561 = vpack.c.bf16 %v1441, %v1437
        %v1562 = vpack.c.bf16 %v1442, %v1438
        %v1563 = vpack.c.bf16 %v1447, %v1443
        %v1564 = vpack.c.bf16 %v1448, %v1444
        %v1565 = vpack.c.bf16 %v1449, %v1445
        %v1566 = vpack.c.bf16 %v1450, %v1446
        %v1567 = vpack.c.bf16 %v1455, %v1451
        %v1568 = vpack.c.bf16 %v1456, %v1452
        %v1569 = vpack.c.bf16 %v1457, %v1453
        %v1570 = vpack.c.bf16 %v1458, %v1454
        %v1571 = vpack.c.bf16 %v1463, %v1459
        %v1572 = vpack.c.bf16 %v1464, %v1460
        %v1573 = vpack.c.bf16 %v1465, %v1461
        %v1574 = vpack.c.bf16 %v1466, %v1462
        %v1575 = vpack.c.bf16 %v1471, %v1467
        %v1576 = vpack.c.bf16 %v1472, %v1468
        %v1577 = vpack.c.bf16 %v1473, %v1469
        %v1578 = vpack.c.bf16 %v1474, %v1470
        %v1579 = vpack.c.bf16 %v1479, %v1475
        %v1580 = vpack.c.bf16 %v1480, %v1476
        %v1581 = vpack.c.bf16 %v1481, %v1477
        %v1582 = vpack.c.bf16 %v1482, %v1478
        %v1583 = vpack.c.bf16 %v1487, %v1483
        %v1584 = vpack.c.bf16 %v1488, %v1484
        %v1585 = vpack.c.bf16 %v1489, %v1485
        %v1586 = vpack.c.bf16 %v1490, %v1486
        %v1587 = vpack.c.bf16 %v1495, %v1491
        %v1588 = vpack.c.bf16 %v1496, %v1492
        %v1589 = vpack.c.bf16 %v1497, %v1493
        %v1590 = vpack.c.bf16 %v1498, %v1494
        %v1591 = vpack.c.bf16 %v1503, %v1499
        %v1592 = vpack.c.bf16 %v1504, %v1500
        %v1593 = vpack.c.bf16 %v1505, %v1501
        %v1594 = vpack.c.bf16 %v1506, %v1502
        %v1595 = vpack.c.bf16 %v1511, %v1507
        %v1596 = vpack.c.bf16 %v1512, %v1508
        %v1597 = vpack.c.bf16 %v1513, %v1509
        %v1598 = vpack.c.bf16 %v1514, %v1510
        %v1599 = vpack.c.bf16 %v1519, %v1515
        %v1600 = vpack.c.bf16 %v1520, %v1516
        %v1601 = vpack.c.bf16 %v1521, %v1517
        %v1602 = vpack.c.bf16 %v1522, %v1518
        %v1603 = vpack.c.bf16 %v1527, %v1523
        %v1604 = vpack.c.bf16 %v1528, %v1524
        %v1605 = vpack.c.bf16 %v1529, %v1525
        %v1606 = vpack.c.bf16 %v1530, %v1526
        %v1607 = vpack.c.bf16 %v1535, %v1531
        %v1608 = vpack.c.bf16 %v1536, %v1532
        %v1609 = vpack.c.bf16 %v1537, %v1533
        %v1610 = vpack.c.bf16 %v1538, %v1534
        %v1611 = vpack.c.bf16 %v1543, %v1539
        %v1612 = vpack.c.bf16 %v1544, %v1540
        %v1613 = vpack.c.bf16 %v1545, %v1541
        %v1614 = vpack.c.bf16 %v1546, %v1542
        %v1615 = vpack.c.bf16 %v1551, %v1547
        %v1616 = vpack.c.bf16 %v1552, %v1548
        %v1617 = vpack.c.bf16 %v1553, %v1549
        %v1618 = vpack.c.bf16 %v1554, %v1550
        %v1619 = vld [vmem:[#allocation7] sm:$0xff]
        %v1620 = vld [vmem:[#allocation7 + $0x8] sm:$0xff]
        %v1621 = vld [vmem:[#allocation7 + $0x10] sm:$0xff]
        %v1622 = vld [vmem:[#allocation7 + $0x18] sm:$0xff]
        %v1623 = vld [vmem:[#allocation7 + $0x20] sm:$0xff]
        %v1624 = vld [vmem:[#allocation7 + $0x28] sm:$0xff]
        %v1625 = vld [vmem:[#allocation7 + $0x30] sm:$0xff]
        %v1626 = vld [vmem:[#allocation7 + $0x38] sm:$0xff]
        %v1627 = vld [vmem:[#allocation7 + $0x40] sm:$0xff]
        %v1628 = vld [vmem:[#allocation7 + $0x48] sm:$0xff]
        %v1629 = vld [vmem:[#allocation7 + $0x50] sm:$0xff]
        %v1630 = vld [vmem:[#allocation7 + $0x58] sm:$0xff]
        %v1631 = vld [vmem:[#allocation7 + $0x60] sm:$0xff]
        %v1632 = vld [vmem:[#allocation7 + $0x68] sm:$0xff]
        %v1633 = vld [vmem:[#allocation7 + $0x70] sm:$0xff]
        %v1634 = vld [vmem:[#allocation7 + $0x78] sm:$0xff]
        %v1635 = vld [vmem:[#allocation7 + $0x80] sm:$0xff]
        %v1636 = vld [vmem:[#allocation7 + $0x88] sm:$0xff]
        %v1637 = vld [vmem:[#allocation7 + $0x90] sm:$0xff]
        %v1638 = vld [vmem:[#allocation7 + $0x98] sm:$0xff]
        %v1639 = vld [vmem:[#allocation7 + $0xa0] sm:$0xff]
        %v1640 = vld [vmem:[#allocation7 + $0xa8] sm:$0xff]
        %v1641 = vld [vmem:[#allocation7 + $0xb0] sm:$0xff]
        %v1642 = vld [vmem:[#allocation7 + $0xb8] sm:$0xff]
        %v1643 = vld [vmem:[#allocation7 + $0xc0] sm:$0xff]
        %v1644 = vld [vmem:[#allocation7 + $0xc8] sm:$0xff]
        %v1645 = vld [vmem:[#allocation7 + $0xd0] sm:$0xff]
        %v1646 = vld [vmem:[#allocation7 + $0xd8] sm:$0xff]
        %v1647 = vld [vmem:[#allocation7 + $0xe0] sm:$0xff]
        %v1648 = vld [vmem:[#allocation7 + $0xe8] sm:$0xff]
        %v1649 = vld [vmem:[#allocation7 + $0xf0] sm:$0xff]
        %v1650 = vld [vmem:[#allocation7 + $0xf8] sm:$0xff]
        %v1651 = vld [vmem:[#allocation7 + $0x100] sm:$0xff]
        %v1652 = vld [vmem:[#allocation7 + $0x108] sm:$0xff]
        %v1653 = vld [vmem:[#allocation7 + $0x110] sm:$0xff]
        %v1654 = vld [vmem:[#allocation7 + $0x118] sm:$0xff]
        %v1655 = vld [vmem:[#allocation7 + $0x120] sm:$0xff]
        %v1656 = vld [vmem:[#allocation7 + $0x128] sm:$0xff]
        %v1657 = vld [vmem:[#allocation7 + $0x130] sm:$0xff]
        %v1658 = vld [vmem:[#allocation7 + $0x138] sm:$0xff]
        %v1659 = vld [vmem:[#allocation7 + $0x140] sm:$0xff]
        %v1660 = vld [vmem:[#allocation7 + $0x148] sm:$0xff]
        %v1661 = vld [vmem:[#allocation7 + $0x150] sm:$0xff]
        %v1662 = vld [vmem:[#allocation7 + $0x158] sm:$0xff]
        %v1663 = vld [vmem:[#allocation7 + $0x160] sm:$0xff]
        %v1664 = vld [vmem:[#allocation7 + $0x168] sm:$0xff]
        %v1665 = vld [vmem:[#allocation7 + $0x170] sm:$0xff]
        %v1666 = vld [vmem:[#allocation7 + $0x178] sm:$0xff]
        %v1667 = vld [vmem:[#allocation7 + $0x180] sm:$0xff]
        %v1668 = vld [vmem:[#allocation7 + $0x188] sm:$0xff]
        %v1669 = vld [vmem:[#allocation7 + $0x190] sm:$0xff]
        %v1670 = vld [vmem:[#allocation7 + $0x198] sm:$0xff]
        %v1671 = vld [vmem:[#allocation7 + $0x1a0] sm:$0xff]
        %v1672 = vld [vmem:[#allocation7 + $0x1a8] sm:$0xff]
        %v1673 = vld [vmem:[#allocation7 + $0x1b0] sm:$0xff]
        %v1674 = vld [vmem:[#allocation7 + $0x1b8] sm:$0xff]
        %v1675 = vld [vmem:[#allocation7 + $0x1c0] sm:$0xff]
        %v1676 = vld [vmem:[#allocation7 + $0x1c8] sm:$0xff]
        %v1677 = vld [vmem:[#allocation7 + $0x1d0] sm:$0xff]
        %v1678 = vld [vmem:[#allocation7 + $0x1d8] sm:$0xff]
        %v1679 = vld [vmem:[#allocation7 + $0x1e0] sm:$0xff]
        %v1680 = vld [vmem:[#allocation7 + $0x1e8] sm:$0xff]
        %v1681 = vld [vmem:[#allocation7 + $0x1f0] sm:$0xff]
        %v1682 = vld [vmem:[#allocation7 + $0x1f8] sm:$0xff]
        %v1683 = vld [vmem:[%s3] sm:$0x3]
        %v1685 = vperm.slane %v1683, 0
        %v1686 = vperm.slane %v1683, 1
        %v1753 = vunpack.c.l.b16 %v1619
        %v1754 = vunpack.c.h.b16 %v1619
        %v1755 = vunpack.c.l.b16 %v1620
        %v1756 = vunpack.c.h.b16 %v1620
        %v1757 = vunpack.c.l.b16 %v1621
        %v1758 = vunpack.c.h.b16 %v1621
        %v1759 = vunpack.c.l.b16 %v1622
        %v1760 = vunpack.c.h.b16 %v1622
        %v1761 = vunpack.c.l.b16 %v1623
        %v1762 = vunpack.c.h.b16 %v1623
        %v1763 = vunpack.c.l.b16 %v1624
        %v1764 = vunpack.c.h.b16 %v1624
        %v1765 = vunpack.c.l.b16 %v1625
        %v1766 = vunpack.c.h.b16 %v1625
        %v1767 = vunpack.c.l.b16 %v1626
        %v1768 = vunpack.c.h.b16 %v1626
        %v1769 = vunpack.c.l.b16 %v1627
        %v1770 = vunpack.c.h.b16 %v1627
        %v1771 = vunpack.c.l.b16 %v1628
        %v1772 = vunpack.c.h.b16 %v1628
        %v1773 = vunpack.c.l.b16 %v1629
        %v1774 = vunpack.c.h.b16 %v1629
        %v1775 = vunpack.c.l.b16 %v1630
        %v1776 = vunpack.c.h.b16 %v1630
        %v1777 = vunpack.c.l.b16 %v1631
        %v1778 = vunpack.c.h.b16 %v1631
        %v1779 = vunpack.c.l.b16 %v1632
        %v1780 = vunpack.c.h.b16 %v1632
        %v1781 = vunpack.c.l.b16 %v1633
        %v1782 = vunpack.c.h.b16 %v1633
        %v1783 = vunpack.c.l.b16 %v1634
        %v1784 = vunpack.c.h.b16 %v1634
        %v1785 = vunpack.c.l.b16 %v1635
        %v1786 = vunpack.c.h.b16 %v1635
        %v1787 = vunpack.c.l.b16 %v1636
        %v1788 = vunpack.c.h.b16 %v1636
        %v1789 = vunpack.c.l.b16 %v1637
        %v1790 = vunpack.c.h.b16 %v1637
        %v1791 = vunpack.c.l.b16 %v1638
        %v1792 = vunpack.c.h.b16 %v1638
        %v1793 = vunpack.c.l.b16 %v1639
        %v1794 = vunpack.c.h.b16 %v1639
        %v1795 = vunpack.c.l.b16 %v1640
        %v1796 = vunpack.c.h.b16 %v1640
        %v1797 = vunpack.c.l.b16 %v1641
        %v1798 = vunpack.c.h.b16 %v1641
        %v1799 = vunpack.c.l.b16 %v1642
        %v1800 = vunpack.c.h.b16 %v1642
        %v1801 = vunpack.c.l.b16 %v1643
        %v1802 = vunpack.c.h.b16 %v1643
        %v1803 = vunpack.c.l.b16 %v1644
        %v1804 = vunpack.c.h.b16 %v1644
        %v1805 = vunpack.c.l.b16 %v1645
        %v1806 = vunpack.c.h.b16 %v1645
        %v1807 = vunpack.c.l.b16 %v1646
        %v1808 = vunpack.c.h.b16 %v1646
        %v1809 = vunpack.c.l.b16 %v1647
        %v1810 = vunpack.c.h.b16 %v1647
        %v1811 = vunpack.c.l.b16 %v1648
        %v1812 = vunpack.c.h.b16 %v1648
        %v1813 = vunpack.c.l.b16 %v1649
        %v1814 = vunpack.c.h.b16 %v1649
        %v1815 = vunpack.c.l.b16 %v1650
        %v1816 = vunpack.c.h.b16 %v1650
        %v1817 = vunpack.c.l.b16 %v1651
        %v1818 = vunpack.c.h.b16 %v1651
        %v1819 = vunpack.c.l.b16 %v1652
        %v1820 = vunpack.c.h.b16 %v1652
        %v1821 = vunpack.c.l.b16 %v1653
        %v1822 = vunpack.c.h.b16 %v1653
        %v1823 = vunpack.c.l.b16 %v1654
        %v1824 = vunpack.c.h.b16 %v1654
        %v1825 = vunpack.c.l.b16 %v1655
        %v1826 = vunpack.c.h.b16 %v1655
        %v1827 = vunpack.c.l.b16 %v1656
        %v1828 = vunpack.c.h.b16 %v1656
        %v1829 = vunpack.c.l.b16 %v1657
        %v1830 = vunpack.c.h.b16 %v1657
        %v1831 = vunpack.c.l.b16 %v1658
        %v1832 = vunpack.c.h.b16 %v1658
        %v1833 = vunpack.c.l.b16 %v1659
        %v1834 = vunpack.c.h.b16 %v1659
        %v1835 = vunpack.c.l.b16 %v1660
        %v1836 = vunpack.c.h.b16 %v1660
        %v1837 = vunpack.c.l.b16 %v1661
        %v1838 = vunpack.c.h.b16 %v1661
        %v1839 = vunpack.c.l.b16 %v1662
        %v1840 = vunpack.c.h.b16 %v1662
        %v1841 = vunpack.c.l.b16 %v1663
        %v1842 = vunpack.c.h.b16 %v1663
        %v1843 = vunpack.c.l.b16 %v1664
        %v1844 = vunpack.c.h.b16 %v1664
        %v1845 = vunpack.c.l.b16 %v1665
        %v1846 = vunpack.c.h.b16 %v1665
        %v1847 = vunpack.c.l.b16 %v1666
        %v1848 = vunpack.c.h.b16 %v1666
        %v1849 = vunpack.c.l.b16 %v1667
        %v1850 = vunpack.c.h.b16 %v1667
        %v1851 = vunpack.c.l.b16 %v1668
        %v1852 = vunpack.c.h.b16 %v1668
        %v1853 = vunpack.c.l.b16 %v1669
        %v1854 = vunpack.c.h.b16 %v1669
        %v1855 = vunpack.c.l.b16 %v1670
        %v1856 = vunpack.c.h.b16 %v1670
        %v1857 = vunpack.c.l.b16 %v1671
        %v1858 = vunpack.c.h.b16 %v1671
        %v1859 = vunpack.c.l.b16 %v1672
        %v1860 = vunpack.c.h.b16 %v1672
        %v1861 = vunpack.c.l.b16 %v1673
        %v1862 = vunpack.c.h.b16 %v1673
        %v1863 = vunpack.c.l.b16 %v1674
        %v1864 = vunpack.c.h.b16 %v1674
        %v1865 = vunpack.c.l.b16 %v1675
        %v1866 = vunpack.c.h.b16 %v1675
        %v1867 = vunpack.c.l.b16 %v1676
        %v1868 = vunpack.c.h.b16 %v1676
        %v1869 = vunpack.c.l.b16 %v1677
        %v1870 = vunpack.c.h.b16 %v1677
        %v1871 = vunpack.c.l.b16 %v1678
        %v1872 = vunpack.c.h.b16 %v1678
        %v1873 = vunpack.c.l.b16 %v1679
        %v1874 = vunpack.c.h.b16 %v1679
        %v1875 = vunpack.c.l.b16 %v1680
        %v1876 = vunpack.c.h.b16 %v1680
        %v1877 = vunpack.c.l.b16 %v1681
        %v1878 = vunpack.c.h.b16 %v1681
        %v1879 = vunpack.c.l.b16 %v1682
        %v1880 = vunpack.c.h.b16 %v1682
        %v1881 = vpack.c.b16 %v1755, %v1753
        %v1882 = vpack.c.b16 %v1756, %v1754
        %v1883 = vpack.c.b16 %v1759, %v1757
        %v1884 = vpack.c.b16 %v1760, %v1758
        %v1885 = vpack.c.b16 %v1763, %v1761
        %v1886 = vpack.c.b16 %v1764, %v1762
        %v1887 = vpack.c.b16 %v1767, %v1765
        %v1888 = vpack.c.b16 %v1768, %v1766
        %v1889 = vpack.c.b16 %v1771, %v1769
        %v1890 = vpack.c.b16 %v1772, %v1770
        %v1891 = vpack.c.b16 %v1775, %v1773
        %v1892 = vpack.c.b16 %v1776, %v1774
        %v1893 = vpack.c.b16 %v1779, %v1777
        %v1894 = vpack.c.b16 %v1780, %v1778
        %v1895 = vpack.c.b16 %v1783, %v1781
        %v1896 = vpack.c.b16 %v1784, %v1782
        %v1897 = vpack.c.b16 %v1787, %v1785
        %v1898 = vpack.c.b16 %v1788, %v1786
        %v1899 = vpack.c.b16 %v1791, %v1789
        %v1900 = vpack.c.b16 %v1792, %v1790
        %v1901 = vpack.c.b16 %v1795, %v1793
        %v1902 = vpack.c.b16 %v1796, %v1794
        %v1903 = vpack.c.b16 %v1799, %v1797
        %v1904 = vpack.c.b16 %v1800, %v1798
        %v1905 = vpack.c.b16 %v1803, %v1801
        %v1906 = vpack.c.b16 %v1804, %v1802
        %v1907 = vpack.c.b16 %v1807, %v1805
        %v1908 = vpack.c.b16 %v1808, %v1806
        %v1909 = vpack.c.b16 %v1811, %v1809
        %v1910 = vpack.c.b16 %v1812, %v1810
        %v1911 = vpack.c.b16 %v1815, %v1813
        %v1912 = vpack.c.b16 %v1816, %v1814
        %v1913 = vpack.c.b16 %v1819, %v1817
        %v1914 = vpack.c.b16 %v1820, %v1818
        %v1915 = vpack.c.b16 %v1823, %v1821
        %v1916 = vpack.c.b16 %v1824, %v1822
        %v1917 = vpack.c.b16 %v1827, %v1825
        %v1918 = vpack.c.b16 %v1828, %v1826
        %v1919 = vpack.c.b16 %v1831, %v1829
        %v1920 = vpack.c.b16 %v1832, %v1830
        %v1921 = vpack.c.b16 %v1835, %v1833
        %v1922 = vpack.c.b16 %v1836, %v1834
        %v1923 = vpack.c.b16 %v1839, %v1837
        %v1924 = vpack.c.b16 %v1840, %v1838
        %v1925 = vpack.c.b16 %v1843, %v1841
        %v1926 = vpack.c.b16 %v1844, %v1842
        %v1927 = vpack.c.b16 %v1847, %v1845
        %v1928 = vpack.c.b16 %v1848, %v1846
        %v1929 = vpack.c.b16 %v1851, %v1849
        %v1930 = vpack.c.b16 %v1852, %v1850
        %v1931 = vpack.c.b16 %v1855, %v1853
        %v1932 = vpack.c.b16 %v1856, %v1854
        %v1933 = vpack.c.b16 %v1859, %v1857
        %v1934 = vpack.c.b16 %v1860, %v1858
        %v1935 = vpack.c.b16 %v1863, %v1861
        %v1936 = vpack.c.b16 %v1864, %v1862
        %v1937 = vpack.c.b16 %v1867, %v1865
        %v1938 = vpack.c.b16 %v1868, %v1866
        %v1939 = vpack.c.b16 %v1871, %v1869
        %v1940 = vpack.c.b16 %v1872, %v1870
        %v1941 = vpack.c.b16 %v1875, %v1873
        %v1942 = vpack.c.b16 %v1876, %v1874
        %v1943 = vpack.c.b16 %v1879, %v1877
        %v1944 = vpack.c.b16 %v1880, %v1878
        %2009 = vmatpush.bf16.msra.mxu0 %v1895
        %2010 = vmatpush.bf16.msra.mxu0 %v1893
        %2011 = vmatpush.bf16.msra.mxu0 %v1891
        %2012 = vmatpush.bf16.msra.mxu0 %v1889
        %2013 = vmatpush.bf16.msra.mxu0 %v1887
        %2014 = vmatpush.bf16.msra.mxu0 %v1885
        %2015 = vmatpush.bf16.msra.mxu0 %v1883
        %2016 = vmatpush.bf16.msra.mxu0 %v1881
        %2017 = vmatmul.bf16.gmra.mxu0 %v1555
        %v2018 = vpop.f32.mrf.mxu0
        %v2019 = vadd.f32 %v1685, %v2018
        %v2020 = vpop.f32.mrf.mxu0
        %v2021 = vadd.f32 %v1685, %v2020
        %2022 = vmatmul.bf16.gmra.mxu0 %v1559
        %v2023 = vpop.f32.mrf.mxu0
        %v2024 = vadd.f32 %v1685, %v2023
        %v2025 = vpop.f32.mrf.mxu0
        %v2026 = vadd.f32 %v1685, %v2025
        %2027 = vmatmul.bf16.gmra.mxu0 %v1563
        %v2028 = vpop.f32.mrf.mxu0
        %v2029 = vadd.f32 %v1685, %v2028
        %v2030 = vpop.f32.mrf.mxu0
        %v2031 = vadd.f32 %v1685, %v2030
        %2032 = vmatmul.bf16.gmra.mxu0 %v1567
        %v2033 = vpop.f32.mrf.mxu0
        %v2034 = vadd.f32 %v1685, %v2033
        %v2035 = vpop.f32.mrf.mxu0
        %v2036 = vadd.f32 %v1685, %v2035
        %2037 = vmatmul.bf16.gmra.mxu0 %v1571
        %v2038 = vpop.f32.mrf.mxu0
        %v2039 = vadd.f32 %v1685, %v2038
        %v2040 = vpop.f32.mrf.mxu0
        %v2041 = vadd.f32 %v1685, %v2040
        %2042 = vmatmul.bf16.gmra.mxu0 %v1575
        %v2043 = vpop.f32.mrf.mxu0
        %v2044 = vadd.f32 %v1685, %v2043
        %v2045 = vpop.f32.mrf.mxu0
        %v2046 = vadd.f32 %v1685, %v2045
        %2047 = vmatmul.bf16.gmra.mxu0 %v1579
        %v2048 = vpop.f32.mrf.mxu0
        %v2049 = vadd.f32 %v1685, %v2048
        %v2050 = vpop.f32.mrf.mxu0
        %v2051 = vadd.f32 %v1685, %v2050
        %2052 = vmatmul.bf16.gmra.mxu0 %v1583
        %v2053 = vpop.f32.mrf.mxu0
        %v2054 = vadd.f32 %v1685, %v2053
        %v2055 = vpop.f32.mrf.mxu0
        %v2056 = vadd.f32 %v1685, %v2055
        %2057 = vmatmul.bf16.gmra.mxu0 %v1587
        %v2058 = vpop.f32.mrf.mxu0
        %v2059 = vadd.f32 %v1685, %v2058
        %v2060 = vpop.f32.mrf.mxu0
        %v2061 = vadd.f32 %v1685, %v2060
        %2062 = vmatmul.bf16.gmra.mxu0 %v1591
        %v2063 = vpop.f32.mrf.mxu0
        %v2064 = vadd.f32 %v1685, %v2063
        %v2065 = vpop.f32.mrf.mxu0
        %v2066 = vadd.f32 %v1685, %v2065
        %2067 = vmatmul.bf16.gmra.mxu0 %v1595
        %v2068 = vpop.f32.mrf.mxu0
        %v2069 = vadd.f32 %v1685, %v2068
        %v2070 = vpop.f32.mrf.mxu0
        %v2071 = vadd.f32 %v1685, %v2070
        %2072 = vmatmul.bf16.gmra.mxu0 %v1599
        %v2073 = vpop.f32.mrf.mxu0
        %v2074 = vadd.f32 %v1685, %v2073
        %v2075 = vpop.f32.mrf.mxu0
        %v2076 = vadd.f32 %v1685, %v2075
        %2077 = vmatmul.bf16.gmra.mxu0 %v1603
        %v2078 = vpop.f32.mrf.mxu0
        %v2079 = vadd.f32 %v1685, %v2078
        %v2080 = vpop.f32.mrf.mxu0
        %v2081 = vadd.f32 %v1685, %v2080
        %2082 = vmatmul.bf16.gmra.mxu0 %v1607
        %v2083 = vpop.f32.mrf.mxu0
        %v2084 = vadd.f32 %v1685, %v2083
        %v2085 = vpop.f32.mrf.mxu0
        %v2086 = vadd.f32 %v1685, %v2085
        %2087 = vmatmul.bf16.gmra.mxu0 %v1611
        %v2088 = vpop.f32.mrf.mxu0
        %v2089 = vadd.f32 %v1685, %v2088
        %v2090 = vpop.f32.mrf.mxu0
        %v2091 = vadd.f32 %v1685, %v2090
        %2092 = vmatmul.bf16.gmra.mxu0 %v1615
        %v2093 = vpop.f32.mrf.mxu0
        %v2094 = vadd.f32 %v1685, %v2093
        %v2095 = vpop.f32.mrf.mxu0
        %v2096 = vadd.f32 %v1685, %v2095
        %2097 = vdwg.mxu0
        %2098 = vmatpush.bf16.msra.mxu0 %v1911
        %2099 = vmatpush.bf16.msra.mxu0 %v1909
        %2100 = vmatpush.bf16.msra.mxu0 %v1907
        %2101 = vmatpush.bf16.msra.mxu0 %v1905
        %2102 = vmatpush.bf16.msra.mxu0 %v1903
        %2103 = vmatpush.bf16.msra.mxu0 %v1901
        %2104 = vmatpush.bf16.msra.mxu0 %v1899
        %2105 = vmatpush.bf16.msra.mxu0 %v1897
        %2106 = vmatmul.bf16.gmra.mxu0 %v1556
        %v2107 = vpop.f32.mrf.mxu0
        %v2108 = vadd.f32 %v2019, %v2107
        %v2109 = vpop.f32.mrf.mxu0
        %v2110 = vadd.f32 %v2021, %v2109
        %2111 = vmatmul.bf16.gmra.mxu0 %v1560
        %v2112 = vpop.f32.mrf.mxu0
        %v2113 = vadd.f32 %v2024, %v2112
        %v2114 = vpop.f32.mrf.mxu0
        %v2115 = vadd.f32 %v2026, %v2114
        %2116 = vmatmul.bf16.gmra.mxu0 %v1564
        %v2117 = vpop.f32.mrf.mxu0
        %v2118 = vadd.f32 %v2029, %v2117
        %v2119 = vpop.f32.mrf.mxu0
        %v2120 = vadd.f32 %v2031, %v2119
        %2121 = vmatmul.bf16.gmra.mxu0 %v1568
        %v2122 = vpop.f32.mrf.mxu0
        %v2123 = vadd.f32 %v2034, %v2122
        %v2124 = vpop.f32.mrf.mxu0
        %v2125 = vadd.f32 %v2036, %v2124
        %2126 = vmatmul.bf16.gmra.mxu0 %v1572
        %v2127 = vpop.f32.mrf.mxu0
        %v2128 = vadd.f32 %v2039, %v2127
        %v2129 = vpop.f32.mrf.mxu0
        %v2130 = vadd.f32 %v2041, %v2129
        %2131 = vmatmul.bf16.gmra.mxu0 %v1576
        %v2132 = vpop.f32.mrf.mxu0
        %v2133 = vadd.f32 %v2044, %v2132
        %v2134 = vpop.f32.mrf.mxu0
        %v2135 = vadd.f32 %v2046, %v2134
        %2136 = vmatmul.bf16.gmra.mxu0 %v1580
        %v2137 = vpop.f32.mrf.mxu0
        %v2138 = vadd.f32 %v2049, %v2137
        %v2139 = vpop.f32.mrf.mxu0
        %v2140 = vadd.f32 %v2051, %v2139
        %2141 = vmatmul.bf16.gmra.mxu0 %v1584
        %v2142 = vpop.f32.mrf.mxu0
        %v2143 = vadd.f32 %v2054, %v2142
        %v2144 = vpop.f32.mrf.mxu0
        %v2145 = vadd.f32 %v2056, %v2144
        %2146 = vmatmul.bf16.gmra.mxu0 %v1588
        %v2147 = vpop.f32.mrf.mxu0
        %v2148 = vadd.f32 %v2059, %v2147
        %v2149 = vpop.f32.mrf.mxu0
        %v2150 = vadd.f32 %v2061, %v2149
        %2151 = vmatmul.bf16.gmra.mxu0 %v1592
        %v2152 = vpop.f32.mrf.mxu0
        %v2153 = vadd.f32 %v2064, %v2152
        %v2154 = vpop.f32.mrf.mxu0
        %v2155 = vadd.f32 %v2066, %v2154
        %2156 = vmatmul.bf16.gmra.mxu0 %v1596
        %v2157 = vpop.f32.mrf.mxu0
        %v2158 = vadd.f32 %v2069, %v2157
        %v2159 = vpop.f32.mrf.mxu0
        %v2160 = vadd.f32 %v2071, %v2159
        %2161 = vmatmul.bf16.gmra.mxu0 %v1600
        %v2162 = vpop.f32.mrf.mxu0
        %v2163 = vadd.f32 %v2074, %v2162
        %v2164 = vpop.f32.mrf.mxu0
        %v2165 = vadd.f32 %v2076, %v2164
        %2166 = vmatmul.bf16.gmra.mxu0 %v1604
        %v2167 = vpop.f32.mrf.mxu0
        %v2168 = vadd.f32 %v2079, %v2167
        %v2169 = vpop.f32.mrf.mxu0
        %v2170 = vadd.f32 %v2081, %v2169
        %2171 = vmatmul.bf16.gmra.mxu0 %v1608
        %v2172 = vpop.f32.mrf.mxu0
        %v2173 = vadd.f32 %v2084, %v2172
        %v2174 = vpop.f32.mrf.mxu0
        %v2175 = vadd.f32 %v2086, %v2174
        %2176 = vmatmul.bf16.gmra.mxu0 %v1612
        %v2177 = vpop.f32.mrf.mxu0
        %v2178 = vadd.f32 %v2089, %v2177
        %v2179 = vpop.f32.mrf.mxu0
        %v2180 = vadd.f32 %v2091, %v2179
        %2181 = vmatmul.bf16.gmra.mxu0 %v1616
        %v2182 = vpop.f32.mrf.mxu0
        %v2183 = vadd.f32 %v2094, %v2182
        %v2184 = vpop.f32.mrf.mxu0
        %v2185 = vadd.f32 %v2096, %v2184
        %2186 = vdwg.mxu0
        %2187 = vmatpush.bf16.msra.mxu0 %v1927
        %2188 = vmatpush.bf16.msra.mxu0 %v1925
        %2189 = vmatpush.bf16.msra.mxu0 %v1923
        %2190 = vmatpush.bf16.msra.mxu0 %v1921
        %2191 = vmatpush.bf16.msra.mxu0 %v1919
        %2192 = vmatpush.bf16.msra.mxu0 %v1917
        %2193 = vmatpush.bf16.msra.mxu0 %v1915
        %2194 = vmatpush.bf16.msra.mxu0 %v1913
        %2195 = vmatmul.bf16.gmra.mxu0 %v1557
        %v2196 = vpop.f32.mrf.mxu0
        %v2197 = vadd.f32 %v2108, %v2196
        %v2198 = vpop.f32.mrf.mxu0
        %v2199 = vadd.f32 %v2110, %v2198
        %2200 = vmatmul.bf16.gmra.mxu0 %v1561
        %v2201 = vpop.f32.mrf.mxu0
        %v2202 = vadd.f32 %v2113, %v2201
        %v2203 = vpop.f32.mrf.mxu0
        %v2204 = vadd.f32 %v2115, %v2203
        %2205 = vmatmul.bf16.gmra.mxu0 %v1565
        %v2206 = vpop.f32.mrf.mxu0
        %v2207 = vadd.f32 %v2118, %v2206
        %v2208 = vpop.f32.mrf.mxu0
        %v2209 = vadd.f32 %v2120, %v2208
        %2210 = vmatmul.bf16.gmra.mxu0 %v1569
        %v2211 = vpop.f32.mrf.mxu0
        %v2212 = vadd.f32 %v2123, %v2211
        %v2213 = vpop.f32.mrf.mxu0
        %v2214 = vadd.f32 %v2125, %v2213
        %2215 = vmatmul.bf16.gmra.mxu0 %v1573
        %v2216 = vpop.f32.mrf.mxu0
        %v2217 = vadd.f32 %v2128, %v2216
        %v2218 = vpop.f32.mrf.mxu0
        %v2219 = vadd.f32 %v2130, %v2218
        %2220 = vmatmul.bf16.gmra.mxu0 %v1577
        %v2221 = vpop.f32.mrf.mxu0
        %v2222 = vadd.f32 %v2133, %v2221
        %v2223 = vpop.f32.mrf.mxu0
        %v2224 = vadd.f32 %v2135, %v2223
        %2225 = vmatmul.bf16.gmra.mxu0 %v1581
        %v2226 = vpop.f32.mrf.mxu0
        %v2227 = vadd.f32 %v2138, %v2226
        %v2228 = vpop.f32.mrf.mxu0
        %v2229 = vadd.f32 %v2140, %v2228
        %2230 = vmatmul.bf16.gmra.mxu0 %v1585
        %v2231 = vpop.f32.mrf.mxu0
        %v2232 = vadd.f32 %v2143, %v2231
        %v2233 = vpop.f32.mrf.mxu0
        %v2234 = vadd.f32 %v2145, %v2233
        %2235 = vmatmul.bf16.gmra.mxu0 %v1589
        %v2236 = vpop.f32.mrf.mxu0
        %v2237 = vadd.f32 %v2148, %v2236
        %v2238 = vpop.f32.mrf.mxu0
        %v2239 = vadd.f32 %v2150, %v2238
        %2240 = vmatmul.bf16.gmra.mxu0 %v1593
        %v2241 = vpop.f32.mrf.mxu0
        %v2242 = vadd.f32 %v2153, %v2241
        %v2243 = vpop.f32.mrf.mxu0
        %v2244 = vadd.f32 %v2155, %v2243
        %2245 = vmatmul.bf16.gmra.mxu0 %v1597
        %v2246 = vpop.f32.mrf.mxu0
        %v2247 = vadd.f32 %v2158, %v2246
        %v2248 = vpop.f32.mrf.mxu0
        %v2249 = vadd.f32 %v2160, %v2248
        %2250 = vmatmul.bf16.gmra.mxu0 %v1601
        %v2251 = vpop.f32.mrf.mxu0
        %v2252 = vadd.f32 %v2163, %v2251
        %v2253 = vpop.f32.mrf.mxu0
        %v2254 = vadd.f32 %v2165, %v2253
        %2255 = vmatmul.bf16.gmra.mxu0 %v1605
        %v2256 = vpop.f32.mrf.mxu0
        %v2257 = vadd.f32 %v2168, %v2256
        %v2258 = vpop.f32.mrf.mxu0
        %v2259 = vadd.f32 %v2170, %v2258
        %2260 = vmatmul.bf16.gmra.mxu0 %v1609
        %v2261 = vpop.f32.mrf.mxu0
        %v2262 = vadd.f32 %v2173, %v2261
        %v2263 = vpop.f32.mrf.mxu0
        %v2264 = vadd.f32 %v2175, %v2263
        %2265 = vmatmul.bf16.gmra.mxu0 %v1613
        %v2266 = vpop.f32.mrf.mxu0
        %v2267 = vadd.f32 %v2178, %v2266
        %v2268 = vpop.f32.mrf.mxu0
        %v2269 = vadd.f32 %v2180, %v2268
        %2270 = vmatmul.bf16.gmra.mxu0 %v1617
        %v2271 = vpop.f32.mrf.mxu0
        %v2272 = vadd.f32 %v2183, %v2271
        %v2273 = vpop.f32.mrf.mxu0
        %v2274 = vadd.f32 %v2185, %v2273
        %2275 = vdwg.mxu0
        %2276 = vmatpush.bf16.msra.mxu0 %v1943
        %2277 = vmatpush.bf16.msra.mxu0 %v1941
        %2278 = vmatpush.bf16.msra.mxu0 %v1939
        %2279 = vmatpush.bf16.msra.mxu0 %v1937
        %2280 = vmatpush.bf16.msra.mxu0 %v1935
        %2281 = vmatpush.bf16.msra.mxu0 %v1933
        %2282 = vmatpush.bf16.msra.mxu0 %v1931
        %2283 = vmatpush.bf16.msra.mxu0 %v1929
        %2284 = vmatmul.bf16.gmra.mxu0 %v1558
        %v2285 = vpop.f32.mrf.mxu0
        %v2286 = vadd.f32 %v2197, %v2285
        %v2287 = vpop.f32.mrf.mxu0
        %v2288 = vadd.f32 %v2199, %v2287
        %2289 = vmatmul.bf16.gmra.mxu0 %v1562
        %v2290 = vpop.f32.mrf.mxu0
        %v2291 = vadd.f32 %v2202, %v2290
        %v2292 = vpop.f32.mrf.mxu0
        %v2293 = vadd.f32 %v2204, %v2292
        %2294 = vmatmul.bf16.gmra.mxu0 %v1566
        %v2295 = vpop.f32.mrf.mxu0
        %v2296 = vadd.f32 %v2207, %v2295
        %v2297 = vpop.f32.mrf.mxu0
        %v2298 = vadd.f32 %v2209, %v2297
        %2299 = vmatmul.bf16.gmra.mxu0 %v1570
        %v2300 = vpop.f32.mrf.mxu0
        %v2301 = vadd.f32 %v2212, %v2300
        %v2302 = vpop.f32.mrf.mxu0
        %v2303 = vadd.f32 %v2214, %v2302
        %2304 = vmatmul.bf16.gmra.mxu0 %v1574
        %v2305 = vpop.f32.mrf.mxu0
        %v2306 = vadd.f32 %v2217, %v2305
        %v2307 = vpop.f32.mrf.mxu0
        %v2308 = vadd.f32 %v2219, %v2307
        %2309 = vmatmul.bf16.gmra.mxu0 %v1578
        %v2310 = vpop.f32.mrf.mxu0
        %v2311 = vadd.f32 %v2222, %v2310
        %v2312 = vpop.f32.mrf.mxu0
        %v2313 = vadd.f32 %v2224, %v2312
        %2314 = vmatmul.bf16.gmra.mxu0 %v1582
        %v2315 = vpop.f32.mrf.mxu0
        %v2316 = vadd.f32 %v2227, %v2315
        %v2317 = vpop.f32.mrf.mxu0
        %v2318 = vadd.f32 %v2229, %v2317
        %2319 = vmatmul.bf16.gmra.mxu0 %v1586
        %v2320 = vpop.f32.mrf.mxu0
        %v2321 = vadd.f32 %v2232, %v2320
        %v2322 = vpop.f32.mrf.mxu0
        %v2323 = vadd.f32 %v2234, %v2322
        %2324 = vmatmul.bf16.gmra.mxu0 %v1590
        %v2325 = vpop.f32.mrf.mxu0
        %v2326 = vadd.f32 %v2237, %v2325
        %v2327 = vpop.f32.mrf.mxu0
        %v2328 = vadd.f32 %v2239, %v2327
        %2329 = vmatmul.bf16.gmra.mxu0 %v1594
        %v2330 = vpop.f32.mrf.mxu0
        %v2331 = vadd.f32 %v2242, %v2330
        %v2332 = vpop.f32.mrf.mxu0
        %v2333 = vadd.f32 %v2244, %v2332
        %2334 = vmatmul.bf16.gmra.mxu0 %v1598
        %v2335 = vpop.f32.mrf.mxu0
        %v2336 = vadd.f32 %v2247, %v2335
        %v2337 = vpop.f32.mrf.mxu0
        %v2338 = vadd.f32 %v2249, %v2337
        %2339 = vmatmul.bf16.gmra.mxu0 %v1602
        %v2340 = vpop.f32.mrf.mxu0
        %v2341 = vadd.f32 %v2252, %v2340
        %v2342 = vpop.f32.mrf.mxu0
        %v2343 = vadd.f32 %v2254, %v2342
        %2344 = vmatmul.bf16.gmra.mxu0 %v1606
        %v2345 = vpop.f32.mrf.mxu0
        %v2346 = vadd.f32 %v2257, %v2345
        %v2347 = vpop.f32.mrf.mxu0
        %v2348 = vadd.f32 %v2259, %v2347
        %2349 = vmatmul.bf16.gmra.mxu0 %v1610
        %v2350 = vpop.f32.mrf.mxu0
        %v2351 = vadd.f32 %v2262, %v2350
        %v2352 = vpop.f32.mrf.mxu0
        %v2353 = vadd.f32 %v2264, %v2352
        %2354 = vmatmul.bf16.gmra.mxu0 %v1614
        %v2355 = vpop.f32.mrf.mxu0
        %v2356 = vadd.f32 %v2267, %v2355
        %v2357 = vpop.f32.mrf.mxu0
        %v2358 = vadd.f32 %v2269, %v2357
        %2359 = vmatmul.bf16.gmra.mxu0 %v1618
        %v2360 = vpop.f32.mrf.mxu0
        %v2361 = vadd.f32 %v2272, %v2360
        %v2362 = vpop.f32.mrf.mxu0
        %v2363 = vadd.f32 %v2274, %v2362
        %2364 = vdwg.mxu0
        %2365 = vmatpush.bf16.msra.mxu0 %v1896
        %2366 = vmatpush.bf16.msra.mxu0 %v1894
        %2367 = vmatpush.bf16.msra.mxu0 %v1892
        %2368 = vmatpush.bf16.msra.mxu0 %v1890
        %2369 = vmatpush.bf16.msra.mxu0 %v1888
        %2370 = vmatpush.bf16.msra.mxu0 %v1886
        %2371 = vmatpush.bf16.msra.mxu0 %v1884
        %2372 = vmatpush.bf16.msra.mxu0 %v1882
        %2373 = vmatmul.bf16.gmra.mxu0 %v1555
        %v2374 = vpop.f32.mrf.mxu0
        %v2375 = vadd.f32 %v1686, %v2374
        %v2376 = vpop.f32.mrf.mxu0
        %v2377 = vadd.f32 %v1686, %v2376
        %2378 = vmatmul.bf16.gmra.mxu0 %v1559
        %v2379 = vpop.f32.mrf.mxu0
        %v2380 = vadd.f32 %v1686, %v2379
        %v2381 = vpop.f32.mrf.mxu0
        %v2382 = vadd.f32 %v1686, %v2381
        %2383 = vmatmul.bf16.gmra.mxu0 %v1563
        %v2384 = vpop.f32.mrf.mxu0
        %v2385 = vadd.f32 %v1686, %v2384
        %v2386 = vpop.f32.mrf.mxu0
        %v2387 = vadd.f32 %v1686, %v2386
        %2388 = vmatmul.bf16.gmra.mxu0 %v1567
        %v2389 = vpop.f32.mrf.mxu0
        %v2390 = vadd.f32 %v1686, %v2389
        %v2391 = vpop.f32.mrf.mxu0
        %v2392 = vadd.f32 %v1686, %v2391
        %2393 = vmatmul.bf16.gmra.mxu0 %v1571
        %v2394 = vpop.f32.mrf.mxu0
        %v2395 = vadd.f32 %v1686, %v2394
        %v2396 = vpop.f32.mrf.mxu0
        %v2397 = vadd.f32 %v1686, %v2396
        %2398 = vmatmul.bf16.gmra.mxu0 %v1575
        %v2399 = vpop.f32.mrf.mxu0
        %v2400 = vadd.f32 %v1686, %v2399
        %v2401 = vpop.f32.mrf.mxu0
        %v2402 = vadd.f32 %v1686, %v2401
        %2403 = vmatmul.bf16.gmra.mxu0 %v1579
        %v2404 = vpop.f32.mrf.mxu0
        %v2405 = vadd.f32 %v1686, %v2404
        %v2406 = vpop.f32.mrf.mxu0
        %v2407 = vadd.f32 %v1686, %v2406
        %2408 = vmatmul.bf16.gmra.mxu0 %v1583
        %v2409 = vpop.f32.mrf.mxu0
        %v2410 = vadd.f32 %v1686, %v2409
        %v2411 = vpop.f32.mrf.mxu0
        %v2412 = vadd.f32 %v1686, %v2411
        %2413 = vmatmul.bf16.gmra.mxu0 %v1587
        %v2414 = vpop.f32.mrf.mxu0
        %v2415 = vadd.f32 %v1686, %v2414
        %v2416 = vpop.f32.mrf.mxu0
        %v2417 = vadd.f32 %v1686, %v2416
        %2418 = vmatmul.bf16.gmra.mxu0 %v1591
        %v2419 = vpop.f32.mrf.mxu0
        %v2420 = vadd.f32 %v1686, %v2419
        %v2421 = vpop.f32.mrf.mxu0
        %v2422 = vadd.f32 %v1686, %v2421
        %2423 = vmatmul.bf16.gmra.mxu0 %v1595
        %v2424 = vpop.f32.mrf.mxu0
        %v2425 = vadd.f32 %v1686, %v2424
        %v2426 = vpop.f32.mrf.mxu0
        %v2427 = vadd.f32 %v1686, %v2426
        %2428 = vmatmul.bf16.gmra.mxu0 %v1599
        %v2429 = vpop.f32.mrf.mxu0
        %v2430 = vadd.f32 %v1686, %v2429
        %v2431 = vpop.f32.mrf.mxu0
        %v2432 = vadd.f32 %v1686, %v2431
        %2433 = vmatmul.bf16.gmra.mxu0 %v1603
        %v2434 = vpop.f32.mrf.mxu0
        %v2435 = vadd.f32 %v1686, %v2434
        %v2436 = vpop.f32.mrf.mxu0
        %v2437 = vadd.f32 %v1686, %v2436
        %2438 = vmatmul.bf16.gmra.mxu0 %v1607
        %v2439 = vpop.f32.mrf.mxu0
        %v2440 = vadd.f32 %v1686, %v2439
        %v2441 = vpop.f32.mrf.mxu0
        %v2442 = vadd.f32 %v1686, %v2441
        %2443 = vmatmul.bf16.gmra.mxu0 %v1611
        %v2444 = vpop.f32.mrf.mxu0
        %v2445 = vadd.f32 %v1686, %v2444
        %v2446 = vpop.f32.mrf.mxu0
        %v2447 = vadd.f32 %v1686, %v2446
        %2448 = vmatmul.bf16.gmra.mxu0 %v1615
        %v2449 = vpop.f32.mrf.mxu0
        %v2450 = vadd.f32 %v1686, %v2449
        %v2451 = vpop.f32.mrf.mxu0
        %v2452 = vadd.f32 %v1686, %v2451
        %2453 = vdwg.mxu0
        %2454 = vmatpush.bf16.msra.mxu0 %v1912
        %2455 = vmatpush.bf16.msra.mxu0 %v1910
        %2456 = vmatpush.bf16.msra.mxu0 %v1908
        %2457 = vmatpush.bf16.msra.mxu0 %v1906
        %2458 = vmatpush.bf16.msra.mxu0 %v1904
        %2459 = vmatpush.bf16.msra.mxu0 %v1902
        %2460 = vmatpush.bf16.msra.mxu0 %v1900
        %2461 = vmatpush.bf16.msra.mxu0 %v1898
        %2462 = vmatmul.bf16.gmra.mxu0 %v1556
        %v2463 = vpop.f32.mrf.mxu0
        %v2464 = vadd.f32 %v2375, %v2463
        %v2465 = vpop.f32.mrf.mxu0
        %v2466 = vadd.f32 %v2377, %v2465
        %2467 = vmatmul.bf16.gmra.mxu0 %v1560
        %v2468 = vpop.f32.mrf.mxu0
        %v2469 = vadd.f32 %v2380, %v2468
        %v2470 = vpop.f32.mrf.mxu0
        %v2471 = vadd.f32 %v2382, %v2470
        %2472 = vmatmul.bf16.gmra.mxu0 %v1564
        %v2473 = vpop.f32.mrf.mxu0
        %v2474 = vadd.f32 %v2385, %v2473
        %v2475 = vpop.f32.mrf.mxu0
        %v2476 = vadd.f32 %v2387, %v2475
        %2477 = vmatmul.bf16.gmra.mxu0 %v1568
        %v2478 = vpop.f32.mrf.mxu0
        %v2479 = vadd.f32 %v2390, %v2478
        %v2480 = vpop.f32.mrf.mxu0
        %v2481 = vadd.f32 %v2392, %v2480
        %2482 = vmatmul.bf16.gmra.mxu0 %v1572
        %v2483 = vpop.f32.mrf.mxu0
        %v2484 = vadd.f32 %v2395, %v2483
        %v2485 = vpop.f32.mrf.mxu0
        %v2486 = vadd.f32 %v2397, %v2485
        %2487 = vmatmul.bf16.gmra.mxu0 %v1576
        %v2488 = vpop.f32.mrf.mxu0
        %v2489 = vadd.f32 %v2400, %v2488
        %v2490 = vpop.f32.mrf.mxu0
        %v2491 = vadd.f32 %v2402, %v2490
        %2492 = vmatmul.bf16.gmra.mxu0 %v1580
        %v2493 = vpop.f32.mrf.mxu0
        %v2494 = vadd.f32 %v2405, %v2493
        %v2495 = vpop.f32.mrf.mxu0
        %v2496 = vadd.f32 %v2407, %v2495
        %2497 = vmatmul.bf16.gmra.mxu0 %v1584
        %v2498 = vpop.f32.mrf.mxu0
        %v2499 = vadd.f32 %v2410, %v2498
        %v2500 = vpop.f32.mrf.mxu0
        %v2501 = vadd.f32 %v2412, %v2500
        %2502 = vmatmul.bf16.gmra.mxu0 %v1588
        %v2503 = vpop.f32.mrf.mxu0
        %v2504 = vadd.f32 %v2415, %v2503
        %v2505 = vpop.f32.mrf.mxu0
        %v2506 = vadd.f32 %v2417, %v2505
        %2507 = vmatmul.bf16.gmra.mxu0 %v1592
        %v2508 = vpop.f32.mrf.mxu0
        %v2509 = vadd.f32 %v2420, %v2508
        %v2510 = vpop.f32.mrf.mxu0
        %v2511 = vadd.f32 %v2422, %v2510
        %2512 = vmatmul.bf16.gmra.mxu0 %v1596
        %v2513 = vpop.f32.mrf.mxu0
        %v2514 = vadd.f32 %v2425, %v2513
        %v2515 = vpop.f32.mrf.mxu0
        %v2516 = vadd.f32 %v2427, %v2515
        %2517 = vmatmul.bf16.gmra.mxu0 %v1600
        %v2518 = vpop.f32.mrf.mxu0
        %v2519 = vadd.f32 %v2430, %v2518
        %v2520 = vpop.f32.mrf.mxu0
        %v2521 = vadd.f32 %v2432, %v2520
        %2522 = vmatmul.bf16.gmra.mxu0 %v1604
        %v2523 = vpop.f32.mrf.mxu0
        %v2524 = vadd.f32 %v2435, %v2523
        %v2525 = vpop.f32.mrf.mxu0
        %v2526 = vadd.f32 %v2437, %v2525
        %2527 = vmatmul.bf16.gmra.mxu0 %v1608
        %v2528 = vpop.f32.mrf.mxu0
        %v2529 = vadd.f32 %v2440, %v2528
        %v2530 = vpop.f32.mrf.mxu0
        %v2531 = vadd.f32 %v2442, %v2530
        %2532 = vmatmul.bf16.gmra.mxu0 %v1612
        %v2533 = vpop.f32.mrf.mxu0
        %v2534 = vadd.f32 %v2445, %v2533
        %v2535 = vpop.f32.mrf.mxu0
        %v2536 = vadd.f32 %v2447, %v2535
        %2537 = vmatmul.bf16.gmra.mxu0 %v1616
        %v2538 = vpop.f32.mrf.mxu0
        %v2539 = vadd.f32 %v2450, %v2538
        %v2540 = vpop.f32.mrf.mxu0
        %v2541 = vadd.f32 %v2452, %v2540
        %2542 = vdwg.mxu0
        %2543 = vmatpush.bf16.msra.mxu0 %v1928
        %2544 = vmatpush.bf16.msra.mxu0 %v1926
        %2545 = vmatpush.bf16.msra.mxu0 %v1924
        %2546 = vmatpush.bf16.msra.mxu0 %v1922
        %2547 = vmatpush.bf16.msra.mxu0 %v1920
        %2548 = vmatpush.bf16.msra.mxu0 %v1918
        %2549 = vmatpush.bf16.msra.mxu0 %v1916
        %2550 = vmatpush.bf16.msra.mxu0 %v1914
        %2551 = vmatmul.bf16.gmra.mxu0 %v1557
        %v2552 = vpop.f32.mrf.mxu0
        %v2553 = vadd.f32 %v2464, %v2552
        %v2554 = vpop.f32.mrf.mxu0
        %v2555 = vadd.f32 %v2466, %v2554
        %2556 = vmatmul.bf16.gmra.mxu0 %v1561
        %v2557 = vpop.f32.mrf.mxu0
        %v2558 = vadd.f32 %v2469, %v2557
        %v2559 = vpop.f32.mrf.mxu0
        %v2560 = vadd.f32 %v2471, %v2559
        %2561 = vmatmul.bf16.gmra.mxu0 %v1565
        %v2562 = vpop.f32.mrf.mxu0
        %v2563 = vadd.f32 %v2474, %v2562
        %v2564 = vpop.f32.mrf.mxu0
        %v2565 = vadd.f32 %v2476, %v2564
        %2566 = vmatmul.bf16.gmra.mxu0 %v1569
        %v2567 = vpop.f32.mrf.mxu0
        %v2568 = vadd.f32 %v2479, %v2567
        %v2569 = vpop.f32.mrf.mxu0
        %v2570 = vadd.f32 %v2481, %v2569
        %2571 = vmatmul.bf16.gmra.mxu0 %v1573
        %v2572 = vpop.f32.mrf.mxu0
        %v2573 = vadd.f32 %v2484, %v2572
        %v2574 = vpop.f32.mrf.mxu0
        %v2575 = vadd.f32 %v2486, %v2574
        %2576 = vmatmul.bf16.gmra.mxu0 %v1577
        %v2577 = vpop.f32.mrf.mxu0
        %v2578 = vadd.f32 %v2489, %v2577
        %v2579 = vpop.f32.mrf.mxu0
        %v2580 = vadd.f32 %v2491, %v2579
        %2581 = vmatmul.bf16.gmra.mxu0 %v1581
        %v2582 = vpop.f32.mrf.mxu0
        %v2583 = vadd.f32 %v2494, %v2582
        %v2584 = vpop.f32.mrf.mxu0
        %v2585 = vadd.f32 %v2496, %v2584
        %2586 = vmatmul.bf16.gmra.mxu0 %v1585
        %v2587 = vpop.f32.mrf.mxu0
        %v2588 = vadd.f32 %v2499, %v2587
        %v2589 = vpop.f32.mrf.mxu0
        %v2590 = vadd.f32 %v2501, %v2589
        %2591 = vmatmul.bf16.gmra.mxu0 %v1589
        %v2592 = vpop.f32.mrf.mxu0
        %v2593 = vadd.f32 %v2504, %v2592
        %v2594 = vpop.f32.mrf.mxu0
        %v2595 = vadd.f32 %v2506, %v2594
        %2596 = vmatmul.bf16.gmra.mxu0 %v1593
        %v2597 = vpop.f32.mrf.mxu0
        %v2598 = vadd.f32 %v2509, %v2597
        %v2599 = vpop.f32.mrf.mxu0
        %v2600 = vadd.f32 %v2511, %v2599
        %2601 = vmatmul.bf16.gmra.mxu0 %v1597
        %v2602 = vpop.f32.mrf.mxu0
        %v2603 = vadd.f32 %v2514, %v2602
        %v2604 = vpop.f32.mrf.mxu0
        %v2605 = vadd.f32 %v2516, %v2604
        %2606 = vmatmul.bf16.gmra.mxu0 %v1601
        %v2607 = vpop.f32.mrf.mxu0
        %v2608 = vadd.f32 %v2519, %v2607
        %v2609 = vpop.f32.mrf.mxu0
        %v2610 = vadd.f32 %v2521, %v2609
        %2611 = vmatmul.bf16.gmra.mxu0 %v1605
        %v2612 = vpop.f32.mrf.mxu0
        %v2613 = vadd.f32 %v2524, %v2612
        %v2614 = vpop.f32.mrf.mxu0
        %v2615 = vadd.f32 %v2526, %v2614
        %2616 = vmatmul.bf16.gmra.mxu0 %v1609
        %v2617 = vpop.f32.mrf.mxu0
        %v2618 = vadd.f32 %v2529, %v2617
        %v2619 = vpop.f32.mrf.mxu0
        %v2620 = vadd.f32 %v2531, %v2619
        %2621 = vmatmul.bf16.gmra.mxu0 %v1613
        %v2622 = vpop.f32.mrf.mxu0
        %v2623 = vadd.f32 %v2534, %v2622
        %v2624 = vpop.f32.mrf.mxu0
        %v2625 = vadd.f32 %v2536, %v2624
        %2626 = vmatmul.bf16.gmra.mxu0 %v1617
        %v2627 = vpop.f32.mrf.mxu0
        %v2628 = vadd.f32 %v2539, %v2627
        %v2629 = vpop.f32.mrf.mxu0
        %v2630 = vadd.f32 %v2541, %v2629
        %2631 = vdwg.mxu0
        %2632 = vmatpush.bf16.msra.mxu0 %v1944
        %2633 = vmatpush.bf16.msra.mxu0 %v1942
        %2634 = vmatpush.bf16.msra.mxu0 %v1940
        %2635 = vmatpush.bf16.msra.mxu0 %v1938
        %2636 = vmatpush.bf16.msra.mxu0 %v1936
        %2637 = vmatpush.bf16.msra.mxu0 %v1934
        %2638 = vmatpush.bf16.msra.mxu0 %v1932
        %2639 = vmatpush.bf16.msra.mxu0 %v1930
        %2640 = vmatmul.bf16.gmra.mxu0 %v1558
        %v2641 = vpop.f32.mrf.mxu0
        %v2642 = vadd.f32 %v2553, %v2641
        %v2643 = vpop.f32.mrf.mxu0
        %v2644 = vadd.f32 %v2555, %v2643
        %2645 = vmatmul.bf16.gmra.mxu0 %v1562
        %v2646 = vpop.f32.mrf.mxu0
        %v2647 = vadd.f32 %v2558, %v2646
        %v2648 = vpop.f32.mrf.mxu0
        %v2649 = vadd.f32 %v2560, %v2648
        %2650 = vmatmul.bf16.gmra.mxu0 %v1566
        %v2651 = vpop.f32.mrf.mxu0
        %v2652 = vadd.f32 %v2563, %v2651
        %v2653 = vpop.f32.mrf.mxu0
        %v2654 = vadd.f32 %v2565, %v2653
        %2655 = vmatmul.bf16.gmra.mxu0 %v1570
        %v2656 = vpop.f32.mrf.mxu0
        %v2657 = vadd.f32 %v2568, %v2656
        %v2658 = vpop.f32.mrf.mxu0
        %v2659 = vadd.f32 %v2570, %v2658
        %2660 = vmatmul.bf16.gmra.mxu0 %v1574
        %v2661 = vpop.f32.mrf.mxu0
        %v2662 = vadd.f32 %v2573, %v2661
        %v2663 = vpop.f32.mrf.mxu0
        %v2664 = vadd.f32 %v2575, %v2663
        %2665 = vmatmul.bf16.gmra.mxu0 %v1578
        %v2666 = vpop.f32.mrf.mxu0
        %v2667 = vadd.f32 %v2578, %v2666
        %v2668 = vpop.f32.mrf.mxu0
        %v2669 = vadd.f32 %v2580, %v2668
        %2670 = vmatmul.bf16.gmra.mxu0 %v1582
        %v2671 = vpop.f32.mrf.mxu0
        %v2672 = vadd.f32 %v2583, %v2671
        %v2673 = vpop.f32.mrf.mxu0
        %v2674 = vadd.f32 %v2585, %v2673
        %2675 = vmatmul.bf16.gmra.mxu0 %v1586
        %v2676 = vpop.f32.mrf.mxu0
        %v2677 = vadd.f32 %v2588, %v2676
        %v2678 = vpop.f32.mrf.mxu0
        %v2679 = vadd.f32 %v2590, %v2678
        %2680 = vmatmul.bf16.gmra.mxu0 %v1590
        %v2681 = vpop.f32.mrf.mxu0
        %v2682 = vadd.f32 %v2593, %v2681
        %v2683 = vpop.f32.mrf.mxu0
        %v2684 = vadd.f32 %v2595, %v2683
        %2685 = vmatmul.bf16.gmra.mxu0 %v1594
        %v2686 = vpop.f32.mrf.mxu0
        %v2687 = vadd.f32 %v2598, %v2686
        %v2688 = vpop.f32.mrf.mxu0
        %v2689 = vadd.f32 %v2600, %v2688
        %2690 = vmatmul.bf16.gmra.mxu0 %v1598
        %v2691 = vpop.f32.mrf.mxu0
        %v2692 = vadd.f32 %v2603, %v2691
        %v2693 = vpop.f32.mrf.mxu0
        %v2694 = vadd.f32 %v2605, %v2693
        %2695 = vmatmul.bf16.gmra.mxu0 %v1602
        %v2696 = vpop.f32.mrf.mxu0
        %v2697 = vadd.f32 %v2608, %v2696
        %v2698 = vpop.f32.mrf.mxu0
        %v2699 = vadd.f32 %v2610, %v2698
        %2700 = vmatmul.bf16.gmra.mxu0 %v1606
        %v2701 = vpop.f32.mrf.mxu0
        %v2702 = vadd.f32 %v2613, %v2701
        %v2703 = vpop.f32.mrf.mxu0
        %v2704 = vadd.f32 %v2615, %v2703
        %2705 = vmatmul.bf16.gmra.mxu0 %v1610
        %v2706 = vpop.f32.mrf.mxu0
        %v2707 = vadd.f32 %v2618, %v2706
        %v2708 = vpop.f32.mrf.mxu0
        %v2709 = vadd.f32 %v2620, %v2708
        %2710 = vmatmul.bf16.gmra.mxu0 %v1614
        %v2711 = vpop.f32.mrf.mxu0
        %v2712 = vadd.f32 %v2623, %v2711
        %v2713 = vpop.f32.mrf.mxu0
        %v2714 = vadd.f32 %v2625, %v2713
        %2715 = vmatmul.bf16.gmra.mxu0 %v1618
        %v2716 = vpop.f32.mrf.mxu0
        %v2717 = vadd.f32 %v2628, %v2716
        %v2718 = vpop.f32.mrf.mxu0
        %v2719 = vadd.f32 %v2630, %v2718
        %2720 = vdwg.mxu0
        %v2721 = vtanh.pop %v2286
        %v2722 = vtanh.pop %v2642
        %v2723 = vtanh.pop %v2288
        %v2724 = vtanh.pop %v2644
        %v2725 = vtanh.pop %v2291
        %v2726 = vtanh.pop %v2647
        %v2727 = vtanh.pop %v2293
        %v2728 = vtanh.pop %v2649
        %v2729 = vtanh.pop %v2296
        %v2730 = vtanh.pop %v2652
        %v2731 = vtanh.pop %v2298
        %v2732 = vtanh.pop %v2654
        %v2733 = vtanh.pop %v2301
        %v2734 = vtanh.pop %v2657
        %v2735 = vtanh.pop %v2303
        %v2736 = vtanh.pop %v2659
        %v2737 = vtanh.pop %v2306
        %v2738 = vtanh.pop %v2662
        %v2739 = vtanh.pop %v2308
        %v2740 = vtanh.pop %v2664
        %v2741 = vtanh.pop %v2311
        %v2742 = vtanh.pop %v2667
        %v2743 = vtanh.pop %v2313
        %v2744 = vtanh.pop %v2669
        %v2745 = vtanh.pop %v2316
        %v2746 = vtanh.pop %v2672
        %v2747 = vtanh.pop %v2318
        %v2748 = vtanh.pop %v2674
        %v2749 = vtanh.pop %v2321
        %v2750 = vtanh.pop %v2677
        %v2751 = vtanh.pop %v2323
        %v2752 = vtanh.pop %v2679
        %v2753 = vtanh.pop %v2326
        %v2754 = vtanh.pop %v2682
        %v2755 = vtanh.pop %v2328
        %v2756 = vtanh.pop %v2684
        %v2757 = vtanh.pop %v2331
        %v2758 = vtanh.pop %v2687
        %v2759 = vtanh.pop %v2333
        %v2760 = vtanh.pop %v2689
        %v2761 = vtanh.pop %v2336
        %v2762 = vtanh.pop %v2692
        %v2763 = vtanh.pop %v2338
        %v2764 = vtanh.pop %v2694
        %v2765 = vtanh.pop %v2341
        %v2766 = vtanh.pop %v2697
        %v2767 = vtanh.pop %v2343
        %v2768 = vtanh.pop %v2699
        %v2769 = vtanh.pop %v2346
        %v2770 = vtanh.pop %v2702
        %v2771 = vtanh.pop %v2348
        %v2772 = vtanh.pop %v2704
        %v2773 = vtanh.pop %v2351
        %v2774 = vtanh.pop %v2707
        %v2775 = vtanh.pop %v2353
        %v2776 = vtanh.pop %v2709
        %v2777 = vtanh.pop %v2356
        %v2778 = vtanh.pop %v2712
        %v2779 = vtanh.pop %v2358
        %v2780 = vtanh.pop %v2714
        %v2781 = vtanh.pop %v2361
        %v2782 = vtanh.pop %v2717
        %v2783 = vtanh.pop %v2363
        %v2784 = vtanh.pop %v2719
        %v2785 = vpack.c.bf16 %v2723, %v2721
        %v2786 = vpack.c.bf16 %v2724, %v2722
        %v2787 = vpack.c.bf16 %v2727, %v2725
        %v2788 = vpack.c.bf16 %v2728, %v2726
        %v2789 = vpack.c.bf16 %v2731, %v2729
        %v2790 = vpack.c.bf16 %v2732, %v2730
        %v2791 = vpack.c.bf16 %v2735, %v2733
        %v2792 = vpack.c.bf16 %v2736, %v2734
        %v2793 = vpack.c.bf16 %v2739, %v2737
        %v2794 = vpack.c.bf16 %v2740, %v2738
        %v2795 = vpack.c.bf16 %v2743, %v2741
        %v2796 = vpack.c.bf16 %v2744, %v2742
        %v2797 = vpack.c.bf16 %v2747, %v2745
        %v2798 = vpack.c.bf16 %v2748, %v2746
        %v2799 = vpack.c.bf16 %v2751, %v2749
        %v2800 = vpack.c.bf16 %v2752, %v2750
        %v2801 = vpack.c.bf16 %v2755, %v2753
        %v2802 = vpack.c.bf16 %v2756, %v2754
        %v2803 = vpack.c.bf16 %v2759, %v2757
        %v2804 = vpack.c.bf16 %v2760, %v2758
        %v2805 = vpack.c.bf16 %v2763, %v2761
        %v2806 = vpack.c.bf16 %v2764, %v2762
        %v2807 = vpack.c.bf16 %v2767, %v2765
        %v2808 = vpack.c.bf16 %v2768, %v2766
        %v2809 = vpack.c.bf16 %v2771, %v2769
        %v2810 = vpack.c.bf16 %v2772, %v2770
        %v2811 = vpack.c.bf16 %v2775, %v2773
        %v2812 = vpack.c.bf16 %v2776, %v2774
        %v2813 = vpack.c.bf16 %v2779, %v2777
        %v2814 = vpack.c.bf16 %v2780, %v2778
        %v2815 = vpack.c.bf16 %v2783, %v2781
        %v2816 = vpack.c.bf16 %v2784, %v2782
        %v2817 = vld [vmem:[#allocation8] sm:$0xff]
        %v2818 = vld [vmem:[#allocation8 + $0x8] sm:$0xff]
        %v2819 = vld [vmem:[#allocation8 + $0x10] sm:$0xff]
        %v2820 = vld [vmem:[#allocation8 + $0x18] sm:$0xff]
        %v2821 = vld [vmem:[#allocation8 + $0x20] sm:$0xff]
        %v2822 = vld [vmem:[#allocation8 + $0x28] sm:$0xff]
        %v2823 = vld [vmem:[#allocation8 + $0x30] sm:$0xff]
        %v2824 = vld [vmem:[#allocation8 + $0x38] sm:$0xff]
        %v2825 = vld [vmem:[#allocation8 + $0x40] sm:$0xff]
        %v2826 = vld [vmem:[#allocation8 + $0x48] sm:$0xff]
        %v2827 = vld [vmem:[#allocation8 + $0x50] sm:$0xff]
        %v2828 = vld [vmem:[#allocation8 + $0x58] sm:$0xff]
        %v2829 = vld [vmem:[#allocation8 + $0x60] sm:$0xff]
        %v2830 = vld [vmem:[#allocation8 + $0x68] sm:$0xff]
        %v2831 = vld [vmem:[#allocation8 + $0x70] sm:$0xff]
        %v2832 = vld [vmem:[#allocation8 + $0x78] sm:$0xff]
        %v2833 = vld [vmem:[#allocation8 + $0x80] sm:$0xff]
        %v2834 = vld [vmem:[#allocation8 + $0x88] sm:$0xff]
        %v2835 = vld [vmem:[#allocation8 + $0x90] sm:$0xff]
        %v2836 = vld [vmem:[#allocation8 + $0x98] sm:$0xff]
        %v2837 = vld [vmem:[#allocation8 + $0xa0] sm:$0xff]
        %v2838 = vld [vmem:[#allocation8 + $0xa8] sm:$0xff]
        %v2839 = vld [vmem:[#allocation8 + $0xb0] sm:$0xff]
        %v2840 = vld [vmem:[#allocation8 + $0xb8] sm:$0xff]
        %v2841 = vld [vmem:[#allocation8 + $0xc0] sm:$0xff]
        %v2842 = vld [vmem:[#allocation8 + $0xc8] sm:$0xff]
        %v2843 = vld [vmem:[#allocation8 + $0xd0] sm:$0xff]
        %v2844 = vld [vmem:[#allocation8 + $0xd8] sm:$0xff]
        %v2845 = vld [vmem:[#allocation8 + $0xe0] sm:$0xff]
        %v2846 = vld [vmem:[#allocation8 + $0xe8] sm:$0xff]
        %v2847 = vld [vmem:[#allocation8 + $0xf0] sm:$0xff]
        %v2848 = vld [vmem:[#allocation8 + $0xf8] sm:$0xff]
        %v2849 = vld [vmem:[#allocation10] sm:$0x3]
        %v2851 = vperm.slane %v2849, 0
        %v2852 = vperm.slane %v2849, 1
        %v2887 = vunpack.c.l.b16 %v2817
        %v2888 = vunpack.c.h.b16 %v2817
        %v2889 = vunpack.c.l.b16 %v2818
        %v2890 = vunpack.c.h.b16 %v2818
        %v2891 = vunpack.c.l.b16 %v2819
        %v2892 = vunpack.c.h.b16 %v2819
        %v2893 = vunpack.c.l.b16 %v2820
        %v2894 = vunpack.c.h.b16 %v2820
        %v2895 = vunpack.c.l.b16 %v2821
        %v2896 = vunpack.c.h.b16 %v2821
        %v2897 = vunpack.c.l.b16 %v2822
        %v2898 = vunpack.c.h.b16 %v2822
        %v2899 = vunpack.c.l.b16 %v2823
        %v2900 = vunpack.c.h.b16 %v2823
        %v2901 = vunpack.c.l.b16 %v2824
        %v2902 = vunpack.c.h.b16 %v2824
        %v2903 = vunpack.c.l.b16 %v2825
        %v2904 = vunpack.c.h.b16 %v2825
        %v2905 = vunpack.c.l.b16 %v2826
        %v2906 = vunpack.c.h.b16 %v2826
        %v2907 = vunpack.c.l.b16 %v2827
        %v2908 = vunpack.c.h.b16 %v2827
        %v2909 = vunpack.c.l.b16 %v2828
        %v2910 = vunpack.c.h.b16 %v2828
        %v2911 = vunpack.c.l.b16 %v2829
        %v2912 = vunpack.c.h.b16 %v2829
        %v2913 = vunpack.c.l.b16 %v2830
        %v2914 = vunpack.c.h.b16 %v2830
        %v2915 = vunpack.c.l.b16 %v2831
        %v2916 = vunpack.c.h.b16 %v2831
        %v2917 = vunpack.c.l.b16 %v2832
        %v2918 = vunpack.c.h.b16 %v2832
        %v2919 = vunpack.c.l.b16 %v2833
        %v2920 = vunpack.c.h.b16 %v2833
        %v2921 = vunpack.c.l.b16 %v2834
        %v2922 = vunpack.c.h.b16 %v2834
        %v2923 = vunpack.c.l.b16 %v2835
        %v2924 = vunpack.c.h.b16 %v2835
        %v2925 = vunpack.c.l.b16 %v2836
        %v2926 = vunpack.c.h.b16 %v2836
        %v2927 = vunpack.c.l.b16 %v2837
        %v2928 = vunpack.c.h.b16 %v2837
        %v2929 = vunpack.c.l.b16 %v2838
        %v2930 = vunpack.c.h.b16 %v2838
        %v2931 = vunpack.c.l.b16 %v2839
        %v2932 = vunpack.c.h.b16 %v2839
        %v2933 = vunpack.c.l.b16 %v2840
        %v2934 = vunpack.c.h.b16 %v2840
        %v2935 = vunpack.c.l.b16 %v2841
        %v2936 = vunpack.c.h.b16 %v2841
        %v2937 = vunpack.c.l.b16 %v2842
        %v2938 = vunpack.c.h.b16 %v2842
        %v2939 = vunpack.c.l.b16 %v2843
        %v2940 = vunpack.c.h.b16 %v2843
        %v2941 = vunpack.c.l.b16 %v2844
        %v2942 = vunpack.c.h.b16 %v2844
        %v2943 = vunpack.c.l.b16 %v2845
        %v2944 = vunpack.c.h.b16 %v2845
        %v2945 = vunpack.c.l.b16 %v2846
        %v2946 = vunpack.c.h.b16 %v2846
        %v2947 = vunpack.c.l.b16 %v2847
        %v2948 = vunpack.c.h.b16 %v2847
        %v2949 = vunpack.c.l.b16 %v2848
        %v2950 = vunpack.c.h.b16 %v2848
        %v2951 = vpack.c.b16 %v2889, %v2887
        %v2952 = vpack.c.b16 %v2890, %v2888
        %v2953 = vpack.c.b16 %v2893, %v2891
        %v2954 = vpack.c.b16 %v2894, %v2892
        %v2955 = vpack.c.b16 %v2897, %v2895
        %v2956 = vpack.c.b16 %v2898, %v2896
        %v2957 = vpack.c.b16 %v2901, %v2899
        %v2958 = vpack.c.b16 %v2902, %v2900
        %v2959 = vpack.c.b16 %v2905, %v2903
        %v2960 = vpack.c.b16 %v2906, %v2904
        %v2961 = vpack.c.b16 %v2909, %v2907
        %v2962 = vpack.c.b16 %v2910, %v2908
        %v2963 = vpack.c.b16 %v2913, %v2911
        %v2964 = vpack.c.b16 %v2914, %v2912
        %v2965 = vpack.c.b16 %v2917, %v2915
        %v2966 = vpack.c.b16 %v2918, %v2916
        %v2967 = vpack.c.b16 %v2921, %v2919
        %v2968 = vpack.c.b16 %v2922, %v2920
        %v2969 = vpack.c.b16 %v2925, %v2923
        %v2970 = vpack.c.b16 %v2926, %v2924
        %v2971 = vpack.c.b16 %v2929, %v2927
        %v2972 = vpack.c.b16 %v2930, %v2928
        %v2973 = vpack.c.b16 %v2933, %v2931
        %v2974 = vpack.c.b16 %v2934, %v2932
        %v2975 = vpack.c.b16 %v2937, %v2935
        %v2976 = vpack.c.b16 %v2938, %v2936
        %v2977 = vpack.c.b16 %v2941, %v2939
        %v2978 = vpack.c.b16 %v2942, %v2940
        %v2979 = vpack.c.b16 %v2945, %v2943
        %v2980 = vpack.c.b16 %v2946, %v2944
        %v2981 = vpack.c.b16 %v2949, %v2947
        %v2982 = vpack.c.b16 %v2950, %v2948
        %3015 = vmatpush.bf16.msra.mxu0 %v2965
        %3016 = vmatpush.bf16.msra.mxu0 %v2963
        %3017 = vmatpush.bf16.msra.mxu0 %v2961
        %3018 = vmatpush.bf16.msra.mxu0 %v2959
        %3019 = vmatpush.bf16.msra.mxu0 %v2957
        %3020 = vmatpush.bf16.msra.mxu0 %v2955
        %3021 = vmatpush.bf16.msra.mxu0 %v2953
        %3022 = vmatpush.bf16.msra.mxu0 %v2951
        %3023 = vmatmul.bf16.gmra.mxu0 %v2785
        %v3024 = vpop.f32.mrf.mxu0
        %v3025 = vadd.f32 %v2851, %v3024
        %v3026 = vpop.f32.mrf.mxu0
        %v3027 = vadd.f32 %v2851, %v3026
        %3028 = vmatmul.bf16.gmra.mxu0 %v2787
        %v3029 = vpop.f32.mrf.mxu0
        %v3030 = vadd.f32 %v2851, %v3029
        %v3031 = vpop.f32.mrf.mxu0
        %v3032 = vadd.f32 %v2851, %v3031
        %3033 = vmatmul.bf16.gmra.mxu0 %v2789
        %v3034 = vpop.f32.mrf.mxu0
        %v3035 = vadd.f32 %v2851, %v3034
        %v3036 = vpop.f32.mrf.mxu0
        %v3037 = vadd.f32 %v2851, %v3036
        %3038 = vmatmul.bf16.gmra.mxu0 %v2791
        %v3039 = vpop.f32.mrf.mxu0
        %v3040 = vadd.f32 %v2851, %v3039
        %v3041 = vpop.f32.mrf.mxu0
        %v3042 = vadd.f32 %v2851, %v3041
        %3043 = vmatmul.bf16.gmra.mxu0 %v2793
        %v3044 = vpop.f32.mrf.mxu0
        %v3045 = vadd.f32 %v2851, %v3044
        %v3046 = vpop.f32.mrf.mxu0
        %v3047 = vadd.f32 %v2851, %v3046
        %3048 = vmatmul.bf16.gmra.mxu0 %v2795
        %v3049 = vpop.f32.mrf.mxu0
        %v3050 = vadd.f32 %v2851, %v3049
        %v3051 = vpop.f32.mrf.mxu0
        %v3052 = vadd.f32 %v2851, %v3051
        %3053 = vmatmul.bf16.gmra.mxu0 %v2797
        %v3054 = vpop.f32.mrf.mxu0
        %v3055 = vadd.f32 %v2851, %v3054
        %v3056 = vpop.f32.mrf.mxu0
        %v3057 = vadd.f32 %v2851, %v3056
        %3058 = vmatmul.bf16.gmra.mxu0 %v2799
        %v3059 = vpop.f32.mrf.mxu0
        %v3060 = vadd.f32 %v2851, %v3059
        %v3061 = vpop.f32.mrf.mxu0
        %v3062 = vadd.f32 %v2851, %v3061
        %3063 = vmatmul.bf16.gmra.mxu0 %v2801
        %v3064 = vpop.f32.mrf.mxu0
        %v3065 = vadd.f32 %v2851, %v3064
        %v3066 = vpop.f32.mrf.mxu0
        %v3067 = vadd.f32 %v2851, %v3066
        %3068 = vmatmul.bf16.gmra.mxu0 %v2803
        %v3069 = vpop.f32.mrf.mxu0
        %v3070 = vadd.f32 %v2851, %v3069
        %v3071 = vpop.f32.mrf.mxu0
        %v3072 = vadd.f32 %v2851, %v3071
        %3073 = vmatmul.bf16.gmra.mxu0 %v2805
        %v3074 = vpop.f32.mrf.mxu0
        %v3075 = vadd.f32 %v2851, %v3074
        %v3076 = vpop.f32.mrf.mxu0
        %v3077 = vadd.f32 %v2851, %v3076
        %3078 = vmatmul.bf16.gmra.mxu0 %v2807
        %v3079 = vpop.f32.mrf.mxu0
        %v3080 = vadd.f32 %v2851, %v3079
        %v3081 = vpop.f32.mrf.mxu0
        %v3082 = vadd.f32 %v2851, %v3081
        %3083 = vmatmul.bf16.gmra.mxu0 %v2809
        %v3084 = vpop.f32.mrf.mxu0
        %v3085 = vadd.f32 %v2851, %v3084
        %v3086 = vpop.f32.mrf.mxu0
        %v3087 = vadd.f32 %v2851, %v3086
        %3088 = vmatmul.bf16.gmra.mxu0 %v2811
        %v3089 = vpop.f32.mrf.mxu0
        %v3090 = vadd.f32 %v2851, %v3089
        %v3091 = vpop.f32.mrf.mxu0
        %v3092 = vadd.f32 %v2851, %v3091
        %3093 = vmatmul.bf16.gmra.mxu0 %v2813
        %v3094 = vpop.f32.mrf.mxu0
        %v3095 = vadd.f32 %v2851, %v3094
        %v3096 = vpop.f32.mrf.mxu0
        %v3097 = vadd.f32 %v2851, %v3096
        %3098 = vmatmul.bf16.gmra.mxu0 %v2815
        %v3099 = vpop.f32.mrf.mxu0
        %v3100 = vadd.f32 %v2851, %v3099
        %v3101 = vpop.f32.mrf.mxu0
        %v3102 = vadd.f32 %v2851, %v3101
        %3103 = vdwg.mxu0
        %3104 = vmatpush.bf16.msra.mxu0 %v2981
        %3105 = vmatpush.bf16.msra.mxu0 %v2979
        %3106 = vmatpush.bf16.msra.mxu0 %v2977
        %3107 = vmatpush.bf16.msra.mxu0 %v2975
        %3108 = vmatpush.bf16.msra.mxu0 %v2973
        %3109 = vmatpush.bf16.msra.mxu0 %v2971
        %3110 = vmatpush.bf16.msra.mxu0 %v2969
        %3111 = vmatpush.bf16.msra.mxu0 %v2967
        %3112 = vmatmul.bf16.gmra.mxu0 %v2786
        %v3113 = vpop.f32.mrf.mxu0
        %v3114 = vadd.f32 %v3025, %v3113
        %v3115 = vpop.f32.mrf.mxu0
        %v3116 = vadd.f32 %v3027, %v3115
        %3117 = vmatmul.bf16.gmra.mxu0 %v2788
        %v3118 = vpop.f32.mrf.mxu0
        %v3119 = vadd.f32 %v3030, %v3118
        %v3120 = vpop.f32.mrf.mxu0
        %v3121 = vadd.f32 %v3032, %v3120
        %3122 = vmatmul.bf16.gmra.mxu0 %v2790
        %v3123 = vpop.f32.mrf.mxu0
        %v3124 = vadd.f32 %v3035, %v3123
        %v3125 = vpop.f32.mrf.mxu0
        %v3126 = vadd.f32 %v3037, %v3125
        %3127 = vmatmul.bf16.gmra.mxu0 %v2792
        %v3128 = vpop.f32.mrf.mxu0
        %v3129 = vadd.f32 %v3040, %v3128
        %v3130 = vpop.f32.mrf.mxu0
        %v3131 = vadd.f32 %v3042, %v3130
        %3132 = vmatmul.bf16.gmra.mxu0 %v2794
        %v3133 = vpop.f32.mrf.mxu0
        %v3134 = vadd.f32 %v3045, %v3133
        %v3135 = vpop.f32.mrf.mxu0
        %v3136 = vadd.f32 %v3047, %v3135
        %3137 = vmatmul.bf16.gmra.mxu0 %v2796
        %v3138 = vpop.f32.mrf.mxu0
        %v3139 = vadd.f32 %v3050, %v3138
        %v3140 = vpop.f32.mrf.mxu0
        %v3141 = vadd.f32 %v3052, %v3140
        %3142 = vmatmul.bf16.gmra.mxu0 %v2798
        %v3143 = vpop.f32.mrf.mxu0
        %v3144 = vadd.f32 %v3055, %v3143
        %v3145 = vpop.f32.mrf.mxu0
        %v3146 = vadd.f32 %v3057, %v3145
        %3147 = vmatmul.bf16.gmra.mxu0 %v2800
        %v3148 = vpop.f32.mrf.mxu0
        %v3149 = vadd.f32 %v3060, %v3148
        %v3150 = vpop.f32.mrf.mxu0
        %v3151 = vadd.f32 %v3062, %v3150
        %3152 = vmatmul.bf16.gmra.mxu0 %v2802
        %v3153 = vpop.f32.mrf.mxu0
        %v3154 = vadd.f32 %v3065, %v3153
        %v3155 = vpop.f32.mrf.mxu0
        %v3156 = vadd.f32 %v3067, %v3155
        %3157 = vmatmul.bf16.gmra.mxu0 %v2804
        %v3158 = vpop.f32.mrf.mxu0
        %v3159 = vadd.f32 %v3070, %v3158
        %v3160 = vpop.f32.mrf.mxu0
        %v3161 = vadd.f32 %v3072, %v3160
        %3162 = vmatmul.bf16.gmra.mxu0 %v2806
        %v3163 = vpop.f32.mrf.mxu0
        %v3164 = vadd.f32 %v3075, %v3163
        %v3165 = vpop.f32.mrf.mxu0
        %v3166 = vadd.f32 %v3077, %v3165
        %3167 = vmatmul.bf16.gmra.mxu0 %v2808
        %v3168 = vpop.f32.mrf.mxu0
        %v3169 = vadd.f32 %v3080, %v3168
        %v3170 = vpop.f32.mrf.mxu0
        %v3171 = vadd.f32 %v3082, %v3170
        %3172 = vmatmul.bf16.gmra.mxu0 %v2810
        %v3173 = vpop.f32.mrf.mxu0
        %v3174 = vadd.f32 %v3085, %v3173
        %v3175 = vpop.f32.mrf.mxu0
        %v3176 = vadd.f32 %v3087, %v3175
        %3177 = vmatmul.bf16.gmra.mxu0 %v2812
        %v3178 = vpop.f32.mrf.mxu0
        %v3179 = vadd.f32 %v3090, %v3178
        %v3180 = vpop.f32.mrf.mxu0
        %v3181 = vadd.f32 %v3092, %v3180
        %3182 = vmatmul.bf16.gmra.mxu0 %v2814
        %v3183 = vpop.f32.mrf.mxu0
        %v3184 = vadd.f32 %v3095, %v3183
        %v3185 = vpop.f32.mrf.mxu0
        %v3186 = vadd.f32 %v3097, %v3185
        %3187 = vmatmul.bf16.gmra.mxu0 %v2816
        %v3188 = vpop.f32.mrf.mxu0
        %v3189 = vadd.f32 %v3100, %v3188
        %v3190 = vpop.f32.mrf.mxu0
        %v3191 = vadd.f32 %v3102, %v3190
        %3192 = vdwg.mxu0
        %3193 = vmatpush.bf16.msra.mxu0 %v2966
        %3194 = vmatpush.bf16.msra.mxu0 %v2964
        %3195 = vmatpush.bf16.msra.mxu0 %v2962
        %3196 = vmatpush.bf16.msra.mxu0 %v2960
        %3197 = vmatpush.bf16.msra.mxu0 %v2958
        %3198 = vmatpush.bf16.msra.mxu0 %v2956
        %3199 = vmatpush.bf16.msra.mxu0 %v2954
        %3200 = vmatpush.bf16.msra.mxu0 %v2952
        %3201 = vmatmul.bf16.gmra.mxu0 %v2785
        %v3202 = vpop.f32.mrf.mxu0
        %v3203 = vadd.f32 %v2852, %v3202
        %v3204 = vpop.f32.mrf.mxu0
        %v3205 = vadd.f32 %v2852, %v3204
        %3206 = vmatmul.bf16.gmra.mxu0 %v2787
        %v3207 = vpop.f32.mrf.mxu0
        %v3208 = vadd.f32 %v2852, %v3207
        %v3209 = vpop.f32.mrf.mxu0
        %v3210 = vadd.f32 %v2852, %v3209
        %3211 = vmatmul.bf16.gmra.mxu0 %v2789
        %v3212 = vpop.f32.mrf.mxu0
        %v3213 = vadd.f32 %v2852, %v3212
        %v3214 = vpop.f32.mrf.mxu0
        %v3215 = vadd.f32 %v2852, %v3214
        %3216 = vmatmul.bf16.gmra.mxu0 %v2791
        %v3217 = vpop.f32.mrf.mxu0
        %v3218 = vadd.f32 %v2852, %v3217
        %v3219 = vpop.f32.mrf.mxu0
        %v3220 = vadd.f32 %v2852, %v3219
        %3221 = vmatmul.bf16.gmra.mxu0 %v2793
        %v3222 = vpop.f32.mrf.mxu0
        %v3223 = vadd.f32 %v2852, %v3222
        %v3224 = vpop.f32.mrf.mxu0
        %v3225 = vadd.f32 %v2852, %v3224
        %3226 = vmatmul.bf16.gmra.mxu0 %v2795
        %v3227 = vpop.f32.mrf.mxu0
        %v3228 = vadd.f32 %v2852, %v3227
        %v3229 = vpop.f32.mrf.mxu0
        %v3230 = vadd.f32 %v2852, %v3229
        %3231 = vmatmul.bf16.gmra.mxu0 %v2797
        %v3232 = vpop.f32.mrf.mxu0
        %v3233 = vadd.f32 %v2852, %v3232
        %v3234 = vpop.f32.mrf.mxu0
        %v3235 = vadd.f32 %v2852, %v3234
        %3236 = vmatmul.bf16.gmra.mxu0 %v2799
        %v3237 = vpop.f32.mrf.mxu0
        %v3238 = vadd.f32 %v2852, %v3237
        %v3239 = vpop.f32.mrf.mxu0
        %v3240 = vadd.f32 %v2852, %v3239
        %3241 = vmatmul.bf16.gmra.mxu0 %v2801
        %v3242 = vpop.f32.mrf.mxu0
        %v3243 = vadd.f32 %v2852, %v3242
        %v3244 = vpop.f32.mrf.mxu0
        %v3245 = vadd.f32 %v2852, %v3244
        %3246 = vmatmul.bf16.gmra.mxu0 %v2803
        %v3247 = vpop.f32.mrf.mxu0
        %v3248 = vadd.f32 %v2852, %v3247
        %v3249 = vpop.f32.mrf.mxu0
        %v3250 = vadd.f32 %v2852, %v3249
        %3251 = vmatmul.bf16.gmra.mxu0 %v2805
        %v3252 = vpop.f32.mrf.mxu0
        %v3253 = vadd.f32 %v2852, %v3252
        %v3254 = vpop.f32.mrf.mxu0
        %v3255 = vadd.f32 %v2852, %v3254
        %3256 = vmatmul.bf16.gmra.mxu0 %v2807
        %v3257 = vpop.f32.mrf.mxu0
        %v3258 = vadd.f32 %v2852, %v3257
        %v3259 = vpop.f32.mrf.mxu0
        %v3260 = vadd.f32 %v2852, %v3259
        %3261 = vmatmul.bf16.gmra.mxu0 %v2809
        %v3262 = vpop.f32.mrf.mxu0
        %v3263 = vadd.f32 %v2852, %v3262
        %v3264 = vpop.f32.mrf.mxu0
        %v3265 = vadd.f32 %v2852, %v3264
        %3266 = vmatmul.bf16.gmra.mxu0 %v2811
        %v3267 = vpop.f32.mrf.mxu0
        %v3268 = vadd.f32 %v2852, %v3267
        %v3269 = vpop.f32.mrf.mxu0
        %v3270 = vadd.f32 %v2852, %v3269
        %3271 = vmatmul.bf16.gmra.mxu0 %v2813
        %v3272 = vpop.f32.mrf.mxu0
        %v3273 = vadd.f32 %v2852, %v3272
        %v3274 = vpop.f32.mrf.mxu0
        %v3275 = vadd.f32 %v2852, %v3274
        %3276 = vmatmul.bf16.gmra.mxu0 %v2815
        %v3277 = vpop.f32.mrf.mxu0
        %v3278 = vadd.f32 %v2852, %v3277
        %v3279 = vpop.f32.mrf.mxu0
        %v3280 = vadd.f32 %v2852, %v3279
        %3281 = vdwg.mxu0
        %3282 = vmatpush.bf16.msra.mxu0 %v2982
        %3283 = vmatpush.bf16.msra.mxu0 %v2980
        %3284 = vmatpush.bf16.msra.mxu0 %v2978
        %3285 = vmatpush.bf16.msra.mxu0 %v2976
        %3286 = vmatpush.bf16.msra.mxu0 %v2974
        %3287 = vmatpush.bf16.msra.mxu0 %v2972
        %3288 = vmatpush.bf16.msra.mxu0 %v2970
        %3289 = vmatpush.bf16.msra.mxu0 %v2968
        %3290 = vmatmul.bf16.gmra.mxu0 %v2786
        %v3291 = vpop.f32.mrf.mxu0
        %v3292 = vadd.f32 %v3203, %v3291
        %v3293 = vpop.f32.mrf.mxu0
        %v3294 = vadd.f32 %v3205, %v3293
        %3295 = vmatmul.bf16.gmra.mxu0 %v2788
        %v3296 = vpop.f32.mrf.mxu0
        %v3297 = vadd.f32 %v3208, %v3296
        %v3298 = vpop.f32.mrf.mxu0
        %v3299 = vadd.f32 %v3210, %v3298
        %3300 = vmatmul.bf16.gmra.mxu0 %v2790
        %v3301 = vpop.f32.mrf.mxu0
        %v3302 = vadd.f32 %v3213, %v3301
        %v3303 = vpop.f32.mrf.mxu0
        %v3304 = vadd.f32 %v3215, %v3303
        %3305 = vmatmul.bf16.gmra.mxu0 %v2792
        %v3306 = vpop.f32.mrf.mxu0
        %v3307 = vadd.f32 %v3218, %v3306
        %v3308 = vpop.f32.mrf.mxu0
        %v3309 = vadd.f32 %v3220, %v3308
        %3310 = vmatmul.bf16.gmra.mxu0 %v2794
        %v3311 = vpop.f32.mrf.mxu0
        %v3312 = vadd.f32 %v3223, %v3311
        %v3313 = vpop.f32.mrf.mxu0
        %v3314 = vadd.f32 %v3225, %v3313
        %3315 = vmatmul.bf16.gmra.mxu0 %v2796
        %v3316 = vpop.f32.mrf.mxu0
        %v3317 = vadd.f32 %v3228, %v3316
        %v3318 = vpop.f32.mrf.mxu0
        %v3319 = vadd.f32 %v3230, %v3318
        %3320 = vmatmul.bf16.gmra.mxu0 %v2798
        %v3321 = vpop.f32.mrf.mxu0
        %v3322 = vadd.f32 %v3233, %v3321
        %v3323 = vpop.f32.mrf.mxu0
        %v3324 = vadd.f32 %v3235, %v3323
        %3325 = vmatmul.bf16.gmra.mxu0 %v2800
        %v3326 = vpop.f32.mrf.mxu0
        %v3327 = vadd.f32 %v3238, %v3326
        %v3328 = vpop.f32.mrf.mxu0
        %v3329 = vadd.f32 %v3240, %v3328
        %3330 = vmatmul.bf16.gmra.mxu0 %v2802
        %v3331 = vpop.f32.mrf.mxu0
        %v3332 = vadd.f32 %v3243, %v3331
        %v3333 = vpop.f32.mrf.mxu0
        %v3334 = vadd.f32 %v3245, %v3333
        %3335 = vmatmul.bf16.gmra.mxu0 %v2804
        %v3336 = vpop.f32.mrf.mxu0
        %v3337 = vadd.f32 %v3248, %v3336
        %v3338 = vpop.f32.mrf.mxu0
        %v3339 = vadd.f32 %v3250, %v3338
        %3340 = vmatmul.bf16.gmra.mxu0 %v2806
        %v3341 = vpop.f32.mrf.mxu0
        %v3342 = vadd.f32 %v3253, %v3341
        %v3343 = vpop.f32.mrf.mxu0
        %v3344 = vadd.f32 %v3255, %v3343
        %3345 = vmatmul.bf16.gmra.mxu0 %v2808
        %v3346 = vpop.f32.mrf.mxu0
        %v3347 = vadd.f32 %v3258, %v3346
        %v3348 = vpop.f32.mrf.mxu0
        %v3349 = vadd.f32 %v3260, %v3348
        %3350 = vmatmul.bf16.gmra.mxu0 %v2810
        %v3351 = vpop.f32.mrf.mxu0
        %v3352 = vadd.f32 %v3263, %v3351
        %v3353 = vpop.f32.mrf.mxu0
        %v3354 = vadd.f32 %v3265, %v3353
        %3355 = vmatmul.bf16.gmra.mxu0 %v2812
        %v3356 = vpop.f32.mrf.mxu0
        %v3357 = vadd.f32 %v3268, %v3356
        %v3358 = vpop.f32.mrf.mxu0
        %v3359 = vadd.f32 %v3270, %v3358
        %3360 = vmatmul.bf16.gmra.mxu0 %v2814
        %v3361 = vpop.f32.mrf.mxu0
        %v3362 = vadd.f32 %v3273, %v3361
        %v3363 = vpop.f32.mrf.mxu0
        %v3364 = vadd.f32 %v3275, %v3363
        %3365 = vmatmul.bf16.gmra.mxu0 %v2816
        %v3366 = vpop.f32.mrf.mxu0
        %v3367 = vadd.f32 %v3278, %v3366
        %v3368 = vpop.f32.mrf.mxu0
        %v3369 = vadd.f32 %v3280, %v3368
        %3370 = vdwg.mxu0
        %v3371 = vld [vmem:[%s503] sm:$0xff]
        %v3372 = vld [vmem:[%s503 + $0x8] sm:$0xff]
        %v3373 = vld [vmem:[%s503 + $0x10] sm:$0xff]
        %v3374 = vld [vmem:[%s503 + $0x18] sm:$0xff]
        %v3375 = vld [vmem:[%s503 + $0x20] sm:$0xff]
        %v3376 = vld [vmem:[%s503 + $0x28] sm:$0xff]
        %v3377 = vld [vmem:[%s503 + $0x30] sm:$0xff]
        %v3378 = vld [vmem:[%s503 + $0x38] sm:$0xff]
        %v3379 = vld [vmem:[%s503 + $0x40] sm:$0xff]
        %v3380 = vld [vmem:[%s503 + $0x48] sm:$0xff]
        %v3381 = vld [vmem:[%s503 + $0x50] sm:$0xff]
        %v3382 = vld [vmem:[%s503 + $0x58] sm:$0xff]
        %v3383 = vld [vmem:[%s503 + $0x60] sm:$0xff]
        %v3384 = vld [vmem:[%s503 + $0x68] sm:$0xff]
        %v3385 = vld [vmem:[%s503 + $0x70] sm:$0xff]
        %v3386 = vld [vmem:[%s503 + $0x78] sm:$0xff]
        %v3387 = vld [vmem:[%s503 + $0x80] sm:$0xff]
        %v3388 = vld [vmem:[%s503 + $0x88] sm:$0xff]
        %v3389 = vld [vmem:[%s503 + $0x90] sm:$0xff]
        %v3390 = vld [vmem:[%s503 + $0x98] sm:$0xff]
        %v3391 = vld [vmem:[%s503 + $0xa0] sm:$0xff]
        %v3392 = vld [vmem:[%s503 + $0xa8] sm:$0xff]
        %v3393 = vld [vmem:[%s503 + $0xb0] sm:$0xff]
        %v3394 = vld [vmem:[%s503 + $0xb8] sm:$0xff]
        %v3395 = vld [vmem:[%s503 + $0xc0] sm:$0xff]
        %v3396 = vld [vmem:[%s503 + $0xc8] sm:$0xff]
        %v3397 = vld [vmem:[%s503 + $0xd0] sm:$0xff]
        %v3398 = vld [vmem:[%s503 + $0xd8] sm:$0xff]
        %v3399 = vld [vmem:[%s503 + $0xe0] sm:$0xff]
        %v3400 = vld [vmem:[%s503 + $0xe8] sm:$0xff]
        %v3401 = vld [vmem:[%s503 + $0xf0] sm:$0xff]
        %v3402 = vld [vmem:[%s503 + $0xf8] sm:$0xff]
        %v3403 = vmul.f32 %v3292, 0.5
        %v3404 = vmul.f32 %v3294, 0.5
        %v3405 = vmul.f32 %v3297, 0.5
        %v3406 = vmul.f32 %v3299, 0.5
        %v3407 = vmul.f32 %v3302, 0.5
        %v3408 = vmul.f32 %v3304, 0.5
        %v3409 = vmul.f32 %v3307, 0.5
        %v3410 = vmul.f32 %v3309, 0.5
        %v3411 = vmul.f32 %v3312, 0.5
        %v3412 = vmul.f32 %v3314, 0.5
        %v3413 = vmul.f32 %v3317, 0.5
        %v3414 = vmul.f32 %v3319, 0.5
        %v3415 = vmul.f32 %v3322, 0.5
        %v3416 = vmul.f32 %v3324, 0.5
        %v3417 = vmul.f32 %v3327, 0.5
        %v3418 = vmul.f32 %v3329, 0.5
        %v3419 = vmul.f32 %v3332, 0.5
        %v3420 = vmul.f32 %v3334, 0.5
        %v3421 = vmul.f32 %v3337, 0.5
        %v3422 = vmul.f32 %v3339, 0.5
        %v3423 = vmul.f32 %v3342, 0.5
        %v3424 = vmul.f32 %v3344, 0.5
        %v3425 = vmul.f32 %v3347, 0.5
        %v3426 = vmul.f32 %v3349, 0.5
        %v3427 = vmul.f32 %v3352, 0.5
        %v3428 = vmul.f32 %v3354, 0.5
        %v3429 = vmul.f32 %v3357, 0.5
        %v3430 = vmul.f32 %v3359, 0.5
        %v3431 = vmul.f32 %v3362, 0.5
        %v3432 = vmul.f32 %v3364, 0.5
        %v3433 = vmul.f32 %v3367, 0.5
        %v3434 = vmul.f32 %v3369, 0.5
        %v3435 = vmul.f32 %v3403, 1.442695
        %v3436 = vpow.pop %v3435
        %v3437 = vmul.f32 %v3404, 1.442695
        %v3438 = vpow.pop %v3437
        %v3439 = vmul.f32 %v3405, 1.442695
        %v3440 = vpow.pop %v3439
        %v3441 = vmul.f32 %v3406, 1.442695
        %v3442 = vpow.pop %v3441
        %v3443 = vmul.f32 %v3407, 1.442695
        %v3444 = vpow.pop %v3443
        %v3445 = vmul.f32 %v3408, 1.442695
        %v3446 = vpow.pop %v3445
        %v3447 = vmul.f32 %v3409, 1.442695
        %v3448 = vpow.pop %v3447
        %v3449 = vmul.f32 %v3410, 1.442695
        %v3450 = vpow.pop %v3449
        %v3451 = vmul.f32 %v3411, 1.442695
        %v3452 = vpow.pop %v3451
        %v3453 = vmul.f32 %v3412, 1.442695
        %v3454 = vpow.pop %v3453
        %v3455 = vmul.f32 %v3413, 1.442695
        %v3456 = vpow.pop %v3455
        %v3457 = vmul.f32 %v3414, 1.442695
        %v3458 = vpow.pop %v3457
        %v3459 = vmul.f32 %v3415, 1.442695
        %v3460 = vpow.pop %v3459
        %v3461 = vmul.f32 %v3416, 1.442695
        %v3462 = vpow.pop %v3461
        %v3463 = vmul.f32 %v3417, 1.442695
        %v3464 = vpow.pop %v3463
        %v3465 = vmul.f32 %v3418, 1.442695
        %v3466 = vpow.pop %v3465
        %v3467 = vmul.f32 %v3419, 1.442695
        %v3468 = vpow.pop %v3467
        %v3469 = vmul.f32 %v3420, 1.442695
        %v3470 = vpow.pop %v3469
        %v3471 = vmul.f32 %v3421, 1.442695
        %v3472 = vpow.pop %v3471
        %v3473 = vmul.f32 %v3422, 1.442695
        %v3474 = vpow.pop %v3473
        %v3475 = vmul.f32 %v3423, 1.442695
        %v3476 = vpow.pop %v3475
        %v3477 = vmul.f32 %v3424, 1.442695
        %v3478 = vpow.pop %v3477
        %v3479 = vmul.f32 %v3425, 1.442695
        %v3480 = vpow.pop %v3479
        %v3481 = vmul.f32 %v3426, 1.442695
        %v3482 = vpow.pop %v3481
        %v3483 = vmul.f32 %v3427, 1.442695
        %v3484 = vpow.pop %v3483
        %v3485 = vmul.f32 %v3428, 1.442695
        %v3486 = vpow.pop %v3485
        %v3487 = vmul.f32 %v3429, 1.442695
        %v3488 = vpow.pop %v3487
        %v3489 = vmul.f32 %v3430, 1.442695
        %v3490 = vpow.pop %v3489
        %v3491 = vmul.f32 %v3431, 1.442695
        %v3492 = vpow.pop %v3491
        %v3493 = vmul.f32 %v3432, 1.442695
        %v3494 = vpow.pop %v3493
        %v3495 = vmul.f32 %v3433, 1.442695
        %v3496 = vpow.pop %v3495
        %v3497 = vmul.f32 %v3434, 1.442695
        %v3498 = vpow.pop %v3497
        %v3499 = vmul.f32 %v3371, %v3436
        %v3500 = vmul.f32 %v3372, %v3438
        %v3501 = vmul.f32 %v3373, %v3440
        %v3502 = vmul.f32 %v3374, %v3442
        %v3503 = vmul.f32 %v3375, %v3444
        %v3504 = vmul.f32 %v3376, %v3446
        %v3505 = vmul.f32 %v3377, %v3448
        %v3506 = vmul.f32 %v3378, %v3450
        %v3507 = vmul.f32 %v3379, %v3452
        %v3508 = vmul.f32 %v3380, %v3454
        %v3509 = vmul.f32 %v3381, %v3456
        %v3510 = vmul.f32 %v3382, %v3458
        %v3511 = vmul.f32 %v3383, %v3460
        %v3512 = vmul.f32 %v3384, %v3462
        %v3513 = vmul.f32 %v3385, %v3464
        %v3514 = vmul.f32 %v3386, %v3466
        %v3515 = vmul.f32 %v3387, %v3468
        %v3516 = vmul.f32 %v3388, %v3470
        %v3517 = vmul.f32 %v3389, %v3472
        %v3518 = vmul.f32 %v3390, %v3474
        %v3519 = vmul.f32 %v3391, %v3476
        %v3520 = vmul.f32 %v3392, %v3478
        %v3521 = vmul.f32 %v3393, %v3480
        %v3522 = vmul.f32 %v3394, %v3482
        %v3523 = vmul.f32 %v3395, %v3484
        %v3524 = vmul.f32 %v3396, %v3486
        %v3525 = vmul.f32 %v3397, %v3488
        %v3526 = vmul.f32 %v3398, %v3490
        %v3527 = vmul.f32 %v3399, %v3492
        %v3528 = vmul.f32 %v3400, %v3494
        %v3529 = vmul.f32 %v3401, %v3496
        %v3530 = vmul.f32 %v3402, %v3498
        %v3531 = vadd.f32 %v3499, %v3114
        %v3532 = vadd.f32 %v3500, %v3116
        %v3533 = vadd.f32 %v3501, %v3119
        %v3534 = vadd.f32 %v3502, %v3121
        %v3535 = vadd.f32 %v3503, %v3124
        %v3536 = vadd.f32 %v3504, %v3126
        %v3537 = vadd.f32 %v3505, %v3129
        %v3538 = vadd.f32 %v3506, %v3131
        %v3539 = vadd.f32 %v3507, %v3134
        %v3540 = vadd.f32 %v3508, %v3136
        %v3541 = vadd.f32 %v3509, %v3139
        %v3542 = vadd.f32 %v3510, %v3141
        %v3543 = vadd.f32 %v3511, %v3144
        %v3544 = vadd.f32 %v3512, %v3146
        %v3545 = vadd.f32 %v3513, %v3149
        %v3546 = vadd.f32 %v3514, %v3151
        %v3547 = vadd.f32 %v3515, %v3154
        %v3548 = vadd.f32 %v3516, %v3156
        %v3549 = vadd.f32 %v3517, %v3159
        %v3550 = vadd.f32 %v3518, %v3161
        %v3551 = vadd.f32 %v3519, %v3164
        %v3552 = vadd.f32 %v3520, %v3166
        %v3553 = vadd.f32 %v3521, %v3169
        %v3554 = vadd.f32 %v3522, %v3171
        %v3555 = vadd.f32 %v3523, %v3174
        %v3556 = vadd.f32 %v3524, %v3176
        %v3557 = vadd.f32 %v3525, %v3179
        %v3558 = vadd.f32 %v3526, %v3181
        %v3559 = vadd.f32 %v3527, %v3184
        %v3560 = vadd.f32 %v3528, %v3186
        %v3561 = vadd.f32 %v3529, %v3189
        %v3562 = vadd.f32 %v3530, %v3191
        %v3563 = vpack.c.bf16 %v3532, %v3531
        %v3564 = vpack.c.bf16 %v3534, %v3533
        %v3565 = vpack.c.bf16 %v3536, %v3535
        %v3566 = vpack.c.bf16 %v3538, %v3537
        %v3567 = vpack.c.bf16 %v3540, %v3539
        %v3568 = vpack.c.bf16 %v3542, %v3541
        %v3569 = vpack.c.bf16 %v3544, %v3543
        %v3570 = vpack.c.bf16 %v3546, %v3545
        %v3571 = vpack.c.bf16 %v3548, %v3547
        %v3572 = vpack.c.bf16 %v3550, %v3549
        %v3573 = vpack.c.bf16 %v3552, %v3551
        %v3574 = vpack.c.bf16 %v3554, %v3553
        %v3575 = vpack.c.bf16 %v3556, %v3555
        %v3576 = vpack.c.bf16 %v3558, %v3557
        %v3577 = vpack.c.bf16 %v3560, %v3559
        %v3578 = vpack.c.bf16 %v3562, %v3561
        %v3579 = vld [vmem:[#allocation11] sm:$0xff]
        %v3580 = vld [vmem:[#allocation11 + $0x8] sm:$0xff]
        %v3581 = vld [vmem:[#allocation11 + $0x10] sm:$0xff]
        %v3582 = vld [vmem:[#allocation11 + $0x18] sm:$0xff]
        %v3583 = vld [vmem:[#allocation11 + $0x20] sm:$0xff]
        %v3584 = vld [vmem:[#allocation11 + $0x28] sm:$0xff]
        %v3585 = vld [vmem:[#allocation11 + $0x30] sm:$0xff]
        %v3586 = vld [vmem:[#allocation11 + $0x38] sm:$0xff]
        %v3587 = vld [vmem:[#allocation11 + $0x40] sm:$0xff]
        %v3588 = vld [vmem:[#allocation11 + $0x48] sm:$0xff]
        %v3589 = vld [vmem:[#allocation11 + $0x50] sm:$0xff]
        %v3590 = vld [vmem:[#allocation11 + $0x58] sm:$0xff]
        %v3591 = vld [vmem:[#allocation11 + $0x60] sm:$0xff]
        %v3592 = vld [vmem:[#allocation11 + $0x68] sm:$0xff]
        %v3593 = vld [vmem:[#allocation11 + $0x70] sm:$0xff]
        %v3594 = vld [vmem:[#allocation11 + $0x78] sm:$0xff]
        %v3595 = vld [vmem:[#allocation13] sm:$0x3]
        %v3597 = vperm.slane %v3595, 0
        %v3598 = vperm.slane %v3595, 1
        %v3617 = vunpack.c.l.b16 %v3579
        %v3618 = vunpack.c.h.b16 %v3579
        %v3619 = vunpack.c.l.b16 %v3580
        %v3620 = vunpack.c.h.b16 %v3580
        %v3621 = vunpack.c.l.b16 %v3581
        %v3622 = vunpack.c.h.b16 %v3581
        %v3623 = vunpack.c.l.b16 %v3582
        %v3624 = vunpack.c.h.b16 %v3582
        %v3625 = vunpack.c.l.b16 %v3583
        %v3626 = vunpack.c.h.b16 %v3583
        %v3627 = vunpack.c.l.b16 %v3584
        %v3628 = vunpack.c.h.b16 %v3584
        %v3629 = vunpack.c.l.b16 %v3585
        %v3630 = vunpack.c.h.b16 %v3585
        %v3631 = vunpack.c.l.b16 %v3586
        %v3632 = vunpack.c.h.b16 %v3586
        %v3633 = vunpack.c.l.b16 %v3587
        %v3634 = vunpack.c.h.b16 %v3587
        %v3635 = vunpack.c.l.b16 %v3588
        %v3636 = vunpack.c.h.b16 %v3588
        %v3637 = vunpack.c.l.b16 %v3589
        %v3638 = vunpack.c.h.b16 %v3589
        %v3639 = vunpack.c.l.b16 %v3590
        %v3640 = vunpack.c.h.b16 %v3590
        %v3641 = vunpack.c.l.b16 %v3591
        %v3642 = vunpack.c.h.b16 %v3591
        %v3643 = vunpack.c.l.b16 %v3592
        %v3644 = vunpack.c.h.b16 %v3592
        %v3645 = vunpack.c.l.b16 %v3593
        %v3646 = vunpack.c.h.b16 %v3593
        %v3647 = vunpack.c.l.b16 %v3594
        %v3648 = vunpack.c.h.b16 %v3594
        %v3649 = vpack.c.b16 %v3619, %v3617
        %v3650 = vpack.c.b16 %v3620, %v3618
        %v3651 = vpack.c.b16 %v3623, %v3621
        %v3652 = vpack.c.b16 %v3624, %v3622
        %v3653 = vpack.c.b16 %v3627, %v3625
        %v3654 = vpack.c.b16 %v3628, %v3626
        %v3655 = vpack.c.b16 %v3631, %v3629
        %v3656 = vpack.c.b16 %v3632, %v3630
        %v3657 = vpack.c.b16 %v3635, %v3633
        %v3658 = vpack.c.b16 %v3636, %v3634
        %v3659 = vpack.c.b16 %v3639, %v3637
        %v3660 = vpack.c.b16 %v3640, %v3638
        %v3661 = vpack.c.b16 %v3643, %v3641
        %v3662 = vpack.c.b16 %v3644, %v3642
        %v3663 = vpack.c.b16 %v3647, %v3645
        %v3664 = vpack.c.b16 %v3648, %v3646
        %3681 = vmatpush.bf16.msra.mxu0 %v3663
        %3682 = vmatpush.bf16.msra.mxu0 %v3661
        %3683 = vmatpush.bf16.msra.mxu0 %v3659
        %3684 = vmatpush.bf16.msra.mxu0 %v3657
        %3685 = vmatpush.bf16.msra.mxu0 %v3655
        %3686 = vmatpush.bf16.msra.mxu0 %v3653
        %3687 = vmatpush.bf16.msra.mxu0 %v3651
        %3688 = vmatpush.bf16.msra.mxu0 %v3649
        %3689 = vmatmul.bf16.gmra.mxu0 %v3563
        %v3690 = vpop.f32.mrf.mxu0
        %v3691 = vadd.f32 %v3597, %v3690
        %v3692 = vpop.f32.mrf.mxu0
        %v3693 = vadd.f32 %v3597, %v3692
        %3694 = vmatmul.bf16.gmra.mxu0 %v3564
        %v3695 = vpop.f32.mrf.mxu0
        %v3696 = vadd.f32 %v3597, %v3695
        %v3697 = vpop.f32.mrf.mxu0
        %v3698 = vadd.f32 %v3597, %v3697
        %3699 = vmatmul.bf16.gmra.mxu0 %v3565
        %v3700 = vpop.f32.mrf.mxu0
        %v3701 = vadd.f32 %v3597, %v3700
        %v3702 = vpop.f32.mrf.mxu0
        %v3703 = vadd.f32 %v3597, %v3702
        %3704 = vmatmul.bf16.gmra.mxu0 %v3566
        %v3705 = vpop.f32.mrf.mxu0
        %v3706 = vadd.f32 %v3597, %v3705
        %v3707 = vpop.f32.mrf.mxu0
        %v3708 = vadd.f32 %v3597, %v3707
        %3709 = vmatmul.bf16.gmra.mxu0 %v3567
        %v3710 = vpop.f32.mrf.mxu0
        %v3711 = vadd.f32 %v3597, %v3710
        %v3712 = vpop.f32.mrf.mxu0
        %v3713 = vadd.f32 %v3597, %v3712
        %3714 = vmatmul.bf16.gmra.mxu0 %v3568
        %v3715 = vpop.f32.mrf.mxu0
        %v3716 = vadd.f32 %v3597, %v3715
        %v3717 = vpop.f32.mrf.mxu0
        %v3718 = vadd.f32 %v3597, %v3717
        %3719 = vmatmul.bf16.gmra.mxu0 %v3569
        %v3720 = vpop.f32.mrf.mxu0
        %v3721 = vadd.f32 %v3597, %v3720
        %v3722 = vpop.f32.mrf.mxu0
        %v3723 = vadd.f32 %v3597, %v3722
        %3724 = vmatmul.bf16.gmra.mxu0 %v3570
        %v3725 = vpop.f32.mrf.mxu0
        %v3726 = vadd.f32 %v3597, %v3725
        %v3727 = vpop.f32.mrf.mxu0
        %v3728 = vadd.f32 %v3597, %v3727
        %3729 = vmatmul.bf16.gmra.mxu0 %v3571
        %v3730 = vpop.f32.mrf.mxu0
        %v3731 = vadd.f32 %v3597, %v3730
        %v3732 = vpop.f32.mrf.mxu0
        %v3733 = vadd.f32 %v3597, %v3732
        %3734 = vmatmul.bf16.gmra.mxu0 %v3572
        %v3735 = vpop.f32.mrf.mxu0
        %v3736 = vadd.f32 %v3597, %v3735
        %v3737 = vpop.f32.mrf.mxu0
        %v3738 = vadd.f32 %v3597, %v3737
        %3739 = vmatmul.bf16.gmra.mxu0 %v3573
        %v3740 = vpop.f32.mrf.mxu0
        %v3741 = vadd.f32 %v3597, %v3740
        %v3742 = vpop.f32.mrf.mxu0
        %v3743 = vadd.f32 %v3597, %v3742
        %3744 = vmatmul.bf16.gmra.mxu0 %v3574
        %v3745 = vpop.f32.mrf.mxu0
        %v3746 = vadd.f32 %v3597, %v3745
        %v3747 = vpop.f32.mrf.mxu0
        %v3748 = vadd.f32 %v3597, %v3747
        %3749 = vmatmul.bf16.gmra.mxu0 %v3575
        %v3750 = vpop.f32.mrf.mxu0
        %v3751 = vadd.f32 %v3597, %v3750
        %v3752 = vpop.f32.mrf.mxu0
        %v3753 = vadd.f32 %v3597, %v3752
        %3754 = vmatmul.bf16.gmra.mxu0 %v3576
        %v3755 = vpop.f32.mrf.mxu0
        %v3756 = vadd.f32 %v3597, %v3755
        %v3757 = vpop.f32.mrf.mxu0
        %v3758 = vadd.f32 %v3597, %v3757
        %3759 = vmatmul.bf16.gmra.mxu0 %v3577
        %v3760 = vpop.f32.mrf.mxu0
        %v3761 = vadd.f32 %v3597, %v3760
        %v3762 = vpop.f32.mrf.mxu0
        %v3763 = vadd.f32 %v3597, %v3762
        %3764 = vmatmul.bf16.gmra.mxu0 %v3578
        %v3765 = vpop.f32.mrf.mxu0
        %v3766 = vadd.f32 %v3597, %v3765
        %v3767 = vpop.f32.mrf.mxu0
        %v3768 = vadd.f32 %v3597, %v3767
        %3769 = vdwg.mxu0
        %3770 = vmatpush.bf16.msra.mxu0 %v3664
        %3771 = vmatpush.bf16.msra.mxu0 %v3662
        %3772 = vmatpush.bf16.msra.mxu0 %v3660
        %3773 = vmatpush.bf16.msra.mxu0 %v3658
        %3774 = vmatpush.bf16.msra.mxu0 %v3656
        %3775 = vmatpush.bf16.msra.mxu0 %v3654
        %3776 = vmatpush.bf16.msra.mxu0 %v3652
        %3777 = vmatpush.bf16.msra.mxu0 %v3650
        %3778 = vmatmul.bf16.gmra.mxu0 %v3563
        %v3779 = vpop.f32.mrf.mxu0
        %v3780 = vadd.f32 %v3598, %v3779
        %v3781 = vpop.f32.mrf.mxu0
        %v3782 = vadd.f32 %v3598, %v3781
        %3783 = vmatmul.bf16.gmra.mxu0 %v3564
        %v3784 = vpop.f32.mrf.mxu0
        %v3785 = vadd.f32 %v3598, %v3784
        %v3786 = vpop.f32.mrf.mxu0
        %v3787 = vadd.f32 %v3598, %v3786
        %3788 = vmatmul.bf16.gmra.mxu0 %v3565
        %v3789 = vpop.f32.mrf.mxu0
        %v3790 = vadd.f32 %v3598, %v3789
        %v3791 = vpop.f32.mrf.mxu0
        %v3792 = vadd.f32 %v3598, %v3791
        %3793 = vmatmul.bf16.gmra.mxu0 %v3566
        %v3794 = vpop.f32.mrf.mxu0
        %v3795 = vadd.f32 %v3598, %v3794
        %v3796 = vpop.f32.mrf.mxu0
        %v3797 = vadd.f32 %v3598, %v3796
        %3798 = vmatmul.bf16.gmra.mxu0 %v3567
        %v3799 = vpop.f32.mrf.mxu0
        %v3800 = vadd.f32 %v3598, %v3799
        %v3801 = vpop.f32.mrf.mxu0
        %v3802 = vadd.f32 %v3598, %v3801
        %3803 = vmatmul.bf16.gmra.mxu0 %v3568
        %v3804 = vpop.f32.mrf.mxu0
        %v3805 = vadd.f32 %v3598, %v3804
        %v3806 = vpop.f32.mrf.mxu0
        %v3807 = vadd.f32 %v3598, %v3806
        %3808 = vmatmul.bf16.gmra.mxu0 %v3569
        %v3809 = vpop.f32.mrf.mxu0
        %v3810 = vadd.f32 %v3598, %v3809
        %v3811 = vpop.f32.mrf.mxu0
        %v3812 = vadd.f32 %v3598, %v3811
        %3813 = vmatmul.bf16.gmra.mxu0 %v3570
        %v3814 = vpop.f32.mrf.mxu0
        %v3815 = vadd.f32 %v3598, %v3814
        %v3816 = vpop.f32.mrf.mxu0
        %v3817 = vadd.f32 %v3598, %v3816
        %3818 = vmatmul.bf16.gmra.mxu0 %v3571
        %v3819 = vpop.f32.mrf.mxu0
        %v3820 = vadd.f32 %v3598, %v3819
        %v3821 = vpop.f32.mrf.mxu0
        %v3822 = vadd.f32 %v3598, %v3821
        %3823 = vmatmul.bf16.gmra.mxu0 %v3572
        %v3824 = vpop.f32.mrf.mxu0
        %v3825 = vadd.f32 %v3598, %v3824
        %v3826 = vpop.f32.mrf.mxu0
        %v3827 = vadd.f32 %v3598, %v3826
        %3828 = vmatmul.bf16.gmra.mxu0 %v3573
        %v3829 = vpop.f32.mrf.mxu0
        %v3830 = vadd.f32 %v3598, %v3829
        %v3831 = vpop.f32.mrf.mxu0
        %v3832 = vadd.f32 %v3598, %v3831
        %3833 = vmatmul.bf16.gmra.mxu0 %v3574
        %v3834 = vpop.f32.mrf.mxu0
        %v3835 = vadd.f32 %v3598, %v3834
        %v3836 = vpop.f32.mrf.mxu0
        %v3837 = vadd.f32 %v3598, %v3836
        %3838 = vmatmul.bf16.gmra.mxu0 %v3575
        %v3839 = vpop.f32.mrf.mxu0
        %v3840 = vadd.f32 %v3598, %v3839
        %v3841 = vpop.f32.mrf.mxu0
        %v3842 = vadd.f32 %v3598, %v3841
        %3843 = vmatmul.bf16.gmra.mxu0 %v3576
        %v3844 = vpop.f32.mrf.mxu0
        %v3845 = vadd.f32 %v3598, %v3844
        %v3846 = vpop.f32.mrf.mxu0
        %v3847 = vadd.f32 %v3598, %v3846
        %3848 = vmatmul.bf16.gmra.mxu0 %v3577
        %v3849 = vpop.f32.mrf.mxu0
        %v3850 = vadd.f32 %v3598, %v3849
        %v3851 = vpop.f32.mrf.mxu0
        %v3852 = vadd.f32 %v3598, %v3851
        %3853 = vmatmul.bf16.gmra.mxu0 %v3578
        %v3854 = vpop.f32.mrf.mxu0
        %v3855 = vadd.f32 %v3598, %v3854
        %v3856 = vpop.f32.mrf.mxu0
        %v3857 = vadd.f32 %v3598, %v3856
        %3858 = vdwg.mxu0
        %v3859 = vtanh.pop %v3691
        %v3860 = vtanh.pop %v3780
        %v3861 = vtanh.pop %v3693
        %v3862 = vtanh.pop %v3782
        %v3863 = vtanh.pop %v3696
        %v3864 = vtanh.pop %v3785
        %v3865 = vtanh.pop %v3698
        %v3866 = vtanh.pop %v3787
        %v3867 = vtanh.pop %v3701
        %v3868 = vtanh.pop %v3790
        %v3869 = vtanh.pop %v3703
        %v3870 = vtanh.pop %v3792
        %v3871 = vtanh.pop %v3706
        %v3872 = vtanh.pop %v3795
        %v3873 = vtanh.pop %v3708
        %v3874 = vtanh.pop %v3797
        %v3875 = vtanh.pop %v3711
        %v3876 = vtanh.pop %v3800
        %v3877 = vtanh.pop %v3713
        %v3878 = vtanh.pop %v3802
        %v3879 = vtanh.pop %v3716
        %v3880 = vtanh.pop %v3805
        %v3881 = vtanh.pop %v3718
        %v3882 = vtanh.pop %v3807
        %v3883 = vtanh.pop %v3721
        %v3884 = vtanh.pop %v3810
        %v3885 = vtanh.pop %v3723
        %v3886 = vtanh.pop %v3812
        %v3887 = vtanh.pop %v3726
        %v3888 = vtanh.pop %v3815
        %v3889 = vtanh.pop %v3728
        %v3890 = vtanh.pop %v3817
        %v3891 = vtanh.pop %v3731
        %v3892 = vtanh.pop %v3820
        %v3893 = vtanh.pop %v3733
        %v3894 = vtanh.pop %v3822
        %v3895 = vtanh.pop %v3736
        %v3896 = vtanh.pop %v3825
        %v3897 = vtanh.pop %v3738
        %v3898 = vtanh.pop %v3827
        %v3899 = vtanh.pop %v3741
        %v3900 = vtanh.pop %v3830
        %v3901 = vtanh.pop %v3743
        %v3902 = vtanh.pop %v3832
        %v3903 = vtanh.pop %v3746
        %v3904 = vtanh.pop %v3835
        %v3905 = vtanh.pop %v3748
        %v3906 = vtanh.pop %v3837
        %v3907 = vtanh.pop %v3751
        %v3908 = vtanh.pop %v3840
        %v3909 = vtanh.pop %v3753
        %v3910 = vtanh.pop %v3842
        %v3911 = vtanh.pop %v3756
        %v3912 = vtanh.pop %v3845
        %v3913 = vtanh.pop %v3758
        %v3914 = vtanh.pop %v3847
        %v3915 = vtanh.pop %v3761
        %v3916 = vtanh.pop %v3850
        %v3917 = vtanh.pop %v3763
        %v3918 = vtanh.pop %v3852
        %v3919 = vtanh.pop %v3766
        %v3920 = vtanh.pop %v3855
        %v3921 = vtanh.pop %v3768
        %v3922 = vtanh.pop %v3857
        %v3923 = vpack.c.bf16 %v3861, %v3859
        %v3924 = vpack.c.bf16 %v3862, %v3860
        %v3925 = vpack.c.bf16 %v3865, %v3863
        %v3926 = vpack.c.bf16 %v3866, %v3864
        %v3927 = vpack.c.bf16 %v3869, %v3867
        %v3928 = vpack.c.bf16 %v3870, %v3868
        %v3929 = vpack.c.bf16 %v3873, %v3871
        %v3930 = vpack.c.bf16 %v3874, %v3872
        %v3931 = vpack.c.bf16 %v3877, %v3875
        %v3932 = vpack.c.bf16 %v3878, %v3876
        %v3933 = vpack.c.bf16 %v3881, %v3879
        %v3934 = vpack.c.bf16 %v3882, %v3880
        %v3935 = vpack.c.bf16 %v3885, %v3883
        %v3936 = vpack.c.bf16 %v3886, %v3884
        %v3937 = vpack.c.bf16 %v3889, %v3887
        %v3938 = vpack.c.bf16 %v3890, %v3888
        %v3939 = vpack.c.bf16 %v3893, %v3891
        %v3940 = vpack.c.bf16 %v3894, %v3892
        %v3941 = vpack.c.bf16 %v3897, %v3895
        %v3942 = vpack.c.bf16 %v3898, %v3896
        %v3943 = vpack.c.bf16 %v3901, %v3899
        %v3944 = vpack.c.bf16 %v3902, %v3900
        %v3945 = vpack.c.bf16 %v3905, %v3903
        %v3946 = vpack.c.bf16 %v3906, %v3904
        %v3947 = vpack.c.bf16 %v3909, %v3907
        %v3948 = vpack.c.bf16 %v3910, %v3908
        %v3949 = vpack.c.bf16 %v3913, %v3911
        %v3950 = vpack.c.bf16 %v3914, %v3912
        %v3951 = vpack.c.bf16 %v3917, %v3915
        %v3952 = vpack.c.bf16 %v3918, %v3916
        %v3953 = vpack.c.bf16 %v3921, %v3919
        %v3954 = vpack.c.bf16 %v3922, %v3920
        %v3955 = vld [vmem:[#allocation14] sm:$0xff]
        %v3956 = vld [vmem:[#allocation14 + $0x8] sm:$0xff]
        %v3957 = vld [vmem:[#allocation14 + $0x10] sm:$0xff]
        %v3958 = vld [vmem:[#allocation14 + $0x18] sm:$0xff]
        %v3959 = vld [vmem:[#allocation14 + $0x20] sm:$0xff]
        %v3960 = vld [vmem:[#allocation14 + $0x28] sm:$0xff]
        %v3961 = vld [vmem:[#allocation14 + $0x30] sm:$0xff]
        %v3962 = vld [vmem:[#allocation14 + $0x38] sm:$0xff]
        %v3963 = vld [vmem:[#allocation14 + $0x40] sm:$0xff]
        %v3964 = vld [vmem:[#allocation14 + $0x48] sm:$0xff]
        %v3965 = vld [vmem:[#allocation14 + $0x50] sm:$0xff]
        %v3966 = vld [vmem:[#allocation14 + $0x58] sm:$0xff]
        %v3967 = vld [vmem:[#allocation14 + $0x60] sm:$0xff]
        %v3968 = vld [vmem:[#allocation14 + $0x68] sm:$0xff]
        %v3969 = vld [vmem:[#allocation14 + $0x70] sm:$0xff]
        %v3970 = vld [vmem:[#allocation14 + $0x78] sm:$0xff]
        %v3971 = vld [vmem:[#allocation14 + $0x80] sm:$0xff]
        %v3972 = vld [vmem:[#allocation14 + $0x88] sm:$0xff]
        %v3973 = vld [vmem:[#allocation14 + $0x90] sm:$0xff]
        %v3974 = vld [vmem:[#allocation14 + $0x98] sm:$0xff]
        %v3975 = vld [vmem:[#allocation14 + $0xa0] sm:$0xff]
        %v3976 = vld [vmem:[#allocation14 + $0xa8] sm:$0xff]
        %v3977 = vld [vmem:[#allocation14 + $0xb0] sm:$0xff]
        %v3978 = vld [vmem:[#allocation14 + $0xb8] sm:$0xff]
        %v3979 = vld [vmem:[#allocation14 + $0xc0] sm:$0xff]
        %v3980 = vld [vmem:[#allocation14 + $0xc8] sm:$0xff]
        %v3981 = vld [vmem:[#allocation14 + $0xd0] sm:$0xff]
        %v3982 = vld [vmem:[#allocation14 + $0xd8] sm:$0xff]
        %v3983 = vld [vmem:[#allocation14 + $0xe0] sm:$0xff]
        %v3984 = vld [vmem:[#allocation14 + $0xe8] sm:$0xff]
        %v3985 = vld [vmem:[#allocation14 + $0xf0] sm:$0xff]
        %v3986 = vld [vmem:[#allocation14 + $0xf8] sm:$0xff]
        %v3987 = vld [vmem:[#allocation14 + $0x100] sm:$0xff]
        %v3988 = vld [vmem:[#allocation14 + $0x108] sm:$0xff]
        %v3989 = vld [vmem:[#allocation14 + $0x110] sm:$0xff]
        %v3990 = vld [vmem:[#allocation14 + $0x118] sm:$0xff]
        %v3991 = vld [vmem:[#allocation14 + $0x120] sm:$0xff]
        %v3992 = vld [vmem:[#allocation14 + $0x128] sm:$0xff]
        %v3993 = vld [vmem:[#allocation14 + $0x130] sm:$0xff]
        %v3994 = vld [vmem:[#allocation14 + $0x138] sm:$0xff]
        %v3995 = vld [vmem:[#allocation14 + $0x140] sm:$0xff]
        %v3996 = vld [vmem:[#allocation14 + $0x148] sm:$0xff]
        %v3997 = vld [vmem:[#allocation14 + $0x150] sm:$0xff]
        %v3998 = vld [vmem:[#allocation14 + $0x158] sm:$0xff]
        %v3999 = vld [vmem:[#allocation14 + $0x160] sm:$0xff]
        %v4000 = vld [vmem:[#allocation14 + $0x168] sm:$0xff]
        %v4001 = vld [vmem:[#allocation14 + $0x170] sm:$0xff]
        %v4002 = vld [vmem:[#allocation14 + $0x178] sm:$0xff]
        %v4003 = vld [vmem:[#allocation14 + $0x180] sm:$0xff]
        %v4004 = vld [vmem:[#allocation14 + $0x188] sm:$0xff]
        %v4005 = vld [vmem:[#allocation14 + $0x190] sm:$0xff]
        %v4006 = vld [vmem:[#allocation14 + $0x198] sm:$0xff]
        %v4007 = vld [vmem:[#allocation14 + $0x1a0] sm:$0xff]
        %v4008 = vld [vmem:[#allocation14 + $0x1a8] sm:$0xff]
        %v4009 = vld [vmem:[#allocation14 + $0x1b0] sm:$0xff]
        %v4010 = vld [vmem:[#allocation14 + $0x1b8] sm:$0xff]
        %v4011 = vld [vmem:[#allocation14 + $0x1c0] sm:$0xff]
        %v4012 = vld [vmem:[#allocation14 + $0x1c8] sm:$0xff]
        %v4013 = vld [vmem:[#allocation14 + $0x1d0] sm:$0xff]
        %v4014 = vld [vmem:[#allocation14 + $0x1d8] sm:$0xff]
        %v4015 = vld [vmem:[#allocation14 + $0x1e0] sm:$0xff]
        %v4016 = vld [vmem:[#allocation14 + $0x1e8] sm:$0xff]
        %v4017 = vld [vmem:[#allocation14 + $0x1f0] sm:$0xff]
        %v4018 = vld [vmem:[#allocation14 + $0x1f8] sm:$0xff]
        %v4019 = vld [vmem:[%s9] sm:$0xf]
        %v4021 = vperm.slane %v4019, 0
        %v4022 = vperm.slane %v4019, 1
        %v4023 = vperm.slane %v4019, 2
        %v4024 = vperm.slane %v4019, 3
        %v4093 = vunpack.c.l.b16 %v3955
        %v4094 = vunpack.c.h.b16 %v3955
        %v4095 = vunpack.c.l.b16 %v3956
        %v4096 = vunpack.c.h.b16 %v3956
        %v4097 = vunpack.c.l.b16 %v3957
        %v4098 = vunpack.c.h.b16 %v3957
        %v4099 = vunpack.c.l.b16 %v3958
        %v4100 = vunpack.c.h.b16 %v3958
        %v4101 = vunpack.c.l.b16 %v3959
        %v4102 = vunpack.c.h.b16 %v3959
        %v4103 = vunpack.c.l.b16 %v3960
        %v4104 = vunpack.c.h.b16 %v3960
        %v4105 = vunpack.c.l.b16 %v3961
        %v4106 = vunpack.c.h.b16 %v3961
        %v4107 = vunpack.c.l.b16 %v3962
        %v4108 = vunpack.c.h.b16 %v3962
        %v4109 = vunpack.c.l.b16 %v3963
        %v4110 = vunpack.c.h.b16 %v3963
        %v4111 = vunpack.c.l.b16 %v3964
        %v4112 = vunpack.c.h.b16 %v3964
        %v4113 = vunpack.c.l.b16 %v3965
        %v4114 = vunpack.c.h.b16 %v3965
        %v4115 = vunpack.c.l.b16 %v3966
        %v4116 = vunpack.c.h.b16 %v3966
        %v4117 = vunpack.c.l.b16 %v3967
        %v4118 = vunpack.c.h.b16 %v3967
        %v4119 = vunpack.c.l.b16 %v3968
        %v4120 = vunpack.c.h.b16 %v3968
        %v4121 = vunpack.c.l.b16 %v3969
        %v4122 = vunpack.c.h.b16 %v3969
        %v4123 = vunpack.c.l.b16 %v3970
        %v4124 = vunpack.c.h.b16 %v3970
        %v4125 = vunpack.c.l.b16 %v3971
        %v4126 = vunpack.c.h.b16 %v3971
        %v4127 = vunpack.c.l.b16 %v3972
        %v4128 = vunpack.c.h.b16 %v3972
        %v4129 = vunpack.c.l.b16 %v3973
        %v4130 = vunpack.c.h.b16 %v3973
        %v4131 = vunpack.c.l.b16 %v3974
        %v4132 = vunpack.c.h.b16 %v3974
        %v4133 = vunpack.c.l.b16 %v3975
        %v4134 = vunpack.c.h.b16 %v3975
        %v4135 = vunpack.c.l.b16 %v3976
        %v4136 = vunpack.c.h.b16 %v3976
        %v4137 = vunpack.c.l.b16 %v3977
        %v4138 = vunpack.c.h.b16 %v3977
        %v4139 = vunpack.c.l.b16 %v3978
        %v4140 = vunpack.c.h.b16 %v3978
        %v4141 = vunpack.c.l.b16 %v3979
        %v4142 = vunpack.c.h.b16 %v3979
        %v4143 = vunpack.c.l.b16 %v3980
        %v4144 = vunpack.c.h.b16 %v3980
        %v4145 = vunpack.c.l.b16 %v3981
        %v4146 = vunpack.c.h.b16 %v3981
        %v4147 = vunpack.c.l.b16 %v3982
        %v4148 = vunpack.c.h.b16 %v3982
        %v4149 = vunpack.c.l.b16 %v3983
        %v4150 = vunpack.c.h.b16 %v3983
        %v4151 = vunpack.c.l.b16 %v3984
        %v4152 = vunpack.c.h.b16 %v3984
        %v4153 = vunpack.c.l.b16 %v3985
        %v4154 = vunpack.c.h.b16 %v3985
        %v4155 = vunpack.c.l.b16 %v3986
        %v4156 = vunpack.c.h.b16 %v3986
        %v4157 = vunpack.c.l.b16 %v3987
        %v4158 = vunpack.c.h.b16 %v3987
        %v4159 = vunpack.c.l.b16 %v3988
        %v4160 = vunpack.c.h.b16 %v3988
        %v4161 = vunpack.c.l.b16 %v3989
        %v4162 = vunpack.c.h.b16 %v3989
        %v4163 = vunpack.c.l.b16 %v3990
        %v4164 = vunpack.c.h.b16 %v3990
        %v4165 = vunpack.c.l.b16 %v3991
        %v4166 = vunpack.c.h.b16 %v3991
        %v4167 = vunpack.c.l.b16 %v3992
        %v4168 = vunpack.c.h.b16 %v3992
        %v4169 = vunpack.c.l.b16 %v3993
        %v4170 = vunpack.c.h.b16 %v3993
        %v4171 = vunpack.c.l.b16 %v3994
        %v4172 = vunpack.c.h.b16 %v3994
        %v4173 = vunpack.c.l.b16 %v3995
        %v4174 = vunpack.c.h.b16 %v3995
        %v4175 = vunpack.c.l.b16 %v3996
        %v4176 = vunpack.c.h.b16 %v3996
        %v4177 = vunpack.c.l.b16 %v3997
        %v4178 = vunpack.c.h.b16 %v3997
        %v4179 = vunpack.c.l.b16 %v3998
        %v4180 = vunpack.c.h.b16 %v3998
        %v4181 = vunpack.c.l.b16 %v3999
        %v4182 = vunpack.c.h.b16 %v3999
        %v4183 = vunpack.c.l.b16 %v4000
        %v4184 = vunpack.c.h.b16 %v4000
        %v4185 = vunpack.c.l.b16 %v4001
        %v4186 = vunpack.c.h.b16 %v4001
        %v4187 = vunpack.c.l.b16 %v4002
        %v4188 = vunpack.c.h.b16 %v4002
        %v4189 = vunpack.c.l.b16 %v4003
        %v4190 = vunpack.c.h.b16 %v4003
        %v4191 = vunpack.c.l.b16 %v4004
        %v4192 = vunpack.c.h.b16 %v4004
        %v4193 = vunpack.c.l.b16 %v4005
        %v4194 = vunpack.c.h.b16 %v4005
        %v4195 = vunpack.c.l.b16 %v4006
        %v4196 = vunpack.c.h.b16 %v4006
        %v4197 = vunpack.c.l.b16 %v4007
        %v4198 = vunpack.c.h.b16 %v4007
        %v4199 = vunpack.c.l.b16 %v4008
        %v4200 = vunpack.c.h.b16 %v4008
        %v4201 = vunpack.c.l.b16 %v4009
        %v4202 = vunpack.c.h.b16 %v4009
        %v4203 = vunpack.c.l.b16 %v4010
        %v4204 = vunpack.c.h.b16 %v4010
        %v4205 = vunpack.c.l.b16 %v4011
        %v4206 = vunpack.c.h.b16 %v4011
        %v4207 = vunpack.c.l.b16 %v4012
        %v4208 = vunpack.c.h.b16 %v4012
        %v4209 = vunpack.c.l.b16 %v4013
        %v4210 = vunpack.c.h.b16 %v4013
        %v4211 = vunpack.c.l.b16 %v4014
        %v4212 = vunpack.c.h.b16 %v4014
        %v4213 = vunpack.c.l.b16 %v4015
        %v4214 = vunpack.c.h.b16 %v4015
        %v4215 = vunpack.c.l.b16 %v4016
        %v4216 = vunpack.c.h.b16 %v4016
        %v4217 = vunpack.c.l.b16 %v4017
        %v4218 = vunpack.c.h.b16 %v4017
        %v4219 = vunpack.c.l.b16 %v4018
        %v4220 = vunpack.c.h.b16 %v4018
        %v4221 = vpack.c.b16 %v4097, %v4093
        %v4222 = vpack.c.b16 %v4098, %v4094
        %v4223 = vpack.c.b16 %v4099, %v4095
        %v4224 = vpack.c.b16 %v4100, %v4096
        %v4225 = vpack.c.b16 %v4105, %v4101
        %v4226 = vpack.c.b16 %v4106, %v4102
        %v4227 = vpack.c.b16 %v4107, %v4103
        %v4228 = vpack.c.b16 %v4108, %v4104
        %v4229 = vpack.c.b16 %v4113, %v4109
        %v4230 = vpack.c.b16 %v4114, %v4110
        %v4231 = vpack.c.b16 %v4115, %v4111
        %v4232 = vpack.c.b16 %v4116, %v4112
        %v4233 = vpack.c.b16 %v4121, %v4117
        %v4234 = vpack.c.b16 %v4122, %v4118
        %v4235 = vpack.c.b16 %v4123, %v4119
        %v4236 = vpack.c.b16 %v4124, %v4120
        %v4237 = vpack.c.b16 %v4129, %v4125
        %v4238 = vpack.c.b16 %v4130, %v4126
        %v4239 = vpack.c.b16 %v4131, %v4127
        %v4240 = vpack.c.b16 %v4132, %v4128
        %v4241 = vpack.c.b16 %v4137, %v4133
        %v4242 = vpack.c.b16 %v4138, %v4134
        %v4243 = vpack.c.b16 %v4139, %v4135
        %v4244 = vpack.c.b16 %v4140, %v4136
        %v4245 = vpack.c.b16 %v4145, %v4141
        %v4246 = vpack.c.b16 %v4146, %v4142
        %v4247 = vpack.c.b16 %v4147, %v4143
        %v4248 = vpack.c.b16 %v4148, %v4144
        %v4249 = vpack.c.b16 %v4153, %v4149
        %v4250 = vpack.c.b16 %v4154, %v4150
        %v4251 = vpack.c.b16 %v4155, %v4151
        %v4252 = vpack.c.b16 %v4156, %v4152
        %v4253 = vpack.c.b16 %v4161, %v4157
        %v4254 = vpack.c.b16 %v4162, %v4158
        %v4255 = vpack.c.b16 %v4163, %v4159
        %v4256 = vpack.c.b16 %v4164, %v4160
        %v4257 = vpack.c.b16 %v4169, %v4165
        %v4258 = vpack.c.b16 %v4170, %v4166
        %v4259 = vpack.c.b16 %v4171, %v4167
        %v4260 = vpack.c.b16 %v4172, %v4168
        %v4261 = vpack.c.b16 %v4177, %v4173
        %v4262 = vpack.c.b16 %v4178, %v4174
        %v4263 = vpack.c.b16 %v4179, %v4175
        %v4264 = vpack.c.b16 %v4180, %v4176
        %v4265 = vpack.c.b16 %v4185, %v4181
        %v4266 = vpack.c.b16 %v4186, %v4182
        %v4267 = vpack.c.b16 %v4187, %v4183
        %v4268 = vpack.c.b16 %v4188, %v4184
        %v4269 = vpack.c.b16 %v4193, %v4189
        %v4270 = vpack.c.b16 %v4194, %v4190
        %v4271 = vpack.c.b16 %v4195, %v4191
        %v4272 = vpack.c.b16 %v4196, %v4192
        %v4273 = vpack.c.b16 %v4201, %v4197
        %v4274 = vpack.c.b16 %v4202, %v4198
        %v4275 = vpack.c.b16 %v4203, %v4199
        %v4276 = vpack.c.b16 %v4204, %v4200
        %v4277 = vpack.c.b16 %v4209, %v4205
        %v4278 = vpack.c.b16 %v4210, %v4206
        %v4279 = vpack.c.b16 %v4211, %v4207
        %v4280 = vpack.c.b16 %v4212, %v4208
        %v4281 = vpack.c.b16 %v4217, %v4213
        %v4282 = vpack.c.b16 %v4218, %v4214
        %v4283 = vpack.c.b16 %v4219, %v4215
        %v4284 = vpack.c.b16 %v4220, %v4216
        %4349 = vmatpush.bf16.msra.mxu0 %v4249
        %4350 = vmatpush.bf16.msra.mxu0 %v4245
        %4351 = vmatpush.bf16.msra.mxu0 %v4241
        %4352 = vmatpush.bf16.msra.mxu0 %v4237
        %4353 = vmatpush.bf16.msra.mxu0 %v4233
        %4354 = vmatpush.bf16.msra.mxu0 %v4229
        %4355 = vmatpush.bf16.msra.mxu0 %v4225
        %4356 = vmatpush.bf16.msra.mxu0 %v4221
        %4357 = vmatmul.bf16.gmra.mxu0 %v3923
        %v4358 = vpop.f32.mrf.mxu0
        %v4359 = vadd.f32 %v4021, %v4358
        %v4360 = vpop.f32.mrf.mxu0
        %v4361 = vadd.f32 %v4021, %v4360
        %4362 = vmatmul.bf16.gmra.mxu0 %v3925
        %v4363 = vpop.f32.mrf.mxu0
        %v4364 = vadd.f32 %v4021, %v4363
        %v4365 = vpop.f32.mrf.mxu0
        %v4366 = vadd.f32 %v4021, %v4365
        %4367 = vmatmul.bf16.gmra.mxu0 %v3927
        %v4368 = vpop.f32.mrf.mxu0
        %v4369 = vadd.f32 %v4021, %v4368
        %v4370 = vpop.f32.mrf.mxu0
        %v4371 = vadd.f32 %v4021, %v4370
        %4372 = vmatmul.bf16.gmra.mxu0 %v3929
        %v4373 = vpop.f32.mrf.mxu0
        %v4374 = vadd.f32 %v4021, %v4373
        %v4375 = vpop.f32.mrf.mxu0
        %v4376 = vadd.f32 %v4021, %v4375
        %4377 = vmatmul.bf16.gmra.mxu0 %v3931
        %v4378 = vpop.f32.mrf.mxu0
        %v4379 = vadd.f32 %v4021, %v4378
        %v4380 = vpop.f32.mrf.mxu0
        %v4381 = vadd.f32 %v4021, %v4380
        %4382 = vmatmul.bf16.gmra.mxu0 %v3933
        %v4383 = vpop.f32.mrf.mxu0
        %v4384 = vadd.f32 %v4021, %v4383
        %v4385 = vpop.f32.mrf.mxu0
        %v4386 = vadd.f32 %v4021, %v4385
        %4387 = vmatmul.bf16.gmra.mxu0 %v3935
        %v4388 = vpop.f32.mrf.mxu0
        %v4389 = vadd.f32 %v4021, %v4388
        %v4390 = vpop.f32.mrf.mxu0
        %v4391 = vadd.f32 %v4021, %v4390
        %4392 = vmatmul.bf16.gmra.mxu0 %v3937
        %v4393 = vpop.f32.mrf.mxu0
        %v4394 = vadd.f32 %v4021, %v4393
        %v4395 = vpop.f32.mrf.mxu0
        %v4396 = vadd.f32 %v4021, %v4395
        %4397 = vmatmul.bf16.gmra.mxu0 %v3939
        %v4398 = vpop.f32.mrf.mxu0
        %v4399 = vadd.f32 %v4021, %v4398
        %v4400 = vpop.f32.mrf.mxu0
        %v4401 = vadd.f32 %v4021, %v4400
        %4402 = vmatmul.bf16.gmra.mxu0 %v3941
        %v4403 = vpop.f32.mrf.mxu0
        %v4404 = vadd.f32 %v4021, %v4403
        %v4405 = vpop.f32.mrf.mxu0
        %v4406 = vadd.f32 %v4021, %v4405
        %4407 = vmatmul.bf16.gmra.mxu0 %v3943
        %v4408 = vpop.f32.mrf.mxu0
        %v4409 = vadd.f32 %v4021, %v4408
        %v4410 = vpop.f32.mrf.mxu0
        %v4411 = vadd.f32 %v4021, %v4410
        %4412 = vmatmul.bf16.gmra.mxu0 %v3945
        %v4413 = vpop.f32.mrf.mxu0
        %v4414 = vadd.f32 %v4021, %v4413
        %v4415 = vpop.f32.mrf.mxu0
        %v4416 = vadd.f32 %v4021, %v4415
        %4417 = vmatmul.bf16.gmra.mxu0 %v3947
        %v4418 = vpop.f32.mrf.mxu0
        %v4419 = vadd.f32 %v4021, %v4418
        %v4420 = vpop.f32.mrf.mxu0
        %v4421 = vadd.f32 %v4021, %v4420
        %4422 = vmatmul.bf16.gmra.mxu0 %v3949
        %v4423 = vpop.f32.mrf.mxu0
        %v4424 = vadd.f32 %v4021, %v4423
        %v4425 = vpop.f32.mrf.mxu0
        %v4426 = vadd.f32 %v4021, %v4425
        %4427 = vmatmul.bf16.gmra.mxu0 %v3951
        %v4428 = vpop.f32.mrf.mxu0
        %v4429 = vadd.f32 %v4021, %v4428
        %v4430 = vpop.f32.mrf.mxu0
        %v4431 = vadd.f32 %v4021, %v4430
        %4432 = vmatmul.bf16.gmra.mxu0 %v3953
        %v4433 = vpop.f32.mrf.mxu0
        %v4434 = vadd.f32 %v4021, %v4433
        %v4435 = vpop.f32.mrf.mxu0
        %v4436 = vadd.f32 %v4021, %v4435
        %4437 = vdwg.mxu0
        %4438 = vmatpush.bf16.msra.mxu0 %v4281
        %4439 = vmatpush.bf16.msra.mxu0 %v4277
        %4440 = vmatpush.bf16.msra.mxu0 %v4273
        %4441 = vmatpush.bf16.msra.mxu0 %v4269
        %4442 = vmatpush.bf16.msra.mxu0 %v4265
        %4443 = vmatpush.bf16.msra.mxu0 %v4261
        %4444 = vmatpush.bf16.msra.mxu0 %v4257
        %4445 = vmatpush.bf16.msra.mxu0 %v4253
        %4446 = vmatmul.bf16.gmra.mxu0 %v3924
        %v4447 = vpop.f32.mrf.mxu0
        %v4448 = vadd.f32 %v4359, %v4447
        %v4449 = vpop.f32.mrf.mxu0
        %v4450 = vadd.f32 %v4361, %v4449
        %4451 = vmatmul.bf16.gmra.mxu0 %v3926
        %v4452 = vpop.f32.mrf.mxu0
        %v4453 = vadd.f32 %v4364, %v4452
        %v4454 = vpop.f32.mrf.mxu0
        %v4455 = vadd.f32 %v4366, %v4454
        %4456 = vmatmul.bf16.gmra.mxu0 %v3928
        %v4457 = vpop.f32.mrf.mxu0
        %v4458 = vadd.f32 %v4369, %v4457
        %v4459 = vpop.f32.mrf.mxu0
        %v4460 = vadd.f32 %v4371, %v4459
        %4461 = vmatmul.bf16.gmra.mxu0 %v3930
        %v4462 = vpop.f32.mrf.mxu0
        %v4463 = vadd.f32 %v4374, %v4462
        %v4464 = vpop.f32.mrf.mxu0
        %v4465 = vadd.f32 %v4376, %v4464
        %4466 = vmatmul.bf16.gmra.mxu0 %v3932
        %v4467 = vpop.f32.mrf.mxu0
        %v4468 = vadd.f32 %v4379, %v4467
        %v4469 = vpop.f32.mrf.mxu0
        %v4470 = vadd.f32 %v4381, %v4469
        %4471 = vmatmul.bf16.gmra.mxu0 %v3934
        %v4472 = vpop.f32.mrf.mxu0
        %v4473 = vadd.f32 %v4384, %v4472
        %v4474 = vpop.f32.mrf.mxu0
        %v4475 = vadd.f32 %v4386, %v4474
        %4476 = vmatmul.bf16.gmra.mxu0 %v3936
        %v4477 = vpop.f32.mrf.mxu0
        %v4478 = vadd.f32 %v4389, %v4477
        %v4479 = vpop.f32.mrf.mxu0
        %v4480 = vadd.f32 %v4391, %v4479
        %4481 = vmatmul.bf16.gmra.mxu0 %v3938
        %v4482 = vpop.f32.mrf.mxu0
        %v4483 = vadd.f32 %v4394, %v4482
        %v4484 = vpop.f32.mrf.mxu0
        %v4485 = vadd.f32 %v4396, %v4484
        %4486 = vmatmul.bf16.gmra.mxu0 %v3940
        %v4487 = vpop.f32.mrf.mxu0
        %v4488 = vadd.f32 %v4399, %v4487
        %v4489 = vpop.f32.mrf.mxu0
        %v4490 = vadd.f32 %v4401, %v4489
        %4491 = vmatmul.bf16.gmra.mxu0 %v3942
        %v4492 = vpop.f32.mrf.mxu0
        %v4493 = vadd.f32 %v4404, %v4492
        %v4494 = vpop.f32.mrf.mxu0
        %v4495 = vadd.f32 %v4406, %v4494
        %4496 = vmatmul.bf16.gmra.mxu0 %v3944
        %v4497 = vpop.f32.mrf.mxu0
        %v4498 = vadd.f32 %v4409, %v4497
        %v4499 = vpop.f32.mrf.mxu0
        %v4500 = vadd.f32 %v4411, %v4499
        %4501 = vmatmul.bf16.gmra.mxu0 %v3946
        %v4502 = vpop.f32.mrf.mxu0
        %v4503 = vadd.f32 %v4414, %v4502
        %v4504 = vpop.f32.mrf.mxu0
        %v4505 = vadd.f32 %v4416, %v4504
        %4506 = vmatmul.bf16.gmra.mxu0 %v3948
        %v4507 = vpop.f32.mrf.mxu0
        %v4508 = vadd.f32 %v4419, %v4507
        %v4509 = vpop.f32.mrf.mxu0
        %v4510 = vadd.f32 %v4421, %v4509
        %4511 = vmatmul.bf16.gmra.mxu0 %v3950
        %v4512 = vpop.f32.mrf.mxu0
        %v4513 = vadd.f32 %v4424, %v4512
        %v4514 = vpop.f32.mrf.mxu0
        %v4515 = vadd.f32 %v4426, %v4514
        %4516 = vmatmul.bf16.gmra.mxu0 %v3952
        %v4517 = vpop.f32.mrf.mxu0
        %v4518 = vadd.f32 %v4429, %v4517
        %v4519 = vpop.f32.mrf.mxu0
        %v4520 = vadd.f32 %v4431, %v4519
        %4521 = vmatmul.bf16.gmra.mxu0 %v3954
        %v4522 = vpop.f32.mrf.mxu0
        %v4523 = vadd.f32 %v4434, %v4522
        %v4524 = vpop.f32.mrf.mxu0
        %v4525 = vadd.f32 %v4436, %v4524
        %4526 = vdwg.mxu0
        %4527 = vmatpush.bf16.msra.mxu0 %v4250
        %4528 = vmatpush.bf16.msra.mxu0 %v4246
        %4529 = vmatpush.bf16.msra.mxu0 %v4242
        %4530 = vmatpush.bf16.msra.mxu0 %v4238
        %4531 = vmatpush.bf16.msra.mxu0 %v4234
        %4532 = vmatpush.bf16.msra.mxu0 %v4230
        %4533 = vmatpush.bf16.msra.mxu0 %v4226
        %4534 = vmatpush.bf16.msra.mxu0 %v4222
        %4535 = vmatmul.bf16.gmra.mxu0 %v3923
        %v4536 = vpop.f32.mrf.mxu0
        %v4537 = vadd.f32 %v4022, %v4536
        %v4538 = vpop.f32.mrf.mxu0
        %v4539 = vadd.f32 %v4022, %v4538
        %4540 = vmatmul.bf16.gmra.mxu0 %v3925
        %v4541 = vpop.f32.mrf.mxu0
        %v4542 = vadd.f32 %v4022, %v4541
        %v4543 = vpop.f32.mrf.mxu0
        %v4544 = vadd.f32 %v4022, %v4543
        %4545 = vmatmul.bf16.gmra.mxu0 %v3927
        %v4546 = vpop.f32.mrf.mxu0
        %v4547 = vadd.f32 %v4022, %v4546
        %v4548 = vpop.f32.mrf.mxu0
        %v4549 = vadd.f32 %v4022, %v4548
        %4550 = vmatmul.bf16.gmra.mxu0 %v3929
        %v4551 = vpop.f32.mrf.mxu0
        %v4552 = vadd.f32 %v4022, %v4551
        %v4553 = vpop.f32.mrf.mxu0
        %v4554 = vadd.f32 %v4022, %v4553
        %4555 = vmatmul.bf16.gmra.mxu0 %v3931
        %v4556 = vpop.f32.mrf.mxu0
        %v4557 = vadd.f32 %v4022, %v4556
        %v4558 = vpop.f32.mrf.mxu0
        %v4559 = vadd.f32 %v4022, %v4558
        %4560 = vmatmul.bf16.gmra.mxu0 %v3933
        %v4561 = vpop.f32.mrf.mxu0
        %v4562 = vadd.f32 %v4022, %v4561
        %v4563 = vpop.f32.mrf.mxu0
        %v4564 = vadd.f32 %v4022, %v4563
        %4565 = vmatmul.bf16.gmra.mxu0 %v3935
        %v4566 = vpop.f32.mrf.mxu0
        %v4567 = vadd.f32 %v4022, %v4566
        %v4568 = vpop.f32.mrf.mxu0
        %v4569 = vadd.f32 %v4022, %v4568
        %4570 = vmatmul.bf16.gmra.mxu0 %v3937
        %v4571 = vpop.f32.mrf.mxu0
        %v4572 = vadd.f32 %v4022, %v4571
        %v4573 = vpop.f32.mrf.mxu0
        %v4574 = vadd.f32 %v4022, %v4573
        %4575 = vmatmul.bf16.gmra.mxu0 %v3939
        %v4576 = vpop.f32.mrf.mxu0
        %v4577 = vadd.f32 %v4022, %v4576
        %v4578 = vpop.f32.mrf.mxu0
        %v4579 = vadd.f32 %v4022, %v4578
        %4580 = vmatmul.bf16.gmra.mxu0 %v3941
        %v4581 = vpop.f32.mrf.mxu0
        %v4582 = vadd.f32 %v4022, %v4581
        %v4583 = vpop.f32.mrf.mxu0
        %v4584 = vadd.f32 %v4022, %v4583
        %4585 = vmatmul.bf16.gmra.mxu0 %v3943
        %v4586 = vpop.f32.mrf.mxu0
        %v4587 = vadd.f32 %v4022, %v4586
        %v4588 = vpop.f32.mrf.mxu0
        %v4589 = vadd.f32 %v4022, %v4588
        %4590 = vmatmul.bf16.gmra.mxu0 %v3945
        %v4591 = vpop.f32.mrf.mxu0
        %v4592 = vadd.f32 %v4022, %v4591
        %v4593 = vpop.f32.mrf.mxu0
        %v4594 = vadd.f32 %v4022, %v4593
        %4595 = vmatmul.bf16.gmra.mxu0 %v3947
        %v4596 = vpop.f32.mrf.mxu0
        %v4597 = vadd.f32 %v4022, %v4596
        %v4598 = vpop.f32.mrf.mxu0
        %v4599 = vadd.f32 %v4022, %v4598
        %4600 = vmatmul.bf16.gmra.mxu0 %v3949
        %v4601 = vpop.f32.mrf.mxu0
        %v4602 = vadd.f32 %v4022, %v4601
        %v4603 = vpop.f32.mrf.mxu0
        %v4604 = vadd.f32 %v4022, %v4603
        %4605 = vmatmul.bf16.gmra.mxu0 %v3951
        %v4606 = vpop.f32.mrf.mxu0
        %v4607 = vadd.f32 %v4022, %v4606
        %v4608 = vpop.f32.mrf.mxu0
        %v4609 = vadd.f32 %v4022, %v4608
        %4610 = vmatmul.bf16.gmra.mxu0 %v3953
        %v4611 = vpop.f32.mrf.mxu0
        %v4612 = vadd.f32 %v4022, %v4611
        %v4613 = vpop.f32.mrf.mxu0
        %v4614 = vadd.f32 %v4022, %v4613
        %4615 = vdwg.mxu0
        %4616 = vmatpush.bf16.msra.mxu0 %v4282
        %4617 = vmatpush.bf16.msra.mxu0 %v4278
        %4618 = vmatpush.bf16.msra.mxu0 %v4274
        %4619 = vmatpush.bf16.msra.mxu0 %v4270
        %4620 = vmatpush.bf16.msra.mxu0 %v4266
        %4621 = vmatpush.bf16.msra.mxu0 %v4262
        %4622 = vmatpush.bf16.msra.mxu0 %v4258
        %4623 = vmatpush.bf16.msra.mxu0 %v4254
        %4624 = vmatmul.bf16.gmra.mxu0 %v3924
        %v4625 = vpop.f32.mrf.mxu0
        %v4626 = vadd.f32 %v4537, %v4625
        %v4627 = vpop.f32.mrf.mxu0
        %v4628 = vadd.f32 %v4539, %v4627
        %4629 = vmatmul.bf16.gmra.mxu0 %v3926
        %v4630 = vpop.f32.mrf.mxu0
        %v4631 = vadd.f32 %v4542, %v4630
        %v4632 = vpop.f32.mrf.mxu0
        %v4633 = vadd.f32 %v4544, %v4632
        %4634 = vmatmul.bf16.gmra.mxu0 %v3928
        %v4635 = vpop.f32.mrf.mxu0
        %v4636 = vadd.f32 %v4547, %v4635
        %v4637 = vpop.f32.mrf.mxu0
        %v4638 = vadd.f32 %v4549, %v4637
        %4639 = vmatmul.bf16.gmra.mxu0 %v3930
        %v4640 = vpop.f32.mrf.mxu0
        %v4641 = vadd.f32 %v4552, %v4640
        %v4642 = vpop.f32.mrf.mxu0
        %v4643 = vadd.f32 %v4554, %v4642
        %4644 = vmatmul.bf16.gmra.mxu0 %v3932
        %v4645 = vpop.f32.mrf.mxu0
        %v4646 = vadd.f32 %v4557, %v4645
        %v4647 = vpop.f32.mrf.mxu0
        %v4648 = vadd.f32 %v4559, %v4647
        %4649 = vmatmul.bf16.gmra.mxu0 %v3934
        %v4650 = vpop.f32.mrf.mxu0
        %v4651 = vadd.f32 %v4562, %v4650
        %v4652 = vpop.f32.mrf.mxu0
        %v4653 = vadd.f32 %v4564, %v4652
        %4654 = vmatmul.bf16.gmra.mxu0 %v3936
        %v4655 = vpop.f32.mrf.mxu0
        %v4656 = vadd.f32 %v4567, %v4655
        %v4657 = vpop.f32.mrf.mxu0
        %v4658 = vadd.f32 %v4569, %v4657
        %4659 = vmatmul.bf16.gmra.mxu0 %v3938
        %v4660 = vpop.f32.mrf.mxu0
        %v4661 = vadd.f32 %v4572, %v4660
        %v4662 = vpop.f32.mrf.mxu0
        %v4663 = vadd.f32 %v4574, %v4662
        %4664 = vmatmul.bf16.gmra.mxu0 %v3940
        %v4665 = vpop.f32.mrf.mxu0
        %v4666 = vadd.f32 %v4577, %v4665
        %v4667 = vpop.f32.mrf.mxu0
        %v4668 = vadd.f32 %v4579, %v4667
        %4669 = vmatmul.bf16.gmra.mxu0 %v3942
        %v4670 = vpop.f32.mrf.mxu0
        %v4671 = vadd.f32 %v4582, %v4670
        %v4672 = vpop.f32.mrf.mxu0
        %v4673 = vadd.f32 %v4584, %v4672
        %4674 = vmatmul.bf16.gmra.mxu0 %v3944
        %v4675 = vpop.f32.mrf.mxu0
        %v4676 = vadd.f32 %v4587, %v4675
        %v4677 = vpop.f32.mrf.mxu0
        %v4678 = vadd.f32 %v4589, %v4677
        %4679 = vmatmul.bf16.gmra.mxu0 %v3946
        %v4680 = vpop.f32.mrf.mxu0
        %v4681 = vadd.f32 %v4592, %v4680
        %v4682 = vpop.f32.mrf.mxu0
        %v4683 = vadd.f32 %v4594, %v4682
        %4684 = vmatmul.bf16.gmra.mxu0 %v3948
        %v4685 = vpop.f32.mrf.mxu0
        %v4686 = vadd.f32 %v4597, %v4685
        %v4687 = vpop.f32.mrf.mxu0
        %v4688 = vadd.f32 %v4599, %v4687
        %4689 = vmatmul.bf16.gmra.mxu0 %v3950
        %v4690 = vpop.f32.mrf.mxu0
        %v4691 = vadd.f32 %v4602, %v4690
        %v4692 = vpop.f32.mrf.mxu0
        %v4693 = vadd.f32 %v4604, %v4692
        %4694 = vmatmul.bf16.gmra.mxu0 %v3952
        %v4695 = vpop.f32.mrf.mxu0
        %v4696 = vadd.f32 %v4607, %v4695
        %v4697 = vpop.f32.mrf.mxu0
        %v4698 = vadd.f32 %v4609, %v4697
        %4699 = vmatmul.bf16.gmra.mxu0 %v3954
        %v4700 = vpop.f32.mrf.mxu0
        %v4701 = vadd.f32 %v4612, %v4700
        %v4702 = vpop.f32.mrf.mxu0
        %v4703 = vadd.f32 %v4614, %v4702
        %4704 = vdwg.mxu0
        %4705 = vmatpush.bf16.msra.mxu0 %v4251
        %4706 = vmatpush.bf16.msra.mxu0 %v4247
        %4707 = vmatpush.bf16.msra.mxu0 %v4243
        %4708 = vmatpush.bf16.msra.mxu0 %v4239
        %4709 = vmatpush.bf16.msra.mxu0 %v4235
        %4710 = vmatpush.bf16.msra.mxu0 %v4231
        %4711 = vmatpush.bf16.msra.mxu0 %v4227
        %4712 = vmatpush.bf16.msra.mxu0 %v4223
        %4713 = vmatmul.bf16.gmra.mxu0 %v3923
        %v4714 = vpop.f32.mrf.mxu0
        %v4715 = vadd.f32 %v4023, %v4714
        %v4716 = vpop.f32.mrf.mxu0
        %v4717 = vadd.f32 %v4023, %v4716
        %4718 = vmatmul.bf16.gmra.mxu0 %v3925
        %v4719 = vpop.f32.mrf.mxu0
        %v4720 = vadd.f32 %v4023, %v4719
        %v4721 = vpop.f32.mrf.mxu0
        %v4722 = vadd.f32 %v4023, %v4721
        %4723 = vmatmul.bf16.gmra.mxu0 %v3927
        %v4724 = vpop.f32.mrf.mxu0
        %v4725 = vadd.f32 %v4023, %v4724
        %v4726 = vpop.f32.mrf.mxu0
        %v4727 = vadd.f32 %v4023, %v4726
        %4728 = vmatmul.bf16.gmra.mxu0 %v3929
        %v4729 = vpop.f32.mrf.mxu0
        %v4730 = vadd.f32 %v4023, %v4729
        %v4731 = vpop.f32.mrf.mxu0
        %v4732 = vadd.f32 %v4023, %v4731
        %4733 = vmatmul.bf16.gmra.mxu0 %v3931
        %v4734 = vpop.f32.mrf.mxu0
        %v4735 = vadd.f32 %v4023, %v4734
        %v4736 = vpop.f32.mrf.mxu0
        %v4737 = vadd.f32 %v4023, %v4736
        %4738 = vmatmul.bf16.gmra.mxu0 %v3933
        %v4739 = vpop.f32.mrf.mxu0
        %v4740 = vadd.f32 %v4023, %v4739
        %v4741 = vpop.f32.mrf.mxu0
        %v4742 = vadd.f32 %v4023, %v4741
        %4743 = vmatmul.bf16.gmra.mxu0 %v3935
        %v4744 = vpop.f32.mrf.mxu0
        %v4745 = vadd.f32 %v4023, %v4744
        %v4746 = vpop.f32.mrf.mxu0
        %v4747 = vadd.f32 %v4023, %v4746
        %4748 = vmatmul.bf16.gmra.mxu0 %v3937
        %v4749 = vpop.f32.mrf.mxu0
        %v4750 = vadd.f32 %v4023, %v4749
        %v4751 = vpop.f32.mrf.mxu0
        %v4752 = vadd.f32 %v4023, %v4751
        %4753 = vmatmul.bf16.gmra.mxu0 %v3939
        %v4754 = vpop.f32.mrf.mxu0
        %v4755 = vadd.f32 %v4023, %v4754
        %v4756 = vpop.f32.mrf.mxu0
        %v4757 = vadd.f32 %v4023, %v4756
        %4758 = vmatmul.bf16.gmra.mxu0 %v3941
        %v4759 = vpop.f32.mrf.mxu0
        %v4760 = vadd.f32 %v4023, %v4759
        %v4761 = vpop.f32.mrf.mxu0
        %v4762 = vadd.f32 %v4023, %v4761
        %4763 = vmatmul.bf16.gmra.mxu0 %v3943
        %v4764 = vpop.f32.mrf.mxu0
        %v4765 = vadd.f32 %v4023, %v4764
        %v4766 = vpop.f32.mrf.mxu0
        %v4767 = vadd.f32 %v4023, %v4766
        %4768 = vmatmul.bf16.gmra.mxu0 %v3945
        %v4769 = vpop.f32.mrf.mxu0
        %v4770 = vadd.f32 %v4023, %v4769
        %v4771 = vpop.f32.mrf.mxu0
        %v4772 = vadd.f32 %v4023, %v4771
        %4773 = vmatmul.bf16.gmra.mxu0 %v3947
        %v4774 = vpop.f32.mrf.mxu0
        %v4775 = vadd.f32 %v4023, %v4774
        %v4776 = vpop.f32.mrf.mxu0
        %v4777 = vadd.f32 %v4023, %v4776
        %4778 = vmatmul.bf16.gmra.mxu0 %v3949
        %v4779 = vpop.f32.mrf.mxu0
        %v4780 = vadd.f32 %v4023, %v4779
        %v4781 = vpop.f32.mrf.mxu0
        %v4782 = vadd.f32 %v4023, %v4781
        %4783 = vmatmul.bf16.gmra.mxu0 %v3951
        %v4784 = vpop.f32.mrf.mxu0
        %v4785 = vadd.f32 %v4023, %v4784
        %v4786 = vpop.f32.mrf.mxu0
        %v4787 = vadd.f32 %v4023, %v4786
        %4788 = vmatmul.bf16.gmra.mxu0 %v3953
        %v4789 = vpop.f32.mrf.mxu0
        %v4790 = vadd.f32 %v4023, %v4789
        %v4791 = vpop.f32.mrf.mxu0
        %v4792 = vadd.f32 %v4023, %v4791
        %4793 = vdwg.mxu0
        %4794 = vmatpush.bf16.msra.mxu0 %v4283
        %4795 = vmatpush.bf16.msra.mxu0 %v4279
        %4796 = vmatpush.bf16.msra.mxu0 %v4275
        %4797 = vmatpush.bf16.msra.mxu0 %v4271
        %4798 = vmatpush.bf16.msra.mxu0 %v4267
        %4799 = vmatpush.bf16.msra.mxu0 %v4263
        %4800 = vmatpush.bf16.msra.mxu0 %v4259
        %4801 = vmatpush.bf16.msra.mxu0 %v4255
        %4802 = vmatmul.bf16.gmra.mxu0 %v3924
        %v4803 = vpop.f32.mrf.mxu0
        %v4804 = vadd.f32 %v4715, %v4803
        %v4805 = vpop.f32.mrf.mxu0
        %v4806 = vadd.f32 %v4717, %v4805
        %4807 = vmatmul.bf16.gmra.mxu0 %v3926
        %v4808 = vpop.f32.mrf.mxu0
        %v4809 = vadd.f32 %v4720, %v4808
        %v4810 = vpop.f32.mrf.mxu0
        %v4811 = vadd.f32 %v4722, %v4810
        %4812 = vmatmul.bf16.gmra.mxu0 %v3928
        %v4813 = vpop.f32.mrf.mxu0
        %v4814 = vadd.f32 %v4725, %v4813
        %v4815 = vpop.f32.mrf.mxu0
        %v4816 = vadd.f32 %v4727, %v4815
        %4817 = vmatmul.bf16.gmra.mxu0 %v3930
        %v4818 = vpop.f32.mrf.mxu0
        %v4819 = vadd.f32 %v4730, %v4818
        %v4820 = vpop.f32.mrf.mxu0
        %v4821 = vadd.f32 %v4732, %v4820
        %4822 = vmatmul.bf16.gmra.mxu0 %v3932
        %v4823 = vpop.f32.mrf.mxu0
        %v4824 = vadd.f32 %v4735, %v4823
        %v4825 = vpop.f32.mrf.mxu0
        %v4826 = vadd.f32 %v4737, %v4825
        %4827 = vmatmul.bf16.gmra.mxu0 %v3934
        %v4828 = vpop.f32.mrf.mxu0
        %v4829 = vadd.f32 %v4740, %v4828
        %v4830 = vpop.f32.mrf.mxu0
        %v4831 = vadd.f32 %v4742, %v4830
        %4832 = vmatmul.bf16.gmra.mxu0 %v3936
        %v4833 = vpop.f32.mrf.mxu0
        %v4834 = vadd.f32 %v4745, %v4833
        %v4835 = vpop.f32.mrf.mxu0
        %v4836 = vadd.f32 %v4747, %v4835
        %4837 = vmatmul.bf16.gmra.mxu0 %v3938
        %v4838 = vpop.f32.mrf.mxu0
        %v4839 = vadd.f32 %v4750, %v4838
        %v4840 = vpop.f32.mrf.mxu0
        %v4841 = vadd.f32 %v4752, %v4840
        %4842 = vmatmul.bf16.gmra.mxu0 %v3940
        %v4843 = vpop.f32.mrf.mxu0
        %v4844 = vadd.f32 %v4755, %v4843
        %v4845 = vpop.f32.mrf.mxu0
        %v4846 = vadd.f32 %v4757, %v4845
        %4847 = vmatmul.bf16.gmra.mxu0 %v3942
        %v4848 = vpop.f32.mrf.mxu0
        %v4849 = vadd.f32 %v4760, %v4848
        %v4850 = vpop.f32.mrf.mxu0
        %v4851 = vadd.f32 %v4762, %v4850
        %4852 = vmatmul.bf16.gmra.mxu0 %v3944
        %v4853 = vpop.f32.mrf.mxu0
        %v4854 = vadd.f32 %v4765, %v4853
        %v4855 = vpop.f32.mrf.mxu0
        %v4856 = vadd.f32 %v4767, %v4855
        %4857 = vmatmul.bf16.gmra.mxu0 %v3946
        %v4858 = vpop.f32.mrf.mxu0
        %v4859 = vadd.f32 %v4770, %v4858
        %v4860 = vpop.f32.mrf.mxu0
        %v4861 = vadd.f32 %v4772, %v4860
        %4862 = vmatmul.bf16.gmra.mxu0 %v3948
        %v4863 = vpop.f32.mrf.mxu0
        %v4864 = vadd.f32 %v4775, %v4863
        %v4865 = vpop.f32.mrf.mxu0
        %v4866 = vadd.f32 %v4777, %v4865
        %4867 = vmatmul.bf16.gmra.mxu0 %v3950
        %v4868 = vpop.f32.mrf.mxu0
        %v4869 = vadd.f32 %v4780, %v4868
        %v4870 = vpop.f32.mrf.mxu0
        %v4871 = vadd.f32 %v4782, %v4870
        %4872 = vmatmul.bf16.gmra.mxu0 %v3952
        %v4873 = vpop.f32.mrf.mxu0
        %v4874 = vadd.f32 %v4785, %v4873
        %v4875 = vpop.f32.mrf.mxu0
        %v4876 = vadd.f32 %v4787, %v4875
        %4877 = vmatmul.bf16.gmra.mxu0 %v3954
        %v4878 = vpop.f32.mrf.mxu0
        %v4879 = vadd.f32 %v4790, %v4878
        %v4880 = vpop.f32.mrf.mxu0
        %v4881 = vadd.f32 %v4792, %v4880
        %4882 = vdwg.mxu0
        %4883 = vmatpush.bf16.msra.mxu0 %v4252
        %4884 = vmatpush.bf16.msra.mxu0 %v4248
        %4885 = vmatpush.bf16.msra.mxu0 %v4244
        %4886 = vmatpush.bf16.msra.mxu0 %v4240
        %4887 = vmatpush.bf16.msra.mxu0 %v4236
        %4888 = vmatpush.bf16.msra.mxu0 %v4232
        %4889 = vmatpush.bf16.msra.mxu0 %v4228
        %4890 = vmatpush.bf16.msra.mxu0 %v4224
        %4891 = vmatmul.bf16.gmra.mxu0 %v3923
        %v4892 = vpop.f32.mrf.mxu0
        %v4893 = vadd.f32 %v4024, %v4892
        %v4894 = vpop.f32.mrf.mxu0
        %v4895 = vadd.f32 %v4024, %v4894
        %4896 = vmatmul.bf16.gmra.mxu0 %v3925
        %v4897 = vpop.f32.mrf.mxu0
        %v4898 = vadd.f32 %v4024, %v4897
        %v4899 = vpop.f32.mrf.mxu0
        %v4900 = vadd.f32 %v4024, %v4899
        %4901 = vmatmul.bf16.gmra.mxu0 %v3927
        %v4902 = vpop.f32.mrf.mxu0
        %v4903 = vadd.f32 %v4024, %v4902
        %v4904 = vpop.f32.mrf.mxu0
        %v4905 = vadd.f32 %v4024, %v4904
        %4906 = vmatmul.bf16.gmra.mxu0 %v3929
        %v4907 = vpop.f32.mrf.mxu0
        %v4908 = vadd.f32 %v4024, %v4907
        %v4909 = vpop.f32.mrf.mxu0
        %v4910 = vadd.f32 %v4024, %v4909
        %4911 = vmatmul.bf16.gmra.mxu0 %v3931
        %v4912 = vpop.f32.mrf.mxu0
        %v4913 = vadd.f32 %v4024, %v4912
        %v4914 = vpop.f32.mrf.mxu0
        %v4915 = vadd.f32 %v4024, %v4914
        %4916 = vmatmul.bf16.gmra.mxu0 %v3933
        %v4917 = vpop.f32.mrf.mxu0
        %v4918 = vadd.f32 %v4024, %v4917
        %v4919 = vpop.f32.mrf.mxu0
        %v4920 = vadd.f32 %v4024, %v4919
        %4921 = vmatmul.bf16.gmra.mxu0 %v3935
        %v4922 = vpop.f32.mrf.mxu0
        %v4923 = vadd.f32 %v4024, %v4922
        %v4924 = vpop.f32.mrf.mxu0
        %v4925 = vadd.f32 %v4024, %v4924
        %4926 = vmatmul.bf16.gmra.mxu0 %v3937
        %v4927 = vpop.f32.mrf.mxu0
        %v4928 = vadd.f32 %v4024, %v4927
        %v4929 = vpop.f32.mrf.mxu0
        %v4930 = vadd.f32 %v4024, %v4929
        %4931 = vmatmul.bf16.gmra.mxu0 %v3939
        %v4932 = vpop.f32.mrf.mxu0
        %v4933 = vadd.f32 %v4024, %v4932
        %v4934 = vpop.f32.mrf.mxu0
        %v4935 = vadd.f32 %v4024, %v4934
        %4936 = vmatmul.bf16.gmra.mxu0 %v3941
        %v4937 = vpop.f32.mrf.mxu0
        %v4938 = vadd.f32 %v4024, %v4937
        %v4939 = vpop.f32.mrf.mxu0
        %v4940 = vadd.f32 %v4024, %v4939
        %4941 = vmatmul.bf16.gmra.mxu0 %v3943
        %v4942 = vpop.f32.mrf.mxu0
        %v4943 = vadd.f32 %v4024, %v4942
        %v4944 = vpop.f32.mrf.mxu0
        %v4945 = vadd.f32 %v4024, %v4944
        %4946 = vmatmul.bf16.gmra.mxu0 %v3945
        %v4947 = vpop.f32.mrf.mxu0
        %v4948 = vadd.f32 %v4024, %v4947
        %v4949 = vpop.f32.mrf.mxu0
        %v4950 = vadd.f32 %v4024, %v4949
        %4951 = vmatmul.bf16.gmra.mxu0 %v3947
        %v4952 = vpop.f32.mrf.mxu0
        %v4953 = vadd.f32 %v4024, %v4952
        %v4954 = vpop.f32.mrf.mxu0
        %v4955 = vadd.f32 %v4024, %v4954
        %4956 = vmatmul.bf16.gmra.mxu0 %v3949
        %v4957 = vpop.f32.mrf.mxu0
        %v4958 = vadd.f32 %v4024, %v4957
        %v4959 = vpop.f32.mrf.mxu0
        %v4960 = vadd.f32 %v4024, %v4959
        %4961 = vmatmul.bf16.gmra.mxu0 %v3951
        %v4962 = vpop.f32.mrf.mxu0
        %v4963 = vadd.f32 %v4024, %v4962
        %v4964 = vpop.f32.mrf.mxu0
        %v4965 = vadd.f32 %v4024, %v4964
        %4966 = vmatmul.bf16.gmra.mxu0 %v3953
        %v4967 = vpop.f32.mrf.mxu0
        %v4968 = vadd.f32 %v4024, %v4967
        %v4969 = vpop.f32.mrf.mxu0
        %v4970 = vadd.f32 %v4024, %v4969
        %4971 = vdwg.mxu0
        %4972 = vmatpush.bf16.msra.mxu0 %v4284
        %4973 = vmatpush.bf16.msra.mxu0 %v4280
        %4974 = vmatpush.bf16.msra.mxu0 %v4276
        %4975 = vmatpush.bf16.msra.mxu0 %v4272
        %4976 = vmatpush.bf16.msra.mxu0 %v4268
        %4977 = vmatpush.bf16.msra.mxu0 %v4264
        %4978 = vmatpush.bf16.msra.mxu0 %v4260
        %4979 = vmatpush.bf16.msra.mxu0 %v4256
        %4980 = vmatmul.bf16.gmra.mxu0 %v3924
        %v4981 = vpop.f32.mrf.mxu0
        %v4982 = vadd.f32 %v4893, %v4981
        %v4983 = vpop.f32.mrf.mxu0
        %v4984 = vadd.f32 %v4895, %v4983
        %4985 = vmatmul.bf16.gmra.mxu0 %v3926
        %v4986 = vpop.f32.mrf.mxu0
        %v4987 = vadd.f32 %v4898, %v4986
        %v4988 = vpop.f32.mrf.mxu0
        %v4989 = vadd.f32 %v4900, %v4988
        %4990 = vmatmul.bf16.gmra.mxu0 %v3928
        %v4991 = vpop.f32.mrf.mxu0
        %v4992 = vadd.f32 %v4903, %v4991
        %v4993 = vpop.f32.mrf.mxu0
        %v4994 = vadd.f32 %v4905, %v4993
        %4995 = vmatmul.bf16.gmra.mxu0 %v3930
        %v4996 = vpop.f32.mrf.mxu0
        %v4997 = vadd.f32 %v4908, %v4996
        %v4998 = vpop.f32.mrf.mxu0
        %v4999 = vadd.f32 %v4910, %v4998
        %5000 = vmatmul.bf16.gmra.mxu0 %v3932
        %v5001 = vpop.f32.mrf.mxu0
        %v5002 = vadd.f32 %v4913, %v5001
        %v5003 = vpop.f32.mrf.mxu0
        %v5004 = vadd.f32 %v4915, %v5003
        %5005 = vmatmul.bf16.gmra.mxu0 %v3934
        %v5006 = vpop.f32.mrf.mxu0
        %v5007 = vadd.f32 %v4918, %v5006
        %v5008 = vpop.f32.mrf.mxu0
        %v5009 = vadd.f32 %v4920, %v5008
        %5010 = vmatmul.bf16.gmra.mxu0 %v3936
        %v5011 = vpop.f32.mrf.mxu0
        %v5012 = vadd.f32 %v4923, %v5011
        %v5013 = vpop.f32.mrf.mxu0
        %v5014 = vadd.f32 %v4925, %v5013
        %5015 = vmatmul.bf16.gmra.mxu0 %v3938
        %v5016 = vpop.f32.mrf.mxu0
        %v5017 = vadd.f32 %v4928, %v5016
        %v5018 = vpop.f32.mrf.mxu0
        %v5019 = vadd.f32 %v4930, %v5018
        %5020 = vmatmul.bf16.gmra.mxu0 %v3940
        %v5021 = vpop.f32.mrf.mxu0
        %v5022 = vadd.f32 %v4933, %v5021
        %v5023 = vpop.f32.mrf.mxu0
        %v5024 = vadd.f32 %v4935, %v5023
        %5025 = vmatmul.bf16.gmra.mxu0 %v3942
        %v5026 = vpop.f32.mrf.mxu0
        %v5027 = vadd.f32 %v4938, %v5026
        %v5028 = vpop.f32.mrf.mxu0
        %v5029 = vadd.f32 %v4940, %v5028
        %5030 = vmatmul.bf16.gmra.mxu0 %v3944
        %v5031 = vpop.f32.mrf.mxu0
        %v5032 = vadd.f32 %v4943, %v5031
        %v5033 = vpop.f32.mrf.mxu0
        %v5034 = vadd.f32 %v4945, %v5033
        %5035 = vmatmul.bf16.gmra.mxu0 %v3946
        %v5036 = vpop.f32.mrf.mxu0
        %v5037 = vadd.f32 %v4948, %v5036
        %v5038 = vpop.f32.mrf.mxu0
        %v5039 = vadd.f32 %v4950, %v5038
        %5040 = vmatmul.bf16.gmra.mxu0 %v3948
        %v5041 = vpop.f32.mrf.mxu0
        %v5042 = vadd.f32 %v4953, %v5041
        %v5043 = vpop.f32.mrf.mxu0
        %v5044 = vadd.f32 %v4955, %v5043
        %5045 = vmatmul.bf16.gmra.mxu0 %v3950
        %v5046 = vpop.f32.mrf.mxu0
        %v5047 = vadd.f32 %v4958, %v5046
        %v5048 = vpop.f32.mrf.mxu0
        %v5049 = vadd.f32 %v4960, %v5048
        %5050 = vmatmul.bf16.gmra.mxu0 %v3952
        %v5051 = vpop.f32.mrf.mxu0
        %v5052 = vadd.f32 %v4963, %v5051
        %v5053 = vpop.f32.mrf.mxu0
        %v5054 = vadd.f32 %v4965, %v5053
        %5055 = vmatmul.bf16.gmra.mxu0 %v3954
        %v5056 = vpop.f32.mrf.mxu0
        %v5057 = vadd.f32 %v4968, %v5056
        %v5058 = vpop.f32.mrf.mxu0
        %v5059 = vadd.f32 %v4970, %v5058
        %5060 = vdwg.mxu0
        %5061 = vst [vmem:[%s575] sm:$0xff] %v4448
        %5062 = vst [vmem:[%s575 + $0x8] sm:$0xff] %v4626
        %5063 = vst [vmem:[%s575 + $0x10] sm:$0xff] %v4804
        %5064 = vst [vmem:[%s575 + $0x18] sm:$0xff] %v4982
        %5065 = vst [vmem:[%s575 + $0x20] sm:$0xff] %v4450
        %5066 = vst [vmem:[%s575 + $0x28] sm:$0xff] %v4628
        %5067 = vst [vmem:[%s575 + $0x30] sm:$0xff] %v4806
        %5068 = vst [vmem:[%s575 + $0x38] sm:$0xff] %v4984
        %5069 = vst [vmem:[%s575 + $0x40] sm:$0xff] %v4453
        %5070 = vst [vmem:[%s575 + $0x48] sm:$0xff] %v4631
        %5071 = vst [vmem:[%s575 + $0x50] sm:$0xff] %v4809
        %5072 = vst [vmem:[%s575 + $0x58] sm:$0xff] %v4987
        %5073 = vst [vmem:[%s575 + $0x60] sm:$0xff] %v4455
        %5074 = vst [vmem:[%s575 + $0x68] sm:$0xff] %v4633
        %5075 = vst [vmem:[%s575 + $0x70] sm:$0xff] %v4811
        %5076 = vst [vmem:[%s575 + $0x78] sm:$0xff] %v4989
        %5077 = vst [vmem:[%s575 + $0x80] sm:$0xff] %v4458
        %5078 = vst [vmem:[%s575 + $0x88] sm:$0xff] %v4636
        %5079 = vst [vmem:[%s575 + $0x90] sm:$0xff] %v4814
        %5080 = vst [vmem:[%s575 + $0x98] sm:$0xff] %v4992
        %5081 = vst [vmem:[%s575 + $0xa0] sm:$0xff] %v4460
        %5082 = vst [vmem:[%s575 + $0xa8] sm:$0xff] %v4638
        %5083 = vst [vmem:[%s575 + $0xb0] sm:$0xff] %v4816
        %5084 = vst [vmem:[%s575 + $0xb8] sm:$0xff] %v4994
        %5085 = vst [vmem:[%s575 + $0xc0] sm:$0xff] %v4463
        %5086 = vst [vmem:[%s575 + $0xc8] sm:$0xff] %v4641
        %5087 = vst [vmem:[%s575 + $0xd0] sm:$0xff] %v4819
        %5088 = vst [vmem:[%s575 + $0xd8] sm:$0xff] %v4997
        %5089 = vst [vmem:[%s575 + $0xe0] sm:$0xff] %v4465
        %5090 = vst [vmem:[%s575 + $0xe8] sm:$0xff] %v4643
        %5091 = vst [vmem:[%s575 + $0xf0] sm:$0xff] %v4821
        %5092 = vst [vmem:[%s575 + $0xf8] sm:$0xff] %v4999
        %5093 = vst [vmem:[%s575 + $0x100] sm:$0xff] %v4468
        %5094 = vst [vmem:[%s575 + $0x108] sm:$0xff] %v4646
        %5095 = vst [vmem:[%s575 + $0x110] sm:$0xff] %v4824
        %5096 = vst [vmem:[%s575 + $0x118] sm:$0xff] %v5002
        %5097 = vst [vmem:[%s575 + $0x120] sm:$0xff] %v4470
        %5098 = vst [vmem:[%s575 + $0x128] sm:$0xff] %v4648
        %5099 = vst [vmem:[%s575 + $0x130] sm:$0xff] %v4826
        %5100 = vst [vmem:[%s575 + $0x138] sm:$0xff] %v5004
        %5101 = vst [vmem:[%s575 + $0x140] sm:$0xff] %v4473
        %5102 = vst [vmem:[%s575 + $0x148] sm:$0xff] %v4651
        %5103 = vst [vmem:[%s575 + $0x150] sm:$0xff] %v4829
        %5104 = vst [vmem:[%s575 + $0x158] sm:$0xff] %v5007
        %5105 = vst [vmem:[%s575 + $0x160] sm:$0xff] %v4475
        %5106 = vst [vmem:[%s575 + $0x168] sm:$0xff] %v4653
        %5107 = vst [vmem:[%s575 + $0x170] sm:$0xff] %v4831
        %5108 = vst [vmem:[%s575 + $0x178] sm:$0xff] %v5009
        %5109 = vst [vmem:[%s575 + $0x180] sm:$0xff] %v4478
        %5110 = vst [vmem:[%s575 + $0x188] sm:$0xff] %v4656
        %5111 = vst [vmem:[%s575 + $0x190] sm:$0xff] %v4834
        %5112 = vst [vmem:[%s575 + $0x198] sm:$0xff] %v5012
        %5113 = vst [vmem:[%s575 + $0x1a0] sm:$0xff] %v4480
        %5114 = vst [vmem:[%s575 + $0x1a8] sm:$0xff] %v4658
        %5115 = vst [vmem:[%s575 + $0x1b0] sm:$0xff] %v4836
        %5116 = vst [vmem:[%s575 + $0x1b8] sm:$0xff] %v5014
        %5117 = vst [vmem:[%s575 + $0x1c0] sm:$0xff] %v4483
        %5118 = vst [vmem:[%s575 + $0x1c8] sm:$0xff] %v4661
        %5119 = vst [vmem:[%s575 + $0x1d0] sm:$0xff] %v4839
        %5120 = vst [vmem:[%s575 + $0x1d8] sm:$0xff] %v5017
        %5121 = vst [vmem:[%s575 + $0x1e0] sm:$0xff] %v4485
        %5122 = vst [vmem:[%s575 + $0x1e8] sm:$0xff] %v4663
        %5123 = vst [vmem:[%s575 + $0x1f0] sm:$0xff] %v4841
        %5124 = vst [vmem:[%s575 + $0x1f8] sm:$0xff] %v5019
        %5125 = vst [vmem:[%s575 + $0x200] sm:$0xff] %v4488
        %5126 = vst [vmem:[%s575 + $0x208] sm:$0xff] %v4666
        %5127 = vst [vmem:[%s575 + $0x210] sm:$0xff] %v4844
        %5128 = vst [vmem:[%s575 + $0x218] sm:$0xff] %v5022
        %5129 = vst [vmem:[%s575 + $0x220] sm:$0xff] %v4490
        %5130 = vst [vmem:[%s575 + $0x228] sm:$0xff] %v4668
        %5131 = vst [vmem:[%s575 + $0x230] sm:$0xff] %v4846
        %5132 = vst [vmem:[%s575 + $0x238] sm:$0xff] %v5024
        %5133 = vst [vmem:[%s575 + $0x240] sm:$0xff] %v4493
        %5134 = vst [vmem:[%s575 + $0x248] sm:$0xff] %v4671
        %5135 = vst [vmem:[%s575 + $0x250] sm:$0xff] %v4849
        %5136 = vst [vmem:[%s575 + $0x258] sm:$0xff] %v5027
        %5137 = vst [vmem:[%s575 + $0x260] sm:$0xff] %v4495
        %5138 = vst [vmem:[%s575 + $0x268] sm:$0xff] %v4673
        %5139 = vst [vmem:[%s575 + $0x270] sm:$0xff] %v4851
        %5140 = vst [vmem:[%s575 + $0x278] sm:$0xff] %v5029
        %5141 = vst [vmem:[%s575 + $0x280] sm:$0xff] %v4498
        %5142 = vst [vmem:[%s575 + $0x288] sm:$0xff] %v4676
        %5143 = vst [vmem:[%s575 + $0x290] sm:$0xff] %v4854
        %5144 = vst [vmem:[%s575 + $0x298] sm:$0xff] %v5032
        %5145 = vst [vmem:[%s575 + $0x2a0] sm:$0xff] %v4500
        %5146 = vst [vmem:[%s575 + $0x2a8] sm:$0xff] %v4678
        %5147 = vst [vmem:[%s575 + $0x2b0] sm:$0xff] %v4856
        %5148 = vst [vmem:[%s575 + $0x2b8] sm:$0xff] %v5034
        %5149 = vst [vmem:[%s575 + $0x2c0] sm:$0xff] %v4503
        %5150 = vst [vmem:[%s575 + $0x2c8] sm:$0xff] %v4681
        %5151 = vst [vmem:[%s575 + $0x2d0] sm:$0xff] %v4859
        %5152 = vst [vmem:[%s575 + $0x2d8] sm:$0xff] %v5037
        %5153 = vst [vmem:[%s575 + $0x2e0] sm:$0xff] %v4505
        %5154 = vst [vmem:[%s575 + $0x2e8] sm:$0xff] %v4683
        %5155 = vst [vmem:[%s575 + $0x2f0] sm:$0xff] %v4861
        %5156 = vst [vmem:[%s575 + $0x2f8] sm:$0xff] %v5039
        %5157 = vst [vmem:[%s575 + $0x300] sm:$0xff] %v4508
        %5158 = vst [vmem:[%s575 + $0x308] sm:$0xff] %v4686
        %5159 = vst [vmem:[%s575 + $0x310] sm:$0xff] %v4864
        %5160 = vst [vmem:[%s575 + $0x318] sm:$0xff] %v5042
        %5161 = vst [vmem:[%s575 + $0x320] sm:$0xff] %v4510
        %5162 = vst [vmem:[%s575 + $0x328] sm:$0xff] %v4688
        %5163 = vst [vmem:[%s575 + $0x330] sm:$0xff] %v4866
        %5164 = vst [vmem:[%s575 + $0x338] sm:$0xff] %v5044
        %5165 = vst [vmem:[%s575 + $0x340] sm:$0xff] %v4513
        %5166 = vst [vmem:[%s575 + $0x348] sm:$0xff] %v4691
        %5167 = vst [vmem:[%s575 + $0x350] sm:$0xff] %v4869
        %5168 = vst [vmem:[%s575 + $0x358] sm:$0xff] %v5047
        %5169 = vst [vmem:[%s575 + $0x360] sm:$0xff] %v4515
        %5170 = vst [vmem:[%s575 + $0x368] sm:$0xff] %v4693
        %5171 = vst [vmem:[%s575 + $0x370] sm:$0xff] %v4871
        %5172 = vst [vmem:[%s575 + $0x378] sm:$0xff] %v5049
        %5173 = vst [vmem:[%s575 + $0x380] sm:$0xff] %v4518
        %5174 = vst [vmem:[%s575 + $0x388] sm:$0xff] %v4696
        %5175 = vst [vmem:[%s575 + $0x390] sm:$0xff] %v4874
        %5176 = vst [vmem:[%s575 + $0x398] sm:$0xff] %v5052
        %5177 = vst [vmem:[%s575 + $0x3a0] sm:$0xff] %v4520
        %5178 = vst [vmem:[%s575 + $0x3a8] sm:$0xff] %v4698
        %5179 = vst [vmem:[%s575 + $0x3b0] sm:$0xff] %v4876
        %5180 = vst [vmem:[%s575 + $0x3b8] sm:$0xff] %v5054
        %5181 = vst [vmem:[%s575 + $0x3c0] sm:$0xff] %v4523
        %5182 = vst [vmem:[%s575 + $0x3c8] sm:$0xff] %v4701
        %5183 = vst [vmem:[%s575 + $0x3d0] sm:$0xff] %v4879
        %5184 = vst [vmem:[%s575 + $0x3d8] sm:$0xff] %v5057
        %5185 = vst [vmem:[%s575 + $0x3e0] sm:$0xff] %v4525
        %5186 = vst [vmem:[%s575 + $0x3e8] sm:$0xff] %v4703
        %5187 = vst [vmem:[%s575 + $0x3f0] sm:$0xff] %v4881
        %5188 = vst [vmem:[%s575 + $0x3f8] sm:$0xff] %v5059
        %5189 = vst [vmem:[%s582] sm:$0xff] %v3114
        %5190 = vst [vmem:[%s582 + $0x8] sm:$0xff] %v3116
        %5191 = vst [vmem:[%s582 + $0x10] sm:$0xff] %v3119
        %5192 = vst [vmem:[%s582 + $0x18] sm:$0xff] %v3121
        %5193 = vst [vmem:[%s582 + $0x20] sm:$0xff] %v3124
        %5194 = vst [vmem:[%s582 + $0x28] sm:$0xff] %v3126
        %5195 = vst [vmem:[%s582 + $0x30] sm:$0xff] %v3129
        %5196 = vst [vmem:[%s582 + $0x38] sm:$0xff] %v3131
        %5197 = vst [vmem:[%s582 + $0x40] sm:$0xff] %v3134
        %5198 = vst [vmem:[%s582 + $0x48] sm:$0xff] %v3136
        %5199 = vst [vmem:[%s582 + $0x50] sm:$0xff] %v3139
        %5200 = vst [vmem:[%s582 + $0x58] sm:$0xff] %v3141
        %5201 = vst [vmem:[%s582 + $0x60] sm:$0xff] %v3144
        %5202 = vst [vmem:[%s582 + $0x68] sm:$0xff] %v3146
        %5203 = vst [vmem:[%s582 + $0x70] sm:$0xff] %v3149
        %5204 = vst [vmem:[%s582 + $0x78] sm:$0xff] %v3151
        %5205 = vst [vmem:[%s582 + $0x80] sm:$0xff] %v3154
        %5206 = vst [vmem:[%s582 + $0x88] sm:$0xff] %v3156
        %5207 = vst [vmem:[%s582 + $0x90] sm:$0xff] %v3159
        %5208 = vst [vmem:[%s582 + $0x98] sm:$0xff] %v3161
        %5209 = vst [vmem:[%s582 + $0xa0] sm:$0xff] %v3164
        %5210 = vst [vmem:[%s582 + $0xa8] sm:$0xff] %v3166
        %5211 = vst [vmem:[%s582 + $0xb0] sm:$0xff] %v3169
        %5212 = vst [vmem:[%s582 + $0xb8] sm:$0xff] %v3171
        %5213 = vst [vmem:[%s582 + $0xc0] sm:$0xff] %v3174
        %5214 = vst [vmem:[%s582 + $0xc8] sm:$0xff] %v3176
        %5215 = vst [vmem:[%s582 + $0xd0] sm:$0xff] %v3179
        %5216 = vst [vmem:[%s582 + $0xd8] sm:$0xff] %v3181
        %5217 = vst [vmem:[%s582 + $0xe0] sm:$0xff] %v3184
        %5218 = vst [vmem:[%s582 + $0xe8] sm:$0xff] %v3186
        %5219 = vst [vmem:[%s582 + $0xf0] sm:$0xff] %v3189
        %5220 = vst [vmem:[%s582 + $0xf8] sm:$0xff] %v3191
        %5221 = vst [vmem:[%s589] sm:$0xff] %v3292
        %5222 = vst [vmem:[%s589 + $0x8] sm:$0xff] %v3294
        %5223 = vst [vmem:[%s589 + $0x10] sm:$0xff] %v3297
        %5224 = vst [vmem:[%s589 + $0x18] sm:$0xff] %v3299
        %5225 = vst [vmem:[%s589 + $0x20] sm:$0xff] %v3302
        %5226 = vst [vmem:[%s589 + $0x28] sm:$0xff] %v3304
        %5227 = vst [vmem:[%s589 + $0x30] sm:$0xff] %v3307
        %5228 = vst [vmem:[%s589 + $0x38] sm:$0xff] %v3309
        %5229 = vst [vmem:[%s589 + $0x40] sm:$0xff] %v3312
        %5230 = vst [vmem:[%s589 + $0x48] sm:$0xff] %v3314
        %5231 = vst [vmem:[%s589 + $0x50] sm:$0xff] %v3317
        %5232 = vst [vmem:[%s589 + $0x58] sm:$0xff] %v3319
        %5233 = vst [vmem:[%s589 + $0x60] sm:$0xff] %v3322
        %5234 = vst [vmem:[%s589 + $0x68] sm:$0xff] %v3324
        %5235 = vst [vmem:[%s589 + $0x70] sm:$0xff] %v3327
        %5236 = vst [vmem:[%s589 + $0x78] sm:$0xff] %v3329
        %5237 = vst [vmem:[%s589 + $0x80] sm:$0xff] %v3332
        %5238 = vst [vmem:[%s589 + $0x88] sm:$0xff] %v3334
        %5239 = vst [vmem:[%s589 + $0x90] sm:$0xff] %v3337
        %5240 = vst [vmem:[%s589 + $0x98] sm:$0xff] %v3339
        %5241 = vst [vmem:[%s589 + $0xa0] sm:$0xff] %v3342
        %5242 = vst [vmem:[%s589 + $0xa8] sm:$0xff] %v3344
        %5243 = vst [vmem:[%s589 + $0xb0] sm:$0xff] %v3347
        %5244 = vst [vmem:[%s589 + $0xb8] sm:$0xff] %v3349
        %5245 = vst [vmem:[%s589 + $0xc0] sm:$0xff] %v3352
        %5246 = vst [vmem:[%s589 + $0xc8] sm:$0xff] %v3354
        %5247 = vst [vmem:[%s589 + $0xd0] sm:$0xff] %v3357
        %5248 = vst [vmem:[%s589 + $0xd8] sm:$0xff] %v3359
        %5249 = vst [vmem:[%s589 + $0xe0] sm:$0xff] %v3362
        %5250 = vst [vmem:[%s589 + $0xe8] sm:$0xff] %v3364
        %5251 = vst [vmem:[%s589 + $0xf0] sm:$0xff] %v3367
        %5252 = vst [vmem:[%s589 + $0xf8] sm:$0xff] %v3369
        %s5253 = sand.u32 %s267, 1
        %s5254 = scalar_lea.sflag [#allocation4], %s5253
        %s5255 = sand.u32 %s267, 1
        %s5256 = smul.addr %s5255, 1024
        %s5257 = scalar_lea.vmem [#allocation16], %s5256
        %s5258 = sand.u32 %s39, 1
        %s5259 = scalar_lea.sflag [#allocation18], %s5258
        %s5260 = sand.u32 %s293, 1
        %s5261 = smul.addr %s5260, 256
        %s5262 = scalar_lea.vmem [#allocation17], %s5261
        %s5263 = sand.u32 %s39, 1
        %s5264 = scalar_lea.sflag [#allocation18], %s5263
        %s5265 = sand.u32 %s319, 1
        %s5266 = smul.addr %s5265, 256
        %s5267 = scalar_lea.vmem [#allocation19], %s5266
        // Predicated region
        $region93: #{tpu_custom_call.1} parent=59 // pred_check
          %p5268 = pneg %p277
        $region94: #{tpu_custom_call.1} parent=59 // pred_check_branch
          %5270 = sbr.rel (%p5268) target = $region96
        $region95: #{tpu_custom_call.1} parent=59 // pred_region
          %s5271 = smul.u32 32, %s39
          %5273 = vsyncadd %s5254, 0
          %s5274 = smul.addr %s5271, 4
          %s5275 = smul.addr %s5274, 8
          %s5276 = scalar_lea.hbm %s10, %s5275
          %s5277 = sshll.u32 %s5257, 4
          %s5278 = int_to_ptr.vmem [resolvable:$true] %s5277
          %s5279 = sshll.u32 %s5276, 4
          %s5280 = int_to_ptr.hbm [resolvable:$true] %s5279
          %5285 = dma.vmem_to_hbm [thread:$0]  %s5278, 16384, %s5280, %s5254, 512, 512, 32
        $region96: #{tpu_custom_call.1} parent=59 // pred_fallthru
          _
        // Predicated region
        $region97: #{tpu_custom_call.1} parent=59 // pred_check
          %p5286 = pneg %p303
        $region98: #{tpu_custom_call.1} parent=59 // pred_check_branch
          %5288 = sbr.rel (%p5286) target = $region100
        $region99: #{tpu_custom_call.1} parent=59 // pred_region
          %s5289 = smul.u32 32, %s39
          %5291 = vsyncadd %s5259, 0
          %s5292 = smul.addr %s5289, 8
          %s5293 = scalar_lea.hbm %s11, %s5292
          %s5294 = sshll.u32 %s5262, 4
          %s5295 = int_to_ptr.vmem [resolvable:$true] %s5294
          %s5296 = sshll.u32 %s5293, 4
          %s5297 = int_to_ptr.hbm [resolvable:$true] %s5296
          %5302 = dma.vmem_to_hbm [thread:$0]  %s5295, 4096, %s5297, %s5259, 128, 128, 8
        $region100: #{tpu_custom_call.1} parent=59 // pred_fallthru
          _
        // Predicated region
        $region101: #{tpu_custom_call.1} parent=59 // pred_check
          %p5303 = pneg %p329
        $region102: #{tpu_custom_call.1} parent=59 // pred_check_branch
          %5305 = sbr.rel (%p5303) target = $region104
        $region103: #{tpu_custom_call.1} parent=59 // pred_region
          %s5306 = smul.u32 32, %s39
          %5308 = vsyncadd %s5264, 0
          %s5309 = smul.addr %s5306, 8
          %s5310 = scalar_lea.hbm %s12, %s5309
          %s5311 = sshll.u32 %s5267, 4
          %s5312 = int_to_ptr.vmem [resolvable:$true] %s5311
          %s5313 = sshll.u32 %s5310, 4
          %s5314 = int_to_ptr.hbm [resolvable:$true] %s5313
          %5319 = dma.vmem_to_hbm [thread:$0]  %s5312, 4096, %s5314, %s5264, 128, 128, 8
        $region104: #{tpu_custom_call.1} parent=59 // pred_fallthru
          _
      $region60: #{tpu_custom_call.1} parent=5 // pred_fallthru
        _
      %p5320 = scmp.le.s32.totalorder 2, %s34
      // Predicated region
      $region105: #{tpu_custom_call.1} parent=5 // pred_check
        %p5321 = pneg %p5320
      $region106: #{tpu_custom_call.1} parent=5 // pred_check_branch
        %5323 = sbr.rel (%p5321) target = $region108
      $region107: #{tpu_custom_call.1} parent=5 // pred_region
        %s5324 = ssub.s32 %s34, 2
        // Predicated region
        $region109: #{tpu_custom_call.1} parent=107 // pred_check
          %p5325 = pneg %p283
        $region110: #{tpu_custom_call.1} parent=107 // pred_check_branch
          %5327 = sbr.rel (%p5325) target = $region112
        $region111: #{tpu_custom_call.1} parent=107 // pred_region
          %s5328 = sand.u32 %s268, 1
          %s5329 = scalar_lea.sflag [#allocation4], %s5328
          %s5330 = sand.u32 %s268, 1
          %s5331 = smul.addr %s5330, 1024
          %s5332 = scalar_lea.vmem [#allocation16], %s5331
          %5334 = dma.done %s5329, 16384
        $region112: #{tpu_custom_call.1} parent=107 // pred_fallthru
          _
        // Predicated region
        $region113: #{tpu_custom_call.1} parent=107 // pred_check
          %p5335 = pneg %p309
        $region114: #{tpu_custom_call.1} parent=107 // pred_check_branch
          %5337 = sbr.rel (%p5335) target = $region116
        $region115: #{tpu_custom_call.1} parent=107 // pred_region
          %s5338 = sand.u32 %s40, 1
          %s5339 = scalar_lea.sflag [#allocation18], %s5338
          %s5340 = sand.u32 %s294, 1
          %s5341 = smul.addr %s5340, 256
          %s5342 = scalar_lea.vmem [#allocation17], %s5341
          %5344 = dma.done %s5339, 4096
        $region116: #{tpu_custom_call.1} parent=107 // pred_fallthru
          _
        // Predicated region
        $region117: #{tpu_custom_call.1} parent=107 // pred_check
          %p5345 = pneg %p335
        $region118: #{tpu_custom_call.1} parent=107 // pred_check_branch
          %5347 = sbr.rel (%p5345) target = $region120
        $region119: #{tpu_custom_call.1} parent=107 // pred_region
          %s5348 = sand.u32 %s40, 1
          %s5349 = scalar_lea.sflag [#allocation18], %s5348
          %s5350 = sand.u32 %s320, 1
          %s5351 = smul.addr %s5350, 256
          %s5352 = scalar_lea.vmem [#allocation19], %s5351
          %5354 = dma.done %s5349, 4096
        $region120: #{tpu_custom_call.1} parent=107 // pred_fallthru
          _
      $region108: #{tpu_custom_call.1} parent=5 // pred_fallthru
        _
    $region6: #{tpu_custom_call.1} parent=1 // loop_footer
      %s38 = sadd.s32 1, %s34
    $region7: #{tpu_custom_call.1} parent=1 // loop_footer_branch
      %33 = sbr.rel target = $region3
    $region8: #{tpu_custom_call.1} parent=1 // loop_exit
      _
    %5355 = vsyncpa [#allocation3], 1
    %s5356 = scalar_lea.sflag [#allocation3], 1
    %5357 = vsyncpa %s5356, 1
    %5358 = vsyncpa [#allocation6], 1
    %s5359 = scalar_lea.sflag [#allocation6], 1
    %5360 = vsyncpa %s5359, 1
    %5361 = vsyncpa [#allocation9], 1
    %5362 = vsyncpa [#allocation12], 1
    %5363 = vsyncpa [#allocation15], 1
    %5364 = vsyncpa [#allocation4], 1
    %s5365 = scalar_lea.sflag [#allocation4], 1
    %5366 = vsyncpa %s5365, 1
    %5367 = vsyncpa [#allocation18], 1
    %s5368 = scalar_lea.sflag [#allocation18], 1
    %5369 = vsyncpa %s5368, 1

</llo_original>
